<compile_context>
chip_gen: v5e
topology: v5e:2x2
jax: 0.10.0
libtpu: 0.0.40
codegen_flags: <defaults>
</compile_context>

<pallas_src>
import functools

import jax
import jax.numpy as jnp
from jax import lax
from jax.experimental import pallas as pl
from jax.experimental.pallas import tpu as pltpu

BN_EPS = 1e-5
LANE = 128


def _round_up(x, m):
    return (x + m - 1) // m * m


def _vmem_limit_bytes():
    """Per-generation scoped-VMEM limit: ~3/4 of physical, capped at 100 MiB."""
    try:
        cap = int(pltpu.get_tpu_info().vmem_capacity_bytes)
    except Exception:
        cap = 64 * 1024 * 1024          # conservative fallback (v7x per-core size)
    return min(cap * 3 // 4, 100 * 1024 * 1024)


# ------------------------------ kernels ------------------------------

def _stats_kernel(x_ref, o_ref):
    """Per-batch partial BN statistics: row 0 = sum, row 1 = sum of squares."""
    Cp = x_ref.shape[-1]
    x = x_ref[0].reshape(-1, Cp)                       # (H*W, Cp) f32
    s = jnp.sum(x, axis=0, keepdims=True)
    sq = jnp.sum(x * x, axis=0, keepdims=True)
    o_ref[0] = jnp.concatenate([s, sq], axis=0)        # (2, Cp)


def _conv3x3(a, w_ref, pad_ref, H, W, WP, Cp):
    """3x3 'same' conv via a flat (H+2)xWP padded scratch and 9 accumulated bf16 matmuls.

    a:       (H, W, Cp) f32 post-BN-ReLU activations.
    w_ref:   (9, Cp, Cp) bf16 weights, tap k = kh*3 + kw, layout [k, Cin, Cout].
    pad_ref: ((H+3)*WP, Cp) bf16 scratch; row i*WP + j holds padded pixel (i, j).
    Returns  (H, W, Cp) f32.
    """
    dt = pad_ref.dtype
    # Halo rows (top + bottom + slack): lane-dense full-width stores, re-done each step
    # because the scratch persists across grid iterations (megacore-safe: per-core scratch).
    pad_ref[0:WP, :] = jnp.zeros((WP, Cp), dt)
    pad_ref[(H + 1) * WP:(H + 3) * WP, :] = jnp.zeros((2 * WP, Cp), dt)
    # Interior rows 1..H with the left/right column halo folded in (one aligned store,
    # no width-1 masked column stores).
    a_bf = a.astype(dt)
    z_l = jnp.zeros((H, 1, Cp), dt)
    z_r = jnp.zeros((H, WP - W - 1, Cp), dt)
    interior = jnp.concatenate([z_l, a_bf, z_r], axis=1).reshape(H * WP, Cp)
    pad_ref[WP:(H + 1) * WP, :] = interior

    # out[h, w] lives at flat row h*WP + w; tap (kh, kw) reads flat rows shifted by
    # kh*WP + kw -> each window is a *contiguous* (H*WP, Cp) slice (no im2col slab).
    L = H * WP
    acc = jnp.zeros((L, Cp), jnp.float32)
    for kh in range(3):
        for kw in range(3):
            off = kh * WP + kw
            win = pad_ref[off:off + L, :]              # (L, Cp) bf16, contiguous
            acc += jnp.dot(win, w_ref[kh * 3 + kw],
                           preferred_element_type=jnp.float32)
    # Rows with w >= W are wrap garbage; drop them.
    return acc.reshape(H, WP, Cp)[:, :W, :]


def _bn_relu_conv_kernel(H, W, WP, scale_ref, shift_ref, w_ref, x_ref,
                         h_ref, stat_ref, pad_ref):
    """BN1(scale/shift) -> ReLU -> conv1 (no bias); also emits per-batch BN2 partial stats."""
    Cp = x_ref.shape[-1]
    a = jnp.maximum(x_ref[0] * scale_ref[...] + shift_ref[...], 0.0)      # (H, W, Cp) f32
    out_val = _conv3x3(a, w_ref, pad_ref, H, W, WP, Cp)                   # (H, W, Cp) f32
    h_ref[0] = out_val.astype(h_ref.dtype)                                # bf16 h
    s = jnp.sum(out_val, axis=(0, 1)).reshape(1, Cp)
    sq = jnp.sum(out_val * out_val, axis=(0, 1)).reshape(1, Cp)
    stat_ref[0] = jnp.concatenate([s, sq], axis=0)                        # (2, Cp) partials


def _bn_relu_conv_res_kernel(H, W, WP, scale_ref, shift_ref, w_ref, bias_ref,
                             h_ref, skip_ref, o_ref, pad_ref):
    """BN2(scale/shift) -> ReLU -> conv2 (+bias) -> residual add, per batch element."""
    Cp = h_ref.shape[-1]
    a = jnp.maximum(h_ref[0].astype(jnp.float32) * scale_ref[...] + shift_ref[...], 0.0)
    out_val = _conv3x3(a, w_ref, pad_ref, H, W, WP, Cp) + bias_ref[...]
    o_ref[0] = (out_val + skip_ref[0]).astype(o_ref.dtype)


# --------------------------- pallas_call wrappers ---------------------------

def _channel_stats(x):
    N, H, W, Cp = x.shape
    return pl.pallas_call(
        _stats_kernel,
        out_shape=jax.ShapeDtypeStruct((N, 2, Cp), jnp.float32),
        grid=(N,),
        in_specs=[pl.BlockSpec((1, H, W, Cp), lambda b: (b, 0, 0, 0))],
        out_specs=pl.BlockSpec((1, 2, Cp), lambda b: (b, 0, 0)),
        compiler_params=pltpu.CompilerParams(
            dimension_semantics=("parallel",),
            vmem_limit_bytes=_vmem_limit_bytes()),
    )(x)


def _bn_relu_conv(scale, shift, w, x):
    N, H, W, Cp = x.shape
    WP = _round_up(W + 2, 8)
    return pl.pallas_call(
        functools.partial(_bn_relu_conv_kernel, H, W, WP),
        out_shape=(jax.ShapeDtypeStruct((N, H, W, Cp), jnp.bfloat16),
                   jax.ShapeDtypeStruct((N, 2, Cp), jnp.float32)),
        grid=(N,),
        in_specs=[
            pl.BlockSpec((1, Cp), lambda b: (0, 0)),
            pl.BlockSpec((1, Cp), lambda b: (0, 0)),
            pl.BlockSpec((9, Cp, Cp), lambda b: (0, 0, 0)),
            pl.BlockSpec((1, H, W, Cp), lambda b: (b, 0, 0, 0)),
        ],
        out_specs=(pl.BlockSpec((1, H, W, Cp), lambda b: (b, 0, 0, 0)),
                   pl.BlockSpec((1, 2, Cp), lambda b: (b, 0, 0))),
        scratch_shapes=[pltpu.VMEM(((H + 3) * WP, Cp), jnp.bfloat16)],
        compiler_params=pltpu.CompilerParams(
            dimension_semantics=("parallel",),
            vmem_limit_bytes=_vmem_limit_bytes()),
    )(scale, shift, w, x)


def _bn_relu_conv_residual(scale, shift, w, bias, h, skip):
    N, H, W, Cp = h.shape
    WP = _round_up(W + 2, 8)
    return pl.pallas_call(
        functools.partial(_bn_relu_conv_res_kernel, H, W, WP),
        out_shape=jax.ShapeDtypeStruct((N, H, W, Cp), jnp.float32),
        grid=(N,),
        in_specs=[
            pl.BlockSpec((1, Cp), lambda b: (0, 0)),
            pl.BlockSpec((1, Cp), lambda b: (0, 0)),
            pl.BlockSpec((9, Cp, Cp), lambda b: (0, 0, 0)),
            pl.BlockSpec((1, Cp), lambda b: (0, 0)),
            pl.BlockSpec((1, H, W, Cp), lambda b: (b, 0, 0, 0)),
            pl.BlockSpec((1, H, W, Cp), lambda b: (b, 0, 0, 0)),
        ],
        out_specs=pl.BlockSpec((1, H, W, Cp), lambda b: (b, 0, 0, 0)),
        scratch_shapes=[pltpu.VMEM(((H + 3) * WP, Cp), jnp.bfloat16)],
        compiler_params=pltpu.CompilerParams(
            dimension_semantics=("parallel",),
            vmem_limit_bytes=_vmem_limit_bytes()),
    )(scale, shift, w, bias, h, skip)


# ------------------------------ glue ------------------------------

def _fold_bn(partials, gamma, beta, count):
    """Reduce per-batch (sum, sumsq) partials and fold batch stats + affine into
    fused per-channel scale/shift (O(C) glue; one-pass variance, f32)."""
    stats = jnp.sum(partials, axis=0)                  # (2, Cp)
    mean = stats[0] / count
    var = stats[1] / count - mean * mean
    scale = gamma * lax.rsqrt(var + BN_EPS)
    shift = beta - mean * scale
    return scale.reshape(1, -1), shift.reshape(1, -1)


def residual_block_pallas(x_nchw, params):
    """x_nchw: (N, C, H, W) float32.  Returns (N, C, H, W) float32."""
    N, C, H, W = x_nchw.shape
    assert params["conv1_w"].shape[:2] == (C, C) and params["conv2_w"].shape[:2] == (C, C), \
        "residual add requires in_channels == out_channels"
    Cp = _round_up(C, LANE)                            # lane-dense channel padding

    x = jnp.transpose(x_nchw, (0, 2, 3, 1)).astype(jnp.float32)   # NHWC
    x = jnp.pad(x, ((0, 0), (0, 0), (0, 0), (0, Cp - C)))

    def pad_c(v):
        return jnp.pad(v.astype(jnp.float32), (0, Cp - C))

    def pad_w(w_oihw):
        # effective (weight-normed) OIHW -> (kh, kw, Cin, Cout) -> (9, Cp, Cp) bf16
        w = jnp.transpose(w_oihw, (2, 3, 1, 0)).astype(jnp.float32)
        w = jnp.pad(w, ((0, 0), (0, 0), (0, Cp - C), (0, Cp - C)))
        return w.reshape(9, Cp, Cp).astype(jnp.bfloat16)

    g1, b1 = pad_c(params["bn1_gamma"]), pad_c(params["bn1_beta"])
    g2, b2 = pad_c(params["bn2_gamma"]), pad_c(params["bn2_beta"])
    bias2 = pad_c(params["conv2_bias"]).reshape(1, Cp)
    w1, w2 = pad_w(params["conv1_w"]), pad_w(params["conv2_w"])

    count = N * H * W

    # stage 1: BN1 stats -> fused scale/shift -> BN1+ReLU+conv1 (emits BN2 partial stats)
    stats1 = _channel_stats(x)
    scale1, shift1 = _fold_bn(stats1, g1, b1, count)
    h, stats2 = _bn_relu_conv(scale1, shift1, w1, x)

    # stage 2: fold BN2 stats -> BN2+ReLU+conv2(+bias) + residual
    scale2, shift2 = _fold_bn(stats2, g2, b2, count)
    out = _bn_relu_conv_residual(scale2, shift2, w2, bias2, h, x)

    return jnp.transpose(out[..., :C], (0, 3, 1, 2))


# ------------------------- parameter construction -------------------------

def make_params(key, in_channels, out_channels):
    ks = jax.random.split(key, 8)

    def wn_weight(kv, kg, cout, cin):
        v = 0.1 * jax.random.normal(kv, (cout, cin, 3, 3), jnp.float32)
        g = 1.0 + 0.1 * jax.random.normal(kg, (cout,), jnp.float32)
        norm = jnp.sqrt(jnp.sum(v * v, axis=(1, 2, 3), keepdims=True))
        return g[:, None, None, None] * v / norm  # effective OIHW weight

    return {
        "bn1_gamma": 1.0 + 0.1 * jax.random.normal(ks[0], (in_channels,), jnp.float32),
        "bn1_beta": 0.1 * jax.random.normal(ks[1], (in_channels,), jnp.float32),
        "conv1_w": wn_weight(ks[2], ks[3], out_channels, in_channels),
        "bn2_gamma": 1.0 + 0.1 * jax.random.normal(ks[4], (out_channels,), jnp.float32),
        "bn2_beta": 0.1 * jax.random.normal(ks[5], (out_channels,), jnp.float32),
        "conv2_w": wn_weight(ks[6], ks[7], out_channels, out_channels),
        "conv2_bias": 0.05 * jnp.arange(out_channels, dtype=jnp.float32),
    }


# ------------------------- pure-JAX reference (NCHW) -------------------------

def residual_block_reference(x, params):
    def bn(h, g, b):
        mean = jnp.mean(h, axis=(0, 2, 3), keepdims=True)
        var = jnp.mean((h - mean) ** 2, axis=(0, 2, 3), keepdims=True)
        return (h - mean) / jnp.sqrt(var + BN_EPS) * g.reshape(1, -1, 1, 1) \
            + b.reshape(1, -1, 1, 1)

    conv = functools.partial(
        lax.conv_general_dilated, window_strides=(1, 1),
        padding=((1, 1), (1, 1)), dimension_numbers=("NCHW", "OIHW", "NCHW"))

    h = jax.nn.relu(bn(x, params["bn1_gamma"], params["bn1_beta"]))
    h = conv(h, params["conv1_w"])
    h = jax.nn.relu(bn(h, params["bn2_gamma"], params["bn2_beta"]))
    h = conv(h, params["conv2_w"]) + params["conv2_bias"].reshape(1, -1, 1, 1)
    return h + x


if __name__ == "__main__":
    N, C, H, W = 2, 4, 16, 16  # residual add requires in_channels == out_channels
    key = jax.random.PRNGKey(0)
    kx, kp = jax.random.split(key)
    x = jax.random.normal(kx, (N, C, H, W), jnp.float32)
    params = make_params(kp, C, C)

    out = jax.jit(residual_block_pallas)(x, params)
    out = jax.block_until_ready(out)

    ref = residual_block_reference(x, params)
    assert out.shape == ref.shape == (N, C, H, W)
    max_err = float(jnp.max(jnp.abs(out - ref)))
    # Tolerance reflects bf16 MXU operands (f32 accumulation) and bf16 storage of the
    # intermediate h; the f32 reference is exact.
    assert jnp.allclose(out, ref, atol=5e-2, rtol=5e-2), max_err

    print("KERNEL_OK")
</pallas_src>

<mosaic_0001>
module attributes {stable_mosaic.version = 11 : i64} {
  func.func @_stats_kernel(%arg0: i32, %arg1: memref<1x16x16x128xf32, #tpu.memory_space<vmem>>, %arg2: memref<1x2x128xf32, #tpu.memory_space<vmem>>) attributes {dimension_semantics = [#tpu.dimension_semantics<parallel>], iteration_bounds = array<i64: 2>, scalar_prefetch = 0 : i64, scratch_operands = 0 : i64, tpu.core_type = #tpu.core_type<tc>, window_params = [{transform_indices = @transform_0, window_bounds = array<i64: 1, 16, 16, 128>}, {transform_indices = @transform_1, window_bounds = array<i64: 1, 2, 128>}]} {
    %c0 = arith.constant 0 : index
    %c0_0 = arith.constant 0 : index
    %c0_1 = arith.constant 0 : index
    %c0_2 = arith.constant 0 : index
    %0 = vector.load %arg1[%c0, %c0_0, %c0_1, %c0_2] : memref<1x16x16x128xf32, #tpu.memory_space<vmem>>, vector<1x16x16x128xf32>
    %1 = vector.shape_cast %0 : vector<1x16x16x128xf32> to vector<16x16x128xf32>
    %2 = vector.shape_cast %1 : vector<16x16x128xf32> to vector<256x128xf32>
    %cst = arith.constant dense<0.000000e+00> : vector<128xf32>
    %3 = vector.multi_reduction <add>, %2, %cst [0] : vector<256x128xf32> to vector<128xf32>
    %4 = vector.shape_cast %3 : vector<128xf32> to vector<1x128xf32>
    %5 = arith.mulf %2, %2 : vector<256x128xf32>
    %cst_3 = arith.constant dense<0.000000e+00> : vector<128xf32>
    %6 = vector.multi_reduction <add>, %5, %cst_3 [0] : vector<256x128xf32> to vector<128xf32>
    %7 = vector.shape_cast %6 : vector<128xf32> to vector<1x128xf32>
    %8 = tpu.concatenate %4, %7 in 0 : vector<1x128xf32>, vector<1x128xf32> -> vector<2x128xf32>
    %c0_4 = arith.constant 0 : index
    %c0_5 = arith.constant 0 : index
    %c0_6 = arith.constant 0 : index
    %9 = vector.load %arg2[%c0_4, %c0_5, %c0_6] : memref<1x2x128xf32, #tpu.memory_space<vmem>>, vector<1x2x128xf32>
    %10 = vector.shape_cast %9 : vector<1x2x128xf32> to vector<2x128xf32>
    %11 = vector.shape_cast %8 : vector<2x128xf32> to vector<1x2x128xf32>
    tpu.vector_store %arg2[%c0_4, %c0_5, %c0_6], %11 {strides = array<i32>} : memref<1x2x128xf32, #tpu.memory_space<vmem>>, vector<1x2x128xf32>,
    return
  }
  func.func @transform_0(%arg0: i32) -> (i32, i32, i32, i32) {
    %c0_i32 = arith.constant 0 : i32
    %c0_i32_0 = arith.constant 0 : i32
    %c0_i32_1 = arith.constant 0 : i32
    %c0_i32_2 = arith.constant 0 : i32
    return %arg0, %c0_i32, %c0_i32_0, %c0_i32_1 : i32, i32, i32, i32
  }
  func.func @transform_1(%arg0: i32) -> (i32, i32, i32) {
    %c0_i32 = arith.constant 0 : i32
    %c0_i32_0 = arith.constant 0 : i32
    %c0_i32_1 = arith.constant 0 : i32
    return %arg0, %c0_i32, %c0_i32_0 : i32, i32, i32
  }
}

module attributes {stable_mosaic.version = 11 : i64} {
  func.func @_bn_relu_conv_kernel(%arg0: i32, %arg1: memref<1x128xf32, #tpu.memory_space<vmem>>, %arg2: memref<1x128xf32, #tpu.memory_space<vmem>>, %arg3: memref<9x128x128xbf16, #tpu.memory_space<vmem>>, %arg4: memref<1x16x16x128xf32, #tpu.memory_space<vmem>>, %arg5: memref<1x16x16x128xbf16, #tpu.memory_space<vmem>>, %arg6: memref<1x2x128xf32, #tpu.memory_space<vmem>>, %arg7: memref<456x128xbf16, #tpu.memory_space<vmem>>) attributes {dimension_semantics = [#tpu.dimension_semantics<parallel>], iteration_bounds = array<i64: 2>, scalar_prefetch = 0 : i64, scratch_operands = 1 : i64, tpu.core_type = #tpu.core_type<tc>, window_params = [{pipeline_mode = #tpu.pipeline_mode<synchronous>, transform_indices = @transform_0, window_bounds = array<i64: 1, 128>}, {pipeline_mode = #tpu.pipeline_mode<synchronous>, transform_indices = @transform_1, window_bounds = array<i64: 1, 128>}, {pipeline_mode = #tpu.pipeline_mode<synchronous>, transform_indices = @transform_2, window_bounds = array<i64: 9, 128, 128>}, {transform_indices = @transform_3, window_bounds = array<i64: 1, 16, 16, 128>}, {transform_indices = @transform_4, window_bounds = array<i64: 1, 16, 16, 128>}, {transform_indices = @transform_5, window_bounds = array<i64: 1, 2, 128>}]} {
    %c0 = arith.constant 0 : index
    %c0_0 = arith.constant 0 : index
    %c0_1 = arith.constant 0 : index
    %c0_2 = arith.constant 0 : index
    %0 = vector.load %arg4[%c0, %c0_0, %c0_1, %c0_2] : memref<1x16x16x128xf32, #tpu.memory_space<vmem>>, vector<1x16x16x128xf32>
    %1 = vector.shape_cast %0 : vector<1x16x16x128xf32> to vector<16x16x128xf32>
    %c0_3 = arith.constant 0 : index
    %c0_4 = arith.constant 0 : index
    %2 = vector.load %arg1[%c0_3, %c0_4] : memref<1x128xf32, #tpu.memory_space<vmem>>, vector<1x128xf32>
    %3 = vector.shape_cast %2 : vector<1x128xf32> to vector<1x1x128xf32>
    %4 = vector.broadcast %3 : vector<1x1x128xf32> to vector<16x16x128xf32>
    %5 = arith.mulf %1, %4 : vector<16x16x128xf32>
    %c0_5 = arith.constant 0 : index
    %c0_6 = arith.constant 0 : index
    %6 = vector.load %arg2[%c0_5, %c0_6] : memref<1x128xf32, #tpu.memory_space<vmem>>, vector<1x128xf32>
    %7 = vector.shape_cast %6 : vector<1x128xf32> to vector<1x1x128xf32>
    %8 = vector.broadcast %7 : vector<1x1x128xf32> to vector<16x16x128xf32>
    %9 = arith.addf %5, %8 : vector<16x16x128xf32>
    %cst = arith.constant 0.000000e+00 : f32
    %10 = vector.broadcast %cst : f32 to vector<16x16x128xf32>
    %11 = arith.maximumf %9, %10 : vector<16x16x128xf32>
    %cst_7 = arith.constant 0.000000e+00 : bf16
    %12 = vector.broadcast %cst_7 : bf16 to vector<24x128xbf16>
    %c0_8 = arith.constant 0 : index
    %c0_9 = arith.constant 0 : index
    %13 = vector.load %arg7[%c0_8, %c0_9] : memref<456x128xbf16, #tpu.memory_space<vmem>>, vector<24x128xbf16>
    tpu.vector_store %arg7[%c0_8, %c0_9], %12 {strides = array<i32>} : memref<456x128xbf16, #tpu.memory_space<vmem>>, vector<24x128xbf16>,
    %cst_10 = arith.constant 0.000000e+00 : bf16
    %14 = vector.broadcast %cst_10 : bf16 to vector<48x128xbf16>
    %c408 = arith.constant 408 : index
    %c0_11 = arith.constant 0 : index
    %15 = vector.load %arg7[%c408, %c0_11] : memref<456x128xbf16, #tpu.memory_space<vmem>>, vector<48x128xbf16>
    tpu.vector_store %arg7[%c408, %c0_11], %14 {strides = array<i32>} : memref<456x128xbf16, #tpu.memory_space<vmem>>, vector<48x128xbf16>,
    %16 = arith.truncf %11 : vector<16x16x128xf32> to vector<16x16x128xbf16>
    %cst_12 = arith.constant 0.000000e+00 : bf16
    %17 = vector.broadcast %cst_12 : bf16 to vector<16x1x128xbf16>
    %cst_13 = arith.constant 0.000000e+00 : bf16
    %18 = vector.broadcast %cst_13 : bf16 to vector<16x7x128xbf16>
    %19 = tpu.concatenate %17, %16, %18 in 1 : vector<16x1x128xbf16>, vector<16x16x128xbf16>, vector<16x7x128xbf16> -> vector<16x24x128xbf16>
    %20 = vector.shape_cast %19 : vector<16x24x128xbf16> to vector<384x128xbf16>
    %c24 = arith.constant 24 : index
    %c0_14 = arith.constant 0 : index
    %21 = vector.load %arg7[%c24, %c0_14] : memref<456x128xbf16, #tpu.memory_space<vmem>>, vector<384x128xbf16>
    tpu.vector_store %arg7[%c24, %c0_14], %20 {strides = array<i32>} : memref<456x128xbf16, #tpu.memory_space<vmem>>, vector<384x128xbf16>,
    %cst_15 = arith.constant 0.000000e+00 : f32
    %22 = vector.broadcast %cst_15 : f32 to vector<384x128xf32>
    %c0_16 = arith.constant 0 : index
    %c0_17 = arith.constant 0 : index
    %23 = vector.load %arg7[%c0_16, %c0_17] : memref<456x128xbf16, #tpu.memory_space<vmem>>, vector<384x128xbf16>
    %c0_18 = arith.constant 0 : index
    %c0_19 = arith.constant 0 : index
    %c0_20 = arith.constant 0 : index
    %24 = vector.load %arg3[%c0_18, %c0_19, %c0_20] : memref<9x128x128xbf16, #tpu.memory_space<vmem>>, vector<1x128x128xbf16>
    %25 = vector.shape_cast %24 : vector<1x128x128xbf16> to vector<128x128xbf16>
    %cst_21 = arith.constant dense<0.000000e+00> : vector<384x128xf32>
    %26 = tpu.matmul %23, %25, %cst_21 {dimension_numbers = #tpu.dot_dimension_numbers<[1], [0], [0], [1], [0, 0, 1, 1], [], []>} : vector<384x128xbf16>, vector<128x128xbf16>, vector<384x128xf32> -> vector<384x128xf32>
    %27 = arith.addf %22, %26 : vector<384x128xf32>
    %c1 = arith.constant 1 : index
    %c0_22 = arith.constant 0 : index
    %28 = vector.load %arg7[%c1, %c0_22] : memref<456x128xbf16, #tpu.memory_space<vmem>>, vector<384x128xbf16>
    %c1_23 = arith.constant 1 : index
    %c0_24 = arith.constant 0 : index
    %c0_25 = arith.constant 0 : index
    %29 = vector.load %arg3[%c1_23, %c0_24, %c0_25] : memref<9x128x128xbf16, #tpu.memory_space<vmem>>, vector<1x128x128xbf16>
    %30 = vector.shape_cast %29 : vector<1x128x128xbf16> to vector<128x128xbf16>
    %cst_26 = arith.constant dense<0.000000e+00> : vector<384x128xf32>
    %31 = tpu.matmul %28, %30, %cst_26 {dimension_numbers = #tpu.dot_dimension_numbers<[1], [0], [0], [1], [0, 0, 1, 1], [], []>} : vector<384x128xbf16>, vector<128x128xbf16>, vector<384x128xf32> -> vector<384x128xf32>
    %32 = arith.addf %27, %31 : vector<384x128xf32>
    %c2 = arith.constant 2 : index
    %c0_27 = arith.constant 0 : index
    %33 = vector.load %arg7[%c2, %c0_27] : memref<456x128xbf16, #tpu.memory_space<vmem>>, vector<384x128xbf16>
    %c2_28 = arith.constant 2 : index
    %c0_29 = arith.constant 0 : index
    %c0_30 = arith.constant 0 : index
    %34 = vector.load %arg3[%c2_28, %c0_29, %c0_30] : memref<9x128x128xbf16, #tpu.memory_space<vmem>>, vector<1x128x128xbf16>
    %35 = vector.shape_cast %34 : vector<1x128x128xbf16> to vector<128x128xbf16>
    %cst_31 = arith.constant dense<0.000000e+00> : vector<384x128xf32>
    %36 = tpu.matmul %33, %35, %cst_31 {dimension_numbers = #tpu.dot_dimension_numbers<[1], [0], [0], [1], [0, 0, 1, 1], [], []>} : vector<384x128xbf16>, vector<128x128xbf16>, vector<384x128xf32> -> vector<384x128xf32>
    %37 = arith.addf %32, %36 : vector<384x128xf32>
    %c24_32 = arith.constant 24 : index
    %c0_33 = arith.constant 0 : index
    %38 = vector.load %arg7[%c24_32, %c0_33] : memref<456x128xbf16, #tpu.memory_space<vmem>>, vector<384x128xbf16>
    %c3 = arith.constant 3 : index
    %c0_34 = arith.constant 0 : index
    %c0_35 = arith.constant 0 : index
    %39 = vector.load %arg3[%c3, %c0_34, %c0_35] : memref<9x128x128xbf16, #tpu.memory_space<vmem>>, vector<1x128x128xbf16>
    %40 = vector.shape_cast %39 : vector<1x128x128xbf16> to vector<128x128xbf16>
    %cst_36 = arith.constant dense<0.000000e+00> : vector<384x128xf32>
    %41 = tpu.matmul %38, %40, %cst_36 {dimension_numbers = #tpu.dot_dimension_numbers<[1], [0], [0], [1], [0, 0, 1, 1], [], []>} : vector<384x128xbf16>, vector<128x128xbf16>, vector<384x128xf32> -> vector<384x128xf32>
    %42 = arith.addf %37, %41 : vector<384x128xf32>
    %c25 = arith.constant 25 : index
    %c0_37 = arith.constant 0 : index
    %43 = vector.load %arg7[%c25, %c0_37] : memref<456x128xbf16, #tpu.memory_space<vmem>>, vector<384x128xbf16>
    %c4 = arith.constant 4 : index
    %c0_38 = arith.constant 0 : index
    %c0_39 = arith.constant 0 : index
    %44 = vector.load %arg3[%c4, %c0_38, %c0_39] : memref<9x128x128xbf16, #tpu.memory_space<vmem>>, vector<1x128x128xbf16>
    %45 = vector.shape_cast %44 : vector<1x128x128xbf16> to vector<128x128xbf16>
    %cst_40 = arith.constant dense<0.000000e+00> : vector<384x128xf32>
    %46 = tpu.matmul %43, %45, %cst_40 {dimension_numbers = #tpu.dot_dimension_numbers<[1], [0], [0], [1], [0, 0, 1, 1], [], []>} : vector<384x128xbf16>, vector<128x128xbf16>, vector<384x128xf32> -> vector<384x128xf32>
    %47 = arith.addf %42, %46 : vector<384x128xf32>
    %c26 = arith.constant 26 : index
    %c0_41 = arith.constant 0 : index
    %48 = vector.load %arg7[%c26, %c0_41] : memref<456x128xbf16, #tpu.memory_space<vmem>>, vector<384x128xbf16>
    %c5 = arith.constant 5 : index
    %c0_42 = arith.constant 0 : index
    %c0_43 = arith.constant 0 : index
    %49 = vector.load %arg3[%c5, %c0_42, %c0_43] : memref<9x128x128xbf16, #tpu.memory_space<vmem>>, vector<1x128x128xbf16>
    %50 = vector.shape_cast %49 : vector<1x128x128xbf16> to vector<128x128xbf16>
    %cst_44 = arith.constant dense<0.000000e+00> : vector<384x128xf32>
    %51 = tpu.matmul %48, %50, %cst_44 {dimension_numbers = #tpu.dot_dimension_numbers<[1], [0], [0], [1], [0, 0, 1, 1], [], []>} : vector<384x128xbf16>, vector<128x128xbf16>, vector<384x128xf32> -> vector<384x128xf32>
    %52 = arith.addf %47, %51 : vector<384x128xf32>
    %c48 = arith.constant 48 : index
    %c0_45 = arith.constant 0 : index
    %53 = vector.load %arg7[%c48, %c0_45] : memref<456x128xbf16, #tpu.memory_space<vmem>>, vector<384x128xbf16>
    %c6 = arith.constant 6 : index
    %c0_46 = arith.constant 0 : index
    %c0_47 = arith.constant 0 : index
    %54 = vector.load %arg3[%c6, %c0_46, %c0_47] : memref<9x128x128xbf16, #tpu.memory_space<vmem>>, vector<1x128x128xbf16>
    %55 = vector.shape_cast %54 : vector<1x128x128xbf16> to vector<128x128xbf16>
    %cst_48 = arith.constant dense<0.000000e+00> : vector<384x128xf32>
    %56 = tpu.matmul %53, %55, %cst_48 {dimension_numbers = #tpu.dot_dimension_numbers<[1], [0], [0], [1], [0, 0, 1, 1], [], []>} : vector<384x128xbf16>, vector<128x128xbf16>, vector<384x128xf32> -> vector<384x128xf32>
    %57 = arith.addf %52, %56 : vector<384x128xf32>
    %c49 = arith.constant 49 : index
    %c0_49 = arith.constant 0 : index
    %58 = vector.load %arg7[%c49, %c0_49] : memref<456x128xbf16, #tpu.memory_space<vmem>>, vector<384x128xbf16>
    %c7 = arith.constant 7 : index
    %c0_50 = arith.constant 0 : index
    %c0_51 = arith.constant 0 : index
    %59 = vector.load %arg3[%c7, %c0_50, %c0_51] : memref<9x128x128xbf16, #tpu.memory_space<vmem>>, vector<1x128x128xbf16>
    %60 = vector.shape_cast %59 : vector<1x128x128xbf16> to vector<128x128xbf16>
    %cst_52 = arith.constant dense<0.000000e+00> : vector<384x128xf32>
    %61 = tpu.matmul %58, %60, %cst_52 {dimension_numbers = #tpu.dot_dimension_numbers<[1], [0], [0], [1], [0, 0, 1, 1], [], []>} : vector<384x128xbf16>, vector<128x128xbf16>, vector<384x128xf32> -> vector<384x128xf32>
    %62 = arith.addf %57, %61 : vector<384x128xf32>
    %c50 = arith.constant 50 : index
    %c0_53 = arith.constant 0 : index
    %63 = vector.load %arg7[%c50, %c0_53] : memref<456x128xbf16, #tpu.memory_space<vmem>>, vector<384x128xbf16>
    %c8 = arith.constant 8 : index
    %c0_54 = arith.constant 0 : index
    %c0_55 = arith.constant 0 : index
    %64 = vector.load %arg3[%c8, %c0_54, %c0_55] : memref<9x128x128xbf16, #tpu.memory_space<vmem>>, vector<1x128x128xbf16>
    %65 = vector.shape_cast %64 : vector<1x128x128xbf16> to vector<128x128xbf16>
    %cst_56 = arith.constant dense<0.000000e+00> : vector<384x128xf32>
    %66 = tpu.matmul %63, %65, %cst_56 {dimension_numbers = #tpu.dot_dimension_numbers<[1], [0], [0], [1], [0, 0, 1, 1], [], []>} : vector<384x128xbf16>, vector<128x128xbf16>, vector<384x128xf32> -> vector<384x128xf32>
    %67 = arith.addf %62, %66 : vector<384x128xf32>
    %68 = vector.shape_cast %67 : vector<384x128xf32> to vector<16x24x128xf32>
    %69 = vector.extract_strided_slice %68 {offsets = [0, 0, 0], sizes = [16, 16, 128], strides = [1, 1, 1]} : vector<16x24x128xf32> to vector<16x16x128xf32>
    %70 = arith.truncf %69 : vector<16x16x128xf32> to vector<16x16x128xbf16>
    %c0_57 = arith.constant 0 : index
    %c0_58 = arith.constant 0 : index
    %c0_59 = arith.constant 0 : index
    %c0_60 = arith.constant 0 : index
    %71 = vector.load %arg5[%c0_57, %c0_58, %c0_59, %c0_60] : memref<1x16x16x128xbf16, #tpu.memory_space<vmem>>, vector<1x16x16x128xbf16>
    %72 = vector.shape_cast %71 : vector<1x16x16x128xbf16> to vector<16x16x128xbf16>
    %73 = vector.shape_cast %70 : vector<16x16x128xbf16> to vector<1x16x16x128xbf16>
    tpu.vector_store %arg5[%c0_57, %c0_58, %c0_59, %c0_60], %73 {strides = array<i32>} : memref<1x16x16x128xbf16, #tpu.memory_space<vmem>>, vector<1x16x16x128xbf16>,
    %cst_61 = arith.constant dense<0.000000e+00> : vector<128xf32>
    %74 = vector.multi_reduction <add>, %69, %cst_61 [0, 1] : vector<16x16x128xf32> to vector<128xf32>
    %75 = vector.shape_cast %74 : vector<128xf32> to vector<1x128xf32>
    %76 = arith.mulf %69, %69 : vector<16x16x128xf32>
    %cst_62 = arith.constant dense<0.000000e+00> : vector<128xf32>
    %77 = vector.multi_reduction <add>, %76, %cst_62 [0, 1] : vector<16x16x128xf32> to vector<128xf32>
    %78 = vector.shape_cast %77 : vector<128xf32> to vector<1x128xf32>
    %79 = tpu.concatenate %75, %78 in 0 : vector<1x128xf32>, vector<1x128xf32> -> vector<2x128xf32>
    %c0_63 = arith.constant 0 : index
    %c0_64 = arith.constant 0 : index
    %c0_65 = arith.constant 0 : index
    %80 = vector.load %arg6[%c0_63, %c0_64, %c0_65] : memref<1x2x128xf32, #tpu.memory_space<vmem>>, vector<1x2x128xf32>
    %81 = vector.shape_cast %80 : vector<1x2x128xf32> to vector<2x128xf32>
    %82 = vector.shape_cast %79 : vector<2x128xf32> to vector<1x2x128xf32>
    tpu.vector_store %arg6[%c0_63, %c0_64, %c0_65], %82 {strides = array<i32>} : memref<1x2x128xf32, #tpu.memory_space<vmem>>, vector<1x2x128xf32>,
    return
  }
  func.func @transform_0(%arg0: i32) -> (i32, i32) {
    %c0_i32 = arith.constant 0 : i32
    %c0_i32_0 = arith.constant 0 : i32
    %c0_i32_1 = arith.constant 0 : i32
    return %c0_i32, %c0_i32_0 : i32, i32
  }
  func.func @transform_1(%arg0: i32) -> (i32, i32) {
    %c0_i32 = arith.constant 0 : i32
    %c0_i32_0 = arith.constant 0 : i32
    %c0_i32_1 = arith.constant 0 : i32
    return %c0_i32, %c0_i32_0 : i32, i32
  }
  func.func @transform_2(%arg0: i32) -> (i32, i32, i32) {
    %c0_i32 = arith.constant 0 : i32
    %c0_i32_0 = arith.constant 0 : i32
    %c0_i32_1 = arith.constant 0 : i32
    %c0_i32_2 = arith.constant 0 : i32
    return %c0_i32, %c0_i32_0, %c0_i32_1 : i32, i32, i32
  }
  func.func @transform_3(%arg0: i32) -> (i32, i32, i32, i32) {
    %c0_i32 = arith.constant 0 : i32
    %c0_i32_0 = arith.constant 0 : i32
    %c0_i32_1 = arith.constant 0 : i32
    %c0_i32_2 = arith.constant 0 : i32
    return %arg0, %c0_i32, %c0_i32_0, %c0_i32_1 : i32, i32, i32, i32
  }
  func.func @transform_4(%arg0: i32) -> (i32, i32, i32, i32) {
    %c0_i32 = arith.constant 0 : i32
    %c0_i32_0 = arith.constant 0 : i32
    %c0_i32_1 = arith.constant 0 : i32
    %c0_i32_2 = arith.constant 0 : i32
    return %arg0, %c0_i32, %c0_i32_0, %c0_i32_1 : i32, i32, i32, i32
  }
  func.func @transform_5(%arg0: i32) -> (i32, i32, i32) {
    %c0_i32 = arith.constant 0 : i32
    %c0_i32_0 = arith.constant 0 : i32
    %c0_i32_1 = arith.constant 0 : i32
    return %arg0, %c0_i32, %c0_i32_0 : i32, i32, i32
  }
}

module attributes {stable_mosaic.version = 11 : i64} {
  func.func @_bn_relu_conv_res_kernel(%arg0: i32, %arg1: memref<1x128xf32, #tpu.memory_space<vmem>>, %arg2: memref<1x128xf32, #tpu.memory_space<vmem>>, %arg3: memref<9x128x128xbf16, #tpu.memory_space<vmem>>, %arg4: memref<1x128xf32, #tpu.memory_space<vmem>>, %arg5: memref<1x16x16x128xbf16, #tpu.memory_space<vmem>>, %arg6: memref<1x16x16x128xf32, #tpu.memory_space<vmem>>, %arg7: memref<1x16x16x128xf32, #tpu.memory_space<vmem>>, %arg8: memref<456x128xbf16, #tpu.memory_space<vmem>>) attributes {dimension_semantics = [#tpu.dimension_semantics<parallel>], iteration_bounds = array<i64: 2>, scalar_prefetch = 0 : i64, scratch_operands = 1 : i64, tpu.core_type = #tpu.core_type<tc>, window_params = [{pipeline_mode = #tpu.pipeline_mode<synchronous>, transform_indices = @transform_0, window_bounds = array<i64: 1, 128>}, {pipeline_mode = #tpu.pipeline_mode<synchronous>, transform_indices = @transform_1, window_bounds = array<i64: 1, 128>}, {pipeline_mode = #tpu.pipeline_mode<synchronous>, transform_indices = @transform_2, window_bounds = array<i64: 9, 128, 128>}, {pipeline_mode = #tpu.pipeline_mode<synchronous>, transform_indices = @transform_3, window_bounds = array<i64: 1, 128>}, {transform_indices = @transform_4, window_bounds = array<i64: 1, 16, 16, 128>}, {transform_indices = @transform_5, window_bounds = array<i64: 1, 16, 16, 128>}, {transform_indices = @transform_6, window_bounds = array<i64: 1, 16, 16, 128>}]} {
    %c0 = arith.constant 0 : index
    %c0_0 = arith.constant 0 : index
    %c0_1 = arith.constant 0 : index
    %c0_2 = arith.constant 0 : index
    %0 = vector.load %arg5[%c0, %c0_0, %c0_1, %c0_2] : memref<1x16x16x128xbf16, #tpu.memory_space<vmem>>, vector<1x16x16x128xbf16>
    %1 = vector.shape_cast %0 : vector<1x16x16x128xbf16> to vector<16x16x128xbf16>
    %2 = arith.extf %1 : vector<16x16x128xbf16> to vector<16x16x128xf32>
    %c0_3 = arith.constant 0 : index
    %c0_4 = arith.constant 0 : index
    %3 = vector.load %arg1[%c0_3, %c0_4] : memref<1x128xf32, #tpu.memory_space<vmem>>, vector<1x128xf32>
    %4 = vector.shape_cast %3 : vector<1x128xf32> to vector<1x1x128xf32>
    %5 = vector.broadcast %4 : vector<1x1x128xf32> to vector<16x16x128xf32>
    %6 = arith.mulf %2, %5 : vector<16x16x128xf32>
    %c0_5 = arith.constant 0 : index
    %c0_6 = arith.constant 0 : index
    %7 = vector.load %arg2[%c0_5, %c0_6] : memref<1x128xf32, #tpu.memory_space<vmem>>, vector<1x128xf32>
    %8 = vector.shape_cast %7 : vector<1x128xf32> to vector<1x1x128xf32>
    %9 = vector.broadcast %8 : vector<1x1x128xf32> to vector<16x16x128xf32>
    %10 = arith.addf %6, %9 : vector<16x16x128xf32>
    %cst = arith.constant 0.000000e+00 : f32
    %11 = vector.broadcast %cst : f32 to vector<16x16x128xf32>
    %12 = arith.maximumf %10, %11 : vector<16x16x128xf32>
    %cst_7 = arith.constant 0.000000e+00 : bf16
    %13 = vector.broadcast %cst_7 : bf16 to vector<24x128xbf16>
    %c0_8 = arith.constant 0 : index
    %c0_9 = arith.constant 0 : index
    %14 = vector.load %arg8[%c0_8, %c0_9] : memref<456x128xbf16, #tpu.memory_space<vmem>>, vector<24x128xbf16>
    tpu.vector_store %arg8[%c0_8, %c0_9], %13 {strides = array<i32>} : memref<456x128xbf16, #tpu.memory_space<vmem>>, vector<24x128xbf16>,
    %cst_10 = arith.constant 0.000000e+00 : bf16
    %15 = vector.broadcast %cst_10 : bf16 to vector<48x128xbf16>
    %c408 = arith.constant 408 : index
    %c0_11 = arith.constant 0 : index
    %16 = vector.load %arg8[%c408, %c0_11] : memref<456x128xbf16, #tpu.memory_space<vmem>>, vector<48x128xbf16>
    tpu.vector_store %arg8[%c408, %c0_11], %15 {strides = array<i32>} : memref<456x128xbf16, #tpu.memory_space<vmem>>, vector<48x128xbf16>,
    %17 = arith.truncf %12 : vector<16x16x128xf32> to vector<16x16x128xbf16>
    %cst_12 = arith.constant 0.000000e+00 : bf16
    %18 = vector.broadcast %cst_12 : bf16 to vector<16x1x128xbf16>
    %cst_13 = arith.constant 0.000000e+00 : bf16
    %19 = vector.broadcast %cst_13 : bf16 to vector<16x7x128xbf16>
    %20 = tpu.concatenate %18, %17, %19 in 1 : vector<16x1x128xbf16>, vector<16x16x128xbf16>, vector<16x7x128xbf16> -> vector<16x24x128xbf16>
    %21 = vector.shape_cast %20 : vector<16x24x128xbf16> to vector<384x128xbf16>
    %c24 = arith.constant 24 : index
    %c0_14 = arith.constant 0 : index
    %22 = vector.load %arg8[%c24, %c0_14] : memref<456x128xbf16, #tpu.memory_space<vmem>>, vector<384x128xbf16>
    tpu.vector_store %arg8[%c24, %c0_14], %21 {strides = array<i32>} : memref<456x128xbf16, #tpu.memory_space<vmem>>, vector<384x128xbf16>,
    %cst_15 = arith.constant 0.000000e+00 : f32
    %23 = vector.broadcast %cst_15 : f32 to vector<384x128xf32>
    %c0_16 = arith.constant 0 : index
    %c0_17 = arith.constant 0 : index
    %24 = vector.load %arg8[%c0_16, %c0_17] : memref<456x128xbf16, #tpu.memory_space<vmem>>, vector<384x128xbf16>
    %c0_18 = arith.constant 0 : index
    %c0_19 = arith.constant 0 : index
    %c0_20 = arith.constant 0 : index
    %25 = vector.load %arg3[%c0_18, %c0_19, %c0_20] : memref<9x128x128xbf16, #tpu.memory_space<vmem>>, vector<1x128x128xbf16>
    %26 = vector.shape_cast %25 : vector<1x128x128xbf16> to vector<128x128xbf16>
    %cst_21 = arith.constant dense<0.000000e+00> : vector<384x128xf32>
    %27 = tpu.matmul %24, %26, %cst_21 {dimension_numbers = #tpu.dot_dimension_numbers<[1], [0], [0], [1], [0, 0, 1, 1], [], []>} : vector<384x128xbf16>, vector<128x128xbf16>, vector<384x128xf32> -> vector<384x128xf32>
    %28 = arith.addf %23, %27 : vector<384x128xf32>
    %c1 = arith.constant 1 : index
    %c0_22 = arith.constant 0 : index
    %29 = vector.load %arg8[%c1, %c0_22] : memref<456x128xbf16, #tpu.memory_space<vmem>>, vector<384x128xbf16>
    %c1_23 = arith.constant 1 : index
    %c0_24 = arith.constant 0 : index
    %c0_25 = arith.constant 0 : index
    %30 = vector.load %arg3[%c1_23, %c0_24, %c0_25] : memref<9x128x128xbf16, #tpu.memory_space<vmem>>, vector<1x128x128xbf16>
    %31 = vector.shape_cast %30 : vector<1x128x128xbf16> to vector<128x128xbf16>
    %cst_26 = arith.constant dense<0.000000e+00> : vector<384x128xf32>
    %32 = tpu.matmul %29, %31, %cst_26 {dimension_numbers = #tpu.dot_dimension_numbers<[1], [0], [0], [1], [0, 0, 1, 1], [], []>} : vector<384x128xbf16>, vector<128x128xbf16>, vector<384x128xf32> -> vector<384x128xf32>
    %33 = arith.addf %28, %32 : vector<384x128xf32>
    %c2 = arith.constant 2 : index
    %c0_27 = arith.constant 0 : index
    %34 = vector.load %arg8[%c2, %c0_27] : memref<456x128xbf16, #tpu.memory_space<vmem>>, vector<384x128xbf16>
    %c2_28 = arith.constant 2 : index
    %c0_29 = arith.constant 0 : index
    %c0_30 = arith.constant 0 : index
    %35 = vector.load %arg3[%c2_28, %c0_29, %c0_30] : memref<9x128x128xbf16, #tpu.memory_space<vmem>>, vector<1x128x128xbf16>
    %36 = vector.shape_cast %35 : vector<1x128x128xbf16> to vector<128x128xbf16>
    %cst_31 = arith.constant dense<0.000000e+00> : vector<384x128xf32>
    %37 = tpu.matmul %34, %36, %cst_31 {dimension_numbers = #tpu.dot_dimension_numbers<[1], [0], [0], [1], [0, 0, 1, 1], [], []>} : vector<384x128xbf16>, vector<128x128xbf16>, vector<384x128xf32> -> vector<384x128xf32>
    %38 = arith.addf %33, %37 : vector<384x128xf32>
    %c24_32 = arith.constant 24 : index
    %c0_33 = arith.constant 0 : index
    %39 = vector.load %arg8[%c24_32, %c0_33] : memref<456x128xbf16, #tpu.memory_space<vmem>>, vector<384x128xbf16>
    %c3 = arith.constant 3 : index
    %c0_34 = arith.constant 0 : index
    %c0_35 = arith.constant 0 : index
    %40 = vector.load %arg3[%c3, %c0_34, %c0_35] : memref<9x128x128xbf16, #tpu.memory_space<vmem>>, vector<1x128x128xbf16>
    %41 = vector.shape_cast %40 : vector<1x128x128xbf16> to vector<128x128xbf16>
    %cst_36 = arith.constant dense<0.000000e+00> : vector<384x128xf32>
    %42 = tpu.matmul %39, %41, %cst_36 {dimension_numbers = #tpu.dot_dimension_numbers<[1], [0], [0], [1], [0, 0, 1, 1], [], []>} : vector<384x128xbf16>, vector<128x128xbf16>, vector<384x128xf32> -> vector<384x128xf32>
    %43 = arith.addf %38, %42 : vector<384x128xf32>
    %c25 = arith.constant 25 : index
    %c0_37 = arith.constant 0 : index
    %44 = vector.load %arg8[%c25, %c0_37] : memref<456x128xbf16, #tpu.memory_space<vmem>>, vector<384x128xbf16>
    %c4 = arith.constant 4 : index
    %c0_38 = arith.constant 0 : index
    %c0_39 = arith.constant 0 : index
    %45 = vector.load %arg3[%c4, %c0_38, %c0_39] : memref<9x128x128xbf16, #tpu.memory_space<vmem>>, vector<1x128x128xbf16>
    %46 = vector.shape_cast %45 : vector<1x128x128xbf16> to vector<128x128xbf16>
    %cst_40 = arith.constant dense<0.000000e+00> : vector<384x128xf32>
    %47 = tpu.matmul %44, %46, %cst_40 {dimension_numbers = #tpu.dot_dimension_numbers<[1], [0], [0], [1], [0, 0, 1, 1], [], []>} : vector<384x128xbf16>, vector<128x128xbf16>, vector<384x128xf32> -> vector<384x128xf32>
    %48 = arith.addf %43, %47 : vector<384x128xf32>
    %c26 = arith.constant 26 : index
    %c0_41 = arith.constant 0 : index
    %49 = vector.load %arg8[%c26, %c0_41] : memref<456x128xbf16, #tpu.memory_space<vmem>>, vector<384x128xbf16>
    %c5 = arith.constant 5 : index
    %c0_42 = arith.constant 0 : index
    %c0_43 = arith.constant 0 : index
    %50 = vector.load %arg3[%c5, %c0_42, %c0_43] : memref<9x128x128xbf16, #tpu.memory_space<vmem>>, vector<1x128x128xbf16>
    %51 = vector.shape_cast %50 : vector<1x128x128xbf16> to vector<128x128xbf16>
    %cst_44 = arith.constant dense<0.000000e+00> : vector<384x128xf32>
    %52 = tpu.matmul %49, %51, %cst_44 {dimension_numbers = #tpu.dot_dimension_numbers<[1], [0], [0], [1], [0, 0, 1, 1], [], []>} : vector<384x128xbf16>, vector<128x128xbf16>, vector<384x128xf32> -> vector<384x128xf32>
    %53 = arith.addf %48, %52 : vector<384x128xf32>
    %c48 = arith.constant 48 : index
    %c0_45 = arith.constant 0 : index
    %54 = vector.load %arg8[%c48, %c0_45] : memref<456x128xbf16, #tpu.memory_space<vmem>>, vector<384x128xbf16>
    %c6 = arith.constant 6 : index
    %c0_46 = arith.constant 0 : index
    %c0_47 = arith.constant 0 : index
    %55 = vector.load %arg3[%c6, %c0_46, %c0_47] : memref<9x128x128xbf16, #tpu.memory_space<vmem>>, vector<1x128x128xbf16>
    %56 = vector.shape_cast %55 : vector<1x128x128xbf16> to vector<128x128xbf16>
    %cst_48 = arith.constant dense<0.000000e+00> : vector<384x128xf32>
    %57 = tpu.matmul %54, %56, %cst_48 {dimension_numbers = #tpu.dot_dimension_numbers<[1], [0], [0], [1], [0, 0, 1, 1], [], []>} : vector<384x128xbf16>, vector<128x128xbf16>, vector<384x128xf32> -> vector<384x128xf32>
    %58 = arith.addf %53, %57 : vector<384x128xf32>
    %c49 = arith.constant 49 : index
    %c0_49 = arith.constant 0 : index
    %59 = vector.load %arg8[%c49, %c0_49] : memref<456x128xbf16, #tpu.memory_space<vmem>>, vector<384x128xbf16>
    %c7 = arith.constant 7 : index
    %c0_50 = arith.constant 0 : index
    %c0_51 = arith.constant 0 : index
    %60 = vector.load %arg3[%c7, %c0_50, %c0_51] : memref<9x128x128xbf16, #tpu.memory_space<vmem>>, vector<1x128x128xbf16>
    %61 = vector.shape_cast %60 : vector<1x128x128xbf16> to vector<128x128xbf16>
    %cst_52 = arith.constant dense<0.000000e+00> : vector<384x128xf32>
    %62 = tpu.matmul %59, %61, %cst_52 {dimension_numbers = #tpu.dot_dimension_numbers<[1], [0], [0], [1], [0, 0, 1, 1], [], []>} : vector<384x128xbf16>, vector<128x128xbf16>, vector<384x128xf32> -> vector<384x128xf32>
    %63 = arith.addf %58, %62 : vector<384x128xf32>
    %c50 = arith.constant 50 : index
    %c0_53 = arith.constant 0 : index
    %64 = vector.load %arg8[%c50, %c0_53] : memref<456x128xbf16, #tpu.memory_space<vmem>>, vector<384x128xbf16>
    %c8 = arith.constant 8 : index
    %c0_54 = arith.constant 0 : index
    %c0_55 = arith.constant 0 : index
    %65 = vector.load %arg3[%c8, %c0_54, %c0_55] : memref<9x128x128xbf16, #tpu.memory_space<vmem>>, vector<1x128x128xbf16>
    %66 = vector.shape_cast %65 : vector<1x128x128xbf16> to vector<128x128xbf16>
    %cst_56 = arith.constant dense<0.000000e+00> : vector<384x128xf32>
    %67 = tpu.matmul %64, %66, %cst_56 {dimension_numbers = #tpu.dot_dimension_numbers<[1], [0], [0], [1], [0, 0, 1, 1], [], []>} : vector<384x128xbf16>, vector<128x128xbf16>, vector<384x128xf32> -> vector<384x128xf32>
    %68 = arith.addf %63, %67 : vector<384x128xf32>
    %69 = vector.shape_cast %68 : vector<384x128xf32> to vector<16x24x128xf32>
    %70 = vector.extract_strided_slice %69 {offsets = [0, 0, 0], sizes = [16, 16, 128], strides = [1, 1, 1]} : vector<16x24x128xf32> to vector<16x16x128xf32>
    %c0_57 = arith.constant 0 : index
    %c0_58 = arith.constant 0 : index
    %71 = vector.load %arg4[%c0_57, %c0_58] : memref<1x128xf32, #tpu.memory_space<vmem>>, vector<1x128xf32>
    %72 = vector.shape_cast %71 : vector<1x128xf32> to vector<1x1x128xf32>
    %73 = vector.broadcast %72 : vector<1x1x128xf32> to vector<16x16x128xf32>
    %74 = arith.addf %70, %73 : vector<16x16x128xf32>
    %c0_59 = arith.constant 0 : index
    %c0_60 = arith.constant 0 : index
    %c0_61 = arith.constant 0 : index
    %c0_62 = arith.constant 0 : index
    %75 = vector.load %arg6[%c0_59, %c0_60, %c0_61, %c0_62] : memref<1x16x16x128xf32, #tpu.memory_space<vmem>>, vector<1x16x16x128xf32>
    %76 = vector.shape_cast %75 : vector<1x16x16x128xf32> to vector<16x16x128xf32>
    %77 = arith.addf %74, %76 : vector<16x16x128xf32>
    %c0_63 = arith.constant 0 : index
    %c0_64 = arith.constant 0 : index
    %c0_65 = arith.constant 0 : index
    %c0_66 = arith.constant 0 : index
    %78 = vector.load %arg7[%c0_63, %c0_64, %c0_65, %c0_66] : memref<1x16x16x128xf32, #tpu.memory_space<vmem>>, vector<1x16x16x128xf32>
    %79 = vector.shape_cast %78 : vector<1x16x16x128xf32> to vector<16x16x128xf32>
    %80 = vector.shape_cast %77 : vector<16x16x128xf32> to vector<1x16x16x128xf32>
    tpu.vector_store %arg7[%c0_63, %c0_64, %c0_65, %c0_66], %80 {strides = array<i32>} : memref<1x16x16x128xf32, #tpu.memory_space<vmem>>, vector<1x16x16x128xf32>,
    return
  }
  func.func @transform_0(%arg0: i32) -> (i32, i32) {
    %c0_i32 = arith.constant 0 : i32
    %c0_i32_0 = arith.constant 0 : i32
    %c0_i32_1 = arith.constant 0 : i32
    return %c0_i32, %c0_i32_0 : i32, i32
  }
  func.func @transform_1(%arg0: i32) -> (i32, i32) {
    %c0_i32 = arith.constant 0 : i32
    %c0_i32_0 = arith.constant 0 : i32
    %c0_i32_1 = arith.constant 0 : i32
    return %c0_i32, %c0_i32_0 : i32, i32
  }
  func.func @transform_2(%arg0: i32) -> (i32, i32, i32) {
    %c0_i32 = arith.constant 0 : i32
    %c0_i32_0 = arith.constant 0 : i32
    %c0_i32_1 = arith.constant 0 : i32
    %c0_i32_2 = arith.constant 0 : i32
    return %c0_i32, %c0_i32_0, %c0_i32_1 : i32, i32, i32
  }
  func.func @transform_3(%arg0: i32) -> (i32, i32) {
    %c0_i32 = arith.constant 0 : i32
    %c0_i32_0 = arith.constant 0 : i32
    %c0_i32_1 = arith.constant 0 : i32
    return %c0_i32, %c0_i32_0 : i32, i32
  }
  func.func @transform_4(%arg0: i32) -> (i32, i32, i32, i32) {
    %c0_i32 = arith.constant 0 : i32
    %c0_i32_0 = arith.constant 0 : i32
    %c0_i32_1 = arith.constant 0 : i32
    %c0_i32_2 = arith.constant 0 : i32
    return %arg0, %c0_i32, %c0_i32_0, %c0_i32_1 : i32, i32, i32, i32
  }
  func.func @transform_5(%arg0: i32) -> (i32, i32, i32, i32) {
    %c0_i32 = arith.constant 0 : i32
    %c0_i32_0 = arith.constant 0 : i32
    %c0_i32_1 = arith.constant 0 : i32
    %c0_i32_2 = arith.constant 0 : i32
    return %arg0, %c0_i32, %c0_i32_0, %c0_i32_1 : i32, i32, i32, i32
  }
  func.func @transform_6(%arg0: i32) -> (i32, i32, i32, i32) {
    %c0_i32 = arith.constant 0 : i32
    %c0_i32_0 = arith.constant 0 : i32
    %c0_i32_1 = arith.constant 0 : i32
    %c0_i32_2 = arith.constant 0 : i32
    return %arg0, %c0_i32, %c0_i32_0, %c0_i32_1 : i32, i32, i32, i32
  }
}

</mosaic_0001>

<llo_original>
// kernel: residual_block_pallas.3
$region0: #{residual_block_pallas.3}
  #allocation0 [shape = 'u32[]', space=smem, size = 0x4, offset = 0x4, fixed_abs, tag = 'smem constant byte address 0x4 - core index']
  #allocation1 [shape = 'u32[72,128]{1,0:T(1,128)}', space=vmem, size = 0x9000, scoped, tag = 'internal scratch']
  %s0 = inlined_call_operand.vmem [shape: f32[2,16,16,128], index: 0, kind: input, shape index: {}]
  %s1 = inlined_call_operand.vmem [shape: f32[2,2,128], index: 1, kind: output, shape index: {}]
  %s2 = sld [smem:[#allocation0]]
  $region37: #{residual_block_pallas.3} parent=0
    _
  %s4 = ssub.s32 1, %s2
  %s5 = scalar_select 0, %s4, %s2
  loop: start=0, step=1, limit=4
  $region2: #{residual_block_pallas.3} parent=0 // loop_pre_header
    _
  $region3: #{residual_block_pallas.3} parent=0 // loop_header
    %s7 = sphi 0, %s11
    %p8 = scmp.ge.s32.totalorder %s7, 4
    %s17 = sphi 0, %s19
    %s20 = sphi 0, %s17
    %s21 = sphi 0, %s20
    %s37 = sphi 0, %s21
    %s43 = sphi 0, %s45
    %s46 = sphi 0, %s43
    %s47 = sphi 0, %s46
    %s63 = sphi 0, %s47
  $region4: #{residual_block_pallas.3} parent=0 // loop_header_branch
    %10 = sbr.rel (%p8) target = $region8
  $region5: #{residual_block_pallas.3} parent=0 // loop_body
    %s12 = ssub.s32 %s7, 1
    %s13 = ssub.s32 %s7, 2
    %s14 = sadd.s32 %s7, 1
    %s15 = ssub.s32 %s7, %s14
    %p16 = scmp.eq.s32.totalorder %s15, 0
    %s18 = sadd.s32 %s17, 1
    %s19 = scalar_select %p16, %s17, %s18
    %p22 = pneg %p16
    %p23 = scmp.eq.s32.totalorder %s7, 1
    %p24 = por %p22, %p23
    %p25 = scmp.ne.s32.totalorder %s17, %s20
    %p26 = scmp.eq.s32.totalorder %s7, 0
    %p27 = por %p25, %p26
    %p28 = scmp.ne.s32.totalorder %s17, %s20
    %p29 = scmp.eq.s32.totalorder %s12, 1
    %p30 = por %p28, %p29
    %p31 = scmp.ne.s32.totalorder %s20, %s21
    %p32 = scmp.eq.s32.totalorder %s12, 0
    %p33 = por %p31, %p32
    %p34 = scmp.ne.s32.totalorder %s20, %s21
    %p35 = scmp.eq.s32.totalorder %s13, 1
    %p36 = por %p34, %p35
    %p38 = scmp.ne.s32.totalorder %s21, %s37
    %p39 = scmp.eq.s32.totalorder %s13, 0
    %p40 = por %p38, %p39
    %s41 = ssub.s32 %s7, %s14
    %p42 = scmp.eq.s32.totalorder %s41, 0
    %s44 = sadd.s32 %s43, 1
    %s45 = scalar_select %p42, %s43, %s44
    %p48 = pneg %p42
    %p49 = scmp.eq.s32.totalorder %s7, 1
    %p50 = por %p48, %p49
    %p51 = scmp.ne.s32.totalorder %s43, %s46
    %p52 = scmp.eq.s32.totalorder %s7, 0
    %p53 = por %p51, %p52
    %p54 = scmp.ne.s32.totalorder %s43, %s46
    %p55 = scmp.eq.s32.totalorder %s12, 1
    %p56 = por %p54, %p55
    %p57 = scmp.ne.s32.totalorder %s46, %s47
    %p58 = scmp.eq.s32.totalorder %s12, 0
    %p59 = por %p57, %p58
    %p60 = scmp.ne.s32.totalorder %s46, %s47
    %p61 = scmp.eq.s32.totalorder %s13, 1
    %p62 = por %p60, %p61
    %p64 = scmp.ne.s32.totalorder %s47, %s63
    %p65 = scmp.eq.s32.totalorder %s13, 0
    %p66 = por %p64, %p65
    %p67 = scmp.le.s32.totalorder 1, %s7
    %p68 = scmp.lt.s32.totalorder %s7, 3
    %p69 = pnand %p67, %p68
    %p70 = pneg %p69
    // Predicated region
    $region9: #{residual_block_pallas.3} parent=5 // pred_check
      _
    $region10: #{residual_block_pallas.3} parent=5 // pred_check_branch
      %72 = sbr.rel (%p69) target = $region12
    $region11: #{residual_block_pallas.3} parent=5 // pred_region
      %s73 = ssub.s32 %s7, 1
    $region12: #{residual_block_pallas.3} parent=5 // pred_fallthru
      _
    %p74 = scmp.lt.s32.totalorder %s7, 2
    // Predicated region
    $region13: #{residual_block_pallas.3} parent=5 // pred_check
      %p75 = pneg %p74
    $region14: #{residual_block_pallas.3} parent=5 // pred_check_branch
      %77 = sbr.rel (%p75) target = $region16
    $region15: #{residual_block_pallas.3} parent=5 // pred_region
      // Predicated region
      $region17: #{residual_block_pallas.3} parent=15 // pred_check
        %p78 = pneg %p27
      $region18: #{residual_block_pallas.3} parent=15 // pred_check_branch
        %80 = sbr.rel (%p78) target = $region20
      $region19: #{residual_block_pallas.3} parent=15 // pred_region
        %p81 = scmp.lt.s32.totalorder %s7, 1
        %s82 = scalar_select %p81, %s7, 1
        %s83 = smul.addr %s82, 32
        %s84 = smul.addr %s83, 8
        %s85 = scalar_lea.vmem %s0, %s84
      $region20: #{residual_block_pallas.3} parent=15 // pred_fallthru
        _
    $region16: #{residual_block_pallas.3} parent=5 // pred_fallthru
      _
    %p86 = scmp.le.s32.totalorder 1, %s7
    %p87 = scmp.lt.s32.totalorder %s7, 3
    %p88 = pnand %p86, %p87
    %p89 = pneg %p88
    // Predicated region
    $region21: #{residual_block_pallas.3} parent=5 // pred_check
      _
    $region22: #{residual_block_pallas.3} parent=5 // pred_check_branch
      %91 = sbr.rel (%p88) target = $region24
    $region23: #{residual_block_pallas.3} parent=5 // pred_region
      %s92 = ssub.s32 %s7, 1
      %p93 = scmp.lt.s32.totalorder %s12, 1
      %s94 = scalar_select %p93, %s12, 1
      %s95 = smul.addr %s94, 32
      %s96 = smul.addr %s95, 8
      %s97 = scalar_lea.vmem %s0, %s96
      %p98 = pneg %p33
      %p99 = pneg %p30
      %p100 = pneg %p59
      %p101 = pneg %p56
      %p102 = scmp.lt.s32.totalorder %s12, 1
      %s103 = scalar_select %p102, %s12, 1
      %s104 = smul.addr %s103, 2
      %s105 = scalar_lea.vmem %s1, %s104
      %p106 = scmp.lt.s32.totalorder %s12, 1
      %s107 = scalar_select %p106, %s12, 1
      %s108 = smul.addr %s107, 32
      %s109 = smul.addr %s108, 8
      %s110 = scalar_lea.vmem %s0, %s109
      %p111 = scmp.lt.s32.totalorder %s12, 1
      %s112 = scalar_select %p111, %s12, 1
      %s113 = smul.addr %s112, 2
      %s114 = scalar_lea.vmem %s1, %s113
      %v115 = vld [vmem:[%s110] sm:$0xff]
      %v116 = vld [vmem:[%s110 + $0x8] sm:$0xff]
      %v117 = vld [vmem:[%s110 + $0x10] sm:$0xff]
      %v118 = vld [vmem:[%s110 + $0x18] sm:$0xff]
      %v119 = vld [vmem:[%s110 + $0x20] sm:$0xff]
      %v120 = vld [vmem:[%s110 + $0x28] sm:$0xff]
      %v121 = vld [vmem:[%s110 + $0x30] sm:$0xff]
      %v122 = vld [vmem:[%s110 + $0x38] sm:$0xff]
      %v123 = vld [vmem:[%s110 + $0x40] sm:$0xff]
      %v124 = vld [vmem:[%s110 + $0x48] sm:$0xff]
      %v125 = vld [vmem:[%s110 + $0x50] sm:$0xff]
      %v126 = vld [vmem:[%s110 + $0x58] sm:$0xff]
      %v127 = vld [vmem:[%s110 + $0x60] sm:$0xff]
      %v128 = vld [vmem:[%s110 + $0x68] sm:$0xff]
      %v129 = vld [vmem:[%s110 + $0x70] sm:$0xff]
      %v130 = vld [vmem:[%s110 + $0x78] sm:$0xff]
      %v131 = vld [vmem:[%s110 + $0x80] sm:$0xff]
      %v132 = vld [vmem:[%s110 + $0x88] sm:$0xff]
      %v133 = vld [vmem:[%s110 + $0x90] sm:$0xff]
      %v134 = vld [vmem:[%s110 + $0x98] sm:$0xff]
      %v135 = vld [vmem:[%s110 + $0xa0] sm:$0xff]
      %v136 = vld [vmem:[%s110 + $0xa8] sm:$0xff]
      %v137 = vld [vmem:[%s110 + $0xb0] sm:$0xff]
      %v138 = vld [vmem:[%s110 + $0xb8] sm:$0xff]
      %v139 = vld [vmem:[%s110 + $0xc0] sm:$0xff]
      %v140 = vld [vmem:[%s110 + $0xc8] sm:$0xff]
      %v141 = vld [vmem:[%s110 + $0xd0] sm:$0xff]
      %v142 = vld [vmem:[%s110 + $0xd8] sm:$0xff]
      %v143 = vld [vmem:[%s110 + $0xe0] sm:$0xff]
      %v144 = vld [vmem:[%s110 + $0xe8] sm:$0xff]
      %v145 = vld [vmem:[%s110 + $0xf0] sm:$0xff]
      %v146 = vld [vmem:[%s110 + $0xf8] sm:$0xff]
      %v147 = vadd.f32 %v115, %v116
      %v148 = vadd.f32 %v147, %v117
      %v149 = vadd.f32 %v148, %v118
      %v150 = vadd.f32 %v149, %v119
      %v151 = vadd.f32 %v150, %v120
      %v152 = vadd.f32 %v151, %v121
      %v153 = vadd.f32 %v152, %v122
      %v154 = vadd.f32 %v153, %v123
      %v155 = vadd.f32 %v154, %v124
      %v156 = vadd.f32 %v155, %v125
      %v157 = vadd.f32 %v156, %v126
      %v158 = vadd.f32 %v157, %v127
      %v159 = vadd.f32 %v158, %v128
      %v160 = vadd.f32 %v159, %v129
      %v161 = vadd.f32 %v160, %v130
      %v162 = vadd.f32 %v161, %v131
      %v163 = vadd.f32 %v162, %v132
      %v164 = vadd.f32 %v163, %v133
      %v165 = vadd.f32 %v164, %v134
      %v166 = vadd.f32 %v165, %v135
      %v167 = vadd.f32 %v166, %v136
      %v168 = vadd.f32 %v167, %v137
      %v169 = vadd.f32 %v168, %v138
      %v170 = vadd.f32 %v169, %v139
      %v171 = vadd.f32 %v170, %v140
      %v172 = vadd.f32 %v171, %v141
      %v173 = vadd.f32 %v172, %v142
      %v174 = vadd.f32 %v173, %v143
      %v175 = vadd.f32 %v174, %v144
      %v176 = vadd.f32 %v175, %v145
      %v177 = vadd.f32 %v176, %v146
      %v178 = vrot.slane %v177, 4
      %v179 = vadd.f32 %v177, %v178
      %v180 = vrot.slane %v179, 2
      %v181 = vadd.f32 %v179, %v180
      %v182 = vrot.slane %v181, 1
      %v183 = vadd.f32 %v181, %v182
      %v184 = vmul.f32 %v115, %v115
      %v185 = vmul.f32 %v116, %v116
      %v186 = vmul.f32 %v117, %v117
      %v187 = vmul.f32 %v118, %v118
      %v188 = vmul.f32 %v119, %v119
      %v189 = vmul.f32 %v120, %v120
      %v190 = vmul.f32 %v121, %v121
      %v191 = vmul.f32 %v122, %v122
      %v192 = vmul.f32 %v123, %v123
      %v193 = vmul.f32 %v124, %v124
      %v194 = vmul.f32 %v125, %v125
      %v195 = vmul.f32 %v126, %v126
      %v196 = vmul.f32 %v127, %v127
      %v197 = vmul.f32 %v128, %v128
      %v198 = vmul.f32 %v129, %v129
      %v199 = vmul.f32 %v130, %v130
      %v200 = vmul.f32 %v131, %v131
      %v201 = vmul.f32 %v132, %v132
      %v202 = vmul.f32 %v133, %v133
      %v203 = vmul.f32 %v134, %v134
      %v204 = vmul.f32 %v135, %v135
      %v205 = vmul.f32 %v136, %v136
      %v206 = vmul.f32 %v137, %v137
      %v207 = vmul.f32 %v138, %v138
      %v208 = vmul.f32 %v139, %v139
      %v209 = vmul.f32 %v140, %v140
      %v210 = vmul.f32 %v141, %v141
      %v211 = vmul.f32 %v142, %v142
      %v212 = vmul.f32 %v143, %v143
      %v213 = vmul.f32 %v144, %v144
      %v214 = vmul.f32 %v145, %v145
      %v215 = vmul.f32 %v146, %v146
      %v216 = vadd.f32 %v184, %v185
      %v217 = vadd.f32 %v216, %v186
      %v218 = vadd.f32 %v217, %v187
      %v219 = vadd.f32 %v218, %v188
      %v220 = vadd.f32 %v219, %v189
      %v221 = vadd.f32 %v220, %v190
      %v222 = vadd.f32 %v221, %v191
      %v223 = vadd.f32 %v222, %v192
      %v224 = vadd.f32 %v223, %v193
      %v225 = vadd.f32 %v224, %v194
      %v226 = vadd.f32 %v225, %v195
      %v227 = vadd.f32 %v226, %v196
      %v228 = vadd.f32 %v227, %v197
      %v229 = vadd.f32 %v228, %v198
      %v230 = vadd.f32 %v229, %v199
      %v231 = vadd.f32 %v230, %v200
      %v232 = vadd.f32 %v231, %v201
      %v233 = vadd.f32 %v232, %v202
      %v234 = vadd.f32 %v233, %v203
      %v235 = vadd.f32 %v234, %v204
      %v236 = vadd.f32 %v235, %v205
      %v237 = vadd.f32 %v236, %v206
      %v238 = vadd.f32 %v237, %v207
      %v239 = vadd.f32 %v238, %v208
      %v240 = vadd.f32 %v239, %v209
      %v241 = vadd.f32 %v240, %v210
      %v242 = vadd.f32 %v241, %v211
      %v243 = vadd.f32 %v242, %v212
      %v244 = vadd.f32 %v243, %v213
      %v245 = vadd.f32 %v244, %v214
      %v246 = vadd.f32 %v245, %v215
      %v247 = vrot.slane %v246, 4
      %v248 = vadd.f32 %v246, %v247
      %v249 = vrot.slane %v248, 2
      %v250 = vadd.f32 %v248, %v249
      %v251 = vrot.slane %v250, 1
      %v252 = vadd.f32 %v250, %v251
      %vm253 = vcmask 1040384
      %v254 = vsel %vm253, %v183, %v252
      %255 = vst [vmem:[%s114] sm:$0x3] %v254
      %p256 = scmp.lt.s32.totalorder %s12, 1
      %s257 = scalar_select %p256, %s12, 1
      %s258 = smul.addr %s257, 2
      %s259 = scalar_lea.vmem %s1, %s258
      // Predicated region
      $region25: #{residual_block_pallas.3} parent=23 // pred_check
        %p260 = pneg %p56
      $region26: #{residual_block_pallas.3} parent=23 // pred_check_branch
        %262 = sbr.rel (%p260) target = $region28
      $region27: #{residual_block_pallas.3} parent=23 // pred_region
        _
      $region28: #{residual_block_pallas.3} parent=23 // pred_fallthru
        _
    $region24: #{residual_block_pallas.3} parent=5 // pred_fallthru
      _
    %p263 = scmp.le.s32.totalorder 2, %s7
    // Predicated region
    $region29: #{residual_block_pallas.3} parent=5 // pred_check
      %p264 = pneg %p263
    $region30: #{residual_block_pallas.3} parent=5 // pred_check_branch
      %266 = sbr.rel (%p264) target = $region32
    $region31: #{residual_block_pallas.3} parent=5 // pred_region
      %s267 = ssub.s32 %s7, 2
      // Predicated region
      $region33: #{residual_block_pallas.3} parent=31 // pred_check
        %p268 = pneg %p62
      $region34: #{residual_block_pallas.3} parent=31 // pred_check_branch
        %270 = sbr.rel (%p268) target = $region36
      $region35: #{residual_block_pallas.3} parent=31 // pred_region
        %p271 = scmp.lt.s32.totalorder %s13, 1
        %s272 = scalar_select %p271, %s13, 1
        %s273 = smul.addr %s272, 2
        %s274 = scalar_lea.vmem %s1, %s273
      $region36: #{residual_block_pallas.3} parent=31 // pred_fallthru
        _
    $region32: #{residual_block_pallas.3} parent=5 // pred_fallthru
      _
  $region6: #{residual_block_pallas.3} parent=0 // loop_footer
    %s11 = sadd.s32 1, %s7
  $region7: #{residual_block_pallas.3} parent=0 // loop_footer_branch
    %6 = sbr.rel target = $region3
  $region8: #{residual_block_pallas.3} parent=0 // loop_exit
    _

// kernel: residual_block_pallas.5
$region0: #{residual_block_pallas.5}
  #allocation0 [shape = 'u32[]', space=smem, size = 0x4, offset = 0x4, fixed_abs, tag = 'smem constant byte address 0x4 - core index']
  #allocation1 [shape = 'u32[72,128]{1,0:T(1,128)}', space=vmem, size = 0x9000, scoped, tag = 'internal scratch']
  #allocation2 [shape = 'bf16[456,128]{1,0:T(8,128)(2,1)}', space=vmem, size = 0x1c800, scoped, tag = 'scratch operand']
  %s0 = inlined_call_operand.vmem [shape: f32[1,128], index: 0, kind: input, shape index: {}]
  %s1 = inlined_call_operand.vmem [shape: f32[1,128], index: 1, kind: input, shape index: {}]
  %s2 = inlined_call_operand.vmem [shape: bf16[9,128,128], index: 2, kind: input, shape index: {}]
  %s3 = inlined_call_operand.vmem [shape: f32[1,128], index: 3, kind: input, shape index: {}]
  %s4 = inlined_call_operand.vmem [shape: bf16[2,16,16,128], index: 4, kind: input, shape index: {}]
  %s5 = inlined_call_operand.vmem [shape: f32[2,16,16,128], index: 5, kind: input, shape index: {}]
  %s6 = inlined_call_operand.vmem [shape: f32[2,16,16,128], index: 6, kind: output, shape index: {}]
  %s7 = sld [smem:[#allocation0]]
  $region57: #{residual_block_pallas.5} parent=0
    _
  %s9 = ssub.s32 1, %s7
  %s10 = scalar_select 0, %s9, %s7
  loop: start=0, step=1, limit=4
  $region2: #{residual_block_pallas.5} parent=0 // loop_pre_header
    _
  $region3: #{residual_block_pallas.5} parent=0 // loop_header
    %s12 = sphi 0, %s16
    %p13 = scmp.ge.s32.totalorder %s12, 4
    %s20 = sphi 0, %s20
    %s22 = sphi 0, %s20
    %s23 = sphi 0, %s22
    %s37 = sphi 0, %s23
    %s41 = sphi 0, %s41
    %s43 = sphi 0, %s41
    %s44 = sphi 0, %s43
    %s58 = sphi 0, %s44
    %s62 = sphi 0, %s62
    %s64 = sphi 0, %s62
    %s65 = sphi 0, %s64
    %s79 = sphi 0, %s65
    %s83 = sphi 0, %s83
    %s85 = sphi 0, %s83
    %s86 = sphi 0, %s85
    %s100 = sphi 0, %s86
    %s106 = sphi 0, %s108
    %s109 = sphi 0, %s106
    %s110 = sphi 0, %s109
    %s126 = sphi 0, %s110
    %s132 = sphi 0, %s134
    %s135 = sphi 0, %s132
    %s136 = sphi 0, %s135
    %s152 = sphi 0, %s136
    %s158 = sphi 0, %s160
    %s161 = sphi 0, %s158
    %s162 = sphi 0, %s161
    %s178 = sphi 0, %s162
  $region4: #{residual_block_pallas.5} parent=0 // loop_header_branch
    %15 = sbr.rel (%p13) target = $region8
  $region5: #{residual_block_pallas.5} parent=0 // loop_body
    %s17 = ssub.s32 %s12, 1
    %s18 = ssub.s32 %s12, 2
    %s19 = sadd.s32 %s12, 1
    %s21 = sadd.s32 %s20, 1
    %p24 = scmp.eq.s32.totalorder %s12, 1
    %p25 = scmp.ne.s32.totalorder %s20, %s22
    %p26 = scmp.eq.s32.totalorder %s12, 0
    %p27 = por %p25, %p26
    %p28 = scmp.ne.s32.totalorder %s20, %s22
    %p29 = scmp.eq.s32.totalorder %s17, 1
    %p30 = por %p28, %p29
    %p31 = scmp.ne.s32.totalorder %s22, %s23
    %p32 = scmp.eq.s32.totalorder %s17, 0
    %p33 = por %p31, %p32
    %p34 = scmp.ne.s32.totalorder %s22, %s23
    %p35 = scmp.eq.s32.totalorder %s18, 1
    %p36 = por %p34, %p35
    %p38 = scmp.ne.s32.totalorder %s23, %s37
    %p39 = scmp.eq.s32.totalorder %s18, 0
    %p40 = por %p38, %p39
    %s42 = sadd.s32 %s41, 1
    %p45 = scmp.eq.s32.totalorder %s12, 1
    %p46 = scmp.ne.s32.totalorder %s41, %s43
    %p47 = scmp.eq.s32.totalorder %s12, 0
    %p48 = por %p46, %p47
    %p49 = scmp.ne.s32.totalorder %s41, %s43
    %p50 = scmp.eq.s32.totalorder %s17, 1
    %p51 = por %p49, %p50
    %p52 = scmp.ne.s32.totalorder %s43, %s44
    %p53 = scmp.eq.s32.totalorder %s17, 0
    %p54 = por %p52, %p53
    %p55 = scmp.ne.s32.totalorder %s43, %s44
    %p56 = scmp.eq.s32.totalorder %s18, 1
    %p57 = por %p55, %p56
    %p59 = scmp.ne.s32.totalorder %s44, %s58
    %p60 = scmp.eq.s32.totalorder %s18, 0
    %p61 = por %p59, %p60
    %s63 = sadd.s32 %s62, 1
    %p66 = scmp.eq.s32.totalorder %s12, 1
    %p67 = scmp.ne.s32.totalorder %s62, %s64
    %p68 = scmp.eq.s32.totalorder %s12, 0
    %p69 = por %p67, %p68
    %p70 = scmp.ne.s32.totalorder %s62, %s64
    %p71 = scmp.eq.s32.totalorder %s17, 1
    %p72 = por %p70, %p71
    %p73 = scmp.ne.s32.totalorder %s64, %s65
    %p74 = scmp.eq.s32.totalorder %s17, 0
    %p75 = por %p73, %p74
    %p76 = scmp.ne.s32.totalorder %s64, %s65
    %p77 = scmp.eq.s32.totalorder %s18, 1
    %p78 = por %p76, %p77
    %p80 = scmp.ne.s32.totalorder %s65, %s79
    %p81 = scmp.eq.s32.totalorder %s18, 0
    %p82 = por %p80, %p81
    %s84 = sadd.s32 %s83, 1
    %p87 = scmp.eq.s32.totalorder %s12, 1
    %p88 = scmp.ne.s32.totalorder %s83, %s85
    %p89 = scmp.eq.s32.totalorder %s12, 0
    %p90 = por %p88, %p89
    %p91 = scmp.ne.s32.totalorder %s83, %s85
    %p92 = scmp.eq.s32.totalorder %s17, 1
    %p93 = por %p91, %p92
    %p94 = scmp.ne.s32.totalorder %s85, %s86
    %p95 = scmp.eq.s32.totalorder %s17, 0
    %p96 = por %p94, %p95
    %p97 = scmp.ne.s32.totalorder %s85, %s86
    %p98 = scmp.eq.s32.totalorder %s18, 1
    %p99 = por %p97, %p98
    %p101 = scmp.ne.s32.totalorder %s86, %s100
    %p102 = scmp.eq.s32.totalorder %s18, 0
    %p103 = por %p101, %p102
    %s104 = ssub.s32 %s12, %s19
    %p105 = scmp.eq.s32.totalorder %s104, 0
    %s107 = sadd.s32 %s106, 1
    %s108 = scalar_select %p105, %s106, %s107
    %p111 = pneg %p105
    %p112 = scmp.eq.s32.totalorder %s12, 1
    %p113 = por %p111, %p112
    %p114 = scmp.ne.s32.totalorder %s106, %s109
    %p115 = scmp.eq.s32.totalorder %s12, 0
    %p116 = por %p114, %p115
    %p117 = scmp.ne.s32.totalorder %s106, %s109
    %p118 = scmp.eq.s32.totalorder %s17, 1
    %p119 = por %p117, %p118
    %p120 = scmp.ne.s32.totalorder %s109, %s110
    %p121 = scmp.eq.s32.totalorder %s17, 0
    %p122 = por %p120, %p121
    %p123 = scmp.ne.s32.totalorder %s109, %s110
    %p124 = scmp.eq.s32.totalorder %s18, 1
    %p125 = por %p123, %p124
    %p127 = scmp.ne.s32.totalorder %s110, %s126
    %p128 = scmp.eq.s32.totalorder %s18, 0
    %p129 = por %p127, %p128
    %s130 = ssub.s32 %s12, %s19
    %p131 = scmp.eq.s32.totalorder %s130, 0
    %s133 = sadd.s32 %s132, 1
    %s134 = scalar_select %p131, %s132, %s133
    %p137 = pneg %p131
    %p138 = scmp.eq.s32.totalorder %s12, 1
    %p139 = por %p137, %p138
    %p140 = scmp.ne.s32.totalorder %s132, %s135
    %p141 = scmp.eq.s32.totalorder %s12, 0
    %p142 = por %p140, %p141
    %p143 = scmp.ne.s32.totalorder %s132, %s135
    %p144 = scmp.eq.s32.totalorder %s17, 1
    %p145 = por %p143, %p144
    %p146 = scmp.ne.s32.totalorder %s135, %s136
    %p147 = scmp.eq.s32.totalorder %s17, 0
    %p148 = por %p146, %p147
    %p149 = scmp.ne.s32.totalorder %s135, %s136
    %p150 = scmp.eq.s32.totalorder %s18, 1
    %p151 = por %p149, %p150
    %p153 = scmp.ne.s32.totalorder %s136, %s152
    %p154 = scmp.eq.s32.totalorder %s18, 0
    %p155 = por %p153, %p154
    %s156 = ssub.s32 %s12, %s19
    %p157 = scmp.eq.s32.totalorder %s156, 0
    %s159 = sadd.s32 %s158, 1
    %s160 = scalar_select %p157, %s158, %s159
    %p163 = pneg %p157
    %p164 = scmp.eq.s32.totalorder %s12, 1
    %p165 = por %p163, %p164
    %p166 = scmp.ne.s32.totalorder %s158, %s161
    %p167 = scmp.eq.s32.totalorder %s12, 0
    %p168 = por %p166, %p167
    %p169 = scmp.ne.s32.totalorder %s158, %s161
    %p170 = scmp.eq.s32.totalorder %s17, 1
    %p171 = por %p169, %p170
    %p172 = scmp.ne.s32.totalorder %s161, %s162
    %p173 = scmp.eq.s32.totalorder %s17, 0
    %p174 = por %p172, %p173
    %p175 = scmp.ne.s32.totalorder %s161, %s162
    %p176 = scmp.eq.s32.totalorder %s18, 1
    %p177 = por %p175, %p176
    %p179 = scmp.ne.s32.totalorder %s162, %s178
    %p180 = scmp.eq.s32.totalorder %s18, 0
    %p181 = por %p179, %p180
    %p182 = scmp.le.s32.totalorder 1, %s12
    %p183 = scmp.lt.s32.totalorder %s12, 3
    %p184 = pnand %p182, %p183
    %p185 = pneg %p184
    // Predicated region
    $region9: #{residual_block_pallas.5} parent=5 // pred_check
      _
    $region10: #{residual_block_pallas.5} parent=5 // pred_check_branch
      %187 = sbr.rel (%p184) target = $region12
    $region11: #{residual_block_pallas.5} parent=5 // pred_region
      %s188 = ssub.s32 %s12, 1
      // Predicated region
      $region13: #{residual_block_pallas.5} parent=11 // pred_check
        %p189 = pneg %p33
      $region14: #{residual_block_pallas.5} parent=11 // pred_check_branch
        %191 = sbr.rel (%p189) target = $region16
      $region15: #{residual_block_pallas.5} parent=11 // pred_region
        _
      $region16: #{residual_block_pallas.5} parent=11 // pred_fallthru
        _
      // Predicated region
      $region17: #{residual_block_pallas.5} parent=11 // pred_check
        %p192 = pneg %p54
      $region18: #{residual_block_pallas.5} parent=11 // pred_check_branch
        %194 = sbr.rel (%p192) target = $region20
      $region19: #{residual_block_pallas.5} parent=11 // pred_region
        _
      $region20: #{residual_block_pallas.5} parent=11 // pred_fallthru
        _
      // Predicated region
      $region21: #{residual_block_pallas.5} parent=11 // pred_check
        %p195 = pneg %p75
      $region22: #{residual_block_pallas.5} parent=11 // pred_check_branch
        %197 = sbr.rel (%p195) target = $region24
      $region23: #{residual_block_pallas.5} parent=11 // pred_region
        _
      $region24: #{residual_block_pallas.5} parent=11 // pred_fallthru
        _
      // Predicated region
      $region25: #{residual_block_pallas.5} parent=11 // pred_check
        %p198 = pneg %p96
      $region26: #{residual_block_pallas.5} parent=11 // pred_check_branch
        %200 = sbr.rel (%p198) target = $region28
      $region27: #{residual_block_pallas.5} parent=11 // pred_region
        _
      $region28: #{residual_block_pallas.5} parent=11 // pred_fallthru
        _
    $region12: #{residual_block_pallas.5} parent=5 // pred_fallthru
      _
    %p201 = scmp.lt.s32.totalorder %s12, 2
    // Predicated region
    $region29: #{residual_block_pallas.5} parent=5 // pred_check
      %p202 = pneg %p201
    $region30: #{residual_block_pallas.5} parent=5 // pred_check_branch
      %204 = sbr.rel (%p202) target = $region32
    $region31: #{residual_block_pallas.5} parent=5 // pred_region
      // Predicated region
      $region33: #{residual_block_pallas.5} parent=31 // pred_check
        %p205 = pneg %p116
      $region34: #{residual_block_pallas.5} parent=31 // pred_check_branch
        %207 = sbr.rel (%p205) target = $region36
      $region35: #{residual_block_pallas.5} parent=31 // pred_region
        %p208 = scmp.lt.s32.totalorder %s12, 1
        %s209 = scalar_select %p208, %s12, 1
        %s210 = smul.addr %s209, 32
        %s211 = smul.addr %s210, 4
        %s212 = scalar_lea.vmem %s4, %s211
      $region36: #{residual_block_pallas.5} parent=31 // pred_fallthru
        _
      // Predicated region
      $region37: #{residual_block_pallas.5} parent=31 // pred_check
        %p213 = pneg %p142
      $region38: #{residual_block_pallas.5} parent=31 // pred_check_branch
        %215 = sbr.rel (%p213) target = $region40
      $region39: #{residual_block_pallas.5} parent=31 // pred_region
        %p216 = scmp.lt.s32.totalorder %s12, 1
        %s217 = scalar_select %p216, %s12, 1
        %s218 = smul.addr %s217, 32
        %s219 = smul.addr %s218, 8
        %s220 = scalar_lea.vmem %s5, %s219
      $region40: #{residual_block_pallas.5} parent=31 // pred_fallthru
        _
    $region32: #{residual_block_pallas.5} parent=5 // pred_fallthru
      _
    %p221 = scmp.le.s32.totalorder 1, %s12
    %p222 = scmp.lt.s32.totalorder %s12, 3
    %p223 = pnand %p221, %p222
    %p224 = pneg %p223
    // Predicated region
    $region41: #{residual_block_pallas.5} parent=5 // pred_check
      _
    $region42: #{residual_block_pallas.5} parent=5 // pred_check_branch
      %226 = sbr.rel (%p223) target = $region44
    $region43: #{residual_block_pallas.5} parent=5 // pred_region
      %s227 = ssub.s32 %s12, 1
      %p228 = pneg %p33
      %p229 = pneg %p30
      %p230 = pneg %p54
      %p231 = pneg %p51
      %p232 = pneg %p75
      %p233 = pneg %p72
      %p234 = pneg %p96
      %p235 = pneg %p93
      %p236 = scmp.lt.s32.totalorder %s17, 1
      %s237 = scalar_select %p236, %s17, 1
      %s238 = smul.addr %s237, 32
      %s239 = smul.addr %s238, 4
      %s240 = scalar_lea.vmem %s4, %s239
      %p241 = pneg %p122
      %p242 = pneg %p119
      %p243 = scmp.lt.s32.totalorder %s17, 1
      %s244 = scalar_select %p243, %s17, 1
      %s245 = smul.addr %s244, 32
      %s246 = smul.addr %s245, 8
      %s247 = scalar_lea.vmem %s5, %s246
      %p248 = pneg %p148
      %p249 = pneg %p145
      %p250 = pneg %p174
      %p251 = pneg %p171
      %p252 = scmp.lt.s32.totalorder %s17, 1
      %s253 = scalar_select %p252, %s17, 1
      %s254 = smul.addr %s253, 32
      %s255 = smul.addr %s254, 8
      %s256 = scalar_lea.vmem %s6, %s255
      %p257 = scmp.lt.s32.totalorder %s17, 1
      %s258 = scalar_select %p257, %s17, 1
      %s259 = smul.addr %s258, 32
      %s260 = smul.addr %s259, 4
      %s261 = scalar_lea.vmem %s4, %s260
      %p262 = scmp.lt.s32.totalorder %s17, 1
      %s263 = scalar_select %p262, %s17, 1
      %s264 = smul.addr %s263, 32
      %s265 = smul.addr %s264, 8
      %s266 = scalar_lea.vmem %s5, %s265
      %p267 = scmp.lt.s32.totalorder %s17, 1
      %s268 = scalar_select %p267, %s17, 1
      %s269 = smul.addr %s268, 32
      %s270 = smul.addr %s269, 8
      %s271 = scalar_lea.vmem %s6, %s270
      %v273 = vld [vmem:[%s261] sm:$0xf]
      %v274 = vld [vmem:[%s261 + $0x4] sm:$0xf]
      %v275 = vld [vmem:[%s261 + $0x8] sm:$0xf]
      %v276 = vld [vmem:[%s261 + $0xc] sm:$0xf]
      %v277 = vld [vmem:[%s261 + $0x10] sm:$0xf]
      %v278 = vld [vmem:[%s261 + $0x14] sm:$0xf]
      %v279 = vld [vmem:[%s261 + $0x18] sm:$0xf]
      %v280 = vld [vmem:[%s261 + $0x1c] sm:$0xf]
      %v281 = vld [vmem:[%s261 + $0x20] sm:$0xf]
      %v282 = vld [vmem:[%s261 + $0x24] sm:$0xf]
      %v283 = vld [vmem:[%s261 + $0x28] sm:$0xf]
      %v284 = vld [vmem:[%s261 + $0x2c] sm:$0xf]
      %v285 = vld [vmem:[%s261 + $0x30] sm:$0xf]
      %v286 = vld [vmem:[%s261 + $0x34] sm:$0xf]
      %v287 = vld [vmem:[%s261 + $0x38] sm:$0xf]
      %v288 = vld [vmem:[%s261 + $0x3c] sm:$0xf]
      %v289 = vld [vmem:[%s261 + $0x40] sm:$0xf]
      %v290 = vld [vmem:[%s261 + $0x44] sm:$0xf]
      %v291 = vld [vmem:[%s261 + $0x48] sm:$0xf]
      %v292 = vld [vmem:[%s261 + $0x4c] sm:$0xf]
      %v293 = vld [vmem:[%s261 + $0x50] sm:$0xf]
      %v294 = vld [vmem:[%s261 + $0x54] sm:$0xf]
      %v295 = vld [vmem:[%s261 + $0x58] sm:$0xf]
      %v296 = vld [vmem:[%s261 + $0x5c] sm:$0xf]
      %v297 = vld [vmem:[%s261 + $0x60] sm:$0xf]
      %v298 = vld [vmem:[%s261 + $0x64] sm:$0xf]
      %v299 = vld [vmem:[%s261 + $0x68] sm:$0xf]
      %v300 = vld [vmem:[%s261 + $0x6c] sm:$0xf]
      %v301 = vld [vmem:[%s261 + $0x70] sm:$0xf]
      %v302 = vld [vmem:[%s261 + $0x74] sm:$0xf]
      %v303 = vld [vmem:[%s261 + $0x78] sm:$0xf]
      %v304 = vld [vmem:[%s261 + $0x7c] sm:$0xf]
      %v305 = vunpack.c.l.bf16 %v273
      %v306 = vunpack.c.l.bf16 %v274
      %v307 = vunpack.c.l.bf16 %v275
      %v308 = vunpack.c.l.bf16 %v276
      %v309 = vunpack.c.l.bf16 %v277
      %v310 = vunpack.c.l.bf16 %v278
      %v311 = vunpack.c.l.bf16 %v279
      %v312 = vunpack.c.l.bf16 %v280
      %v313 = vunpack.c.l.bf16 %v281
      %v314 = vunpack.c.l.bf16 %v282
      %v315 = vunpack.c.l.bf16 %v283
      %v316 = vunpack.c.l.bf16 %v284
      %v317 = vunpack.c.l.bf16 %v285
      %v318 = vunpack.c.l.bf16 %v286
      %v319 = vunpack.c.l.bf16 %v287
      %v320 = vunpack.c.l.bf16 %v288
      %v321 = vunpack.c.l.bf16 %v289
      %v322 = vunpack.c.l.bf16 %v290
      %v323 = vunpack.c.l.bf16 %v291
      %v324 = vunpack.c.l.bf16 %v292
      %v325 = vunpack.c.l.bf16 %v293
      %v326 = vunpack.c.l.bf16 %v294
      %v327 = vunpack.c.l.bf16 %v295
      %v328 = vunpack.c.l.bf16 %v296
      %v329 = vunpack.c.l.bf16 %v297
      %v330 = vunpack.c.l.bf16 %v298
      %v331 = vunpack.c.l.bf16 %v299
      %v332 = vunpack.c.l.bf16 %v300
      %v333 = vunpack.c.l.bf16 %v301
      %v334 = vunpack.c.l.bf16 %v302
      %v335 = vunpack.c.l.bf16 %v303
      %v336 = vunpack.c.l.bf16 %v304
      %v337 = vld [vmem:[%s0] sm:$0x1]
      %v339 = vperm.slane %v337, 0
      %v341 = vmul.f32 %v305, %v339
      %v342 = vmul.f32 %v306, %v339
      %v343 = vmul.f32 %v307, %v339
      %v344 = vmul.f32 %v308, %v339
      %v345 = vmul.f32 %v309, %v339
      %v346 = vmul.f32 %v310, %v339
      %v347 = vmul.f32 %v311, %v339
      %v348 = vmul.f32 %v312, %v339
      %v349 = vmul.f32 %v313, %v339
      %v350 = vmul.f32 %v314, %v339
      %v351 = vmul.f32 %v315, %v339
      %v352 = vmul.f32 %v316, %v339
      %v353 = vmul.f32 %v317, %v339
      %v354 = vmul.f32 %v318, %v339
      %v355 = vmul.f32 %v319, %v339
      %v356 = vmul.f32 %v320, %v339
      %v357 = vmul.f32 %v321, %v339
      %v358 = vmul.f32 %v322, %v339
      %v359 = vmul.f32 %v323, %v339
      %v360 = vmul.f32 %v324, %v339
      %v361 = vmul.f32 %v325, %v339
      %v362 = vmul.f32 %v326, %v339
      %v363 = vmul.f32 %v327, %v339
      %v364 = vmul.f32 %v328, %v339
      %v365 = vmul.f32 %v329, %v339
      %v366 = vmul.f32 %v330, %v339
      %v367 = vmul.f32 %v331, %v339
      %v368 = vmul.f32 %v332, %v339
      %v369 = vmul.f32 %v333, %v339
      %v370 = vmul.f32 %v334, %v339
      %v371 = vmul.f32 %v335, %v339
      %v372 = vmul.f32 %v336, %v339
      %v373 = vld [vmem:[%s1] sm:$0x1]
      %v375 = vperm.slane %v373, 0
      %v377 = vadd.f32 %v341, %v375
      %v378 = vadd.f32 %v342, %v375
      %v379 = vadd.f32 %v343, %v375
      %v380 = vadd.f32 %v344, %v375
      %v381 = vadd.f32 %v345, %v375
      %v382 = vadd.f32 %v346, %v375
      %v383 = vadd.f32 %v347, %v375
      %v384 = vadd.f32 %v348, %v375
      %v385 = vadd.f32 %v349, %v375
      %v386 = vadd.f32 %v350, %v375
      %v387 = vadd.f32 %v351, %v375
      %v388 = vadd.f32 %v352, %v375
      %v389 = vadd.f32 %v353, %v375
      %v390 = vadd.f32 %v354, %v375
      %v391 = vadd.f32 %v355, %v375
      %v392 = vadd.f32 %v356, %v375
      %v393 = vadd.f32 %v357, %v375
      %v394 = vadd.f32 %v358, %v375
      %v395 = vadd.f32 %v359, %v375
      %v396 = vadd.f32 %v360, %v375
      %v397 = vadd.f32 %v361, %v375
      %v398 = vadd.f32 %v362, %v375
      %v399 = vadd.f32 %v363, %v375
      %v400 = vadd.f32 %v364, %v375
      %v401 = vadd.f32 %v365, %v375
      %v402 = vadd.f32 %v366, %v375
      %v403 = vadd.f32 %v367, %v375
      %v404 = vadd.f32 %v368, %v375
      %v405 = vadd.f32 %v369, %v375
      %v406 = vadd.f32 %v370, %v375
      %v407 = vadd.f32 %v371, %v375
      %v408 = vadd.f32 %v372, %v375
      %v409 = vmax.f32 %v377, 0.0
      %v410 = vmax.f32 %v378, 0.0
      %v411 = vmax.f32 %v379, 0.0
      %v412 = vmax.f32 %v380, 0.0
      %v413 = vmax.f32 %v381, 0.0
      %v414 = vmax.f32 %v382, 0.0
      %v415 = vmax.f32 %v383, 0.0
      %v416 = vmax.f32 %v384, 0.0
      %v417 = vmax.f32 %v385, 0.0
      %v418 = vmax.f32 %v386, 0.0
      %v419 = vmax.f32 %v387, 0.0
      %v420 = vmax.f32 %v388, 0.0
      %v421 = vmax.f32 %v389, 0.0
      %v422 = vmax.f32 %v390, 0.0
      %v423 = vmax.f32 %v391, 0.0
      %v424 = vmax.f32 %v392, 0.0
      %v425 = vmax.f32 %v393, 0.0
      %v426 = vmax.f32 %v394, 0.0
      %v427 = vmax.f32 %v395, 0.0
      %v428 = vmax.f32 %v396, 0.0
      %v429 = vmax.f32 %v397, 0.0
      %v430 = vmax.f32 %v398, 0.0
      %v431 = vmax.f32 %v399, 0.0
      %v432 = vmax.f32 %v400, 0.0
      %v433 = vmax.f32 %v401, 0.0
      %v434 = vmax.f32 %v402, 0.0
      %v435 = vmax.f32 %v403, 0.0
      %v436 = vmax.f32 %v404, 0.0
      %v437 = vmax.f32 %v405, 0.0
      %v438 = vmax.f32 %v406, 0.0
      %v439 = vmax.f32 %v407, 0.0
      %v440 = vmax.f32 %v408, 0.0
      %441 = vst [vmem:[#allocation2] sm:$0xf] 0
      %442 = vst [vmem:[#allocation2 + $0x4] sm:$0xf] 0
      %443 = vst [vmem:[#allocation2 + $0x8] sm:$0xf] 0
      %444 = vst [vmem:[#allocation2 + $0xcc] sm:$0xf] 0
      %445 = vst [vmem:[#allocation2 + $0xd0] sm:$0xf] 0
      %446 = vst [vmem:[#allocation2 + $0xd4] sm:$0xf] 0
      %447 = vst [vmem:[#allocation2 + $0xd8] sm:$0xf] 0
      %448 = vst [vmem:[#allocation2 + $0xdc] sm:$0xf] 0
      %449 = vst [vmem:[#allocation2 + $0xe0] sm:$0xf] 0
      %v450 = vpack.c.bf16 %v409, %v409
      %v451 = vpack.c.bf16 %v410, %v410
      %v452 = vpack.c.bf16 %v411, %v411
      %v453 = vpack.c.bf16 %v412, %v412
      %v454 = vpack.c.bf16 %v413, %v413
      %v455 = vpack.c.bf16 %v414, %v414
      %v456 = vpack.c.bf16 %v415, %v415
      %v457 = vpack.c.bf16 %v416, %v416
      %v458 = vpack.c.bf16 %v417, %v417
      %v459 = vpack.c.bf16 %v418, %v418
      %v460 = vpack.c.bf16 %v419, %v419
      %v461 = vpack.c.bf16 %v420, %v420
      %v462 = vpack.c.bf16 %v421, %v421
      %v463 = vpack.c.bf16 %v422, %v422
      %v464 = vpack.c.bf16 %v423, %v423
      %v465 = vpack.c.bf16 %v424, %v424
      %v466 = vpack.c.bf16 %v425, %v425
      %v467 = vpack.c.bf16 %v426, %v426
      %v468 = vpack.c.bf16 %v427, %v427
      %v469 = vpack.c.bf16 %v428, %v428
      %v470 = vpack.c.bf16 %v429, %v429
      %v471 = vpack.c.bf16 %v430, %v430
      %v472 = vpack.c.bf16 %v431, %v431
      %v473 = vpack.c.bf16 %v432, %v432
      %v474 = vpack.c.bf16 %v433, %v433
      %v475 = vpack.c.bf16 %v434, %v434
      %v476 = vpack.c.bf16 %v435, %v435
      %v477 = vpack.c.bf16 %v436, %v436
      %v478 = vpack.c.bf16 %v437, %v437
      %v479 = vpack.c.bf16 %v438, %v438
      %v480 = vpack.c.bf16 %v439, %v439
      %v481 = vpack.c.bf16 %v440, %v440
      %v514 = vunpack.c.l.b16 %v450
      %v515 = vunpack.c.l.b16 %v451
      %v516 = vunpack.c.l.b16 %v452
      %v517 = vunpack.c.l.b16 %v453
      %v518 = vunpack.c.l.b16 %v454
      %v519 = vunpack.c.l.b16 %v455
      %v520 = vunpack.c.l.b16 %v456
      %v521 = vunpack.c.l.b16 %v457
      %v522 = vunpack.c.l.b16 %v458
      %v523 = vunpack.c.l.b16 %v459
      %v524 = vunpack.c.l.b16 %v460
      %v525 = vunpack.c.l.b16 %v461
      %v526 = vunpack.c.l.b16 %v462
      %v527 = vunpack.c.l.b16 %v463
      %v528 = vunpack.c.l.b16 %v464
      %v529 = vunpack.c.l.b16 %v465
      %v530 = vunpack.c.l.b16 %v466
      %v531 = vunpack.c.l.b16 %v467
      %v532 = vunpack.c.l.b16 %v468
      %v533 = vunpack.c.l.b16 %v469
      %v534 = vunpack.c.l.b16 %v470
      %v535 = vunpack.c.l.b16 %v471
      %v536 = vunpack.c.l.b16 %v472
      %v537 = vunpack.c.l.b16 %v473
      %v538 = vunpack.c.l.b16 %v474
      %v539 = vunpack.c.l.b16 %v475
      %v540 = vunpack.c.l.b16 %v476
      %v541 = vunpack.c.l.b16 %v477
      %v542 = vunpack.c.l.b16 %v478
      %v543 = vunpack.c.l.b16 %v479
      %v544 = vunpack.c.l.b16 %v480
      %v545 = vunpack.c.l.b16 %v481
      %v546 = vpack.c.b16 %v515, %v514
      %v547 = vpack.c.b16 %v517, %v516
      %v548 = vpack.c.b16 %v519, %v518
      %v549 = vpack.c.b16 %v521, %v520
      %v550 = vpack.c.b16 %v523, %v522
      %v551 = vpack.c.b16 %v525, %v524
      %v552 = vpack.c.b16 %v527, %v526
      %v553 = vpack.c.b16 %v529, %v528
      %v554 = vpack.c.b16 %v531, %v530
      %v555 = vpack.c.b16 %v533, %v532
      %v556 = vpack.c.b16 %v535, %v534
      %v557 = vpack.c.b16 %v537, %v536
      %v558 = vpack.c.b16 %v539, %v538
      %v559 = vpack.c.b16 %v541, %v540
      %v560 = vpack.c.b16 %v543, %v542
      %v561 = vpack.c.b16 %v545, %v544
      %v563 = vshrl.u32 %v546, 16
      %v565 = vrot.slane %v563, 7
      %v566 = vshll.u32 %v546, 16
      %v568 = vor.u32 %v565, %v566
      %v570 = vshrl.u32 %v547, 16
      %v572 = vrot.slane %v570, 7
      %v573 = vshll.u32 %v547, 16
      %v575 = vor.u32 %v572, %v573
      %v577 = vshrl.u32 %v548, 16
      %v579 = vrot.slane %v577, 7
      %v580 = vshll.u32 %v548, 16
      %v582 = vor.u32 %v579, %v580
      %v584 = vshrl.u32 %v549, 16
      %v586 = vrot.slane %v584, 7
      %v587 = vshll.u32 %v549, 16
      %v589 = vor.u32 %v586, %v587
      %v591 = vshrl.u32 %v550, 16
      %v593 = vrot.slane %v591, 7
      %v594 = vshll.u32 %v550, 16
      %v596 = vor.u32 %v593, %v594
      %v598 = vshrl.u32 %v551, 16
      %v600 = vrot.slane %v598, 7
      %v601 = vshll.u32 %v551, 16
      %v603 = vor.u32 %v600, %v601
      %v605 = vshrl.u32 %v552, 16
      %v607 = vrot.slane %v605, 7
      %v608 = vshll.u32 %v552, 16
      %v610 = vor.u32 %v607, %v608
      %v612 = vshrl.u32 %v553, 16
      %v614 = vrot.slane %v612, 7
      %v615 = vshll.u32 %v553, 16
      %v617 = vor.u32 %v614, %v615
      %v619 = vshrl.u32 %v554, 16
      %v621 = vrot.slane %v619, 7
      %v622 = vshll.u32 %v554, 16
      %v624 = vor.u32 %v621, %v622
      %v626 = vshrl.u32 %v555, 16
      %v628 = vrot.slane %v626, 7
      %v629 = vshll.u32 %v555, 16
      %v631 = vor.u32 %v628, %v629
      %v633 = vshrl.u32 %v556, 16
      %v635 = vrot.slane %v633, 7
      %v636 = vshll.u32 %v556, 16
      %v638 = vor.u32 %v635, %v636
      %v640 = vshrl.u32 %v557, 16
      %v642 = vrot.slane %v640, 7
      %v643 = vshll.u32 %v557, 16
      %v645 = vor.u32 %v642, %v643
      %v647 = vshrl.u32 %v558, 16
      %v649 = vrot.slane %v647, 7
      %v650 = vshll.u32 %v558, 16
      %v652 = vor.u32 %v649, %v650
      %v654 = vshrl.u32 %v559, 16
      %v656 = vrot.slane %v654, 7
      %v657 = vshll.u32 %v559, 16
      %v659 = vor.u32 %v656, %v657
      %v661 = vshrl.u32 %v560, 16
      %v663 = vrot.slane %v661, 7
      %v664 = vshll.u32 %v560, 16
      %v666 = vor.u32 %v663, %v664
      %v668 = vshrl.u32 %v561, 16
      %v670 = vrot.slane %v668, 7
      %v671 = vshll.u32 %v561, 16
      %v673 = vor.u32 %v670, %v671
      %vm706 = vcmask 1040384
      %vm707 = vsmask.f32 256
      %vm708 = vmand %vm706, %vm707
      %v709 = vsel %vm708, 0, %v568
      %v710 = vsel %vm708, 0, %v575
      %v711 = vsel %vm708, 0, %v582
      %v712 = vsel %vm708, 0, %v589
      %v713 = vsel %vm708, 0, %v596
      %v714 = vsel %vm708, 0, %v603
      %v715 = vsel %vm708, 0, %v610
      %v716 = vsel %vm708, 0, %v617
      %v717 = vsel %vm708, 0, %v624
      %v718 = vsel %vm708, 0, %v631
      %v719 = vsel %vm708, 0, %v638
      %v720 = vsel %vm708, 0, %v645
      %v721 = vsel %vm708, 0, %v652
      %v722 = vsel %vm708, 0, %v659
      %v723 = vsel %vm708, 0, %v666
      %v724 = vsel %vm708, 0, %v673
      %v725 = vsel %vm708, %v565, 0
      %v726 = vsel %vm708, %v572, 0
      %v727 = vsel %vm708, %v579, 0
      %v728 = vsel %vm708, %v586, 0
      %v729 = vsel %vm708, %v593, 0
      %v730 = vsel %vm708, %v600, 0
      %v731 = vsel %vm708, %v607, 0
      %v732 = vsel %vm708, %v614, 0
      %v733 = vsel %vm708, %v621, 0
      %v734 = vsel %vm708, %v628, 0
      %v735 = vsel %vm708, %v635, 0
      %v736 = vsel %vm708, %v642, 0
      %v737 = vsel %vm708, %v649, 0
      %v738 = vsel %vm708, %v656, 0
      %v739 = vsel %vm708, %v663, 0
      %v740 = vsel %vm708, %v670, 0
      %v773 = vunpack.c.l.b16 %v709
      %v774 = vunpack.c.h.b16 %v709
      %v775 = vunpack.c.l.b16 %v725
      %v776 = vunpack.c.l.b16 %v710
      %v777 = vunpack.c.h.b16 %v710
      %v778 = vunpack.c.l.b16 %v726
      %v779 = vunpack.c.l.b16 %v711
      %v780 = vunpack.c.h.b16 %v711
      %v781 = vunpack.c.l.b16 %v727
      %v782 = vunpack.c.l.b16 %v712
      %v783 = vunpack.c.h.b16 %v712
      %v784 = vunpack.c.l.b16 %v728
      %v785 = vunpack.c.l.b16 %v713
      %v786 = vunpack.c.h.b16 %v713
      %v787 = vunpack.c.l.b16 %v729
      %v788 = vunpack.c.l.b16 %v714
      %v789 = vunpack.c.h.b16 %v714
      %v790 = vunpack.c.l.b16 %v730
      %v791 = vunpack.c.l.b16 %v715
      %v792 = vunpack.c.h.b16 %v715
      %v793 = vunpack.c.l.b16 %v731
      %v794 = vunpack.c.l.b16 %v716
      %v795 = vunpack.c.h.b16 %v716
      %v796 = vunpack.c.l.b16 %v732
      %v797 = vunpack.c.l.b16 %v717
      %v798 = vunpack.c.h.b16 %v717
      %v799 = vunpack.c.l.b16 %v733
      %v800 = vunpack.c.l.b16 %v718
      %v801 = vunpack.c.h.b16 %v718
      %v802 = vunpack.c.l.b16 %v734
      %v803 = vunpack.c.l.b16 %v719
      %v804 = vunpack.c.h.b16 %v719
      %v805 = vunpack.c.l.b16 %v735
      %v806 = vunpack.c.l.b16 %v720
      %v807 = vunpack.c.h.b16 %v720
      %v808 = vunpack.c.l.b16 %v736
      %v809 = vunpack.c.l.b16 %v721
      %v810 = vunpack.c.h.b16 %v721
      %v811 = vunpack.c.l.b16 %v737
      %v812 = vunpack.c.l.b16 %v722
      %v813 = vunpack.c.h.b16 %v722
      %v814 = vunpack.c.l.b16 %v738
      %v815 = vunpack.c.l.b16 %v723
      %v816 = vunpack.c.h.b16 %v723
      %v817 = vunpack.c.l.b16 %v739
      %v818 = vunpack.c.l.b16 %v724
      %v819 = vunpack.c.h.b16 %v724
      %v820 = vunpack.c.l.b16 %v740
      %v821 = vpack.c.b16 %v773, %v773
      %v822 = vpack.c.b16 %v774, %v774
      %v823 = vpack.c.b16 %v775, %v775
      %v824 = vpack.c.b16 %v776, %v776
      %v825 = vpack.c.b16 %v777, %v777
      %v826 = vpack.c.b16 %v778, %v778
      %v827 = vpack.c.b16 %v779, %v779
      %v828 = vpack.c.b16 %v780, %v780
      %v829 = vpack.c.b16 %v781, %v781
      %v830 = vpack.c.b16 %v782, %v782
      %v831 = vpack.c.b16 %v783, %v783
      %v832 = vpack.c.b16 %v784, %v784
      %v833 = vpack.c.b16 %v785, %v785
      %v834 = vpack.c.b16 %v786, %v786
      %v835 = vpack.c.b16 %v787, %v787
      %v836 = vpack.c.b16 %v788, %v788
      %v837 = vpack.c.b16 %v789, %v789
      %v838 = vpack.c.b16 %v790, %v790
      %v839 = vpack.c.b16 %v791, %v791
      %v840 = vpack.c.b16 %v792, %v792
      %v841 = vpack.c.b16 %v793, %v793
      %v842 = vpack.c.b16 %v794, %v794
      %v843 = vpack.c.b16 %v795, %v795
      %v844 = vpack.c.b16 %v796, %v796
      %v845 = vpack.c.b16 %v797, %v797
      %v846 = vpack.c.b16 %v798, %v798
      %v847 = vpack.c.b16 %v799, %v799
      %v848 = vpack.c.b16 %v800, %v800
      %v849 = vpack.c.b16 %v801, %v801
      %v850 = vpack.c.b16 %v802, %v802
      %v851 = vpack.c.b16 %v803, %v803
      %v852 = vpack.c.b16 %v804, %v804
      %v853 = vpack.c.b16 %v805, %v805
      %v854 = vpack.c.b16 %v806, %v806
      %v855 = vpack.c.b16 %v807, %v807
      %v856 = vpack.c.b16 %v808, %v808
      %v857 = vpack.c.b16 %v809, %v809
      %v858 = vpack.c.b16 %v810, %v810
      %v859 = vpack.c.b16 %v811, %v811
      %v860 = vpack.c.b16 %v812, %v812
      %v861 = vpack.c.b16 %v813, %v813
      %v862 = vpack.c.b16 %v814, %v814
      %v863 = vpack.c.b16 %v815, %v815
      %v864 = vpack.c.b16 %v816, %v816
      %v865 = vpack.c.b16 %v817, %v817
      %v866 = vpack.c.b16 %v818, %v818
      %v867 = vpack.c.b16 %v819, %v819
      %v868 = vpack.c.b16 %v820, %v820
      %917 = vst [vmem:[#allocation2 + $0xc] sm:$0xf] %v821
      %918 = vst [vmem:[#allocation2 + $0x10] sm:$0xf] %v822
      %919 = vst [vmem:[#allocation2 + $0x14] sm:$0xf] %v823
      %920 = vst [vmem:[#allocation2 + $0x18] sm:$0xf] %v824
      %921 = vst [vmem:[#allocation2 + $0x1c] sm:$0xf] %v825
      %922 = vst [vmem:[#allocation2 + $0x20] sm:$0xf] %v826
      %923 = vst [vmem:[#allocation2 + $0x24] sm:$0xf] %v827
      %924 = vst [vmem:[#allocation2 + $0x28] sm:$0xf] %v828
      %925 = vst [vmem:[#allocation2 + $0x2c] sm:$0xf] %v829
      %926 = vst [vmem:[#allocation2 + $0x30] sm:$0xf] %v830
      %927 = vst [vmem:[#allocation2 + $0x34] sm:$0xf] %v831
      %928 = vst [vmem:[#allocation2 + $0x38] sm:$0xf] %v832
      %929 = vst [vmem:[#allocation2 + $0x3c] sm:$0xf] %v833
      %930 = vst [vmem:[#allocation2 + $0x40] sm:$0xf] %v834
      %931 = vst [vmem:[#allocation2 + $0x44] sm:$0xf] %v835
      %932 = vst [vmem:[#allocation2 + $0x48] sm:$0xf] %v836
      %933 = vst [vmem:[#allocation2 + $0x4c] sm:$0xf] %v837
      %934 = vst [vmem:[#allocation2 + $0x50] sm:$0xf] %v838
      %935 = vst [vmem:[#allocation2 + $0x54] sm:$0xf] %v839
      %936 = vst [vmem:[#allocation2 + $0x58] sm:$0xf] %v840
      %937 = vst [vmem:[#allocation2 + $0x5c] sm:$0xf] %v841
      %938 = vst [vmem:[#allocation2 + $0x60] sm:$0xf] %v842
      %939 = vst [vmem:[#allocation2 + $0x64] sm:$0xf] %v843
      %940 = vst [vmem:[#allocation2 + $0x68] sm:$0xf] %v844
      %941 = vst [vmem:[#allocation2 + $0x6c] sm:$0xf] %v845
      %942 = vst [vmem:[#allocation2 + $0x70] sm:$0xf] %v846
      %943 = vst [vmem:[#allocation2 + $0x74] sm:$0xf] %v847
      %944 = vst [vmem:[#allocation2 + $0x78] sm:$0xf] %v848
      %945 = vst [vmem:[#allocation2 + $0x7c] sm:$0xf] %v849
      %946 = vst [vmem:[#allocation2 + $0x80] sm:$0xf] %v850
      %947 = vst [vmem:[#allocation2 + $0x84] sm:$0xf] %v851
      %948 = vst [vmem:[#allocation2 + $0x88] sm:$0xf] %v852
      %949 = vst [vmem:[#allocation2 + $0x8c] sm:$0xf] %v853
      %950 = vst [vmem:[#allocation2 + $0x90] sm:$0xf] %v854
      %951 = vst [vmem:[#allocation2 + $0x94] sm:$0xf] %v855
      %952 = vst [vmem:[#allocation2 + $0x98] sm:$0xf] %v856
      %953 = vst [vmem:[#allocation2 + $0x9c] sm:$0xf] %v857
      %954 = vst [vmem:[#allocation2 + $0xa0] sm:$0xf] %v858
      %955 = vst [vmem:[#allocation2 + $0xa4] sm:$0xf] %v859
      %956 = vst [vmem:[#allocation2 + $0xa8] sm:$0xf] %v860
      %957 = vst [vmem:[#allocation2 + $0xac] sm:$0xf] %v861
      %958 = vst [vmem:[#allocation2 + $0xb0] sm:$0xf] %v862
      %959 = vst [vmem:[#allocation2 + $0xb4] sm:$0xf] %v863
      %960 = vst [vmem:[#allocation2 + $0xb8] sm:$0xf] %v864
      %961 = vst [vmem:[#allocation2 + $0xbc] sm:$0xf] %v865
      %962 = vst [vmem:[#allocation2 + $0xc0] sm:$0xf] %v866
      %963 = vst [vmem:[#allocation2 + $0xc4] sm:$0xf] %v867
      %964 = vst [vmem:[#allocation2 + $0xc8] sm:$0xf] %v868
      %v965 = vld [vmem:[#allocation2] sm:$0xf]
      %v966 = vld [vmem:[#allocation2 + $0x4] sm:$0xf]
      %v967 = vld [vmem:[#allocation2 + $0x8] sm:$0xf]
      %v968 = vld [vmem:[#allocation2 + $0xc] sm:$0xf]
      %v969 = vld [vmem:[#allocation2 + $0x10] sm:$0xf]
      %v970 = vld [vmem:[#allocation2 + $0x14] sm:$0xf]
      %v971 = vld [vmem:[#allocation2 + $0x18] sm:$0xf]
      %v972 = vld [vmem:[#allocation2 + $0x1c] sm:$0xf]
      %v973 = vld [vmem:[#allocation2 + $0x20] sm:$0xf]
      %v974 = vld [vmem:[#allocation2 + $0x24] sm:$0xf]
      %v975 = vld [vmem:[#allocation2 + $0x28] sm:$0xf]
      %v976 = vld [vmem:[#allocation2 + $0x2c] sm:$0xf]
      %v977 = vld [vmem:[#allocation2 + $0x30] sm:$0xf]
      %v978 = vld [vmem:[#allocation2 + $0x34] sm:$0xf]
      %v979 = vld [vmem:[#allocation2 + $0x38] sm:$0xf]
      %v980 = vld [vmem:[#allocation2 + $0x3c] sm:$0xf]
      %v981 = vld [vmem:[#allocation2 + $0x40] sm:$0xf]
      %v982 = vld [vmem:[#allocation2 + $0x44] sm:$0xf]
      %v983 = vld [vmem:[#allocation2 + $0x48] sm:$0xf]
      %v984 = vld [vmem:[#allocation2 + $0x4c] sm:$0xf]
      %v985 = vld [vmem:[#allocation2 + $0x50] sm:$0xf]
      %v986 = vld [vmem:[#allocation2 + $0x54] sm:$0xf]
      %v987 = vld [vmem:[#allocation2 + $0x58] sm:$0xf]
      %v988 = vld [vmem:[#allocation2 + $0x5c] sm:$0xf]
      %v989 = vld [vmem:[#allocation2 + $0x60] sm:$0xf]
      %v990 = vld [vmem:[#allocation2 + $0x64] sm:$0xf]
      %v991 = vld [vmem:[#allocation2 + $0x68] sm:$0xf]
      %v992 = vld [vmem:[#allocation2 + $0x6c] sm:$0xf]
      %v993 = vld [vmem:[#allocation2 + $0x70] sm:$0xf]
      %v994 = vld [vmem:[#allocation2 + $0x74] sm:$0xf]
      %v995 = vld [vmem:[#allocation2 + $0x78] sm:$0xf]
      %v996 = vld [vmem:[#allocation2 + $0x7c] sm:$0xf]
      %v997 = vld [vmem:[#allocation2 + $0x80] sm:$0xf]
      %v998 = vld [vmem:[#allocation2 + $0x84] sm:$0xf]
      %v999 = vld [vmem:[#allocation2 + $0x88] sm:$0xf]
      %v1000 = vld [vmem:[#allocation2 + $0x8c] sm:$0xf]
      %v1001 = vld [vmem:[#allocation2 + $0x90] sm:$0xf]
      %v1002 = vld [vmem:[#allocation2 + $0x94] sm:$0xf]
      %v1003 = vld [vmem:[#allocation2 + $0x98] sm:$0xf]
      %v1004 = vld [vmem:[#allocation2 + $0x9c] sm:$0xf]
      %v1005 = vld [vmem:[#allocation2 + $0xa0] sm:$0xf]
      %v1006 = vld [vmem:[#allocation2 + $0xa4] sm:$0xf]
      %v1007 = vld [vmem:[#allocation2 + $0xa8] sm:$0xf]
      %v1008 = vld [vmem:[#allocation2 + $0xac] sm:$0xf]
      %v1009 = vld [vmem:[#allocation2 + $0xb0] sm:$0xf]
      %v1010 = vld [vmem:[#allocation2 + $0xb4] sm:$0xf]
      %v1011 = vld [vmem:[#allocation2 + $0xb8] sm:$0xf]
      %v1012 = vld [vmem:[#allocation2 + $0xbc] sm:$0xf]
      %v1013 = vld [vmem:[%s2] sm:$0xf]
      %v1014 = vld [vmem:[%s2 + $0x4] sm:$0xf]
      %v1015 = vld [vmem:[%s2 + $0x8] sm:$0xf]
      %v1016 = vld [vmem:[%s2 + $0xc] sm:$0xf]
      %v1017 = vld [vmem:[%s2 + $0x10] sm:$0xf]
      %v1018 = vld [vmem:[%s2 + $0x14] sm:$0xf]
      %v1019 = vld [vmem:[%s2 + $0x18] sm:$0xf]
      %v1020 = vld [vmem:[%s2 + $0x1c] sm:$0xf]
      %v1021 = vld [vmem:[%s2 + $0x20] sm:$0xf]
      %v1022 = vld [vmem:[%s2 + $0x24] sm:$0xf]
      %v1023 = vld [vmem:[%s2 + $0x28] sm:$0xf]
      %v1024 = vld [vmem:[%s2 + $0x2c] sm:$0xf]
      %v1025 = vld [vmem:[%s2 + $0x30] sm:$0xf]
      %v1026 = vld [vmem:[%s2 + $0x34] sm:$0xf]
      %v1027 = vld [vmem:[%s2 + $0x38] sm:$0xf]
      %v1028 = vld [vmem:[%s2 + $0x3c] sm:$0xf]
      %v1029 = vld [vmem:[#allocation2 + $0xc0] sm:$0x1]
      %s1030 = scalar_lea.vmem %s2, 64
      %v1031 = vld [vmem:[%s1030] sm:$0xf]
      %v1032 = vld [vmem:[%s1030 + $0x4] sm:$0xf]
      %v1033 = vld [vmem:[%s1030 + $0x8] sm:$0xf]
      %v1034 = vld [vmem:[%s1030 + $0xc] sm:$0xf]
      %v1035 = vld [vmem:[%s1030 + $0x10] sm:$0xf]
      %v1036 = vld [vmem:[%s1030 + $0x14] sm:$0xf]
      %v1037 = vld [vmem:[%s1030 + $0x18] sm:$0xf]
      %v1038 = vld [vmem:[%s1030 + $0x1c] sm:$0xf]
      %v1039 = vld [vmem:[%s1030 + $0x20] sm:$0xf]
      %v1040 = vld [vmem:[%s1030 + $0x24] sm:$0xf]
      %v1041 = vld [vmem:[%s1030 + $0x28] sm:$0xf]
      %v1042 = vld [vmem:[%s1030 + $0x2c] sm:$0xf]
      %v1043 = vld [vmem:[%s1030 + $0x30] sm:$0xf]
      %v1044 = vld [vmem:[%s1030 + $0x34] sm:$0xf]
      %v1045 = vld [vmem:[%s1030 + $0x38] sm:$0xf]
      %v1046 = vld [vmem:[%s1030 + $0x3c] sm:$0xf]
      %v1096 = vunpack.c.l.b16 %v965
      %v1097 = vunpack.c.l.b16 %v966
      %v1098 = vunpack.c.l.b16 %v967
      %v1099 = vunpack.c.l.b16 %v968
      %v1100 = vunpack.c.l.b16 %v969
      %v1101 = vunpack.c.l.b16 %v970
      %v1102 = vunpack.c.l.b16 %v971
      %v1103 = vunpack.c.l.b16 %v972
      %v1104 = vunpack.c.l.b16 %v973
      %v1105 = vunpack.c.l.b16 %v974
      %v1106 = vunpack.c.l.b16 %v975
      %v1107 = vunpack.c.l.b16 %v976
      %v1108 = vunpack.c.l.b16 %v977
      %v1109 = vunpack.c.l.b16 %v978
      %v1110 = vunpack.c.l.b16 %v979
      %v1111 = vunpack.c.l.b16 %v980
      %v1112 = vunpack.c.l.b16 %v981
      %v1113 = vunpack.c.l.b16 %v982
      %v1114 = vunpack.c.l.b16 %v983
      %v1115 = vunpack.c.l.b16 %v984
      %v1116 = vunpack.c.l.b16 %v985
      %v1117 = vunpack.c.l.b16 %v986
      %v1118 = vunpack.c.l.b16 %v987
      %v1119 = vunpack.c.l.b16 %v988
      %v1120 = vunpack.c.l.b16 %v989
      %v1121 = vunpack.c.l.b16 %v990
      %v1122 = vunpack.c.l.b16 %v991
      %v1123 = vunpack.c.l.b16 %v992
      %v1124 = vunpack.c.l.b16 %v993
      %v1125 = vunpack.c.l.b16 %v994
      %v1126 = vunpack.c.l.b16 %v995
      %v1127 = vunpack.c.l.b16 %v996
      %v1128 = vunpack.c.l.b16 %v997
      %v1129 = vunpack.c.l.b16 %v998
      %v1130 = vunpack.c.l.b16 %v999
      %v1131 = vunpack.c.l.b16 %v1000
      %v1132 = vunpack.c.l.b16 %v1001
      %v1133 = vunpack.c.l.b16 %v1002
      %v1134 = vunpack.c.l.b16 %v1003
      %v1135 = vunpack.c.l.b16 %v1004
      %v1136 = vunpack.c.l.b16 %v1005
      %v1137 = vunpack.c.l.b16 %v1006
      %v1138 = vunpack.c.l.b16 %v1007
      %v1139 = vunpack.c.l.b16 %v1008
      %v1140 = vunpack.c.l.b16 %v1009
      %v1141 = vunpack.c.l.b16 %v1010
      %v1142 = vunpack.c.l.b16 %v1011
      %v1143 = vunpack.c.l.b16 %v1012
      %v1144 = vunpack.c.l.b16 %v1029
      %v1145 = vpack.c.b16 %v1097, %v1096
      %v1146 = vpack.c.b16 %v1099, %v1098
      %v1147 = vpack.c.b16 %v1101, %v1100
      %v1148 = vpack.c.b16 %v1103, %v1102
      %v1149 = vpack.c.b16 %v1105, %v1104
      %v1150 = vpack.c.b16 %v1107, %v1106
      %v1151 = vpack.c.b16 %v1109, %v1108
      %v1152 = vpack.c.b16 %v1111, %v1110
      %v1153 = vpack.c.b16 %v1113, %v1112
      %v1154 = vpack.c.b16 %v1115, %v1114
      %v1155 = vpack.c.b16 %v1117, %v1116
      %v1156 = vpack.c.b16 %v1119, %v1118
      %v1157 = vpack.c.b16 %v1121, %v1120
      %v1158 = vpack.c.b16 %v1123, %v1122
      %v1159 = vpack.c.b16 %v1125, %v1124
      %v1160 = vpack.c.b16 %v1127, %v1126
      %v1161 = vpack.c.b16 %v1129, %v1128
      %v1162 = vpack.c.b16 %v1131, %v1130
      %v1163 = vpack.c.b16 %v1133, %v1132
      %v1164 = vpack.c.b16 %v1135, %v1134
      %v1165 = vpack.c.b16 %v1137, %v1136
      %v1166 = vpack.c.b16 %v1139, %v1138
      %v1167 = vpack.c.b16 %v1141, %v1140
      %v1168 = vpack.c.b16 %v1143, %v1142
      %v1169 = vpack.c.b16 %v1144, %v1144
      %vm1170 = vsmask.f32 7424
      %v1172 = vshrl.u32 %v1145, 16
      %v1174 = vshll.u32 %v1145, 16
      %v1176 = vrot.slane %v1174, 1
      %v1177 = vor.u32 %v1172, %v1176
      %v1179 = vshll.u32 %v1146, 16
      %v1181 = vrot.slane %v1179, 1
      %v1182 = vsel %vm1170, %v1177, %v1181
      %v1183 = vshrl.u32 %v1146, 16
      %v1185 = vor.u32 %v1183, %v1181
      %v1187 = vshll.u32 %v1147, 16
      %v1189 = vrot.slane %v1187, 1
      %v1190 = vsel %vm1170, %v1185, %v1189
      %v1191 = vshrl.u32 %v1147, 16
      %v1193 = vor.u32 %v1191, %v1189
      %v1195 = vshll.u32 %v1148, 16
      %v1197 = vrot.slane %v1195, 1
      %v1198 = vsel %vm1170, %v1193, %v1197
      %v1199 = vshrl.u32 %v1148, 16
      %v1201 = vor.u32 %v1199, %v1197
      %v1203 = vshll.u32 %v1149, 16
      %v1205 = vrot.slane %v1203, 1
      %v1206 = vsel %vm1170, %v1201, %v1205
      %v1207 = vshrl.u32 %v1149, 16
      %v1209 = vor.u32 %v1207, %v1205
      %v1211 = vshll.u32 %v1150, 16
      %v1213 = vrot.slane %v1211, 1
      %v1214 = vsel %vm1170, %v1209, %v1213
      %v1215 = vshrl.u32 %v1150, 16
      %v1217 = vor.u32 %v1215, %v1213
      %v1219 = vshll.u32 %v1151, 16
      %v1221 = vrot.slane %v1219, 1
      %v1222 = vsel %vm1170, %v1217, %v1221
      %v1223 = vshrl.u32 %v1151, 16
      %v1225 = vor.u32 %v1223, %v1221
      %v1227 = vshll.u32 %v1152, 16
      %v1229 = vrot.slane %v1227, 1
      %v1230 = vsel %vm1170, %v1225, %v1229
      %v1231 = vshrl.u32 %v1152, 16
      %v1233 = vor.u32 %v1231, %v1229
      %v1235 = vshll.u32 %v1153, 16
      %v1237 = vrot.slane %v1235, 1
      %v1238 = vsel %vm1170, %v1233, %v1237
      %v1239 = vshrl.u32 %v1153, 16
      %v1241 = vor.u32 %v1239, %v1237
      %v1243 = vshll.u32 %v1154, 16
      %v1245 = vrot.slane %v1243, 1
      %v1246 = vsel %vm1170, %v1241, %v1245
      %v1247 = vshrl.u32 %v1154, 16
      %v1249 = vor.u32 %v1247, %v1245
      %v1251 = vshll.u32 %v1155, 16
      %v1253 = vrot.slane %v1251, 1
      %v1254 = vsel %vm1170, %v1249, %v1253
      %v1255 = vshrl.u32 %v1155, 16
      %v1257 = vor.u32 %v1255, %v1253
      %v1259 = vshll.u32 %v1156, 16
      %v1261 = vrot.slane %v1259, 1
      %v1262 = vsel %vm1170, %v1257, %v1261
      %v1263 = vshrl.u32 %v1156, 16
      %v1265 = vor.u32 %v1263, %v1261
      %v1267 = vshll.u32 %v1157, 16
      %v1269 = vrot.slane %v1267, 1
      %v1270 = vsel %vm1170, %v1265, %v1269
      %v1271 = vshrl.u32 %v1157, 16
      %v1273 = vor.u32 %v1271, %v1269
      %v1275 = vshll.u32 %v1158, 16
      %v1277 = vrot.slane %v1275, 1
      %v1278 = vsel %vm1170, %v1273, %v1277
      %v1279 = vshrl.u32 %v1158, 16
      %v1281 = vor.u32 %v1279, %v1277
      %v1283 = vshll.u32 %v1159, 16
      %v1285 = vrot.slane %v1283, 1
      %v1286 = vsel %vm1170, %v1281, %v1285
      %v1287 = vshrl.u32 %v1159, 16
      %v1289 = vor.u32 %v1287, %v1285
      %v1291 = vshll.u32 %v1160, 16
      %v1293 = vrot.slane %v1291, 1
      %v1294 = vsel %vm1170, %v1289, %v1293
      %v1295 = vshrl.u32 %v1160, 16
      %v1297 = vor.u32 %v1295, %v1293
      %v1299 = vshll.u32 %v1161, 16
      %v1301 = vrot.slane %v1299, 1
      %v1302 = vsel %vm1170, %v1297, %v1301
      %v1303 = vshrl.u32 %v1161, 16
      %v1305 = vor.u32 %v1303, %v1301
      %v1307 = vshll.u32 %v1162, 16
      %v1309 = vrot.slane %v1307, 1
      %v1310 = vsel %vm1170, %v1305, %v1309
      %v1311 = vshrl.u32 %v1162, 16
      %v1313 = vor.u32 %v1311, %v1309
      %v1315 = vshll.u32 %v1163, 16
      %v1317 = vrot.slane %v1315, 1
      %v1318 = vsel %vm1170, %v1313, %v1317
      %v1319 = vshrl.u32 %v1163, 16
      %v1321 = vor.u32 %v1319, %v1317
      %v1323 = vshll.u32 %v1164, 16
      %v1325 = vrot.slane %v1323, 1
      %v1326 = vsel %vm1170, %v1321, %v1325
      %v1327 = vshrl.u32 %v1164, 16
      %v1329 = vor.u32 %v1327, %v1325
      %v1331 = vshll.u32 %v1165, 16
      %v1333 = vrot.slane %v1331, 1
      %v1334 = vsel %vm1170, %v1329, %v1333
      %v1335 = vshrl.u32 %v1165, 16
      %v1337 = vor.u32 %v1335, %v1333
      %v1339 = vshll.u32 %v1166, 16
      %v1341 = vrot.slane %v1339, 1
      %v1342 = vsel %vm1170, %v1337, %v1341
      %v1343 = vshrl.u32 %v1166, 16
      %v1345 = vor.u32 %v1343, %v1341
      %v1347 = vshll.u32 %v1167, 16
      %v1349 = vrot.slane %v1347, 1
      %v1350 = vsel %vm1170, %v1345, %v1349
      %v1351 = vshrl.u32 %v1167, 16
      %v1353 = vor.u32 %v1351, %v1349
      %v1355 = vshll.u32 %v1168, 16
      %v1357 = vrot.slane %v1355, 1
      %v1358 = vsel %vm1170, %v1353, %v1357
      %v1359 = vshrl.u32 %v1168, 16
      %v1361 = vor.u32 %v1359, %v1357
      %v1363 = vshll.u32 %v1169, 16
      %v1365 = vrot.slane %v1363, 1
      %v1366 = vsel %vm1170, %v1361, %v1365
      %v1407 = vunpack.c.l.b16 %v1031
      %v1408 = vunpack.c.l.b16 %v1032
      %v1409 = vunpack.c.l.b16 %v1033
      %v1410 = vunpack.c.l.b16 %v1034
      %v1411 = vunpack.c.l.b16 %v1035
      %v1412 = vunpack.c.l.b16 %v1036
      %v1413 = vunpack.c.l.b16 %v1037
      %v1414 = vunpack.c.l.b16 %v1038
      %v1415 = vunpack.c.l.b16 %v1039
      %v1416 = vunpack.c.l.b16 %v1040
      %v1417 = vunpack.c.l.b16 %v1041
      %v1418 = vunpack.c.l.b16 %v1042
      %v1419 = vunpack.c.l.b16 %v1043
      %v1420 = vunpack.c.l.b16 %v1044
      %v1421 = vunpack.c.l.b16 %v1045
      %v1422 = vunpack.c.l.b16 %v1046
      %v1423 = vpack.c.b16 %v1408, %v1407
      %v1424 = vpack.c.b16 %v1410, %v1409
      %v1425 = vpack.c.b16 %v1412, %v1411
      %v1426 = vpack.c.b16 %v1414, %v1413
      %v1427 = vpack.c.b16 %v1416, %v1415
      %v1428 = vpack.c.b16 %v1418, %v1417
      %v1429 = vpack.c.b16 %v1420, %v1419
      %v1430 = vpack.c.b16 %v1422, %v1421
      %1439 = vmatpush.bf16.msra.mxu0 %v1430
      %1440 = vmatpush.bf16.msra.mxu0 %v1429
      %1441 = vmatpush.bf16.msra.mxu0 %v1428
      %1442 = vmatpush.bf16.msra.mxu0 %v1427
      %1443 = vmatpush.bf16.msra.mxu0 %v1426
      %1444 = vmatpush.bf16.msra.mxu0 %v1425
      %1445 = vmatpush.bf16.msra.mxu0 %v1424
      %1446 = vmatpush.bf16.msra.mxu0 %v1423
      %1447 = vmatmul.bf16.gmra.mxu0 %v1182
      %v1448 = vpop.f32.mrf.mxu0
      %v1449 = vadd.f32 0.0, %v1448
      %v1450 = vpop.f32.mrf.mxu0
      %v1451 = vadd.f32 0.0, %v1450
      %1452 = vmatmul.bf16.gmra.mxu0 %v1190
      %v1453 = vpop.f32.mrf.mxu0
      %v1454 = vpop.f32.mrf.mxu0
      %v1455 = vadd.f32 0.0, %v1454
      %1456 = vmatmul.bf16.gmra.mxu0 %v1198
      %v1457 = vpop.f32.mrf.mxu0
      %v1458 = vadd.f32 0.0, %v1457
      %v1459 = vpop.f32.mrf.mxu0
      %1460 = vmatmul.bf16.gmra.mxu0 %v1206
      %v1461 = vpop.f32.mrf.mxu0
      %v1462 = vadd.f32 0.0, %v1461
      %v1463 = vpop.f32.mrf.mxu0
      %v1464 = vadd.f32 0.0, %v1463
      %1465 = vmatmul.bf16.gmra.mxu0 %v1214
      %v1466 = vpop.f32.mrf.mxu0
      %v1467 = vpop.f32.mrf.mxu0
      %v1468 = vadd.f32 0.0, %v1467
      %1469 = vmatmul.bf16.gmra.mxu0 %v1222
      %v1470 = vpop.f32.mrf.mxu0
      %v1471 = vadd.f32 0.0, %v1470
      %v1472 = vpop.f32.mrf.mxu0
      %1473 = vmatmul.bf16.gmra.mxu0 %v1230
      %v1474 = vpop.f32.mrf.mxu0
      %v1475 = vadd.f32 0.0, %v1474
      %v1476 = vpop.f32.mrf.mxu0
      %v1477 = vadd.f32 0.0, %v1476
      %1478 = vmatmul.bf16.gmra.mxu0 %v1238
      %v1479 = vpop.f32.mrf.mxu0
      %v1480 = vpop.f32.mrf.mxu0
      %v1481 = vadd.f32 0.0, %v1480
      %1482 = vmatmul.bf16.gmra.mxu0 %v1246
      %v1483 = vpop.f32.mrf.mxu0
      %v1484 = vadd.f32 0.0, %v1483
      %v1485 = vpop.f32.mrf.mxu0
      %1486 = vmatmul.bf16.gmra.mxu0 %v1254
      %v1487 = vpop.f32.mrf.mxu0
      %v1488 = vadd.f32 0.0, %v1487
      %v1489 = vpop.f32.mrf.mxu0
      %v1490 = vadd.f32 0.0, %v1489
      %1491 = vmatmul.bf16.gmra.mxu0 %v1262
      %v1492 = vpop.f32.mrf.mxu0
      %v1493 = vpop.f32.mrf.mxu0
      %v1494 = vadd.f32 0.0, %v1493
      %1495 = vmatmul.bf16.gmra.mxu0 %v1270
      %v1496 = vpop.f32.mrf.mxu0
      %v1497 = vadd.f32 0.0, %v1496
      %v1498 = vpop.f32.mrf.mxu0
      %1499 = vmatmul.bf16.gmra.mxu0 %v1278
      %v1500 = vpop.f32.mrf.mxu0
      %v1501 = vadd.f32 0.0, %v1500
      %v1502 = vpop.f32.mrf.mxu0
      %v1503 = vadd.f32 0.0, %v1502
      %1504 = vmatmul.bf16.gmra.mxu0 %v1286
      %v1505 = vpop.f32.mrf.mxu0
      %v1506 = vpop.f32.mrf.mxu0
      %v1507 = vadd.f32 0.0, %v1506
      %1508 = vmatmul.bf16.gmra.mxu0 %v1294
      %v1509 = vpop.f32.mrf.mxu0
      %v1510 = vadd.f32 0.0, %v1509
      %v1511 = vpop.f32.mrf.mxu0
      %1512 = vmatmul.bf16.gmra.mxu0 %v1302
      %v1513 = vpop.f32.mrf.mxu0
      %v1514 = vadd.f32 0.0, %v1513
      %v1515 = vpop.f32.mrf.mxu0
      %v1516 = vadd.f32 0.0, %v1515
      %1517 = vmatmul.bf16.gmra.mxu0 %v1310
      %v1518 = vpop.f32.mrf.mxu0
      %v1519 = vpop.f32.mrf.mxu0
      %v1520 = vadd.f32 0.0, %v1519
      %1521 = vmatmul.bf16.gmra.mxu0 %v1318
      %v1522 = vpop.f32.mrf.mxu0
      %v1523 = vadd.f32 0.0, %v1522
      %v1524 = vpop.f32.mrf.mxu0
      %1525 = vmatmul.bf16.gmra.mxu0 %v1326
      %v1526 = vpop.f32.mrf.mxu0
      %v1527 = vadd.f32 0.0, %v1526
      %v1528 = vpop.f32.mrf.mxu0
      %v1529 = vadd.f32 0.0, %v1528
      %1530 = vmatmul.bf16.gmra.mxu0 %v1334
      %v1531 = vpop.f32.mrf.mxu0
      %v1532 = vpop.f32.mrf.mxu0
      %v1533 = vadd.f32 0.0, %v1532
      %1534 = vmatmul.bf16.gmra.mxu0 %v1342
      %v1535 = vpop.f32.mrf.mxu0
      %v1536 = vadd.f32 0.0, %v1535
      %v1537 = vpop.f32.mrf.mxu0
      %1538 = vmatmul.bf16.gmra.mxu0 %v1350
      %v1539 = vpop.f32.mrf.mxu0
      %v1540 = vadd.f32 0.0, %v1539
      %v1541 = vpop.f32.mrf.mxu0
      %v1542 = vadd.f32 0.0, %v1541
      %1543 = vmatmul.bf16.gmra.mxu0 %v1358
      %v1544 = vpop.f32.mrf.mxu0
      %v1545 = vpop.f32.mrf.mxu0
      %v1546 = vadd.f32 0.0, %v1545
      %1547 = vmatmul.bf16.gmra.mxu0 %v1366
      %v1548 = vpop.f32.mrf.mxu0
      %v1549 = vadd.f32 0.0, %v1548
      %v1550 = vpop.f32.mrf.mxu0
      %1551 = vdwg.mxu0
      %v1592 = vunpack.c.l.b16 %v1013
      %v1593 = vunpack.c.l.b16 %v1014
      %v1594 = vunpack.c.l.b16 %v1015
      %v1595 = vunpack.c.l.b16 %v1016
      %v1596 = vunpack.c.l.b16 %v1017
      %v1597 = vunpack.c.l.b16 %v1018
      %v1598 = vunpack.c.l.b16 %v1019
      %v1599 = vunpack.c.l.b16 %v1020
      %v1600 = vunpack.c.l.b16 %v1021
      %v1601 = vunpack.c.l.b16 %v1022
      %v1602 = vunpack.c.l.b16 %v1023
      %v1603 = vunpack.c.l.b16 %v1024
      %v1604 = vunpack.c.l.b16 %v1025
      %v1605 = vunpack.c.l.b16 %v1026
      %v1606 = vunpack.c.l.b16 %v1027
      %v1607 = vunpack.c.l.b16 %v1028
      %v1608 = vpack.c.b16 %v1593, %v1592
      %v1609 = vpack.c.b16 %v1595, %v1594
      %v1610 = vpack.c.b16 %v1597, %v1596
      %v1611 = vpack.c.b16 %v1599, %v1598
      %v1612 = vpack.c.b16 %v1601, %v1600
      %v1613 = vpack.c.b16 %v1603, %v1602
      %v1614 = vpack.c.b16 %v1605, %v1604
      %v1615 = vpack.c.b16 %v1607, %v1606
      %1624 = vmatpush.bf16.msra.mxu0 %v1615
      %1625 = vmatpush.bf16.msra.mxu0 %v1614
      %1626 = vmatpush.bf16.msra.mxu0 %v1613
      %1627 = vmatpush.bf16.msra.mxu0 %v1612
      %1628 = vmatpush.bf16.msra.mxu0 %v1611
      %1629 = vmatpush.bf16.msra.mxu0 %v1610
      %1630 = vmatpush.bf16.msra.mxu0 %v1609
      %1631 = vmatpush.bf16.msra.mxu0 %v1608
      %1632 = vmatmul.bf16.gmra.mxu0 %v1145
      %v1633 = vpop.f32.mrf.mxu0
      %v1634 = vadd.f32 %v1449, %v1633
      %v1635 = vpop.f32.mrf.mxu0
      %v1636 = vadd.f32 %v1451, %v1635
      %1637 = vmatmul.bf16.gmra.mxu0 %v1146
      %v1638 = vpop.f32.mrf.mxu0
      %v1639 = vpop.f32.mrf.mxu0
      %v1640 = vadd.f32 %v1455, %v1639
      %1641 = vmatmul.bf16.gmra.mxu0 %v1147
      %v1642 = vpop.f32.mrf.mxu0
      %v1643 = vadd.f32 %v1458, %v1642
      %v1644 = vpop.f32.mrf.mxu0
      %1645 = vmatmul.bf16.gmra.mxu0 %v1148
      %v1646 = vpop.f32.mrf.mxu0
      %v1647 = vadd.f32 %v1462, %v1646
      %v1648 = vpop.f32.mrf.mxu0
      %v1649 = vadd.f32 %v1464, %v1648
      %1650 = vmatmul.bf16.gmra.mxu0 %v1149
      %v1651 = vpop.f32.mrf.mxu0
      %v1652 = vpop.f32.mrf.mxu0
      %v1653 = vadd.f32 %v1468, %v1652
      %1654 = vmatmul.bf16.gmra.mxu0 %v1150
      %v1655 = vpop.f32.mrf.mxu0
      %v1656 = vadd.f32 %v1471, %v1655
      %v1657 = vpop.f32.mrf.mxu0
      %1658 = vmatmul.bf16.gmra.mxu0 %v1151
      %v1659 = vpop.f32.mrf.mxu0
      %v1660 = vadd.f32 %v1475, %v1659
      %v1661 = vpop.f32.mrf.mxu0
      %v1662 = vadd.f32 %v1477, %v1661
      %1663 = vmatmul.bf16.gmra.mxu0 %v1152
      %v1664 = vpop.f32.mrf.mxu0
      %v1665 = vpop.f32.mrf.mxu0
      %v1666 = vadd.f32 %v1481, %v1665
      %1667 = vmatmul.bf16.gmra.mxu0 %v1153
      %v1668 = vpop.f32.mrf.mxu0
      %v1669 = vadd.f32 %v1484, %v1668
      %v1670 = vpop.f32.mrf.mxu0
      %1671 = vmatmul.bf16.gmra.mxu0 %v1154
      %v1672 = vpop.f32.mrf.mxu0
      %v1673 = vadd.f32 %v1488, %v1672
      %v1674 = vpop.f32.mrf.mxu0
      %v1675 = vadd.f32 %v1490, %v1674
      %1676 = vmatmul.bf16.gmra.mxu0 %v1155
      %v1677 = vpop.f32.mrf.mxu0
      %v1678 = vpop.f32.mrf.mxu0
      %v1679 = vadd.f32 %v1494, %v1678
      %1680 = vmatmul.bf16.gmra.mxu0 %v1156
      %v1681 = vpop.f32.mrf.mxu0
      %v1682 = vadd.f32 %v1497, %v1681
      %v1683 = vpop.f32.mrf.mxu0
      %1684 = vmatmul.bf16.gmra.mxu0 %v1157
      %v1685 = vpop.f32.mrf.mxu0
      %v1686 = vadd.f32 %v1501, %v1685
      %v1687 = vpop.f32.mrf.mxu0
      %v1688 = vadd.f32 %v1503, %v1687
      %1689 = vmatmul.bf16.gmra.mxu0 %v1158
      %v1690 = vpop.f32.mrf.mxu0
      %v1691 = vpop.f32.mrf.mxu0
      %v1692 = vadd.f32 %v1507, %v1691
      %1693 = vmatmul.bf16.gmra.mxu0 %v1159
      %v1694 = vpop.f32.mrf.mxu0
      %v1695 = vadd.f32 %v1510, %v1694
      %v1696 = vpop.f32.mrf.mxu0
      %1697 = vmatmul.bf16.gmra.mxu0 %v1160
      %v1698 = vpop.f32.mrf.mxu0
      %v1699 = vadd.f32 %v1514, %v1698
      %v1700 = vpop.f32.mrf.mxu0
      %v1701 = vadd.f32 %v1516, %v1700
      %1702 = vmatmul.bf16.gmra.mxu0 %v1161
      %v1703 = vpop.f32.mrf.mxu0
      %v1704 = vpop.f32.mrf.mxu0
      %v1705 = vadd.f32 %v1520, %v1704
      %1706 = vmatmul.bf16.gmra.mxu0 %v1162
      %v1707 = vpop.f32.mrf.mxu0
      %v1708 = vadd.f32 %v1523, %v1707
      %v1709 = vpop.f32.mrf.mxu0
      %1710 = vmatmul.bf16.gmra.mxu0 %v1163
      %v1711 = vpop.f32.mrf.mxu0
      %v1712 = vadd.f32 %v1527, %v1711
      %v1713 = vpop.f32.mrf.mxu0
      %v1714 = vadd.f32 %v1529, %v1713
      %1715 = vmatmul.bf16.gmra.mxu0 %v1164
      %v1716 = vpop.f32.mrf.mxu0
      %v1717 = vpop.f32.mrf.mxu0
      %v1718 = vadd.f32 %v1533, %v1717
      %1719 = vmatmul.bf16.gmra.mxu0 %v1165
      %v1720 = vpop.f32.mrf.mxu0
      %v1721 = vadd.f32 %v1536, %v1720
      %v1722 = vpop.f32.mrf.mxu0
      %1723 = vmatmul.bf16.gmra.mxu0 %v1166
      %v1724 = vpop.f32.mrf.mxu0
      %v1725 = vadd.f32 %v1540, %v1724
      %v1726 = vpop.f32.mrf.mxu0
      %v1727 = vadd.f32 %v1542, %v1726
      %1728 = vmatmul.bf16.gmra.mxu0 %v1167
      %v1729 = vpop.f32.mrf.mxu0
      %v1730 = vpop.f32.mrf.mxu0
      %v1731 = vadd.f32 %v1546, %v1730
      %1732 = vmatmul.bf16.gmra.mxu0 %v1168
      %v1733 = vpop.f32.mrf.mxu0
      %v1734 = vadd.f32 %v1549, %v1733
      %v1735 = vpop.f32.mrf.mxu0
      %1736 = vdwg.mxu0
      %v1737 = vld [vmem:[#allocation2] sm:$0xe]
      %s1738 = scalar_lea.vmem %s2, 128
      %v1739 = vld [vmem:[%s1738] sm:$0xf]
      %v1740 = vld [vmem:[%s1738 + $0x4] sm:$0xf]
      %v1741 = vld [vmem:[%s1738 + $0x8] sm:$0xf]
      %v1742 = vld [vmem:[%s1738 + $0xc] sm:$0xf]
      %v1743 = vld [vmem:[%s1738 + $0x10] sm:$0xf]
      %v1744 = vld [vmem:[%s1738 + $0x14] sm:$0xf]
      %v1745 = vld [vmem:[%s1738 + $0x18] sm:$0xf]
      %v1746 = vld [vmem:[%s1738 + $0x1c] sm:$0xf]
      %v1747 = vld [vmem:[%s1738 + $0x20] sm:$0xf]
      %v1748 = vld [vmem:[%s1738 + $0x24] sm:$0xf]
      %v1749 = vld [vmem:[%s1738 + $0x28] sm:$0xf]
      %v1750 = vld [vmem:[%s1738 + $0x2c] sm:$0xf]
      %v1751 = vld [vmem:[%s1738 + $0x30] sm:$0xf]
      %v1752 = vld [vmem:[%s1738 + $0x34] sm:$0xf]
      %v1753 = vld [vmem:[%s1738 + $0x38] sm:$0xf]
      %v1754 = vld [vmem:[%s1738 + $0x3c] sm:$0xf]
      %v1756 = vunpack.c.l.b16 %v1737
      %v1757 = vpack.c.b16 %v1097, %v1756
      %vm1758 = vcmask 1046528
      %v1759 = vrot.slane %v1757, 1
      %v1760 = vrot.slane %v1146, 1
      %v1761 = vsel %vm1758, %v1759, %v1760
      %v1762 = vrot.slane %v1147, 1
      %v1763 = vsel %vm1758, %v1760, %v1762
      %v1764 = vrot.slane %v1148, 1
      %v1765 = vsel %vm1758, %v1762, %v1764
      %v1766 = vrot.slane %v1149, 1
      %v1767 = vsel %vm1758, %v1764, %v1766
      %v1768 = vrot.slane %v1150, 1
      %v1769 = vsel %vm1758, %v1766, %v1768
      %v1770 = vrot.slane %v1151, 1
      %v1771 = vsel %vm1758, %v1768, %v1770
      %v1772 = vrot.slane %v1152, 1
      %v1773 = vsel %vm1758, %v1770, %v1772
      %v1774 = vrot.slane %v1153, 1
      %v1775 = vsel %vm1758, %v1772, %v1774
      %v1776 = vrot.slane %v1154, 1
      %v1777 = vsel %vm1758, %v1774, %v1776
      %v1778 = vrot.slane %v1155, 1
      %v1779 = vsel %vm1758, %v1776, %v1778
      %v1780 = vrot.slane %v1156, 1
      %v1781 = vsel %vm1758, %v1778, %v1780
      %v1782 = vrot.slane %v1157, 1
      %v1783 = vsel %vm1758, %v1780, %v1782
      %v1784 = vrot.slane %v1158, 1
      %v1785 = vsel %vm1758, %v1782, %v1784
      %v1786 = vrot.slane %v1159, 1
      %v1787 = vsel %vm1758, %v1784, %v1786
      %v1788 = vrot.slane %v1160, 1
      %v1789 = vsel %vm1758, %v1786, %v1788
      %v1790 = vrot.slane %v1161, 1
      %v1791 = vsel %vm1758, %v1788, %v1790
      %v1792 = vrot.slane %v1162, 1
      %v1793 = vsel %vm1758, %v1790, %v1792
      %v1794 = vrot.slane %v1163, 1
      %v1795 = vsel %vm1758, %v1792, %v1794
      %v1796 = vrot.slane %v1164, 1
      %v1797 = vsel %vm1758, %v1794, %v1796
      %v1798 = vrot.slane %v1165, 1
      %v1799 = vsel %vm1758, %v1796, %v1798
      %v1800 = vrot.slane %v1166, 1
      %v1801 = vsel %vm1758, %v1798, %v1800
      %v1802 = vrot.slane %v1167, 1
      %v1803 = vsel %vm1758, %v1800, %v1802
      %v1804 = vrot.slane %v1168, 1
      %v1805 = vsel %vm1758, %v1802, %v1804
      %v1806 = vrot.slane %v1169, 1
      %v1807 = vsel %vm1758, %v1804, %v1806
      %v1848 = vunpack.c.l.b16 %v1739
      %v1849 = vunpack.c.l.b16 %v1740
      %v1850 = vunpack.c.l.b16 %v1741
      %v1851 = vunpack.c.l.b16 %v1742
      %v1852 = vunpack.c.l.b16 %v1743
      %v1853 = vunpack.c.l.b16 %v1744
      %v1854 = vunpack.c.l.b16 %v1745
      %v1855 = vunpack.c.l.b16 %v1746
      %v1856 = vunpack.c.l.b16 %v1747
      %v1857 = vunpack.c.l.b16 %v1748
      %v1858 = vunpack.c.l.b16 %v1749
      %v1859 = vunpack.c.l.b16 %v1750
      %v1860 = vunpack.c.l.b16 %v1751
      %v1861 = vunpack.c.l.b16 %v1752
      %v1862 = vunpack.c.l.b16 %v1753
      %v1863 = vunpack.c.l.b16 %v1754
      %v1864 = vpack.c.b16 %v1849, %v1848
      %v1865 = vpack.c.b16 %v1851, %v1850
      %v1866 = vpack.c.b16 %v1853, %v1852
      %v1867 = vpack.c.b16 %v1855, %v1854
      %v1868 = vpack.c.b16 %v1857, %v1856
      %v1869 = vpack.c.b16 %v1859, %v1858
      %v1870 = vpack.c.b16 %v1861, %v1860
      %v1871 = vpack.c.b16 %v1863, %v1862
      %1880 = vmatpush.bf16.msra.mxu0 %v1871
      %1881 = vmatpush.bf16.msra.mxu0 %v1870
      %1882 = vmatpush.bf16.msra.mxu0 %v1869
      %1883 = vmatpush.bf16.msra.mxu0 %v1868
      %1884 = vmatpush.bf16.msra.mxu0 %v1867
      %1885 = vmatpush.bf16.msra.mxu0 %v1866
      %1886 = vmatpush.bf16.msra.mxu0 %v1865
      %1887 = vmatpush.bf16.msra.mxu0 %v1864
      %1888 = vmatmul.bf16.gmra.mxu0 %v1761
      %v1889 = vpop.f32.mrf.mxu0
      %v1890 = vadd.f32 0.0, %v1889
      %v1891 = vpop.f32.mrf.mxu0
      %v1892 = vadd.f32 0.0, %v1891
      %1893 = vmatmul.bf16.gmra.mxu0 %v1763
      %v1894 = vpop.f32.mrf.mxu0
      %v1895 = vpop.f32.mrf.mxu0
      %v1896 = vadd.f32 0.0, %v1895
      %1897 = vmatmul.bf16.gmra.mxu0 %v1765
      %v1898 = vpop.f32.mrf.mxu0
      %v1899 = vadd.f32 0.0, %v1898
      %v1900 = vpop.f32.mrf.mxu0
      %1901 = vmatmul.bf16.gmra.mxu0 %v1767
      %v1902 = vpop.f32.mrf.mxu0
      %v1903 = vadd.f32 0.0, %v1902
      %v1904 = vpop.f32.mrf.mxu0
      %v1905 = vadd.f32 0.0, %v1904
      %1906 = vmatmul.bf16.gmra.mxu0 %v1769
      %v1907 = vpop.f32.mrf.mxu0
      %v1908 = vpop.f32.mrf.mxu0
      %v1909 = vadd.f32 0.0, %v1908
      %1910 = vmatmul.bf16.gmra.mxu0 %v1771
      %v1911 = vpop.f32.mrf.mxu0
      %v1912 = vadd.f32 0.0, %v1911
      %v1913 = vpop.f32.mrf.mxu0
      %1914 = vmatmul.bf16.gmra.mxu0 %v1773
      %v1915 = vpop.f32.mrf.mxu0
      %v1916 = vadd.f32 0.0, %v1915
      %v1917 = vpop.f32.mrf.mxu0
      %v1918 = vadd.f32 0.0, %v1917
      %1919 = vmatmul.bf16.gmra.mxu0 %v1775
      %v1920 = vpop.f32.mrf.mxu0
      %v1921 = vpop.f32.mrf.mxu0
      %v1922 = vadd.f32 0.0, %v1921
      %1923 = vmatmul.bf16.gmra.mxu0 %v1777
      %v1924 = vpop.f32.mrf.mxu0
      %v1925 = vadd.f32 0.0, %v1924
      %v1926 = vpop.f32.mrf.mxu0
      %1927 = vmatmul.bf16.gmra.mxu0 %v1779
      %v1928 = vpop.f32.mrf.mxu0
      %v1929 = vadd.f32 0.0, %v1928
      %v1930 = vpop.f32.mrf.mxu0
      %v1931 = vadd.f32 0.0, %v1930
      %1932 = vmatmul.bf16.gmra.mxu0 %v1781
      %v1933 = vpop.f32.mrf.mxu0
      %v1934 = vpop.f32.mrf.mxu0
      %v1935 = vadd.f32 0.0, %v1934
      %1936 = vmatmul.bf16.gmra.mxu0 %v1783
      %v1937 = vpop.f32.mrf.mxu0
      %v1938 = vadd.f32 0.0, %v1937
      %v1939 = vpop.f32.mrf.mxu0
      %1940 = vmatmul.bf16.gmra.mxu0 %v1785
      %v1941 = vpop.f32.mrf.mxu0
      %v1942 = vadd.f32 0.0, %v1941
      %v1943 = vpop.f32.mrf.mxu0
      %v1944 = vadd.f32 0.0, %v1943
      %1945 = vmatmul.bf16.gmra.mxu0 %v1787
      %v1946 = vpop.f32.mrf.mxu0
      %v1947 = vpop.f32.mrf.mxu0
      %v1948 = vadd.f32 0.0, %v1947
      %1949 = vmatmul.bf16.gmra.mxu0 %v1789
      %v1950 = vpop.f32.mrf.mxu0
      %v1951 = vadd.f32 0.0, %v1950
      %v1952 = vpop.f32.mrf.mxu0
      %1953 = vmatmul.bf16.gmra.mxu0 %v1791
      %v1954 = vpop.f32.mrf.mxu0
      %v1955 = vadd.f32 0.0, %v1954
      %v1956 = vpop.f32.mrf.mxu0
      %v1957 = vadd.f32 0.0, %v1956
      %1958 = vmatmul.bf16.gmra.mxu0 %v1793
      %v1959 = vpop.f32.mrf.mxu0
      %v1960 = vpop.f32.mrf.mxu0
      %v1961 = vadd.f32 0.0, %v1960
      %1962 = vmatmul.bf16.gmra.mxu0 %v1795
      %v1963 = vpop.f32.mrf.mxu0
      %v1964 = vadd.f32 0.0, %v1963
      %v1965 = vpop.f32.mrf.mxu0
      %1966 = vmatmul.bf16.gmra.mxu0 %v1797
      %v1967 = vpop.f32.mrf.mxu0
      %v1968 = vadd.f32 0.0, %v1967
      %v1969 = vpop.f32.mrf.mxu0
      %v1970 = vadd.f32 0.0, %v1969
      %1971 = vmatmul.bf16.gmra.mxu0 %v1799
      %v1972 = vpop.f32.mrf.mxu0
      %v1973 = vpop.f32.mrf.mxu0
      %v1974 = vadd.f32 0.0, %v1973
      %1975 = vmatmul.bf16.gmra.mxu0 %v1801
      %v1976 = vpop.f32.mrf.mxu0
      %v1977 = vadd.f32 0.0, %v1976
      %v1978 = vpop.f32.mrf.mxu0
      %1979 = vmatmul.bf16.gmra.mxu0 %v1803
      %v1980 = vpop.f32.mrf.mxu0
      %v1981 = vadd.f32 0.0, %v1980
      %v1982 = vpop.f32.mrf.mxu0
      %v1983 = vadd.f32 0.0, %v1982
      %1984 = vmatmul.bf16.gmra.mxu0 %v1805
      %v1985 = vpop.f32.mrf.mxu0
      %v1986 = vpop.f32.mrf.mxu0
      %v1987 = vadd.f32 0.0, %v1986
      %1988 = vmatmul.bf16.gmra.mxu0 %v1807
      %v1989 = vpop.f32.mrf.mxu0
      %v1990 = vadd.f32 0.0, %v1989
      %v1991 = vpop.f32.mrf.mxu0
      %1992 = vdwg.mxu0
      %v1993 = vadd.f32 %v1634, %v1890
      %v1994 = vadd.f32 %v1636, %v1892
      %v1995 = vadd.f32 %v1640, %v1896
      %v1996 = vadd.f32 %v1643, %v1899
      %v1997 = vadd.f32 %v1647, %v1903
      %v1998 = vadd.f32 %v1649, %v1905
      %v1999 = vadd.f32 %v1653, %v1909
      %v2000 = vadd.f32 %v1656, %v1912
      %v2001 = vadd.f32 %v1660, %v1916
      %v2002 = vadd.f32 %v1662, %v1918
      %v2003 = vadd.f32 %v1666, %v1922
      %v2004 = vadd.f32 %v1669, %v1925
      %v2005 = vadd.f32 %v1673, %v1929
      %v2006 = vadd.f32 %v1675, %v1931
      %v2007 = vadd.f32 %v1679, %v1935
      %v2008 = vadd.f32 %v1682, %v1938
      %v2009 = vadd.f32 %v1686, %v1942
      %v2010 = vadd.f32 %v1688, %v1944
      %v2011 = vadd.f32 %v1692, %v1948
      %v2012 = vadd.f32 %v1695, %v1951
      %v2013 = vadd.f32 %v1699, %v1955
      %v2014 = vadd.f32 %v1701, %v1957
      %v2015 = vadd.f32 %v1705, %v1961
      %v2016 = vadd.f32 %v1708, %v1964
      %v2017 = vadd.f32 %v1712, %v1968
      %v2018 = vadd.f32 %v1714, %v1970
      %v2019 = vadd.f32 %v1718, %v1974
      %v2020 = vadd.f32 %v1721, %v1977
      %v2021 = vadd.f32 %v1725, %v1981
      %v2022 = vadd.f32 %v1727, %v1983
      %v2023 = vadd.f32 %v1731, %v1987
      %v2024 = vadd.f32 %v1734, %v1990
      %v2025 = vld [vmem:[#allocation2 + $0xc] sm:$0xf]
      %v2026 = vld [vmem:[#allocation2 + $0x10] sm:$0xf]
      %v2027 = vld [vmem:[#allocation2 + $0x14] sm:$0xf]
      %v2028 = vld [vmem:[#allocation2 + $0x18] sm:$0xf]
      %v2029 = vld [vmem:[#allocation2 + $0x1c] sm:$0xf]
      %v2030 = vld [vmem:[#allocation2 + $0x20] sm:$0xf]
      %v2031 = vld [vmem:[#allocation2 + $0x24] sm:$0xf]
      %v2032 = vld [vmem:[#allocation2 + $0x28] sm:$0xf]
      %v2033 = vld [vmem:[#allocation2 + $0x2c] sm:$0xf]
      %v2034 = vld [vmem:[#allocation2 + $0x30] sm:$0xf]
      %v2035 = vld [vmem:[#allocation2 + $0x34] sm:$0xf]
      %v2036 = vld [vmem:[#allocation2 + $0x38] sm:$0xf]
      %v2037 = vld [vmem:[#allocation2 + $0x3c] sm:$0xf]
      %v2038 = vld [vmem:[#allocation2 + $0x40] sm:$0xf]
      %v2039 = vld [vmem:[#allocation2 + $0x44] sm:$0xf]
      %v2040 = vld [vmem:[#allocation2 + $0x48] sm:$0xf]
      %v2041 = vld [vmem:[#allocation2 + $0x4c] sm:$0xf]
      %v2042 = vld [vmem:[#allocation2 + $0x50] sm:$0xf]
      %v2043 = vld [vmem:[#allocation2 + $0x54] sm:$0xf]
      %v2044 = vld [vmem:[#allocation2 + $0x58] sm:$0xf]
      %v2045 = vld [vmem:[#allocation2 + $0x5c] sm:$0xf]
      %v2046 = vld [vmem:[#allocation2 + $0x60] sm:$0xf]
      %v2047 = vld [vmem:[#allocation2 + $0x64] sm:$0xf]
      %v2048 = vld [vmem:[#allocation2 + $0x68] sm:$0xf]
      %v2049 = vld [vmem:[#allocation2 + $0x6c] sm:$0xf]
      %v2050 = vld [vmem:[#allocation2 + $0x70] sm:$0xf]
      %v2051 = vld [vmem:[#allocation2 + $0x74] sm:$0xf]
      %v2052 = vld [vmem:[#allocation2 + $0x78] sm:$0xf]
      %v2053 = vld [vmem:[#allocation2 + $0x7c] sm:$0xf]
      %v2054 = vld [vmem:[#allocation2 + $0x80] sm:$0xf]
      %v2055 = vld [vmem:[#allocation2 + $0x84] sm:$0xf]
      %v2056 = vld [vmem:[#allocation2 + $0x88] sm:$0xf]
      %v2057 = vld [vmem:[#allocation2 + $0x8c] sm:$0xf]
      %v2058 = vld [vmem:[#allocation2 + $0x90] sm:$0xf]
      %v2059 = vld [vmem:[#allocation2 + $0x94] sm:$0xf]
      %v2060 = vld [vmem:[#allocation2 + $0x98] sm:$0xf]
      %v2061 = vld [vmem:[#allocation2 + $0x9c] sm:$0xf]
      %v2062 = vld [vmem:[#allocation2 + $0xa0] sm:$0xf]
      %v2063 = vld [vmem:[#allocation2 + $0xa4] sm:$0xf]
      %v2064 = vld [vmem:[#allocation2 + $0xa8] sm:$0xf]
      %v2065 = vld [vmem:[#allocation2 + $0xac] sm:$0xf]
      %v2066 = vld [vmem:[#allocation2 + $0xb0] sm:$0xf]
      %v2067 = vld [vmem:[#allocation2 + $0xb4] sm:$0xf]
      %v2068 = vld [vmem:[#allocation2 + $0xb8] sm:$0xf]
      %v2069 = vld [vmem:[#allocation2 + $0xbc] sm:$0xf]
      %v2070 = vld [vmem:[#allocation2 + $0xc0] sm:$0xf]
      %v2071 = vld [vmem:[#allocation2 + $0xc4] sm:$0xf]
      %v2072 = vld [vmem:[#allocation2 + $0xc8] sm:$0xf]
      %s2073 = scalar_lea.vmem %s2, 192
      %v2074 = vld [vmem:[%s2073] sm:$0xf]
      %v2075 = vld [vmem:[%s2073 + $0x4] sm:$0xf]
      %v2076 = vld [vmem:[%s2073 + $0x8] sm:$0xf]
      %v2077 = vld [vmem:[%s2073 + $0xc] sm:$0xf]
      %v2078 = vld [vmem:[%s2073 + $0x10] sm:$0xf]
      %v2079 = vld [vmem:[%s2073 + $0x14] sm:$0xf]
      %v2080 = vld [vmem:[%s2073 + $0x18] sm:$0xf]
      %v2081 = vld [vmem:[%s2073 + $0x1c] sm:$0xf]
      %v2082 = vld [vmem:[%s2073 + $0x20] sm:$0xf]
      %v2083 = vld [vmem:[%s2073 + $0x24] sm:$0xf]
      %v2084 = vld [vmem:[%s2073 + $0x28] sm:$0xf]
      %v2085 = vld [vmem:[%s2073 + $0x2c] sm:$0xf]
      %v2086 = vld [vmem:[%s2073 + $0x30] sm:$0xf]
      %v2087 = vld [vmem:[%s2073 + $0x34] sm:$0xf]
      %v2088 = vld [vmem:[%s2073 + $0x38] sm:$0xf]
      %v2089 = vld [vmem:[%s2073 + $0x3c] sm:$0xf]
      %v2138 = vunpack.c.l.b16 %v2025
      %v2139 = vunpack.c.l.b16 %v2026
      %v2140 = vunpack.c.l.b16 %v2027
      %v2141 = vunpack.c.l.b16 %v2028
      %v2142 = vunpack.c.l.b16 %v2029
      %v2143 = vunpack.c.l.b16 %v2030
      %v2144 = vunpack.c.l.b16 %v2031
      %v2145 = vunpack.c.l.b16 %v2032
      %v2146 = vunpack.c.l.b16 %v2033
      %v2147 = vunpack.c.l.b16 %v2034
      %v2148 = vunpack.c.l.b16 %v2035
      %v2149 = vunpack.c.l.b16 %v2036
      %v2150 = vunpack.c.l.b16 %v2037
      %v2151 = vunpack.c.l.b16 %v2038
      %v2152 = vunpack.c.l.b16 %v2039
      %v2153 = vunpack.c.l.b16 %v2040
      %v2154 = vunpack.c.l.b16 %v2041
      %v2155 = vunpack.c.l.b16 %v2042
      %v2156 = vunpack.c.l.b16 %v2043
      %v2157 = vunpack.c.l.b16 %v2044
      %v2158 = vunpack.c.l.b16 %v2045
      %v2159 = vunpack.c.l.b16 %v2046
      %v2160 = vunpack.c.l.b16 %v2047
      %v2161 = vunpack.c.l.b16 %v2048
      %v2162 = vunpack.c.l.b16 %v2049
      %v2163 = vunpack.c.l.b16 %v2050
      %v2164 = vunpack.c.l.b16 %v2051
      %v2165 = vunpack.c.l.b16 %v2052
      %v2166 = vunpack.c.l.b16 %v2053
      %v2167 = vunpack.c.l.b16 %v2054
      %v2168 = vunpack.c.l.b16 %v2055
      %v2169 = vunpack.c.l.b16 %v2056
      %v2170 = vunpack.c.l.b16 %v2057
      %v2171 = vunpack.c.l.b16 %v2058
      %v2172 = vunpack.c.l.b16 %v2059
      %v2173 = vunpack.c.l.b16 %v2060
      %v2174 = vunpack.c.l.b16 %v2061
      %v2175 = vunpack.c.l.b16 %v2062
      %v2176 = vunpack.c.l.b16 %v2063
      %v2177 = vunpack.c.l.b16 %v2064
      %v2178 = vunpack.c.l.b16 %v2065
      %v2179 = vunpack.c.l.b16 %v2066
      %v2180 = vunpack.c.l.b16 %v2067
      %v2181 = vunpack.c.l.b16 %v2068
      %v2182 = vunpack.c.l.b16 %v2069
      %v2183 = vunpack.c.l.b16 %v2070
      %v2184 = vunpack.c.l.b16 %v2071
      %v2185 = vunpack.c.l.b16 %v2072
      %v2186 = vpack.c.b16 %v2139, %v2138
      %v2187 = vpack.c.b16 %v2141, %v2140
      %v2188 = vpack.c.b16 %v2143, %v2142
      %v2189 = vpack.c.b16 %v2145, %v2144
      %v2190 = vpack.c.b16 %v2147, %v2146
      %v2191 = vpack.c.b16 %v2149, %v2148
      %v2192 = vpack.c.b16 %v2151, %v2150
      %v2193 = vpack.c.b16 %v2153, %v2152
      %v2194 = vpack.c.b16 %v2155, %v2154
      %v2195 = vpack.c.b16 %v2157, %v2156
      %v2196 = vpack.c.b16 %v2159, %v2158
      %v2197 = vpack.c.b16 %v2161, %v2160
      %v2198 = vpack.c.b16 %v2163, %v2162
      %v2199 = vpack.c.b16 %v2165, %v2164
      %v2200 = vpack.c.b16 %v2167, %v2166
      %v2201 = vpack.c.b16 %v2169, %v2168
      %v2202 = vpack.c.b16 %v2171, %v2170
      %v2203 = vpack.c.b16 %v2173, %v2172
      %v2204 = vpack.c.b16 %v2175, %v2174
      %v2205 = vpack.c.b16 %v2177, %v2176
      %v2206 = vpack.c.b16 %v2179, %v2178
      %v2207 = vpack.c.b16 %v2181, %v2180
      %v2208 = vpack.c.b16 %v2183, %v2182
      %v2209 = vpack.c.b16 %v2185, %v2184
      %v2250 = vunpack.c.l.b16 %v2074
      %v2251 = vunpack.c.l.b16 %v2075
      %v2252 = vunpack.c.l.b16 %v2076
      %v2253 = vunpack.c.l.b16 %v2077
      %v2254 = vunpack.c.l.b16 %v2078
      %v2255 = vunpack.c.l.b16 %v2079
      %v2256 = vunpack.c.l.b16 %v2080
      %v2257 = vunpack.c.l.b16 %v2081
      %v2258 = vunpack.c.l.b16 %v2082
      %v2259 = vunpack.c.l.b16 %v2083
      %v2260 = vunpack.c.l.b16 %v2084
      %v2261 = vunpack.c.l.b16 %v2085
      %v2262 = vunpack.c.l.b16 %v2086
      %v2263 = vunpack.c.l.b16 %v2087
      %v2264 = vunpack.c.l.b16 %v2088
      %v2265 = vunpack.c.l.b16 %v2089
      %v2266 = vpack.c.b16 %v2251, %v2250
      %v2267 = vpack.c.b16 %v2253, %v2252
      %v2268 = vpack.c.b16 %v2255, %v2254
      %v2269 = vpack.c.b16 %v2257, %v2256
      %v2270 = vpack.c.b16 %v2259, %v2258
      %v2271 = vpack.c.b16 %v2261, %v2260
      %v2272 = vpack.c.b16 %v2263, %v2262
      %v2273 = vpack.c.b16 %v2265, %v2264
      %2282 = vmatpush.bf16.msra.mxu0 %v2273
      %2283 = vmatpush.bf16.msra.mxu0 %v2272
      %2284 = vmatpush.bf16.msra.mxu0 %v2271
      %2285 = vmatpush.bf16.msra.mxu0 %v2270
      %2286 = vmatpush.bf16.msra.mxu0 %v2269
      %2287 = vmatpush.bf16.msra.mxu0 %v2268
      %2288 = vmatpush.bf16.msra.mxu0 %v2267
      %2289 = vmatpush.bf16.msra.mxu0 %v2266
      %2290 = vmatmul.bf16.gmra.mxu0 %v2186
      %v2291 = vpop.f32.mrf.mxu0
      %v2292 = vadd.f32 0.0, %v2291
      %v2293 = vpop.f32.mrf.mxu0
      %v2294 = vadd.f32 0.0, %v2293
      %2295 = vmatmul.bf16.gmra.mxu0 %v2187
      %v2296 = vpop.f32.mrf.mxu0
      %v2297 = vpop.f32.mrf.mxu0
      %v2298 = vadd.f32 0.0, %v2297
      %2299 = vmatmul.bf16.gmra.mxu0 %v2188
      %v2300 = vpop.f32.mrf.mxu0
      %v2301 = vadd.f32 0.0, %v2300
      %v2302 = vpop.f32.mrf.mxu0
      %2303 = vmatmul.bf16.gmra.mxu0 %v2189
      %v2304 = vpop.f32.mrf.mxu0
      %v2305 = vadd.f32 0.0, %v2304
      %v2306 = vpop.f32.mrf.mxu0
      %v2307 = vadd.f32 0.0, %v2306
      %2308 = vmatmul.bf16.gmra.mxu0 %v2190
      %v2309 = vpop.f32.mrf.mxu0
      %v2310 = vpop.f32.mrf.mxu0
      %v2311 = vadd.f32 0.0, %v2310
      %2312 = vmatmul.bf16.gmra.mxu0 %v2191
      %v2313 = vpop.f32.mrf.mxu0
      %v2314 = vadd.f32 0.0, %v2313
      %v2315 = vpop.f32.mrf.mxu0
      %2316 = vmatmul.bf16.gmra.mxu0 %v2192
      %v2317 = vpop.f32.mrf.mxu0
      %v2318 = vadd.f32 0.0, %v2317
      %v2319 = vpop.f32.mrf.mxu0
      %v2320 = vadd.f32 0.0, %v2319
      %2321 = vmatmul.bf16.gmra.mxu0 %v2193
      %v2322 = vpop.f32.mrf.mxu0
      %v2323 = vpop.f32.mrf.mxu0
      %v2324 = vadd.f32 0.0, %v2323
      %2325 = vmatmul.bf16.gmra.mxu0 %v2194
      %v2326 = vpop.f32.mrf.mxu0
      %v2327 = vadd.f32 0.0, %v2326
      %v2328 = vpop.f32.mrf.mxu0
      %2329 = vmatmul.bf16.gmra.mxu0 %v2195
      %v2330 = vpop.f32.mrf.mxu0
      %v2331 = vadd.f32 0.0, %v2330
      %v2332 = vpop.f32.mrf.mxu0
      %v2333 = vadd.f32 0.0, %v2332
      %2334 = vmatmul.bf16.gmra.mxu0 %v2196
      %v2335 = vpop.f32.mrf.mxu0
      %v2336 = vpop.f32.mrf.mxu0
      %v2337 = vadd.f32 0.0, %v2336
      %2338 = vmatmul.bf16.gmra.mxu0 %v2197
      %v2339 = vpop.f32.mrf.mxu0
      %v2340 = vadd.f32 0.0, %v2339
      %v2341 = vpop.f32.mrf.mxu0
      %2342 = vmatmul.bf16.gmra.mxu0 %v2198
      %v2343 = vpop.f32.mrf.mxu0
      %v2344 = vadd.f32 0.0, %v2343
      %v2345 = vpop.f32.mrf.mxu0
      %v2346 = vadd.f32 0.0, %v2345
      %2347 = vmatmul.bf16.gmra.mxu0 %v2199
      %v2348 = vpop.f32.mrf.mxu0
      %v2349 = vpop.f32.mrf.mxu0
      %v2350 = vadd.f32 0.0, %v2349
      %2351 = vmatmul.bf16.gmra.mxu0 %v2200
      %v2352 = vpop.f32.mrf.mxu0
      %v2353 = vadd.f32 0.0, %v2352
      %v2354 = vpop.f32.mrf.mxu0
      %2355 = vmatmul.bf16.gmra.mxu0 %v2201
      %v2356 = vpop.f32.mrf.mxu0
      %v2357 = vadd.f32 0.0, %v2356
      %v2358 = vpop.f32.mrf.mxu0
      %v2359 = vadd.f32 0.0, %v2358
      %2360 = vmatmul.bf16.gmra.mxu0 %v2202
      %v2361 = vpop.f32.mrf.mxu0
      %v2362 = vpop.f32.mrf.mxu0
      %v2363 = vadd.f32 0.0, %v2362
      %2364 = vmatmul.bf16.gmra.mxu0 %v2203
      %v2365 = vpop.f32.mrf.mxu0
      %v2366 = vadd.f32 0.0, %v2365
      %v2367 = vpop.f32.mrf.mxu0
      %2368 = vmatmul.bf16.gmra.mxu0 %v2204
      %v2369 = vpop.f32.mrf.mxu0
      %v2370 = vadd.f32 0.0, %v2369
      %v2371 = vpop.f32.mrf.mxu0
      %v2372 = vadd.f32 0.0, %v2371
      %2373 = vmatmul.bf16.gmra.mxu0 %v2205
      %v2374 = vpop.f32.mrf.mxu0
      %v2375 = vpop.f32.mrf.mxu0
      %v2376 = vadd.f32 0.0, %v2375
      %2377 = vmatmul.bf16.gmra.mxu0 %v2206
      %v2378 = vpop.f32.mrf.mxu0
      %v2379 = vadd.f32 0.0, %v2378
      %v2380 = vpop.f32.mrf.mxu0
      %2381 = vmatmul.bf16.gmra.mxu0 %v2207
      %v2382 = vpop.f32.mrf.mxu0
      %v2383 = vadd.f32 0.0, %v2382
      %v2384 = vpop.f32.mrf.mxu0
      %v2385 = vadd.f32 0.0, %v2384
      %2386 = vmatmul.bf16.gmra.mxu0 %v2208
      %v2387 = vpop.f32.mrf.mxu0
      %v2388 = vpop.f32.mrf.mxu0
      %v2389 = vadd.f32 0.0, %v2388
      %2390 = vmatmul.bf16.gmra.mxu0 %v2209
      %v2391 = vpop.f32.mrf.mxu0
      %v2392 = vadd.f32 0.0, %v2391
      %v2393 = vpop.f32.mrf.mxu0
      %2394 = vdwg.mxu0
      %v2395 = vadd.f32 %v1993, %v2292
      %v2396 = vadd.f32 %v1994, %v2294
      %v2397 = vadd.f32 %v1995, %v2298
      %v2398 = vadd.f32 %v1996, %v2301
      %v2399 = vadd.f32 %v1997, %v2305
      %v2400 = vadd.f32 %v1998, %v2307
      %v2401 = vadd.f32 %v1999, %v2311
      %v2402 = vadd.f32 %v2000, %v2314
      %v2403 = vadd.f32 %v2001, %v2318
      %v2404 = vadd.f32 %v2002, %v2320
      %v2405 = vadd.f32 %v2003, %v2324
      %v2406 = vadd.f32 %v2004, %v2327
      %v2407 = vadd.f32 %v2005, %v2331
      %v2408 = vadd.f32 %v2006, %v2333
      %v2409 = vadd.f32 %v2007, %v2337
      %v2410 = vadd.f32 %v2008, %v2340
      %v2411 = vadd.f32 %v2009, %v2344
      %v2412 = vadd.f32 %v2010, %v2346
      %v2413 = vadd.f32 %v2011, %v2350
      %v2414 = vadd.f32 %v2012, %v2353
      %v2415 = vadd.f32 %v2013, %v2357
      %v2416 = vadd.f32 %v2014, %v2359
      %v2417 = vadd.f32 %v2015, %v2363
      %v2418 = vadd.f32 %v2016, %v2366
      %v2419 = vadd.f32 %v2017, %v2370
      %v2420 = vadd.f32 %v2018, %v2372
      %v2421 = vadd.f32 %v2019, %v2376
      %v2422 = vadd.f32 %v2020, %v2379
      %v2423 = vadd.f32 %v2021, %v2383
      %v2424 = vadd.f32 %v2022, %v2385
      %v2425 = vadd.f32 %v2023, %v2389
      %v2426 = vadd.f32 %v2024, %v2392
      %v2427 = vld [vmem:[#allocation2 + $0xc] sm:$0xf]
      %v2428 = vld [vmem:[#allocation2 + $0x10] sm:$0xf]
      %v2429 = vld [vmem:[#allocation2 + $0x14] sm:$0xf]
      %v2430 = vld [vmem:[#allocation2 + $0x18] sm:$0xf]
      %v2431 = vld [vmem:[#allocation2 + $0x1c] sm:$0xf]
      %v2432 = vld [vmem:[#allocation2 + $0x20] sm:$0xf]
      %v2433 = vld [vmem:[#allocation2 + $0x24] sm:$0xf]
      %v2434 = vld [vmem:[#allocation2 + $0x28] sm:$0xf]
      %v2435 = vld [vmem:[#allocation2 + $0x2c] sm:$0xf]
      %v2436 = vld [vmem:[#allocation2 + $0x30] sm:$0xf]
      %v2437 = vld [vmem:[#allocation2 + $0x34] sm:$0xf]
      %v2438 = vld [vmem:[#allocation2 + $0x38] sm:$0xf]
      %v2439 = vld [vmem:[#allocation2 + $0x3c] sm:$0xf]
      %v2440 = vld [vmem:[#allocation2 + $0x40] sm:$0xf]
      %v2441 = vld [vmem:[#allocation2 + $0x44] sm:$0xf]
      %v2442 = vld [vmem:[#allocation2 + $0x48] sm:$0xf]
      %v2443 = vld [vmem:[#allocation2 + $0x4c] sm:$0xf]
      %v2444 = vld [vmem:[#allocation2 + $0x50] sm:$0xf]
      %v2445 = vld [vmem:[#allocation2 + $0x54] sm:$0xf]
      %v2446 = vld [vmem:[#allocation2 + $0x58] sm:$0xf]
      %v2447 = vld [vmem:[#allocation2 + $0x5c] sm:$0xf]
      %v2448 = vld [vmem:[#allocation2 + $0x60] sm:$0xf]
      %v2449 = vld [vmem:[#allocation2 + $0x64] sm:$0xf]
      %v2450 = vld [vmem:[#allocation2 + $0x68] sm:$0xf]
      %v2451 = vld [vmem:[#allocation2 + $0x6c] sm:$0xf]
      %v2452 = vld [vmem:[#allocation2 + $0x70] sm:$0xf]
      %v2453 = vld [vmem:[#allocation2 + $0x74] sm:$0xf]
      %v2454 = vld [vmem:[#allocation2 + $0x78] sm:$0xf]
      %v2455 = vld [vmem:[#allocation2 + $0x7c] sm:$0xf]
      %v2456 = vld [vmem:[#allocation2 + $0x80] sm:$0xf]
      %v2457 = vld [vmem:[#allocation2 + $0x84] sm:$0xf]
      %v2458 = vld [vmem:[#allocation2 + $0x88] sm:$0xf]
      %v2459 = vld [vmem:[#allocation2 + $0x8c] sm:$0xf]
      %v2460 = vld [vmem:[#allocation2 + $0x90] sm:$0xf]
      %v2461 = vld [vmem:[#allocation2 + $0x94] sm:$0xf]
      %v2462 = vld [vmem:[#allocation2 + $0x98] sm:$0xf]
      %v2463 = vld [vmem:[#allocation2 + $0x9c] sm:$0xf]
      %v2464 = vld [vmem:[#allocation2 + $0xa0] sm:$0xf]
      %v2465 = vld [vmem:[#allocation2 + $0xa4] sm:$0xf]
      %v2466 = vld [vmem:[#allocation2 + $0xa8] sm:$0xf]
      %v2467 = vld [vmem:[#allocation2 + $0xac] sm:$0xf]
      %v2468 = vld [vmem:[#allocation2 + $0xb0] sm:$0xf]
      %v2469 = vld [vmem:[#allocation2 + $0xb4] sm:$0xf]
      %v2470 = vld [vmem:[#allocation2 + $0xb8] sm:$0xf]
      %v2471 = vld [vmem:[#allocation2 + $0xbc] sm:$0xf]
      %v2472 = vld [vmem:[#allocation2 + $0xc0] sm:$0xf]
      %v2473 = vld [vmem:[#allocation2 + $0xc4] sm:$0xf]
      %v2474 = vld [vmem:[#allocation2 + $0xc8] sm:$0xf]
      %v2475 = vld [vmem:[#allocation2 + $0xcc] sm:$0x1]
      %s2476 = scalar_lea.vmem %s2, 256
      %v2477 = vld [vmem:[%s2476] sm:$0xf]
      %v2478 = vld [vmem:[%s2476 + $0x4] sm:$0xf]
      %v2479 = vld [vmem:[%s2476 + $0x8] sm:$0xf]
      %v2480 = vld [vmem:[%s2476 + $0xc] sm:$0xf]
      %v2481 = vld [vmem:[%s2476 + $0x10] sm:$0xf]
      %v2482 = vld [vmem:[%s2476 + $0x14] sm:$0xf]
      %v2483 = vld [vmem:[%s2476 + $0x18] sm:$0xf]
      %v2484 = vld [vmem:[%s2476 + $0x1c] sm:$0xf]
      %v2485 = vld [vmem:[%s2476 + $0x20] sm:$0xf]
      %v2486 = vld [vmem:[%s2476 + $0x24] sm:$0xf]
      %v2487 = vld [vmem:[%s2476 + $0x28] sm:$0xf]
      %v2488 = vld [vmem:[%s2476 + $0x2c] sm:$0xf]
      %v2489 = vld [vmem:[%s2476 + $0x30] sm:$0xf]
      %v2490 = vld [vmem:[%s2476 + $0x34] sm:$0xf]
      %v2491 = vld [vmem:[%s2476 + $0x38] sm:$0xf]
      %v2492 = vld [vmem:[%s2476 + $0x3c] sm:$0xf]
      %v2542 = vunpack.c.l.b16 %v2427
      %v2543 = vunpack.c.l.b16 %v2428
      %v2544 = vunpack.c.l.b16 %v2429
      %v2545 = vunpack.c.l.b16 %v2430
      %v2546 = vunpack.c.l.b16 %v2431
      %v2547 = vunpack.c.l.b16 %v2432
      %v2548 = vunpack.c.l.b16 %v2433
      %v2549 = vunpack.c.l.b16 %v2434
      %v2550 = vunpack.c.l.b16 %v2435
      %v2551 = vunpack.c.l.b16 %v2436
      %v2552 = vunpack.c.l.b16 %v2437
      %v2553 = vunpack.c.l.b16 %v2438
      %v2554 = vunpack.c.l.b16 %v2439
      %v2555 = vunpack.c.l.b16 %v2440
      %v2556 = vunpack.c.l.b16 %v2441
      %v2557 = vunpack.c.l.b16 %v2442
      %v2558 = vunpack.c.l.b16 %v2443
      %v2559 = vunpack.c.l.b16 %v2444
      %v2560 = vunpack.c.l.b16 %v2445
      %v2561 = vunpack.c.l.b16 %v2446
      %v2562 = vunpack.c.l.b16 %v2447
      %v2563 = vunpack.c.l.b16 %v2448
      %v2564 = vunpack.c.l.b16 %v2449
      %v2565 = vunpack.c.l.b16 %v2450
      %v2566 = vunpack.c.l.b16 %v2451
      %v2567 = vunpack.c.l.b16 %v2452
      %v2568 = vunpack.c.l.b16 %v2453
      %v2569 = vunpack.c.l.b16 %v2454
      %v2570 = vunpack.c.l.b16 %v2455
      %v2571 = vunpack.c.l.b16 %v2456
      %v2572 = vunpack.c.l.b16 %v2457
      %v2573 = vunpack.c.l.b16 %v2458
      %v2574 = vunpack.c.l.b16 %v2459
      %v2575 = vunpack.c.l.b16 %v2460
      %v2576 = vunpack.c.l.b16 %v2461
      %v2577 = vunpack.c.l.b16 %v2462
      %v2578 = vunpack.c.l.b16 %v2463
      %v2579 = vunpack.c.l.b16 %v2464
      %v2580 = vunpack.c.l.b16 %v2465
      %v2581 = vunpack.c.l.b16 %v2466
      %v2582 = vunpack.c.l.b16 %v2467
      %v2583 = vunpack.c.l.b16 %v2468
      %v2584 = vunpack.c.l.b16 %v2469
      %v2585 = vunpack.c.l.b16 %v2470
      %v2586 = vunpack.c.l.b16 %v2471
      %v2587 = vunpack.c.l.b16 %v2472
      %v2588 = vunpack.c.l.b16 %v2473
      %v2589 = vunpack.c.l.b16 %v2474
      %v2590 = vunpack.c.l.b16 %v2475
      %v2591 = vpack.c.b16 %v2543, %v2542
      %v2592 = vpack.c.b16 %v2545, %v2544
      %v2593 = vpack.c.b16 %v2547, %v2546
      %v2594 = vpack.c.b16 %v2549, %v2548
      %v2595 = vpack.c.b16 %v2551, %v2550
      %v2596 = vpack.c.b16 %v2553, %v2552
      %v2597 = vpack.c.b16 %v2555, %v2554
      %v2598 = vpack.c.b16 %v2557, %v2556
      %v2599 = vpack.c.b16 %v2559, %v2558
      %v2600 = vpack.c.b16 %v2561, %v2560
      %v2601 = vpack.c.b16 %v2563, %v2562
      %v2602 = vpack.c.b16 %v2565, %v2564
      %v2603 = vpack.c.b16 %v2567, %v2566
      %v2604 = vpack.c.b16 %v2569, %v2568
      %v2605 = vpack.c.b16 %v2571, %v2570
      %v2606 = vpack.c.b16 %v2573, %v2572
      %v2607 = vpack.c.b16 %v2575, %v2574
      %v2608 = vpack.c.b16 %v2577, %v2576
      %v2609 = vpack.c.b16 %v2579, %v2578
      %v2610 = vpack.c.b16 %v2581, %v2580
      %v2611 = vpack.c.b16 %v2583, %v2582
      %v2612 = vpack.c.b16 %v2585, %v2584
      %v2613 = vpack.c.b16 %v2587, %v2586
      %v2614 = vpack.c.b16 %v2589, %v2588
      %v2615 = vpack.c.b16 %v2590, %v2590
      %v2617 = vshrl.u32 %v2591, 16
      %v2619 = vshll.u32 %v2591, 16
      %v2621 = vrot.slane %v2619, 1
      %v2622 = vor.u32 %v2617, %v2621
      %v2624 = vshll.u32 %v2592, 16
      %v2626 = vrot.slane %v2624, 1
      %v2627 = vsel %vm1170, %v2622, %v2626
      %v2628 = vshrl.u32 %v2592, 16
      %v2630 = vor.u32 %v2628, %v2626
      %v2632 = vshll.u32 %v2593, 16
      %v2634 = vrot.slane %v2632, 1
      %v2635 = vsel %vm1170, %v2630, %v2634
      %v2636 = vshrl.u32 %v2593, 16
      %v2638 = vor.u32 %v2636, %v2634
      %v2640 = vshll.u32 %v2594, 16
      %v2642 = vrot.slane %v2640, 1
      %v2643 = vsel %vm1170, %v2638, %v2642
      %v2644 = vshrl.u32 %v2594, 16
      %v2646 = vor.u32 %v2644, %v2642
      %v2648 = vshll.u32 %v2595, 16
      %v2650 = vrot.slane %v2648, 1
      %v2651 = vsel %vm1170, %v2646, %v2650
      %v2652 = vshrl.u32 %v2595, 16
      %v2654 = vor.u32 %v2652, %v2650
      %v2656 = vshll.u32 %v2596, 16
      %v2658 = vrot.slane %v2656, 1
      %v2659 = vsel %vm1170, %v2654, %v2658
      %v2660 = vshrl.u32 %v2596, 16
      %v2662 = vor.u32 %v2660, %v2658
      %v2664 = vshll.u32 %v2597, 16
      %v2666 = vrot.slane %v2664, 1
      %v2667 = vsel %vm1170, %v2662, %v2666
      %v2668 = vshrl.u32 %v2597, 16
      %v2670 = vor.u32 %v2668, %v2666
      %v2672 = vshll.u32 %v2598, 16
      %v2674 = vrot.slane %v2672, 1
      %v2675 = vsel %vm1170, %v2670, %v2674
      %v2676 = vshrl.u32 %v2598, 16
      %v2678 = vor.u32 %v2676, %v2674
      %v2680 = vshll.u32 %v2599, 16
      %v2682 = vrot.slane %v2680, 1
      %v2683 = vsel %vm1170, %v2678, %v2682
      %v2684 = vshrl.u32 %v2599, 16
      %v2686 = vor.u32 %v2684, %v2682
      %v2688 = vshll.u32 %v2600, 16
      %v2690 = vrot.slane %v2688, 1
      %v2691 = vsel %vm1170, %v2686, %v2690
      %v2692 = vshrl.u32 %v2600, 16
      %v2694 = vor.u32 %v2692, %v2690
      %v2696 = vshll.u32 %v2601, 16
      %v2698 = vrot.slane %v2696, 1
      %v2699 = vsel %vm1170, %v2694, %v2698
      %v2700 = vshrl.u32 %v2601, 16
      %v2702 = vor.u32 %v2700, %v2698
      %v2704 = vshll.u32 %v2602, 16
      %v2706 = vrot.slane %v2704, 1
      %v2707 = vsel %vm1170, %v2702, %v2706
      %v2708 = vshrl.u32 %v2602, 16
      %v2710 = vor.u32 %v2708, %v2706
      %v2712 = vshll.u32 %v2603, 16
      %v2714 = vrot.slane %v2712, 1
      %v2715 = vsel %vm1170, %v2710, %v2714
      %v2716 = vshrl.u32 %v2603, 16
      %v2718 = vor.u32 %v2716, %v2714
      %v2720 = vshll.u32 %v2604, 16
      %v2722 = vrot.slane %v2720, 1
      %v2723 = vsel %vm1170, %v2718, %v2722
      %v2724 = vshrl.u32 %v2604, 16
      %v2726 = vor.u32 %v2724, %v2722
      %v2728 = vshll.u32 %v2605, 16
      %v2730 = vrot.slane %v2728, 1
      %v2731 = vsel %vm1170, %v2726, %v2730
      %v2732 = vshrl.u32 %v2605, 16
      %v2734 = vor.u32 %v2732, %v2730
      %v2736 = vshll.u32 %v2606, 16
      %v2738 = vrot.slane %v2736, 1
      %v2739 = vsel %vm1170, %v2734, %v2738
      %v2740 = vshrl.u32 %v2606, 16
      %v2742 = vor.u32 %v2740, %v2738
      %v2744 = vshll.u32 %v2607, 16
      %v2746 = vrot.slane %v2744, 1
      %v2747 = vsel %vm1170, %v2742, %v2746
      %v2748 = vshrl.u32 %v2607, 16
      %v2750 = vor.u32 %v2748, %v2746
      %v2752 = vshll.u32 %v2608, 16
      %v2754 = vrot.slane %v2752, 1
      %v2755 = vsel %vm1170, %v2750, %v2754
      %v2756 = vshrl.u32 %v2608, 16
      %v2758 = vor.u32 %v2756, %v2754
      %v2760 = vshll.u32 %v2609, 16
      %v2762 = vrot.slane %v2760, 1
      %v2763 = vsel %vm1170, %v2758, %v2762
      %v2764 = vshrl.u32 %v2609, 16
      %v2766 = vor.u32 %v2764, %v2762
      %v2768 = vshll.u32 %v2610, 16
      %v2770 = vrot.slane %v2768, 1
      %v2771 = vsel %vm1170, %v2766, %v2770
      %v2772 = vshrl.u32 %v2610, 16
      %v2774 = vor.u32 %v2772, %v2770
      %v2776 = vshll.u32 %v2611, 16
      %v2778 = vrot.slane %v2776, 1
      %v2779 = vsel %vm1170, %v2774, %v2778
      %v2780 = vshrl.u32 %v2611, 16
      %v2782 = vor.u32 %v2780, %v2778
      %v2784 = vshll.u32 %v2612, 16
      %v2786 = vrot.slane %v2784, 1
      %v2787 = vsel %vm1170, %v2782, %v2786
      %v2788 = vshrl.u32 %v2612, 16
      %v2790 = vor.u32 %v2788, %v2786
      %v2792 = vshll.u32 %v2613, 16
      %v2794 = vrot.slane %v2792, 1
      %v2795 = vsel %vm1170, %v2790, %v2794
      %v2796 = vshrl.u32 %v2613, 16
      %v2798 = vor.u32 %v2796, %v2794
      %v2800 = vshll.u32 %v2614, 16
      %v2802 = vrot.slane %v2800, 1
      %v2803 = vsel %vm1170, %v2798, %v2802
      %v2804 = vshrl.u32 %v2614, 16
      %v2806 = vor.u32 %v2804, %v2802
      %v2808 = vshll.u32 %v2615, 16
      %v2810 = vrot.slane %v2808, 1
      %v2811 = vsel %vm1170, %v2806, %v2810
      %v2852 = vunpack.c.l.b16 %v2477
      %v2853 = vunpack.c.l.b16 %v2478
      %v2854 = vunpack.c.l.b16 %v2479
      %v2855 = vunpack.c.l.b16 %v2480
      %v2856 = vunpack.c.l.b16 %v2481
      %v2857 = vunpack.c.l.b16 %v2482
      %v2858 = vunpack.c.l.b16 %v2483
      %v2859 = vunpack.c.l.b16 %v2484
      %v2860 = vunpack.c.l.b16 %v2485
      %v2861 = vunpack.c.l.b16 %v2486
      %v2862 = vunpack.c.l.b16 %v2487
      %v2863 = vunpack.c.l.b16 %v2488
      %v2864 = vunpack.c.l.b16 %v2489
      %v2865 = vunpack.c.l.b16 %v2490
      %v2866 = vunpack.c.l.b16 %v2491
      %v2867 = vunpack.c.l.b16 %v2492
      %v2868 = vpack.c.b16 %v2853, %v2852
      %v2869 = vpack.c.b16 %v2855, %v2854
      %v2870 = vpack.c.b16 %v2857, %v2856
      %v2871 = vpack.c.b16 %v2859, %v2858
      %v2872 = vpack.c.b16 %v2861, %v2860
      %v2873 = vpack.c.b16 %v2863, %v2862
      %v2874 = vpack.c.b16 %v2865, %v2864
      %v2875 = vpack.c.b16 %v2867, %v2866
      %2884 = vmatpush.bf16.msra.mxu0 %v2875
      %2885 = vmatpush.bf16.msra.mxu0 %v2874
      %2886 = vmatpush.bf16.msra.mxu0 %v2873
      %2887 = vmatpush.bf16.msra.mxu0 %v2872
      %2888 = vmatpush.bf16.msra.mxu0 %v2871
      %2889 = vmatpush.bf16.msra.mxu0 %v2870
      %2890 = vmatpush.bf16.msra.mxu0 %v2869
      %2891 = vmatpush.bf16.msra.mxu0 %v2868
      %2892 = vmatmul.bf16.gmra.mxu0 %v2627
      %v2893 = vpop.f32.mrf.mxu0
      %v2894 = vadd.f32 0.0, %v2893
      %v2895 = vpop.f32.mrf.mxu0
      %v2896 = vadd.f32 0.0, %v2895
      %2897 = vmatmul.bf16.gmra.mxu0 %v2635
      %v2898 = vpop.f32.mrf.mxu0
      %v2899 = vpop.f32.mrf.mxu0
      %v2900 = vadd.f32 0.0, %v2899
      %2901 = vmatmul.bf16.gmra.mxu0 %v2643
      %v2902 = vpop.f32.mrf.mxu0
      %v2903 = vadd.f32 0.0, %v2902
      %v2904 = vpop.f32.mrf.mxu0
      %2905 = vmatmul.bf16.gmra.mxu0 %v2651
      %v2906 = vpop.f32.mrf.mxu0
      %v2907 = vadd.f32 0.0, %v2906
      %v2908 = vpop.f32.mrf.mxu0
      %v2909 = vadd.f32 0.0, %v2908
      %2910 = vmatmul.bf16.gmra.mxu0 %v2659
      %v2911 = vpop.f32.mrf.mxu0
      %v2912 = vpop.f32.mrf.mxu0
      %v2913 = vadd.f32 0.0, %v2912
      %2914 = vmatmul.bf16.gmra.mxu0 %v2667
      %v2915 = vpop.f32.mrf.mxu0
      %v2916 = vadd.f32 0.0, %v2915
      %v2917 = vpop.f32.mrf.mxu0
      %2918 = vmatmul.bf16.gmra.mxu0 %v2675
      %v2919 = vpop.f32.mrf.mxu0
      %v2920 = vadd.f32 0.0, %v2919
      %v2921 = vpop.f32.mrf.mxu0
      %v2922 = vadd.f32 0.0, %v2921
      %2923 = vmatmul.bf16.gmra.mxu0 %v2683
      %v2924 = vpop.f32.mrf.mxu0
      %v2925 = vpop.f32.mrf.mxu0
      %v2926 = vadd.f32 0.0, %v2925
      %2927 = vmatmul.bf16.gmra.mxu0 %v2691
      %v2928 = vpop.f32.mrf.mxu0
      %v2929 = vadd.f32 0.0, %v2928
      %v2930 = vpop.f32.mrf.mxu0
      %2931 = vmatmul.bf16.gmra.mxu0 %v2699
      %v2932 = vpop.f32.mrf.mxu0
      %v2933 = vadd.f32 0.0, %v2932
      %v2934 = vpop.f32.mrf.mxu0
      %v2935 = vadd.f32 0.0, %v2934
      %2936 = vmatmul.bf16.gmra.mxu0 %v2707
      %v2937 = vpop.f32.mrf.mxu0
      %v2938 = vpop.f32.mrf.mxu0
      %v2939 = vadd.f32 0.0, %v2938
      %2940 = vmatmul.bf16.gmra.mxu0 %v2715
      %v2941 = vpop.f32.mrf.mxu0
      %v2942 = vadd.f32 0.0, %v2941
      %v2943 = vpop.f32.mrf.mxu0
      %2944 = vmatmul.bf16.gmra.mxu0 %v2723
      %v2945 = vpop.f32.mrf.mxu0
      %v2946 = vadd.f32 0.0, %v2945
      %v2947 = vpop.f32.mrf.mxu0
      %v2948 = vadd.f32 0.0, %v2947
      %2949 = vmatmul.bf16.gmra.mxu0 %v2731
      %v2950 = vpop.f32.mrf.mxu0
      %v2951 = vpop.f32.mrf.mxu0
      %v2952 = vadd.f32 0.0, %v2951
      %2953 = vmatmul.bf16.gmra.mxu0 %v2739
      %v2954 = vpop.f32.mrf.mxu0
      %v2955 = vadd.f32 0.0, %v2954
      %v2956 = vpop.f32.mrf.mxu0
      %2957 = vmatmul.bf16.gmra.mxu0 %v2747
      %v2958 = vpop.f32.mrf.mxu0
      %v2959 = vadd.f32 0.0, %v2958
      %v2960 = vpop.f32.mrf.mxu0
      %v2961 = vadd.f32 0.0, %v2960
      %2962 = vmatmul.bf16.gmra.mxu0 %v2755
      %v2963 = vpop.f32.mrf.mxu0
      %v2964 = vpop.f32.mrf.mxu0
      %v2965 = vadd.f32 0.0, %v2964
      %2966 = vmatmul.bf16.gmra.mxu0 %v2763
      %v2967 = vpop.f32.mrf.mxu0
      %v2968 = vadd.f32 0.0, %v2967
      %v2969 = vpop.f32.mrf.mxu0
      %2970 = vmatmul.bf16.gmra.mxu0 %v2771
      %v2971 = vpop.f32.mrf.mxu0
      %v2972 = vadd.f32 0.0, %v2971
      %v2973 = vpop.f32.mrf.mxu0
      %v2974 = vadd.f32 0.0, %v2973
      %2975 = vmatmul.bf16.gmra.mxu0 %v2779
      %v2976 = vpop.f32.mrf.mxu0
      %v2977 = vpop.f32.mrf.mxu0
      %v2978 = vadd.f32 0.0, %v2977
      %2979 = vmatmul.bf16.gmra.mxu0 %v2787
      %v2980 = vpop.f32.mrf.mxu0
      %v2981 = vadd.f32 0.0, %v2980
      %v2982 = vpop.f32.mrf.mxu0
      %2983 = vmatmul.bf16.gmra.mxu0 %v2795
      %v2984 = vpop.f32.mrf.mxu0
      %v2985 = vadd.f32 0.0, %v2984
      %v2986 = vpop.f32.mrf.mxu0
      %v2987 = vadd.f32 0.0, %v2986
      %2988 = vmatmul.bf16.gmra.mxu0 %v2803
      %v2989 = vpop.f32.mrf.mxu0
      %v2990 = vpop.f32.mrf.mxu0
      %v2991 = vadd.f32 0.0, %v2990
      %2992 = vmatmul.bf16.gmra.mxu0 %v2811
      %v2993 = vpop.f32.mrf.mxu0
      %v2994 = vadd.f32 0.0, %v2993
      %v2995 = vpop.f32.mrf.mxu0
      %2996 = vdwg.mxu0
      %v2997 = vadd.f32 %v2395, %v2894
      %v2998 = vadd.f32 %v2396, %v2896
      %v2999 = vadd.f32 %v2397, %v2900
      %v3000 = vadd.f32 %v2398, %v2903
      %v3001 = vadd.f32 %v2399, %v2907
      %v3002 = vadd.f32 %v2400, %v2909
      %v3003 = vadd.f32 %v2401, %v2913
      %v3004 = vadd.f32 %v2402, %v2916
      %v3005 = vadd.f32 %v2403, %v2920
      %v3006 = vadd.f32 %v2404, %v2922
      %v3007 = vadd.f32 %v2405, %v2926
      %v3008 = vadd.f32 %v2406, %v2929
      %v3009 = vadd.f32 %v2407, %v2933
      %v3010 = vadd.f32 %v2408, %v2935
      %v3011 = vadd.f32 %v2409, %v2939
      %v3012 = vadd.f32 %v2410, %v2942
      %v3013 = vadd.f32 %v2411, %v2946
      %v3014 = vadd.f32 %v2412, %v2948
      %v3015 = vadd.f32 %v2413, %v2952
      %v3016 = vadd.f32 %v2414, %v2955
      %v3017 = vadd.f32 %v2415, %v2959
      %v3018 = vadd.f32 %v2416, %v2961
      %v3019 = vadd.f32 %v2417, %v2965
      %v3020 = vadd.f32 %v2418, %v2968
      %v3021 = vadd.f32 %v2419, %v2972
      %v3022 = vadd.f32 %v2420, %v2974
      %v3023 = vadd.f32 %v2421, %v2978
      %v3024 = vadd.f32 %v2422, %v2981
      %v3025 = vadd.f32 %v2423, %v2985
      %v3026 = vadd.f32 %v2424, %v2987
      %v3027 = vadd.f32 %v2425, %v2991
      %v3028 = vadd.f32 %v2426, %v2994
      %v3029 = vld [vmem:[#allocation2 + $0xc] sm:$0xe]
      %s3030 = scalar_lea.vmem %s2, 320
      %v3031 = vld [vmem:[%s3030] sm:$0xf]
      %v3032 = vld [vmem:[%s3030 + $0x4] sm:$0xf]
      %v3033 = vld [vmem:[%s3030 + $0x8] sm:$0xf]
      %v3034 = vld [vmem:[%s3030 + $0xc] sm:$0xf]
      %v3035 = vld [vmem:[%s3030 + $0x10] sm:$0xf]
      %v3036 = vld [vmem:[%s3030 + $0x14] sm:$0xf]
      %v3037 = vld [vmem:[%s3030 + $0x18] sm:$0xf]
      %v3038 = vld [vmem:[%s3030 + $0x1c] sm:$0xf]
      %v3039 = vld [vmem:[%s3030 + $0x20] sm:$0xf]
      %v3040 = vld [vmem:[%s3030 + $0x24] sm:$0xf]
      %v3041 = vld [vmem:[%s3030 + $0x28] sm:$0xf]
      %v3042 = vld [vmem:[%s3030 + $0x2c] sm:$0xf]
      %v3043 = vld [vmem:[%s3030 + $0x30] sm:$0xf]
      %v3044 = vld [vmem:[%s3030 + $0x34] sm:$0xf]
      %v3045 = vld [vmem:[%s3030 + $0x38] sm:$0xf]
      %v3046 = vld [vmem:[%s3030 + $0x3c] sm:$0xf]
      %v3048 = vunpack.c.l.b16 %v3029
      %v3049 = vpack.c.b16 %v2543, %v3048
      %v3050 = vrot.slane %v3049, 1
      %v3051 = vrot.slane %v2592, 1
      %v3052 = vsel %vm1758, %v3050, %v3051
      %v3053 = vrot.slane %v2593, 1
      %v3054 = vsel %vm1758, %v3051, %v3053
      %v3055 = vrot.slane %v2594, 1
      %v3056 = vsel %vm1758, %v3053, %v3055
      %v3057 = vrot.slane %v2595, 1
      %v3058 = vsel %vm1758, %v3055, %v3057
      %v3059 = vrot.slane %v2596, 1
      %v3060 = vsel %vm1758, %v3057, %v3059
      %v3061 = vrot.slane %v2597, 1
      %v3062 = vsel %vm1758, %v3059, %v3061
      %v3063 = vrot.slane %v2598, 1
      %v3064 = vsel %vm1758, %v3061, %v3063
      %v3065 = vrot.slane %v2599, 1
      %v3066 = vsel %vm1758, %v3063, %v3065
      %v3067 = vrot.slane %v2600, 1
      %v3068 = vsel %vm1758, %v3065, %v3067
      %v3069 = vrot.slane %v2601, 1
      %v3070 = vsel %vm1758, %v3067, %v3069
      %v3071 = vrot.slane %v2602, 1
      %v3072 = vsel %vm1758, %v3069, %v3071
      %v3073 = vrot.slane %v2603, 1
      %v3074 = vsel %vm1758, %v3071, %v3073
      %v3075 = vrot.slane %v2604, 1
      %v3076 = vsel %vm1758, %v3073, %v3075
      %v3077 = vrot.slane %v2605, 1
      %v3078 = vsel %vm1758, %v3075, %v3077
      %v3079 = vrot.slane %v2606, 1
      %v3080 = vsel %vm1758, %v3077, %v3079
      %v3081 = vrot.slane %v2607, 1
      %v3082 = vsel %vm1758, %v3079, %v3081
      %v3083 = vrot.slane %v2608, 1
      %v3084 = vsel %vm1758, %v3081, %v3083
      %v3085 = vrot.slane %v2609, 1
      %v3086 = vsel %vm1758, %v3083, %v3085
      %v3087 = vrot.slane %v2610, 1
      %v3088 = vsel %vm1758, %v3085, %v3087
      %v3089 = vrot.slane %v2611, 1
      %v3090 = vsel %vm1758, %v3087, %v3089
      %v3091 = vrot.slane %v2612, 1
      %v3092 = vsel %vm1758, %v3089, %v3091
      %v3093 = vrot.slane %v2613, 1
      %v3094 = vsel %vm1758, %v3091, %v3093
      %v3095 = vrot.slane %v2614, 1
      %v3096 = vsel %vm1758, %v3093, %v3095
      %v3097 = vrot.slane %v2615, 1
      %v3098 = vsel %vm1758, %v3095, %v3097
      %v3139 = vunpack.c.l.b16 %v3031
      %v3140 = vunpack.c.l.b16 %v3032
      %v3141 = vunpack.c.l.b16 %v3033
      %v3142 = vunpack.c.l.b16 %v3034
      %v3143 = vunpack.c.l.b16 %v3035
      %v3144 = vunpack.c.l.b16 %v3036
      %v3145 = vunpack.c.l.b16 %v3037
      %v3146 = vunpack.c.l.b16 %v3038
      %v3147 = vunpack.c.l.b16 %v3039
      %v3148 = vunpack.c.l.b16 %v3040
      %v3149 = vunpack.c.l.b16 %v3041
      %v3150 = vunpack.c.l.b16 %v3042
      %v3151 = vunpack.c.l.b16 %v3043
      %v3152 = vunpack.c.l.b16 %v3044
      %v3153 = vunpack.c.l.b16 %v3045
      %v3154 = vunpack.c.l.b16 %v3046
      %v3155 = vpack.c.b16 %v3140, %v3139
      %v3156 = vpack.c.b16 %v3142, %v3141
      %v3157 = vpack.c.b16 %v3144, %v3143
      %v3158 = vpack.c.b16 %v3146, %v3145
      %v3159 = vpack.c.b16 %v3148, %v3147
      %v3160 = vpack.c.b16 %v3150, %v3149
      %v3161 = vpack.c.b16 %v3152, %v3151
      %v3162 = vpack.c.b16 %v3154, %v3153
      %3171 = vmatpush.bf16.msra.mxu0 %v3162
      %3172 = vmatpush.bf16.msra.mxu0 %v3161
      %3173 = vmatpush.bf16.msra.mxu0 %v3160
      %3174 = vmatpush.bf16.msra.mxu0 %v3159
      %3175 = vmatpush.bf16.msra.mxu0 %v3158
      %3176 = vmatpush.bf16.msra.mxu0 %v3157
      %3177 = vmatpush.bf16.msra.mxu0 %v3156
      %3178 = vmatpush.bf16.msra.mxu0 %v3155
      %3179 = vmatmul.bf16.gmra.mxu0 %v3052
      %v3180 = vpop.f32.mrf.mxu0
      %v3181 = vadd.f32 0.0, %v3180
      %v3182 = vpop.f32.mrf.mxu0
      %v3183 = vadd.f32 0.0, %v3182
      %3184 = vmatmul.bf16.gmra.mxu0 %v3054
      %v3185 = vpop.f32.mrf.mxu0
      %v3186 = vpop.f32.mrf.mxu0
      %v3187 = vadd.f32 0.0, %v3186
      %3188 = vmatmul.bf16.gmra.mxu0 %v3056
      %v3189 = vpop.f32.mrf.mxu0
      %v3190 = vadd.f32 0.0, %v3189
      %v3191 = vpop.f32.mrf.mxu0
      %3192 = vmatmul.bf16.gmra.mxu0 %v3058
      %v3193 = vpop.f32.mrf.mxu0
      %v3194 = vadd.f32 0.0, %v3193
      %v3195 = vpop.f32.mrf.mxu0
      %v3196 = vadd.f32 0.0, %v3195
      %3197 = vmatmul.bf16.gmra.mxu0 %v3060
      %v3198 = vpop.f32.mrf.mxu0
      %v3199 = vpop.f32.mrf.mxu0
      %v3200 = vadd.f32 0.0, %v3199
      %3201 = vmatmul.bf16.gmra.mxu0 %v3062
      %v3202 = vpop.f32.mrf.mxu0
      %v3203 = vadd.f32 0.0, %v3202
      %v3204 = vpop.f32.mrf.mxu0
      %3205 = vmatmul.bf16.gmra.mxu0 %v3064
      %v3206 = vpop.f32.mrf.mxu0
      %v3207 = vadd.f32 0.0, %v3206
      %v3208 = vpop.f32.mrf.mxu0
      %v3209 = vadd.f32 0.0, %v3208
      %3210 = vmatmul.bf16.gmra.mxu0 %v3066
      %v3211 = vpop.f32.mrf.mxu0
      %v3212 = vpop.f32.mrf.mxu0
      %v3213 = vadd.f32 0.0, %v3212
      %3214 = vmatmul.bf16.gmra.mxu0 %v3068
      %v3215 = vpop.f32.mrf.mxu0
      %v3216 = vadd.f32 0.0, %v3215
      %v3217 = vpop.f32.mrf.mxu0
      %3218 = vmatmul.bf16.gmra.mxu0 %v3070
      %v3219 = vpop.f32.mrf.mxu0
      %v3220 = vadd.f32 0.0, %v3219
      %v3221 = vpop.f32.mrf.mxu0
      %v3222 = vadd.f32 0.0, %v3221
      %3223 = vmatmul.bf16.gmra.mxu0 %v3072
      %v3224 = vpop.f32.mrf.mxu0
      %v3225 = vpop.f32.mrf.mxu0
      %v3226 = vadd.f32 0.0, %v3225
      %3227 = vmatmul.bf16.gmra.mxu0 %v3074
      %v3228 = vpop.f32.mrf.mxu0
      %v3229 = vadd.f32 0.0, %v3228
      %v3230 = vpop.f32.mrf.mxu0
      %3231 = vmatmul.bf16.gmra.mxu0 %v3076
      %v3232 = vpop.f32.mrf.mxu0
      %v3233 = vadd.f32 0.0, %v3232
      %v3234 = vpop.f32.mrf.mxu0
      %v3235 = vadd.f32 0.0, %v3234
      %3236 = vmatmul.bf16.gmra.mxu0 %v3078
      %v3237 = vpop.f32.mrf.mxu0
      %v3238 = vpop.f32.mrf.mxu0
      %v3239 = vadd.f32 0.0, %v3238
      %3240 = vmatmul.bf16.gmra.mxu0 %v3080
      %v3241 = vpop.f32.mrf.mxu0
      %v3242 = vadd.f32 0.0, %v3241
      %v3243 = vpop.f32.mrf.mxu0
      %3244 = vmatmul.bf16.gmra.mxu0 %v3082
      %v3245 = vpop.f32.mrf.mxu0
      %v3246 = vadd.f32 0.0, %v3245
      %v3247 = vpop.f32.mrf.mxu0
      %v3248 = vadd.f32 0.0, %v3247
      %3249 = vmatmul.bf16.gmra.mxu0 %v3084
      %v3250 = vpop.f32.mrf.mxu0
      %v3251 = vpop.f32.mrf.mxu0
      %v3252 = vadd.f32 0.0, %v3251
      %3253 = vmatmul.bf16.gmra.mxu0 %v3086
      %v3254 = vpop.f32.mrf.mxu0
      %v3255 = vadd.f32 0.0, %v3254
      %v3256 = vpop.f32.mrf.mxu0
      %3257 = vmatmul.bf16.gmra.mxu0 %v3088
      %v3258 = vpop.f32.mrf.mxu0
      %v3259 = vadd.f32 0.0, %v3258
      %v3260 = vpop.f32.mrf.mxu0
      %v3261 = vadd.f32 0.0, %v3260
      %3262 = vmatmul.bf16.gmra.mxu0 %v3090
      %v3263 = vpop.f32.mrf.mxu0
      %v3264 = vpop.f32.mrf.mxu0
      %v3265 = vadd.f32 0.0, %v3264
      %3266 = vmatmul.bf16.gmra.mxu0 %v3092
      %v3267 = vpop.f32.mrf.mxu0
      %v3268 = vadd.f32 0.0, %v3267
      %v3269 = vpop.f32.mrf.mxu0
      %3270 = vmatmul.bf16.gmra.mxu0 %v3094
      %v3271 = vpop.f32.mrf.mxu0
      %v3272 = vadd.f32 0.0, %v3271
      %v3273 = vpop.f32.mrf.mxu0
      %v3274 = vadd.f32 0.0, %v3273
      %3275 = vmatmul.bf16.gmra.mxu0 %v3096
      %v3276 = vpop.f32.mrf.mxu0
      %v3277 = vpop.f32.mrf.mxu0
      %v3278 = vadd.f32 0.0, %v3277
      %3279 = vmatmul.bf16.gmra.mxu0 %v3098
      %v3280 = vpop.f32.mrf.mxu0
      %v3281 = vadd.f32 0.0, %v3280
      %v3282 = vpop.f32.mrf.mxu0
      %3283 = vdwg.mxu0
      %v3284 = vadd.f32 %v2997, %v3181
      %v3285 = vadd.f32 %v2998, %v3183
      %v3286 = vadd.f32 %v2999, %v3187
      %v3287 = vadd.f32 %v3000, %v3190
      %v3288 = vadd.f32 %v3001, %v3194
      %v3289 = vadd.f32 %v3002, %v3196
      %v3290 = vadd.f32 %v3003, %v3200
      %v3291 = vadd.f32 %v3004, %v3203
      %v3292 = vadd.f32 %v3005, %v3207
      %v3293 = vadd.f32 %v3006, %v3209
      %v3294 = vadd.f32 %v3007, %v3213
      %v3295 = vadd.f32 %v3008, %v3216
      %v3296 = vadd.f32 %v3009, %v3220
      %v3297 = vadd.f32 %v3010, %v3222
      %v3298 = vadd.f32 %v3011, %v3226
      %v3299 = vadd.f32 %v3012, %v3229
      %v3300 = vadd.f32 %v3013, %v3233
      %v3301 = vadd.f32 %v3014, %v3235
      %v3302 = vadd.f32 %v3015, %v3239
      %v3303 = vadd.f32 %v3016, %v3242
      %v3304 = vadd.f32 %v3017, %v3246
      %v3305 = vadd.f32 %v3018, %v3248
      %v3306 = vadd.f32 %v3019, %v3252
      %v3307 = vadd.f32 %v3020, %v3255
      %v3308 = vadd.f32 %v3021, %v3259
      %v3309 = vadd.f32 %v3022, %v3261
      %v3310 = vadd.f32 %v3023, %v3265
      %v3311 = vadd.f32 %v3024, %v3268
      %v3312 = vadd.f32 %v3025, %v3272
      %v3313 = vadd.f32 %v3026, %v3274
      %v3314 = vadd.f32 %v3027, %v3278
      %v3315 = vadd.f32 %v3028, %v3281
      %v3316 = vld [vmem:[#allocation2 + $0x18] sm:$0xf]
      %v3317 = vld [vmem:[#allocation2 + $0x1c] sm:$0xf]
      %v3318 = vld [vmem:[#allocation2 + $0x20] sm:$0xf]
      %v3319 = vld [vmem:[#allocation2 + $0x24] sm:$0xf]
      %v3320 = vld [vmem:[#allocation2 + $0x28] sm:$0xf]
      %v3321 = vld [vmem:[#allocation2 + $0x2c] sm:$0xf]
      %v3322 = vld [vmem:[#allocation2 + $0x30] sm:$0xf]
      %v3323 = vld [vmem:[#allocation2 + $0x34] sm:$0xf]
      %v3324 = vld [vmem:[#allocation2 + $0x38] sm:$0xf]
      %v3325 = vld [vmem:[#allocation2 + $0x3c] sm:$0xf]
      %v3326 = vld [vmem:[#allocation2 + $0x40] sm:$0xf]
      %v3327 = vld [vmem:[#allocation2 + $0x44] sm:$0xf]
      %v3328 = vld [vmem:[#allocation2 + $0x48] sm:$0xf]
      %v3329 = vld [vmem:[#allocation2 + $0x4c] sm:$0xf]
      %v3330 = vld [vmem:[#allocation2 + $0x50] sm:$0xf]
      %v3331 = vld [vmem:[#allocation2 + $0x54] sm:$0xf]
      %v3332 = vld [vmem:[#allocation2 + $0x58] sm:$0xf]
      %v3333 = vld [vmem:[#allocation2 + $0x5c] sm:$0xf]
      %v3334 = vld [vmem:[#allocation2 + $0x60] sm:$0xf]
      %v3335 = vld [vmem:[#allocation2 + $0x64] sm:$0xf]
      %v3336 = vld [vmem:[#allocation2 + $0x68] sm:$0xf]
      %v3337 = vld [vmem:[#allocation2 + $0x6c] sm:$0xf]
      %v3338 = vld [vmem:[#allocation2 + $0x70] sm:$0xf]
      %v3339 = vld [vmem:[#allocation2 + $0x74] sm:$0xf]
      %v3340 = vld [vmem:[#allocation2 + $0x78] sm:$0xf]
      %v3341 = vld [vmem:[#allocation2 + $0x7c] sm:$0xf]
      %v3342 = vld [vmem:[#allocation2 + $0x80] sm:$0xf]
      %v3343 = vld [vmem:[#allocation2 + $0x84] sm:$0xf]
      %v3344 = vld [vmem:[#allocation2 + $0x88] sm:$0xf]
      %v3345 = vld [vmem:[#allocation2 + $0x8c] sm:$0xf]
      %v3346 = vld [vmem:[#allocation2 + $0x90] sm:$0xf]
      %v3347 = vld [vmem:[#allocation2 + $0x94] sm:$0xf]
      %v3348 = vld [vmem:[#allocation2 + $0x98] sm:$0xf]
      %v3349 = vld [vmem:[#allocation2 + $0x9c] sm:$0xf]
      %v3350 = vld [vmem:[#allocation2 + $0xa0] sm:$0xf]
      %v3351 = vld [vmem:[#allocation2 + $0xa4] sm:$0xf]
      %v3352 = vld [vmem:[#allocation2 + $0xa8] sm:$0xf]
      %v3353 = vld [vmem:[#allocation2 + $0xac] sm:$0xf]
      %v3354 = vld [vmem:[#allocation2 + $0xb0] sm:$0xf]
      %v3355 = vld [vmem:[#allocation2 + $0xb4] sm:$0xf]
      %v3356 = vld [vmem:[#allocation2 + $0xb8] sm:$0xf]
      %v3357 = vld [vmem:[#allocation2 + $0xbc] sm:$0xf]
      %v3358 = vld [vmem:[#allocation2 + $0xc0] sm:$0xf]
      %v3359 = vld [vmem:[#allocation2 + $0xc4] sm:$0xf]
      %v3360 = vld [vmem:[#allocation2 + $0xc8] sm:$0xf]
      %v3361 = vld [vmem:[#allocation2 + $0xcc] sm:$0xf]
      %v3362 = vld [vmem:[#allocation2 + $0xd0] sm:$0xf]
      %v3363 = vld [vmem:[#allocation2 + $0xd4] sm:$0xf]
      %s3364 = scalar_lea.vmem %s2, 384
      %v3365 = vld [vmem:[%s3364] sm:$0xf]
      %v3366 = vld [vmem:[%s3364 + $0x4] sm:$0xf]
      %v3367 = vld [vmem:[%s3364 + $0x8] sm:$0xf]
      %v3368 = vld [vmem:[%s3364 + $0xc] sm:$0xf]
      %v3369 = vld [vmem:[%s3364 + $0x10] sm:$0xf]
      %v3370 = vld [vmem:[%s3364 + $0x14] sm:$0xf]
      %v3371 = vld [vmem:[%s3364 + $0x18] sm:$0xf]
      %v3372 = vld [vmem:[%s3364 + $0x1c] sm:$0xf]
      %v3373 = vld [vmem:[%s3364 + $0x20] sm:$0xf]
      %v3374 = vld [vmem:[%s3364 + $0x24] sm:$0xf]
      %v3375 = vld [vmem:[%s3364 + $0x28] sm:$0xf]
      %v3376 = vld [vmem:[%s3364 + $0x2c] sm:$0xf]
      %v3377 = vld [vmem:[%s3364 + $0x30] sm:$0xf]
      %v3378 = vld [vmem:[%s3364 + $0x34] sm:$0xf]
      %v3379 = vld [vmem:[%s3364 + $0x38] sm:$0xf]
      %v3380 = vld [vmem:[%s3364 + $0x3c] sm:$0xf]
      %v3429 = vunpack.c.l.b16 %v3316
      %v3430 = vunpack.c.l.b16 %v3317
      %v3431 = vunpack.c.l.b16 %v3318
      %v3432 = vunpack.c.l.b16 %v3319
      %v3433 = vunpack.c.l.b16 %v3320
      %v3434 = vunpack.c.l.b16 %v3321
      %v3435 = vunpack.c.l.b16 %v3322
      %v3436 = vunpack.c.l.b16 %v3323
      %v3437 = vunpack.c.l.b16 %v3324
      %v3438 = vunpack.c.l.b16 %v3325
      %v3439 = vunpack.c.l.b16 %v3326
      %v3440 = vunpack.c.l.b16 %v3327
      %v3441 = vunpack.c.l.b16 %v3328
      %v3442 = vunpack.c.l.b16 %v3329
      %v3443 = vunpack.c.l.b16 %v3330
      %v3444 = vunpack.c.l.b16 %v3331
      %v3445 = vunpack.c.l.b16 %v3332
      %v3446 = vunpack.c.l.b16 %v3333
      %v3447 = vunpack.c.l.b16 %v3334
      %v3448 = vunpack.c.l.b16 %v3335
      %v3449 = vunpack.c.l.b16 %v3336
      %v3450 = vunpack.c.l.b16 %v3337
      %v3451 = vunpack.c.l.b16 %v3338
      %v3452 = vunpack.c.l.b16 %v3339
      %v3453 = vunpack.c.l.b16 %v3340
      %v3454 = vunpack.c.l.b16 %v3341
      %v3455 = vunpack.c.l.b16 %v3342
      %v3456 = vunpack.c.l.b16 %v3343
      %v3457 = vunpack.c.l.b16 %v3344
      %v3458 = vunpack.c.l.b16 %v3345
      %v3459 = vunpack.c.l.b16 %v3346
      %v3460 = vunpack.c.l.b16 %v3347
      %v3461 = vunpack.c.l.b16 %v3348
      %v3462 = vunpack.c.l.b16 %v3349
      %v3463 = vunpack.c.l.b16 %v3350
      %v3464 = vunpack.c.l.b16 %v3351
      %v3465 = vunpack.c.l.b16 %v3352
      %v3466 = vunpack.c.l.b16 %v3353
      %v3467 = vunpack.c.l.b16 %v3354
      %v3468 = vunpack.c.l.b16 %v3355
      %v3469 = vunpack.c.l.b16 %v3356
      %v3470 = vunpack.c.l.b16 %v3357
      %v3471 = vunpack.c.l.b16 %v3358
      %v3472 = vunpack.c.l.b16 %v3359
      %v3473 = vunpack.c.l.b16 %v3360
      %v3474 = vunpack.c.l.b16 %v3361
      %v3475 = vunpack.c.l.b16 %v3362
      %v3476 = vunpack.c.l.b16 %v3363
      %v3477 = vpack.c.b16 %v3430, %v3429
      %v3478 = vpack.c.b16 %v3432, %v3431
      %v3479 = vpack.c.b16 %v3434, %v3433
      %v3480 = vpack.c.b16 %v3436, %v3435
      %v3481 = vpack.c.b16 %v3438, %v3437
      %v3482 = vpack.c.b16 %v3440, %v3439
      %v3483 = vpack.c.b16 %v3442, %v3441
      %v3484 = vpack.c.b16 %v3444, %v3443
      %v3485 = vpack.c.b16 %v3446, %v3445
      %v3486 = vpack.c.b16 %v3448, %v3447
      %v3487 = vpack.c.b16 %v3450, %v3449
      %v3488 = vpack.c.b16 %v3452, %v3451
      %v3489 = vpack.c.b16 %v3454, %v3453
      %v3490 = vpack.c.b16 %v3456, %v3455
      %v3491 = vpack.c.b16 %v3458, %v3457
      %v3492 = vpack.c.b16 %v3460, %v3459
      %v3493 = vpack.c.b16 %v3462, %v3461
      %v3494 = vpack.c.b16 %v3464, %v3463
      %v3495 = vpack.c.b16 %v3466, %v3465
      %v3496 = vpack.c.b16 %v3468, %v3467
      %v3497 = vpack.c.b16 %v3470, %v3469
      %v3498 = vpack.c.b16 %v3472, %v3471
      %v3499 = vpack.c.b16 %v3474, %v3473
      %v3500 = vpack.c.b16 %v3476, %v3475
      %v3541 = vunpack.c.l.b16 %v3365
      %v3542 = vunpack.c.l.b16 %v3366
      %v3543 = vunpack.c.l.b16 %v3367
      %v3544 = vunpack.c.l.b16 %v3368
      %v3545 = vunpack.c.l.b16 %v3369
      %v3546 = vunpack.c.l.b16 %v3370
      %v3547 = vunpack.c.l.b16 %v3371
      %v3548 = vunpack.c.l.b16 %v3372
      %v3549 = vunpack.c.l.b16 %v3373
      %v3550 = vunpack.c.l.b16 %v3374
      %v3551 = vunpack.c.l.b16 %v3375
      %v3552 = vunpack.c.l.b16 %v3376
      %v3553 = vunpack.c.l.b16 %v3377
      %v3554 = vunpack.c.l.b16 %v3378
      %v3555 = vunpack.c.l.b16 %v3379
      %v3556 = vunpack.c.l.b16 %v3380
      %v3557 = vpack.c.b16 %v3542, %v3541
      %v3558 = vpack.c.b16 %v3544, %v3543
      %v3559 = vpack.c.b16 %v3546, %v3545
      %v3560 = vpack.c.b16 %v3548, %v3547
      %v3561 = vpack.c.b16 %v3550, %v3549
      %v3562 = vpack.c.b16 %v3552, %v3551
      %v3563 = vpack.c.b16 %v3554, %v3553
      %v3564 = vpack.c.b16 %v3556, %v3555
      %3573 = vmatpush.bf16.msra.mxu0 %v3564
      %3574 = vmatpush.bf16.msra.mxu0 %v3563
      %3575 = vmatpush.bf16.msra.mxu0 %v3562
      %3576 = vmatpush.bf16.msra.mxu0 %v3561
      %3577 = vmatpush.bf16.msra.mxu0 %v3560
      %3578 = vmatpush.bf16.msra.mxu0 %v3559
      %3579 = vmatpush.bf16.msra.mxu0 %v3558
      %3580 = vmatpush.bf16.msra.mxu0 %v3557
      %3581 = vmatmul.bf16.gmra.mxu0 %v3477
      %v3582 = vpop.f32.mrf.mxu0
      %v3583 = vadd.f32 0.0, %v3582
      %v3584 = vpop.f32.mrf.mxu0
      %v3585 = vadd.f32 0.0, %v3584
      %3586 = vmatmul.bf16.gmra.mxu0 %v3478
      %v3587 = vpop.f32.mrf.mxu0
      %v3588 = vpop.f32.mrf.mxu0
      %v3589 = vadd.f32 0.0, %v3588
      %3590 = vmatmul.bf16.gmra.mxu0 %v3479
      %v3591 = vpop.f32.mrf.mxu0
      %v3592 = vadd.f32 0.0, %v3591
      %v3593 = vpop.f32.mrf.mxu0
      %3594 = vmatmul.bf16.gmra.mxu0 %v3480
      %v3595 = vpop.f32.mrf.mxu0
      %v3596 = vadd.f32 0.0, %v3595
      %v3597 = vpop.f32.mrf.mxu0
      %v3598 = vadd.f32 0.0, %v3597
      %3599 = vmatmul.bf16.gmra.mxu0 %v3481
      %v3600 = vpop.f32.mrf.mxu0
      %v3601 = vpop.f32.mrf.mxu0
      %v3602 = vadd.f32 0.0, %v3601
      %3603 = vmatmul.bf16.gmra.mxu0 %v3482
      %v3604 = vpop.f32.mrf.mxu0
      %v3605 = vadd.f32 0.0, %v3604
      %v3606 = vpop.f32.mrf.mxu0
      %3607 = vmatmul.bf16.gmra.mxu0 %v3483
      %v3608 = vpop.f32.mrf.mxu0
      %v3609 = vadd.f32 0.0, %v3608
      %v3610 = vpop.f32.mrf.mxu0
      %v3611 = vadd.f32 0.0, %v3610
      %3612 = vmatmul.bf16.gmra.mxu0 %v3484
      %v3613 = vpop.f32.mrf.mxu0
      %v3614 = vpop.f32.mrf.mxu0
      %v3615 = vadd.f32 0.0, %v3614
      %3616 = vmatmul.bf16.gmra.mxu0 %v3485
      %v3617 = vpop.f32.mrf.mxu0
      %v3618 = vadd.f32 0.0, %v3617
      %v3619 = vpop.f32.mrf.mxu0
      %3620 = vmatmul.bf16.gmra.mxu0 %v3486
      %v3621 = vpop.f32.mrf.mxu0
      %v3622 = vadd.f32 0.0, %v3621
      %v3623 = vpop.f32.mrf.mxu0
      %v3624 = vadd.f32 0.0, %v3623
      %3625 = vmatmul.bf16.gmra.mxu0 %v3487
      %v3626 = vpop.f32.mrf.mxu0
      %v3627 = vpop.f32.mrf.mxu0
      %v3628 = vadd.f32 0.0, %v3627
      %3629 = vmatmul.bf16.gmra.mxu0 %v3488
      %v3630 = vpop.f32.mrf.mxu0
      %v3631 = vadd.f32 0.0, %v3630
      %v3632 = vpop.f32.mrf.mxu0
      %3633 = vmatmul.bf16.gmra.mxu0 %v3489
      %v3634 = vpop.f32.mrf.mxu0
      %v3635 = vadd.f32 0.0, %v3634
      %v3636 = vpop.f32.mrf.mxu0
      %v3637 = vadd.f32 0.0, %v3636
      %3638 = vmatmul.bf16.gmra.mxu0 %v3490
      %v3639 = vpop.f32.mrf.mxu0
      %v3640 = vpop.f32.mrf.mxu0
      %v3641 = vadd.f32 0.0, %v3640
      %3642 = vmatmul.bf16.gmra.mxu0 %v3491
      %v3643 = vpop.f32.mrf.mxu0
      %v3644 = vadd.f32 0.0, %v3643
      %v3645 = vpop.f32.mrf.mxu0
      %3646 = vmatmul.bf16.gmra.mxu0 %v3492
      %v3647 = vpop.f32.mrf.mxu0
      %v3648 = vadd.f32 0.0, %v3647
      %v3649 = vpop.f32.mrf.mxu0
      %v3650 = vadd.f32 0.0, %v3649
      %3651 = vmatmul.bf16.gmra.mxu0 %v3493
      %v3652 = vpop.f32.mrf.mxu0
      %v3653 = vpop.f32.mrf.mxu0
      %v3654 = vadd.f32 0.0, %v3653
      %3655 = vmatmul.bf16.gmra.mxu0 %v3494
      %v3656 = vpop.f32.mrf.mxu0
      %v3657 = vadd.f32 0.0, %v3656
      %v3658 = vpop.f32.mrf.mxu0
      %3659 = vmatmul.bf16.gmra.mxu0 %v3495
      %v3660 = vpop.f32.mrf.mxu0
      %v3661 = vadd.f32 0.0, %v3660
      %v3662 = vpop.f32.mrf.mxu0
      %v3663 = vadd.f32 0.0, %v3662
      %3664 = vmatmul.bf16.gmra.mxu0 %v3496
      %v3665 = vpop.f32.mrf.mxu0
      %v3666 = vpop.f32.mrf.mxu0
      %v3667 = vadd.f32 0.0, %v3666
      %3668 = vmatmul.bf16.gmra.mxu0 %v3497
      %v3669 = vpop.f32.mrf.mxu0
      %v3670 = vadd.f32 0.0, %v3669
      %v3671 = vpop.f32.mrf.mxu0
      %3672 = vmatmul.bf16.gmra.mxu0 %v3498
      %v3673 = vpop.f32.mrf.mxu0
      %v3674 = vadd.f32 0.0, %v3673
      %v3675 = vpop.f32.mrf.mxu0
      %v3676 = vadd.f32 0.0, %v3675
      %3677 = vmatmul.bf16.gmra.mxu0 %v3499
      %v3678 = vpop.f32.mrf.mxu0
      %v3679 = vpop.f32.mrf.mxu0
      %v3680 = vadd.f32 0.0, %v3679
      %3681 = vmatmul.bf16.gmra.mxu0 %v3500
      %v3682 = vpop.f32.mrf.mxu0
      %v3683 = vadd.f32 0.0, %v3682
      %v3684 = vpop.f32.mrf.mxu0
      %3685 = vdwg.mxu0
      %v3686 = vadd.f32 %v3284, %v3583
      %v3687 = vadd.f32 %v3285, %v3585
      %v3688 = vadd.f32 %v3286, %v3589
      %v3689 = vadd.f32 %v3287, %v3592
      %v3690 = vadd.f32 %v3288, %v3596
      %v3691 = vadd.f32 %v3289, %v3598
      %v3692 = vadd.f32 %v3290, %v3602
      %v3693 = vadd.f32 %v3291, %v3605
      %v3694 = vadd.f32 %v3292, %v3609
      %v3695 = vadd.f32 %v3293, %v3611
      %v3696 = vadd.f32 %v3294, %v3615
      %v3697 = vadd.f32 %v3295, %v3618
      %v3698 = vadd.f32 %v3296, %v3622
      %v3699 = vadd.f32 %v3297, %v3624
      %v3700 = vadd.f32 %v3298, %v3628
      %v3701 = vadd.f32 %v3299, %v3631
      %v3702 = vadd.f32 %v3300, %v3635
      %v3703 = vadd.f32 %v3301, %v3637
      %v3704 = vadd.f32 %v3302, %v3641
      %v3705 = vadd.f32 %v3303, %v3644
      %v3706 = vadd.f32 %v3304, %v3648
      %v3707 = vadd.f32 %v3305, %v3650
      %v3708 = vadd.f32 %v3306, %v3654
      %v3709 = vadd.f32 %v3307, %v3657
      %v3710 = vadd.f32 %v3308, %v3661
      %v3711 = vadd.f32 %v3309, %v3663
      %v3712 = vadd.f32 %v3310, %v3667
      %v3713 = vadd.f32 %v3311, %v3670
      %v3714 = vadd.f32 %v3312, %v3674
      %v3715 = vadd.f32 %v3313, %v3676
      %v3716 = vadd.f32 %v3314, %v3680
      %v3717 = vadd.f32 %v3315, %v3683
      %v3718 = vld [vmem:[#allocation2 + $0x18] sm:$0xf]
      %v3719 = vld [vmem:[#allocation2 + $0x1c] sm:$0xf]
      %v3720 = vld [vmem:[#allocation2 + $0x20] sm:$0xf]
      %v3721 = vld [vmem:[#allocation2 + $0x24] sm:$0xf]
      %v3722 = vld [vmem:[#allocation2 + $0x28] sm:$0xf]
      %v3723 = vld [vmem:[#allocation2 + $0x2c] sm:$0xf]
      %v3724 = vld [vmem:[#allocation2 + $0x30] sm:$0xf]
      %v3725 = vld [vmem:[#allocation2 + $0x34] sm:$0xf]
      %v3726 = vld [vmem:[#allocation2 + $0x38] sm:$0xf]
      %v3727 = vld [vmem:[#allocation2 + $0x3c] sm:$0xf]
      %v3728 = vld [vmem:[#allocation2 + $0x40] sm:$0xf]
      %v3729 = vld [vmem:[#allocation2 + $0x44] sm:$0xf]
      %v3730 = vld [vmem:[#allocation2 + $0x48] sm:$0xf]
      %v3731 = vld [vmem:[#allocation2 + $0x4c] sm:$0xf]
      %v3732 = vld [vmem:[#allocation2 + $0x50] sm:$0xf]
      %v3733 = vld [vmem:[#allocation2 + $0x54] sm:$0xf]
      %v3734 = vld [vmem:[#allocation2 + $0x58] sm:$0xf]
      %v3735 = vld [vmem:[#allocation2 + $0x5c] sm:$0xf]
      %v3736 = vld [vmem:[#allocation2 + $0x60] sm:$0xf]
      %v3737 = vld [vmem:[#allocation2 + $0x64] sm:$0xf]
      %v3738 = vld [vmem:[#allocation2 + $0x68] sm:$0xf]
      %v3739 = vld [vmem:[#allocation2 + $0x6c] sm:$0xf]
      %v3740 = vld [vmem:[#allocation2 + $0x70] sm:$0xf]
      %v3741 = vld [vmem:[#allocation2 + $0x74] sm:$0xf]
      %v3742 = vld [vmem:[#allocation2 + $0x78] sm:$0xf]
      %v3743 = vld [vmem:[#allocation2 + $0x7c] sm:$0xf]
      %v3744 = vld [vmem:[#allocation2 + $0x80] sm:$0xf]
      %v3745 = vld [vmem:[#allocation2 + $0x84] sm:$0xf]
      %v3746 = vld [vmem:[#allocation2 + $0x88] sm:$0xf]
      %v3747 = vld [vmem:[#allocation2 + $0x8c] sm:$0xf]
      %v3748 = vld [vmem:[#allocation2 + $0x90] sm:$0xf]
      %v3749 = vld [vmem:[#allocation2 + $0x94] sm:$0xf]
      %v3750 = vld [vmem:[#allocation2 + $0x98] sm:$0xf]
      %v3751 = vld [vmem:[#allocation2 + $0x9c] sm:$0xf]
      %v3752 = vld [vmem:[#allocation2 + $0xa0] sm:$0xf]
      %v3753 = vld [vmem:[#allocation2 + $0xa4] sm:$0xf]
      %v3754 = vld [vmem:[#allocation2 + $0xa8] sm:$0xf]
      %v3755 = vld [vmem:[#allocation2 + $0xac] sm:$0xf]
      %v3756 = vld [vmem:[#allocation2 + $0xb0] sm:$0xf]
      %v3757 = vld [vmem:[#allocation2 + $0xb4] sm:$0xf]
      %v3758 = vld [vmem:[#allocation2 + $0xb8] sm:$0xf]
      %v3759 = vld [vmem:[#allocation2 + $0xbc] sm:$0xf]
      %v3760 = vld [vmem:[#allocation2 + $0xc0] sm:$0xf]
      %v3761 = vld [vmem:[#allocation2 + $0xc4] sm:$0xf]
      %v3762 = vld [vmem:[#allocation2 + $0xc8] sm:$0xf]
      %v3763 = vld [vmem:[#allocation2 + $0xcc] sm:$0xf]
      %v3764 = vld [vmem:[#allocation2 + $0xd0] sm:$0xf]
      %v3765 = vld [vmem:[#allocation2 + $0xd4] sm:$0xf]
      %v3766 = vld [vmem:[#allocation2 + $0xd8] sm:$0x1]
      %s3767 = scalar_lea.vmem %s2, 448
      %v3768 = vld [vmem:[%s3767] sm:$0xf]
      %v3769 = vld [vmem:[%s3767 + $0x4] sm:$0xf]
      %v3770 = vld [vmem:[%s3767 + $0x8] sm:$0xf]
      %v3771 = vld [vmem:[%s3767 + $0xc] sm:$0xf]
      %v3772 = vld [vmem:[%s3767 + $0x10] sm:$0xf]
      %v3773 = vld [vmem:[%s3767 + $0x14] sm:$0xf]
      %v3774 = vld [vmem:[%s3767 + $0x18] sm:$0xf]
      %v3775 = vld [vmem:[%s3767 + $0x1c] sm:$0xf]
      %v3776 = vld [vmem:[%s3767 + $0x20] sm:$0xf]
      %v3777 = vld [vmem:[%s3767 + $0x24] sm:$0xf]
      %v3778 = vld [vmem:[%s3767 + $0x28] sm:$0xf]
      %v3779 = vld [vmem:[%s3767 + $0x2c] sm:$0xf]
      %v3780 = vld [vmem:[%s3767 + $0x30] sm:$0xf]
      %v3781 = vld [vmem:[%s3767 + $0x34] sm:$0xf]
      %v3782 = vld [vmem:[%s3767 + $0x38] sm:$0xf]
      %v3783 = vld [vmem:[%s3767 + $0x3c] sm:$0xf]
      %v3833 = vunpack.c.l.b16 %v3718
      %v3834 = vunpack.c.l.b16 %v3719
      %v3835 = vunpack.c.l.b16 %v3720
      %v3836 = vunpack.c.l.b16 %v3721
      %v3837 = vunpack.c.l.b16 %v3722
      %v3838 = vunpack.c.l.b16 %v3723
      %v3839 = vunpack.c.l.b16 %v3724
      %v3840 = vunpack.c.l.b16 %v3725
      %v3841 = vunpack.c.l.b16 %v3726
      %v3842 = vunpack.c.l.b16 %v3727
      %v3843 = vunpack.c.l.b16 %v3728
      %v3844 = vunpack.c.l.b16 %v3729
      %v3845 = vunpack.c.l.b16 %v3730
      %v3846 = vunpack.c.l.b16 %v3731
      %v3847 = vunpack.c.l.b16 %v3732
      %v3848 = vunpack.c.l.b16 %v3733
      %v3849 = vunpack.c.l.b16 %v3734
      %v3850 = vunpack.c.l.b16 %v3735
      %v3851 = vunpack.c.l.b16 %v3736
      %v3852 = vunpack.c.l.b16 %v3737
      %v3853 = vunpack.c.l.b16 %v3738
      %v3854 = vunpack.c.l.b16 %v3739
      %v3855 = vunpack.c.l.b16 %v3740
      %v3856 = vunpack.c.l.b16 %v3741
      %v3857 = vunpack.c.l.b16 %v3742
      %v3858 = vunpack.c.l.b16 %v3743
      %v3859 = vunpack.c.l.b16 %v3744
      %v3860 = vunpack.c.l.b16 %v3745
      %v3861 = vunpack.c.l.b16 %v3746
      %v3862 = vunpack.c.l.b16 %v3747
      %v3863 = vunpack.c.l.b16 %v3748
      %v3864 = vunpack.c.l.b16 %v3749
      %v3865 = vunpack.c.l.b16 %v3750
      %v3866 = vunpack.c.l.b16 %v3751
      %v3867 = vunpack.c.l.b16 %v3752
      %v3868 = vunpack.c.l.b16 %v3753
      %v3869 = vunpack.c.l.b16 %v3754
      %v3870 = vunpack.c.l.b16 %v3755
      %v3871 = vunpack.c.l.b16 %v3756
      %v3872 = vunpack.c.l.b16 %v3757
      %v3873 = vunpack.c.l.b16 %v3758
      %v3874 = vunpack.c.l.b16 %v3759
      %v3875 = vunpack.c.l.b16 %v3760
      %v3876 = vunpack.c.l.b16 %v3761
      %v3877 = vunpack.c.l.b16 %v3762
      %v3878 = vunpack.c.l.b16 %v3763
      %v3879 = vunpack.c.l.b16 %v3764
      %v3880 = vunpack.c.l.b16 %v3765
      %v3881 = vunpack.c.l.b16 %v3766
      %v3882 = vpack.c.b16 %v3834, %v3833
      %v3883 = vpack.c.b16 %v3836, %v3835
      %v3884 = vpack.c.b16 %v3838, %v3837
      %v3885 = vpack.c.b16 %v3840, %v3839
      %v3886 = vpack.c.b16 %v3842, %v3841
      %v3887 = vpack.c.b16 %v3844, %v3843
      %v3888 = vpack.c.b16 %v3846, %v3845
      %v3889 = vpack.c.b16 %v3848, %v3847
      %v3890 = vpack.c.b16 %v3850, %v3849
      %v3891 = vpack.c.b16 %v3852, %v3851
      %v3892 = vpack.c.b16 %v3854, %v3853
      %v3893 = vpack.c.b16 %v3856, %v3855
      %v3894 = vpack.c.b16 %v3858, %v3857
      %v3895 = vpack.c.b16 %v3860, %v3859
      %v3896 = vpack.c.b16 %v3862, %v3861
      %v3897 = vpack.c.b16 %v3864, %v3863
      %v3898 = vpack.c.b16 %v3866, %v3865
      %v3899 = vpack.c.b16 %v3868, %v3867
      %v3900 = vpack.c.b16 %v3870, %v3869
      %v3901 = vpack.c.b16 %v3872, %v3871
      %v3902 = vpack.c.b16 %v3874, %v3873
      %v3903 = vpack.c.b16 %v3876, %v3875
      %v3904 = vpack.c.b16 %v3878, %v3877
      %v3905 = vpack.c.b16 %v3880, %v3879
      %v3906 = vpack.c.b16 %v3881, %v3881
      %v3908 = vshrl.u32 %v3882, 16
      %v3910 = vshll.u32 %v3882, 16
      %v3912 = vrot.slane %v3910, 1
      %v3913 = vor.u32 %v3908, %v3912
      %v3915 = vshll.u32 %v3883, 16
      %v3917 = vrot.slane %v3915, 1
      %v3918 = vsel %vm1170, %v3913, %v3917
      %v3919 = vshrl.u32 %v3883, 16
      %v3921 = vor.u32 %v3919, %v3917
      %v3923 = vshll.u32 %v3884, 16
      %v3925 = vrot.slane %v3923, 1
      %v3926 = vsel %vm1170, %v3921, %v3925
      %v3927 = vshrl.u32 %v3884, 16
      %v3929 = vor.u32 %v3927, %v3925
      %v3931 = vshll.u32 %v3885, 16
      %v3933 = vrot.slane %v3931, 1
      %v3934 = vsel %vm1170, %v3929, %v3933
      %v3935 = vshrl.u32 %v3885, 16
      %v3937 = vor.u32 %v3935, %v3933
      %v3939 = vshll.u32 %v3886, 16
      %v3941 = vrot.slane %v3939, 1
      %v3942 = vsel %vm1170, %v3937, %v3941
      %v3943 = vshrl.u32 %v3886, 16
      %v3945 = vor.u32 %v3943, %v3941
      %v3947 = vshll.u32 %v3887, 16
      %v3949 = vrot.slane %v3947, 1
      %v3950 = vsel %vm1170, %v3945, %v3949
      %v3951 = vshrl.u32 %v3887, 16
      %v3953 = vor.u32 %v3951, %v3949
      %v3955 = vshll.u32 %v3888, 16
      %v3957 = vrot.slane %v3955, 1
      %v3958 = vsel %vm1170, %v3953, %v3957
      %v3959 = vshrl.u32 %v3888, 16
      %v3961 = vor.u32 %v3959, %v3957
      %v3963 = vshll.u32 %v3889, 16
      %v3965 = vrot.slane %v3963, 1
      %v3966 = vsel %vm1170, %v3961, %v3965
      %v3967 = vshrl.u32 %v3889, 16
      %v3969 = vor.u32 %v3967, %v3965
      %v3971 = vshll.u32 %v3890, 16
      %v3973 = vrot.slane %v3971, 1
      %v3974 = vsel %vm1170, %v3969, %v3973
      %v3975 = vshrl.u32 %v3890, 16
      %v3977 = vor.u32 %v3975, %v3973
      %v3979 = vshll.u32 %v3891, 16
      %v3981 = vrot.slane %v3979, 1
      %v3982 = vsel %vm1170, %v3977, %v3981
      %v3983 = vshrl.u32 %v3891, 16
      %v3985 = vor.u32 %v3983, %v3981
      %v3987 = vshll.u32 %v3892, 16
      %v3989 = vrot.slane %v3987, 1
      %v3990 = vsel %vm1170, %v3985, %v3989
      %v3991 = vshrl.u32 %v3892, 16
      %v3993 = vor.u32 %v3991, %v3989
      %v3995 = vshll.u32 %v3893, 16
      %v3997 = vrot.slane %v3995, 1
      %v3998 = vsel %vm1170, %v3993, %v3997
      %v3999 = vshrl.u32 %v3893, 16
      %v4001 = vor.u32 %v3999, %v3997
      %v4003 = vshll.u32 %v3894, 16
      %v4005 = vrot.slane %v4003, 1
      %v4006 = vsel %vm1170, %v4001, %v4005
      %v4007 = vshrl.u32 %v3894, 16
      %v4009 = vor.u32 %v4007, %v4005
      %v4011 = vshll.u32 %v3895, 16
      %v4013 = vrot.slane %v4011, 1
      %v4014 = vsel %vm1170, %v4009, %v4013
      %v4015 = vshrl.u32 %v3895, 16
      %v4017 = vor.u32 %v4015, %v4013
      %v4019 = vshll.u32 %v3896, 16
      %v4021 = vrot.slane %v4019, 1
      %v4022 = vsel %vm1170, %v4017, %v4021
      %v4023 = vshrl.u32 %v3896, 16
      %v4025 = vor.u32 %v4023, %v4021
      %v4027 = vshll.u32 %v3897, 16
      %v4029 = vrot.slane %v4027, 1
      %v4030 = vsel %vm1170, %v4025, %v4029
      %v4031 = vshrl.u32 %v3897, 16
      %v4033 = vor.u32 %v4031, %v4029
      %v4035 = vshll.u32 %v3898, 16
      %v4037 = vrot.slane %v4035, 1
      %v4038 = vsel %vm1170, %v4033, %v4037
      %v4039 = vshrl.u32 %v3898, 16
      %v4041 = vor.u32 %v4039, %v4037
      %v4043 = vshll.u32 %v3899, 16
      %v4045 = vrot.slane %v4043, 1
      %v4046 = vsel %vm1170, %v4041, %v4045
      %v4047 = vshrl.u32 %v3899, 16
      %v4049 = vor.u32 %v4047, %v4045
      %v4051 = vshll.u32 %v3900, 16
      %v4053 = vrot.slane %v4051, 1
      %v4054 = vsel %vm1170, %v4049, %v4053
      %v4055 = vshrl.u32 %v3900, 16
      %v4057 = vor.u32 %v4055, %v4053
      %v4059 = vshll.u32 %v3901, 16
      %v4061 = vrot.slane %v4059, 1
      %v4062 = vsel %vm1170, %v4057, %v4061
      %v4063 = vshrl.u32 %v3901, 16
      %v4065 = vor.u32 %v4063, %v4061
      %v4067 = vshll.u32 %v3902, 16
      %v4069 = vrot.slane %v4067, 1
      %v4070 = vsel %vm1170, %v4065, %v4069
      %v4071 = vshrl.u32 %v3902, 16
      %v4073 = vor.u32 %v4071, %v4069
      %v4075 = vshll.u32 %v3903, 16
      %v4077 = vrot.slane %v4075, 1
      %v4078 = vsel %vm1170, %v4073, %v4077
      %v4079 = vshrl.u32 %v3903, 16
      %v4081 = vor.u32 %v4079, %v4077
      %v4083 = vshll.u32 %v3904, 16
      %v4085 = vrot.slane %v4083, 1
      %v4086 = vsel %vm1170, %v4081, %v4085
      %v4087 = vshrl.u32 %v3904, 16
      %v4089 = vor.u32 %v4087, %v4085
      %v4091 = vshll.u32 %v3905, 16
      %v4093 = vrot.slane %v4091, 1
      %v4094 = vsel %vm1170, %v4089, %v4093
      %v4095 = vshrl.u32 %v3905, 16
      %v4097 = vor.u32 %v4095, %v4093
      %v4099 = vshll.u32 %v3906, 16
      %v4101 = vrot.slane %v4099, 1
      %v4102 = vsel %vm1170, %v4097, %v4101
      %v4143 = vunpack.c.l.b16 %v3768
      %v4144 = vunpack.c.l.b16 %v3769
      %v4145 = vunpack.c.l.b16 %v3770
      %v4146 = vunpack.c.l.b16 %v3771
      %v4147 = vunpack.c.l.b16 %v3772
      %v4148 = vunpack.c.l.b16 %v3773
      %v4149 = vunpack.c.l.b16 %v3774
      %v4150 = vunpack.c.l.b16 %v3775
      %v4151 = vunpack.c.l.b16 %v3776
      %v4152 = vunpack.c.l.b16 %v3777
      %v4153 = vunpack.c.l.b16 %v3778
      %v4154 = vunpack.c.l.b16 %v3779
      %v4155 = vunpack.c.l.b16 %v3780
      %v4156 = vunpack.c.l.b16 %v3781
      %v4157 = vunpack.c.l.b16 %v3782
      %v4158 = vunpack.c.l.b16 %v3783
      %v4159 = vpack.c.b16 %v4144, %v4143
      %v4160 = vpack.c.b16 %v4146, %v4145
      %v4161 = vpack.c.b16 %v4148, %v4147
      %v4162 = vpack.c.b16 %v4150, %v4149
      %v4163 = vpack.c.b16 %v4152, %v4151
      %v4164 = vpack.c.b16 %v4154, %v4153
      %v4165 = vpack.c.b16 %v4156, %v4155
      %v4166 = vpack.c.b16 %v4158, %v4157
      %4175 = vmatpush.bf16.msra.mxu0 %v4166
      %4176 = vmatpush.bf16.msra.mxu0 %v4165
      %4177 = vmatpush.bf16.msra.mxu0 %v4164
      %4178 = vmatpush.bf16.msra.mxu0 %v4163
      %4179 = vmatpush.bf16.msra.mxu0 %v4162
      %4180 = vmatpush.bf16.msra.mxu0 %v4161
      %4181 = vmatpush.bf16.msra.mxu0 %v4160
      %4182 = vmatpush.bf16.msra.mxu0 %v4159
      %4183 = vmatmul.bf16.gmra.mxu0 %v3918
      %v4184 = vpop.f32.mrf.mxu0
      %v4185 = vadd.f32 0.0, %v4184
      %v4186 = vpop.f32.mrf.mxu0
      %v4187 = vadd.f32 0.0, %v4186
      %4188 = vmatmul.bf16.gmra.mxu0 %v3926
      %v4189 = vpop.f32.mrf.mxu0
      %v4190 = vpop.f32.mrf.mxu0
      %v4191 = vadd.f32 0.0, %v4190
      %4192 = vmatmul.bf16.gmra.mxu0 %v3934
      %v4193 = vpop.f32.mrf.mxu0
      %v4194 = vadd.f32 0.0, %v4193
      %v4195 = vpop.f32.mrf.mxu0
      %4196 = vmatmul.bf16.gmra.mxu0 %v3942
      %v4197 = vpop.f32.mrf.mxu0
      %v4198 = vadd.f32 0.0, %v4197
      %v4199 = vpop.f32.mrf.mxu0
      %v4200 = vadd.f32 0.0, %v4199
      %4201 = vmatmul.bf16.gmra.mxu0 %v3950
      %v4202 = vpop.f32.mrf.mxu0
      %v4203 = vpop.f32.mrf.mxu0
      %v4204 = vadd.f32 0.0, %v4203
      %4205 = vmatmul.bf16.gmra.mxu0 %v3958
      %v4206 = vpop.f32.mrf.mxu0
      %v4207 = vadd.f32 0.0, %v4206
      %v4208 = vpop.f32.mrf.mxu0
      %4209 = vmatmul.bf16.gmra.mxu0 %v3966
      %v4210 = vpop.f32.mrf.mxu0
      %v4211 = vadd.f32 0.0, %v4210
      %v4212 = vpop.f32.mrf.mxu0
      %v4213 = vadd.f32 0.0, %v4212
      %4214 = vmatmul.bf16.gmra.mxu0 %v3974
      %v4215 = vpop.f32.mrf.mxu0
      %v4216 = vpop.f32.mrf.mxu0
      %v4217 = vadd.f32 0.0, %v4216
      %4218 = vmatmul.bf16.gmra.mxu0 %v3982
      %v4219 = vpop.f32.mrf.mxu0
      %v4220 = vadd.f32 0.0, %v4219
      %v4221 = vpop.f32.mrf.mxu0
      %4222 = vmatmul.bf16.gmra.mxu0 %v3990
      %v4223 = vpop.f32.mrf.mxu0
      %v4224 = vadd.f32 0.0, %v4223
      %v4225 = vpop.f32.mrf.mxu0
      %v4226 = vadd.f32 0.0, %v4225
      %4227 = vmatmul.bf16.gmra.mxu0 %v3998
      %v4228 = vpop.f32.mrf.mxu0
      %v4229 = vpop.f32.mrf.mxu0
      %v4230 = vadd.f32 0.0, %v4229
      %4231 = vmatmul.bf16.gmra.mxu0 %v4006
      %v4232 = vpop.f32.mrf.mxu0
      %v4233 = vadd.f32 0.0, %v4232
      %v4234 = vpop.f32.mrf.mxu0
      %4235 = vmatmul.bf16.gmra.mxu0 %v4014
      %v4236 = vpop.f32.mrf.mxu0
      %v4237 = vadd.f32 0.0, %v4236
      %v4238 = vpop.f32.mrf.mxu0
      %v4239 = vadd.f32 0.0, %v4238
      %4240 = vmatmul.bf16.gmra.mxu0 %v4022
      %v4241 = vpop.f32.mrf.mxu0
      %v4242 = vpop.f32.mrf.mxu0
      %v4243 = vadd.f32 0.0, %v4242
      %4244 = vmatmul.bf16.gmra.mxu0 %v4030
      %v4245 = vpop.f32.mrf.mxu0
      %v4246 = vadd.f32 0.0, %v4245
      %v4247 = vpop.f32.mrf.mxu0
      %4248 = vmatmul.bf16.gmra.mxu0 %v4038
      %v4249 = vpop.f32.mrf.mxu0
      %v4250 = vadd.f32 0.0, %v4249
      %v4251 = vpop.f32.mrf.mxu0
      %v4252 = vadd.f32 0.0, %v4251
      %4253 = vmatmul.bf16.gmra.mxu0 %v4046
      %v4254 = vpop.f32.mrf.mxu0
      %v4255 = vpop.f32.mrf.mxu0
      %v4256 = vadd.f32 0.0, %v4255
      %4257 = vmatmul.bf16.gmra.mxu0 %v4054
      %v4258 = vpop.f32.mrf.mxu0
      %v4259 = vadd.f32 0.0, %v4258
      %v4260 = vpop.f32.mrf.mxu0
      %4261 = vmatmul.bf16.gmra.mxu0 %v4062
      %v4262 = vpop.f32.mrf.mxu0
      %v4263 = vadd.f32 0.0, %v4262
      %v4264 = vpop.f32.mrf.mxu0
      %v4265 = vadd.f32 0.0, %v4264
      %4266 = vmatmul.bf16.gmra.mxu0 %v4070
      %v4267 = vpop.f32.mrf.mxu0
      %v4268 = vpop.f32.mrf.mxu0
      %v4269 = vadd.f32 0.0, %v4268
      %4270 = vmatmul.bf16.gmra.mxu0 %v4078
      %v4271 = vpop.f32.mrf.mxu0
      %v4272 = vadd.f32 0.0, %v4271
      %v4273 = vpop.f32.mrf.mxu0
      %4274 = vmatmul.bf16.gmra.mxu0 %v4086
      %v4275 = vpop.f32.mrf.mxu0
      %v4276 = vadd.f32 0.0, %v4275
      %v4277 = vpop.f32.mrf.mxu0
      %v4278 = vadd.f32 0.0, %v4277
      %4279 = vmatmul.bf16.gmra.mxu0 %v4094
      %v4280 = vpop.f32.mrf.mxu0
      %v4281 = vpop.f32.mrf.mxu0
      %v4282 = vadd.f32 0.0, %v4281
      %4283 = vmatmul.bf16.gmra.mxu0 %v4102
      %v4284 = vpop.f32.mrf.mxu0
      %v4285 = vadd.f32 0.0, %v4284
      %v4286 = vpop.f32.mrf.mxu0
      %4287 = vdwg.mxu0
      %v4288 = vadd.f32 %v3686, %v4185
      %v4289 = vadd.f32 %v3687, %v4187
      %v4290 = vadd.f32 %v3688, %v4191
      %v4291 = vadd.f32 %v3689, %v4194
      %v4292 = vadd.f32 %v3690, %v4198
      %v4293 = vadd.f32 %v3691, %v4200
      %v4294 = vadd.f32 %v3692, %v4204
      %v4295 = vadd.f32 %v3693, %v4207
      %v4296 = vadd.f32 %v3694, %v4211
      %v4297 = vadd.f32 %v3695, %v4213
      %v4298 = vadd.f32 %v3696, %v4217
      %v4299 = vadd.f32 %v3697, %v4220
      %v4300 = vadd.f32 %v3698, %v4224
      %v4301 = vadd.f32 %v3699, %v4226
      %v4302 = vadd.f32 %v3700, %v4230
      %v4303 = vadd.f32 %v3701, %v4233
      %v4304 = vadd.f32 %v3702, %v4237
      %v4305 = vadd.f32 %v3703, %v4239
      %v4306 = vadd.f32 %v3704, %v4243
      %v4307 = vadd.f32 %v3705, %v4246
      %v4308 = vadd.f32 %v3706, %v4250
      %v4309 = vadd.f32 %v3707, %v4252
      %v4310 = vadd.f32 %v3708, %v4256
      %v4311 = vadd.f32 %v3709, %v4259
      %v4312 = vadd.f32 %v3710, %v4263
      %v4313 = vadd.f32 %v3711, %v4265
      %v4314 = vadd.f32 %v3712, %v4269
      %v4315 = vadd.f32 %v3713, %v4272
      %v4316 = vadd.f32 %v3714, %v4276
      %v4317 = vadd.f32 %v3715, %v4278
      %v4318 = vadd.f32 %v3716, %v4282
      %v4319 = vadd.f32 %v3717, %v4285
      %v4320 = vld [vmem:[#allocation2 + $0x18] sm:$0xe]
      %s4321 = scalar_lea.vmem %s2, 512
      %v4322 = vld [vmem:[%s4321] sm:$0xf]
      %v4323 = vld [vmem:[%s4321 + $0x4] sm:$0xf]
      %v4324 = vld [vmem:[%s4321 + $0x8] sm:$0xf]
      %v4325 = vld [vmem:[%s4321 + $0xc] sm:$0xf]
      %v4326 = vld [vmem:[%s4321 + $0x10] sm:$0xf]
      %v4327 = vld [vmem:[%s4321 + $0x14] sm:$0xf]
      %v4328 = vld [vmem:[%s4321 + $0x18] sm:$0xf]
      %v4329 = vld [vmem:[%s4321 + $0x1c] sm:$0xf]
      %v4330 = vld [vmem:[%s4321 + $0x20] sm:$0xf]
      %v4331 = vld [vmem:[%s4321 + $0x24] sm:$0xf]
      %v4332 = vld [vmem:[%s4321 + $0x28] sm:$0xf]
      %v4333 = vld [vmem:[%s4321 + $0x2c] sm:$0xf]
      %v4334 = vld [vmem:[%s4321 + $0x30] sm:$0xf]
      %v4335 = vld [vmem:[%s4321 + $0x34] sm:$0xf]
      %v4336 = vld [vmem:[%s4321 + $0x38] sm:$0xf]
      %v4337 = vld [vmem:[%s4321 + $0x3c] sm:$0xf]
      %v4339 = vunpack.c.l.b16 %v4320
      %v4340 = vpack.c.b16 %v3834, %v4339
      %v4341 = vrot.slane %v4340, 1
      %v4342 = vrot.slane %v3883, 1
      %v4343 = vsel %vm1758, %v4341, %v4342
      %v4344 = vrot.slane %v3884, 1
      %v4345 = vsel %vm1758, %v4342, %v4344
      %v4346 = vrot.slane %v3885, 1
      %v4347 = vsel %vm1758, %v4344, %v4346
      %v4348 = vrot.slane %v3886, 1
      %v4349 = vsel %vm1758, %v4346, %v4348
      %v4350 = vrot.slane %v3887, 1
      %v4351 = vsel %vm1758, %v4348, %v4350
      %v4352 = vrot.slane %v3888, 1
      %v4353 = vsel %vm1758, %v4350, %v4352
      %v4354 = vrot.slane %v3889, 1
      %v4355 = vsel %vm1758, %v4352, %v4354
      %v4356 = vrot.slane %v3890, 1
      %v4357 = vsel %vm1758, %v4354, %v4356
      %v4358 = vrot.slane %v3891, 1
      %v4359 = vsel %vm1758, %v4356, %v4358
      %v4360 = vrot.slane %v3892, 1
      %v4361 = vsel %vm1758, %v4358, %v4360
      %v4362 = vrot.slane %v3893, 1
      %v4363 = vsel %vm1758, %v4360, %v4362
      %v4364 = vrot.slane %v3894, 1
      %v4365 = vsel %vm1758, %v4362, %v4364
      %v4366 = vrot.slane %v3895, 1
      %v4367 = vsel %vm1758, %v4364, %v4366
      %v4368 = vrot.slane %v3896, 1
      %v4369 = vsel %vm1758, %v4366, %v4368
      %v4370 = vrot.slane %v3897, 1
      %v4371 = vsel %vm1758, %v4368, %v4370
      %v4372 = vrot.slane %v3898, 1
      %v4373 = vsel %vm1758, %v4370, %v4372
      %v4374 = vrot.slane %v3899, 1
      %v4375 = vsel %vm1758, %v4372, %v4374
      %v4376 = vrot.slane %v3900, 1
      %v4377 = vsel %vm1758, %v4374, %v4376
      %v4378 = vrot.slane %v3901, 1
      %v4379 = vsel %vm1758, %v4376, %v4378
      %v4380 = vrot.slane %v3902, 1
      %v4381 = vsel %vm1758, %v4378, %v4380
      %v4382 = vrot.slane %v3903, 1
      %v4383 = vsel %vm1758, %v4380, %v4382
      %v4384 = vrot.slane %v3904, 1
      %v4385 = vsel %vm1758, %v4382, %v4384
      %v4386 = vrot.slane %v3905, 1
      %v4387 = vsel %vm1758, %v4384, %v4386
      %v4388 = vrot.slane %v3906, 1
      %v4389 = vsel %vm1758, %v4386, %v4388
      %v4430 = vunpack.c.l.b16 %v4322
      %v4431 = vunpack.c.l.b16 %v4323
      %v4432 = vunpack.c.l.b16 %v4324
      %v4433 = vunpack.c.l.b16 %v4325
      %v4434 = vunpack.c.l.b16 %v4326
      %v4435 = vunpack.c.l.b16 %v4327
      %v4436 = vunpack.c.l.b16 %v4328
      %v4437 = vunpack.c.l.b16 %v4329
      %v4438 = vunpack.c.l.b16 %v4330
      %v4439 = vunpack.c.l.b16 %v4331
      %v4440 = vunpack.c.l.b16 %v4332
      %v4441 = vunpack.c.l.b16 %v4333
      %v4442 = vunpack.c.l.b16 %v4334
      %v4443 = vunpack.c.l.b16 %v4335
      %v4444 = vunpack.c.l.b16 %v4336
      %v4445 = vunpack.c.l.b16 %v4337
      %v4446 = vpack.c.b16 %v4431, %v4430
      %v4447 = vpack.c.b16 %v4433, %v4432
      %v4448 = vpack.c.b16 %v4435, %v4434
      %v4449 = vpack.c.b16 %v4437, %v4436
      %v4450 = vpack.c.b16 %v4439, %v4438
      %v4451 = vpack.c.b16 %v4441, %v4440
      %v4452 = vpack.c.b16 %v4443, %v4442
      %v4453 = vpack.c.b16 %v4445, %v4444
      %4462 = vmatpush.bf16.msra.mxu0 %v4453
      %4463 = vmatpush.bf16.msra.mxu0 %v4452
      %4464 = vmatpush.bf16.msra.mxu0 %v4451
      %4465 = vmatpush.bf16.msra.mxu0 %v4450
      %4466 = vmatpush.bf16.msra.mxu0 %v4449
      %4467 = vmatpush.bf16.msra.mxu0 %v4448
      %4468 = vmatpush.bf16.msra.mxu0 %v4447
      %4469 = vmatpush.bf16.msra.mxu0 %v4446
      %4470 = vmatmul.bf16.gmra.mxu0 %v4343
      %v4471 = vpop.f32.mrf.mxu0
      %v4472 = vadd.f32 0.0, %v4471
      %v4473 = vpop.f32.mrf.mxu0
      %v4474 = vadd.f32 0.0, %v4473
      %4475 = vmatmul.bf16.gmra.mxu0 %v4345
      %v4476 = vpop.f32.mrf.mxu0
      %v4477 = vpop.f32.mrf.mxu0
      %v4478 = vadd.f32 0.0, %v4477
      %4479 = vmatmul.bf16.gmra.mxu0 %v4347
      %v4480 = vpop.f32.mrf.mxu0
      %v4481 = vadd.f32 0.0, %v4480
      %v4482 = vpop.f32.mrf.mxu0
      %4483 = vmatmul.bf16.gmra.mxu0 %v4349
      %v4484 = vpop.f32.mrf.mxu0
      %v4485 = vadd.f32 0.0, %v4484
      %v4486 = vpop.f32.mrf.mxu0
      %v4487 = vadd.f32 0.0, %v4486
      %4488 = vmatmul.bf16.gmra.mxu0 %v4351
      %v4489 = vpop.f32.mrf.mxu0
      %v4490 = vpop.f32.mrf.mxu0
      %v4491 = vadd.f32 0.0, %v4490
      %4492 = vmatmul.bf16.gmra.mxu0 %v4353
      %v4493 = vpop.f32.mrf.mxu0
      %v4494 = vadd.f32 0.0, %v4493
      %v4495 = vpop.f32.mrf.mxu0
      %4496 = vmatmul.bf16.gmra.mxu0 %v4355
      %v4497 = vpop.f32.mrf.mxu0
      %v4498 = vadd.f32 0.0, %v4497
      %v4499 = vpop.f32.mrf.mxu0
      %v4500 = vadd.f32 0.0, %v4499
      %4501 = vmatmul.bf16.gmra.mxu0 %v4357
      %v4502 = vpop.f32.mrf.mxu0
      %v4503 = vpop.f32.mrf.mxu0
      %v4504 = vadd.f32 0.0, %v4503
      %4505 = vmatmul.bf16.gmra.mxu0 %v4359
      %v4506 = vpop.f32.mrf.mxu0
      %v4507 = vadd.f32 0.0, %v4506
      %v4508 = vpop.f32.mrf.mxu0
      %4509 = vmatmul.bf16.gmra.mxu0 %v4361
      %v4510 = vpop.f32.mrf.mxu0
      %v4511 = vadd.f32 0.0, %v4510
      %v4512 = vpop.f32.mrf.mxu0
      %v4513 = vadd.f32 0.0, %v4512
      %4514 = vmatmul.bf16.gmra.mxu0 %v4363
      %v4515 = vpop.f32.mrf.mxu0
      %v4516 = vpop.f32.mrf.mxu0
      %v4517 = vadd.f32 0.0, %v4516
      %4518 = vmatmul.bf16.gmra.mxu0 %v4365
      %v4519 = vpop.f32.mrf.mxu0
      %v4520 = vadd.f32 0.0, %v4519
      %v4521 = vpop.f32.mrf.mxu0
      %4522 = vmatmul.bf16.gmra.mxu0 %v4367
      %v4523 = vpop.f32.mrf.mxu0
      %v4524 = vadd.f32 0.0, %v4523
      %v4525 = vpop.f32.mrf.mxu0
      %v4526 = vadd.f32 0.0, %v4525
      %4527 = vmatmul.bf16.gmra.mxu0 %v4369
      %v4528 = vpop.f32.mrf.mxu0
      %v4529 = vpop.f32.mrf.mxu0
      %v4530 = vadd.f32 0.0, %v4529
      %4531 = vmatmul.bf16.gmra.mxu0 %v4371
      %v4532 = vpop.f32.mrf.mxu0
      %v4533 = vadd.f32 0.0, %v4532
      %v4534 = vpop.f32.mrf.mxu0
      %4535 = vmatmul.bf16.gmra.mxu0 %v4373
      %v4536 = vpop.f32.mrf.mxu0
      %v4537 = vadd.f32 0.0, %v4536
      %v4538 = vpop.f32.mrf.mxu0
      %v4539 = vadd.f32 0.0, %v4538
      %4540 = vmatmul.bf16.gmra.mxu0 %v4375
      %v4541 = vpop.f32.mrf.mxu0
      %v4542 = vpop.f32.mrf.mxu0
      %v4543 = vadd.f32 0.0, %v4542
      %4544 = vmatmul.bf16.gmra.mxu0 %v4377
      %v4545 = vpop.f32.mrf.mxu0
      %v4546 = vadd.f32 0.0, %v4545
      %v4547 = vpop.f32.mrf.mxu0
      %4548 = vmatmul.bf16.gmra.mxu0 %v4379
      %v4549 = vpop.f32.mrf.mxu0
      %v4550 = vadd.f32 0.0, %v4549
      %v4551 = vpop.f32.mrf.mxu0
      %v4552 = vadd.f32 0.0, %v4551
      %4553 = vmatmul.bf16.gmra.mxu0 %v4381
      %v4554 = vpop.f32.mrf.mxu0
      %v4555 = vpop.f32.mrf.mxu0
      %v4556 = vadd.f32 0.0, %v4555
      %4557 = vmatmul.bf16.gmra.mxu0 %v4383
      %v4558 = vpop.f32.mrf.mxu0
      %v4559 = vadd.f32 0.0, %v4558
      %v4560 = vpop.f32.mrf.mxu0
      %4561 = vmatmul.bf16.gmra.mxu0 %v4385
      %v4562 = vpop.f32.mrf.mxu0
      %v4563 = vadd.f32 0.0, %v4562
      %v4564 = vpop.f32.mrf.mxu0
      %v4565 = vadd.f32 0.0, %v4564
      %4566 = vmatmul.bf16.gmra.mxu0 %v4387
      %v4567 = vpop.f32.mrf.mxu0
      %v4568 = vpop.f32.mrf.mxu0
      %v4569 = vadd.f32 0.0, %v4568
      %4570 = vmatmul.bf16.gmra.mxu0 %v4389
      %v4571 = vpop.f32.mrf.mxu0
      %v4572 = vadd.f32 0.0, %v4571
      %v4573 = vpop.f32.mrf.mxu0
      %4574 = vdwg.mxu0
      %v4575 = vadd.f32 %v4288, %v4472
      %v4576 = vadd.f32 %v4289, %v4474
      %v4577 = vadd.f32 %v4290, %v4478
      %v4578 = vadd.f32 %v4291, %v4481
      %v4579 = vadd.f32 %v4292, %v4485
      %v4580 = vadd.f32 %v4293, %v4487
      %v4581 = vadd.f32 %v4294, %v4491
      %v4582 = vadd.f32 %v4295, %v4494
      %v4583 = vadd.f32 %v4296, %v4498
      %v4584 = vadd.f32 %v4297, %v4500
      %v4585 = vadd.f32 %v4298, %v4504
      %v4586 = vadd.f32 %v4299, %v4507
      %v4587 = vadd.f32 %v4300, %v4511
      %v4588 = vadd.f32 %v4301, %v4513
      %v4589 = vadd.f32 %v4302, %v4517
      %v4590 = vadd.f32 %v4303, %v4520
      %v4591 = vadd.f32 %v4304, %v4524
      %v4592 = vadd.f32 %v4305, %v4526
      %v4593 = vadd.f32 %v4306, %v4530
      %v4594 = vadd.f32 %v4307, %v4533
      %v4595 = vadd.f32 %v4308, %v4537
      %v4596 = vadd.f32 %v4309, %v4539
      %v4597 = vadd.f32 %v4310, %v4543
      %v4598 = vadd.f32 %v4311, %v4546
      %v4599 = vadd.f32 %v4312, %v4550
      %v4600 = vadd.f32 %v4313, %v4552
      %v4601 = vadd.f32 %v4314, %v4556
      %v4602 = vadd.f32 %v4315, %v4559
      %v4603 = vadd.f32 %v4316, %v4563
      %v4604 = vadd.f32 %v4317, %v4565
      %v4605 = vadd.f32 %v4318, %v4569
      %v4606 = vadd.f32 %v4319, %v4572
      %v4607 = vld [vmem:[%s3] sm:$0x1]
      %v4609 = vperm.slane %v4607, 0
      %v4611 = vadd.f32 %v4575, %v4609
      %v4612 = vadd.f32 %v4576, %v4609
      %v4613 = vadd.f32 %v4577, %v4609
      %v4614 = vadd.f32 %v4578, %v4609
      %v4615 = vadd.f32 %v4579, %v4609
      %v4616 = vadd.f32 %v4580, %v4609
      %v4617 = vadd.f32 %v4581, %v4609
      %v4618 = vadd.f32 %v4582, %v4609
      %v4619 = vadd.f32 %v4583, %v4609
      %v4620 = vadd.f32 %v4584, %v4609
      %v4621 = vadd.f32 %v4585, %v4609
      %v4622 = vadd.f32 %v4586, %v4609
      %v4623 = vadd.f32 %v4587, %v4609
      %v4624 = vadd.f32 %v4588, %v4609
      %v4625 = vadd.f32 %v4589, %v4609
      %v4626 = vadd.f32 %v4590, %v4609
      %v4627 = vadd.f32 %v4591, %v4609
      %v4628 = vadd.f32 %v4592, %v4609
      %v4629 = vadd.f32 %v4593, %v4609
      %v4630 = vadd.f32 %v4594, %v4609
      %v4631 = vadd.f32 %v4595, %v4609
      %v4632 = vadd.f32 %v4596, %v4609
      %v4633 = vadd.f32 %v4597, %v4609
      %v4634 = vadd.f32 %v4598, %v4609
      %v4635 = vadd.f32 %v4599, %v4609
      %v4636 = vadd.f32 %v4600, %v4609
      %v4637 = vadd.f32 %v4601, %v4609
      %v4638 = vadd.f32 %v4602, %v4609
      %v4639 = vadd.f32 %v4603, %v4609
      %v4640 = vadd.f32 %v4604, %v4609
      %v4641 = vadd.f32 %v4605, %v4609
      %v4642 = vadd.f32 %v4606, %v4609
      %v4643 = vld [vmem:[%s266] sm:$0xff]
      %v4644 = vld [vmem:[%s266 + $0x8] sm:$0xff]
      %v4645 = vld [vmem:[%s266 + $0x10] sm:$0xff]
      %v4646 = vld [vmem:[%s266 + $0x18] sm:$0xff]
      %v4647 = vld [vmem:[%s266 + $0x20] sm:$0xff]
      %v4648 = vld [vmem:[%s266 + $0x28] sm:$0xff]
      %v4649 = vld [vmem:[%s266 + $0x30] sm:$0xff]
      %v4650 = vld [vmem:[%s266 + $0x38] sm:$0xff]
      %v4651 = vld [vmem:[%s266 + $0x40] sm:$0xff]
      %v4652 = vld [vmem:[%s266 + $0x48] sm:$0xff]
      %v4653 = vld [vmem:[%s266 + $0x50] sm:$0xff]
      %v4654 = vld [vmem:[%s266 + $0x58] sm:$0xff]
      %v4655 = vld [vmem:[%s266 + $0x60] sm:$0xff]
      %v4656 = vld [vmem:[%s266 + $0x68] sm:$0xff]
      %v4657 = vld [vmem:[%s266 + $0x70] sm:$0xff]
      %v4658 = vld [vmem:[%s266 + $0x78] sm:$0xff]
      %v4659 = vld [vmem:[%s266 + $0x80] sm:$0xff]
      %v4660 = vld [vmem:[%s266 + $0x88] sm:$0xff]
      %v4661 = vld [vmem:[%s266 + $0x90] sm:$0xff]
      %v4662 = vld [vmem:[%s266 + $0x98] sm:$0xff]
      %v4663 = vld [vmem:[%s266 + $0xa0] sm:$0xff]
      %v4664 = vld [vmem:[%s266 + $0xa8] sm:$0xff]
      %v4665 = vld [vmem:[%s266 + $0xb0] sm:$0xff]
      %v4666 = vld [vmem:[%s266 + $0xb8] sm:$0xff]
      %v4667 = vld [vmem:[%s266 + $0xc0] sm:$0xff]
      %v4668 = vld [vmem:[%s266 + $0xc8] sm:$0xff]
      %v4669 = vld [vmem:[%s266 + $0xd0] sm:$0xff]
      %v4670 = vld [vmem:[%s266 + $0xd8] sm:$0xff]
      %v4671 = vld [vmem:[%s266 + $0xe0] sm:$0xff]
      %v4672 = vld [vmem:[%s266 + $0xe8] sm:$0xff]
      %v4673 = vld [vmem:[%s266 + $0xf0] sm:$0xff]
      %v4674 = vld [vmem:[%s266 + $0xf8] sm:$0xff]
      %v4675 = vadd.f32 %v4611, %v4643
      %v4676 = vadd.f32 %v4612, %v4644
      %v4677 = vadd.f32 %v4613, %v4645
      %v4678 = vadd.f32 %v4614, %v4646
      %v4679 = vadd.f32 %v4615, %v4647
      %v4680 = vadd.f32 %v4616, %v4648
      %v4681 = vadd.f32 %v4617, %v4649
      %v4682 = vadd.f32 %v4618, %v4650
      %v4683 = vadd.f32 %v4619, %v4651
      %v4684 = vadd.f32 %v4620, %v4652
      %v4685 = vadd.f32 %v4621, %v4653
      %v4686 = vadd.f32 %v4622, %v4654
      %v4687 = vadd.f32 %v4623, %v4655
      %v4688 = vadd.f32 %v4624, %v4656
      %v4689 = vadd.f32 %v4625, %v4657
      %v4690 = vadd.f32 %v4626, %v4658
      %v4691 = vadd.f32 %v4627, %v4659
      %v4692 = vadd.f32 %v4628, %v4660
      %v4693 = vadd.f32 %v4629, %v4661
      %v4694 = vadd.f32 %v4630, %v4662
      %v4695 = vadd.f32 %v4631, %v4663
      %v4696 = vadd.f32 %v4632, %v4664
      %v4697 = vadd.f32 %v4633, %v4665
      %v4698 = vadd.f32 %v4634, %v4666
      %v4699 = vadd.f32 %v4635, %v4667
      %v4700 = vadd.f32 %v4636, %v4668
      %v4701 = vadd.f32 %v4637, %v4669
      %v4702 = vadd.f32 %v4638, %v4670
      %v4703 = vadd.f32 %v4639, %v4671
      %v4704 = vadd.f32 %v4640, %v4672
      %v4705 = vadd.f32 %v4641, %v4673
      %v4706 = vadd.f32 %v4642, %v4674
      %4707 = vst [vmem:[%s271] sm:$0xff] %v4675
      %4708 = vst [vmem:[%s271 + $0x8] sm:$0xff] %v4676
      %4709 = vst [vmem:[%s271 + $0x10] sm:$0xff] %v4677
      %4710 = vst [vmem:[%s271 + $0x18] sm:$0xff] %v4678
      %4711 = vst [vmem:[%s271 + $0x20] sm:$0xff] %v4679
      %4712 = vst [vmem:[%s271 + $0x28] sm:$0xff] %v4680
      %4713 = vst [vmem:[%s271 + $0x30] sm:$0xff] %v4681
      %4714 = vst [vmem:[%s271 + $0x38] sm:$0xff] %v4682
      %4715 = vst [vmem:[%s271 + $0x40] sm:$0xff] %v4683
      %4716 = vst [vmem:[%s271 + $0x48] sm:$0xff] %v4684
      %4717 = vst [vmem:[%s271 + $0x50] sm:$0xff] %v4685
      %4718 = vst [vmem:[%s271 + $0x58] sm:$0xff] %v4686
      %4719 = vst [vmem:[%s271 + $0x60] sm:$0xff] %v4687
      %4720 = vst [vmem:[%s271 + $0x68] sm:$0xff] %v4688
      %4721 = vst [vmem:[%s271 + $0x70] sm:$0xff] %v4689
      %4722 = vst [vmem:[%s271 + $0x78] sm:$0xff] %v4690
      %4723 = vst [vmem:[%s271 + $0x80] sm:$0xff] %v4691
      %4724 = vst [vmem:[%s271 + $0x88] sm:$0xff] %v4692
      %4725 = vst [vmem:[%s271 + $0x90] sm:$0xff] %v4693
      %4726 = vst [vmem:[%s271 + $0x98] sm:$0xff] %v4694
      %4727 = vst [vmem:[%s271 + $0xa0] sm:$0xff] %v4695
      %4728 = vst [vmem:[%s271 + $0xa8] sm:$0xff] %v4696
      %4729 = vst [vmem:[%s271 + $0xb0] sm:$0xff] %v4697
      %4730 = vst [vmem:[%s271 + $0xb8] sm:$0xff] %v4698
      %4731 = vst [vmem:[%s271 + $0xc0] sm:$0xff] %v4699
      %4732 = vst [vmem:[%s271 + $0xc8] sm:$0xff] %v4700
      %4733 = vst [vmem:[%s271 + $0xd0] sm:$0xff] %v4701
      %4734 = vst [vmem:[%s271 + $0xd8] sm:$0xff] %v4702
      %4735 = vst [vmem:[%s271 + $0xe0] sm:$0xff] %v4703
      %4736 = vst [vmem:[%s271 + $0xe8] sm:$0xff] %v4704
      %4737 = vst [vmem:[%s271 + $0xf0] sm:$0xff] %v4705
      %4738 = vst [vmem:[%s271 + $0xf8] sm:$0xff] %v4706
      %p4739 = scmp.lt.s32.totalorder %s17, 1
      %s4740 = scalar_select %p4739, %s17, 1
      %s4741 = smul.addr %s4740, 32
      %s4742 = smul.addr %s4741, 8
      %s4743 = scalar_lea.vmem %s6, %s4742
      // Predicated region
      $region45: #{residual_block_pallas.5} parent=43 // pred_check
        %p4744 = pneg %p171
      $region46: #{residual_block_pallas.5} parent=43 // pred_check_branch
        %4746 = sbr.rel (%p4744) target = $region48
      $region47: #{residual_block_pallas.5} parent=43 // pred_region
        _
      $region48: #{residual_block_pallas.5} parent=43 // pred_fallthru
        _
    $region44: #{residual_block_pallas.5} parent=5 // pred_fallthru
      _
    %p4747 = scmp.le.s32.totalorder 2, %s12
    // Predicated region
    $region49: #{residual_block_pallas.5} parent=5 // pred_check
      %p4748 = pneg %p4747
    $region50: #{residual_block_pallas.5} parent=5 // pred_check_branch
      %4750 = sbr.rel (%p4748) target = $region52
    $region51: #{residual_block_pallas.5} parent=5 // pred_region
      %s4751 = ssub.s32 %s12, 2
      // Predicated region
      $region53: #{residual_block_pallas.5} parent=51 // pred_check
        %p4752 = pneg %p177
      $region54: #{residual_block_pallas.5} parent=51 // pred_check_branch
        %4754 = sbr.rel (%p4752) target = $region56
      $region55: #{residual_block_pallas.5} parent=51 // pred_region
        %p4755 = scmp.lt.s32.totalorder %s18, 1
        %s4756 = scalar_select %p4755, %s18, 1
        %s4757 = smul.addr %s4756, 32
        %s4758 = smul.addr %s4757, 8
        %s4759 = scalar_lea.vmem %s6, %s4758
      $region56: #{residual_block_pallas.5} parent=51 // pred_fallthru
        _
    $region52: #{residual_block_pallas.5} parent=5 // pred_fallthru
      _
  $region6: #{residual_block_pallas.5} parent=0 // loop_footer
    %s16 = sadd.s32 1, %s12
  $region7: #{residual_block_pallas.5} parent=0 // loop_footer_branch
    %11 = sbr.rel target = $region3
  $region8: #{residual_block_pallas.5} parent=0 // loop_exit
    _

// kernel: residual_block_pallas.4
$region0: #{residual_block_pallas.4}
  #allocation0 [shape = 'u32[]', space=smem, size = 0x4, offset = 0x4, fixed_abs, tag = 'smem constant byte address 0x4 - core index']
  #allocation1 [shape = 'u32[72,128]{1,0:T(1,128)}', space=vmem, size = 0x9000, scoped, tag = 'internal scratch']
  #allocation2 [shape = 'bf16[456,128]{1,0:T(8,128)(2,1)}', space=vmem, size = 0x1c800, scoped, tag = 'scratch operand']
  %s0 = inlined_call_operand.vmem [shape: f32[1,128], index: 0, kind: input, shape index: {}]
  %s1 = inlined_call_operand.vmem [shape: f32[1,128], index: 1, kind: input, shape index: {}]
  %s2 = inlined_call_operand.vmem [shape: bf16[9,128,128], index: 2, kind: input, shape index: {}]
  %s3 = inlined_call_operand.vmem [shape: f32[2,16,16,128], index: 3, kind: input, shape index: {}]
  %s4 = inlined_call_operand.vmem [shape: bf16[2,16,16,128], index: 4, kind: output, shape index: {0}]
  %s5 = inlined_call_operand.vmem [shape: f32[2,2,128], index: 5, kind: output, shape index: {1}]
  %6 = xla_tuple %s4, %s5
  %s7 = sld [smem:[#allocation0]]
  $region57: #{residual_block_pallas.4} parent=0
    _
  %s9 = ssub.s32 1, %s7
  %s10 = scalar_select 0, %s9, %s7
  loop: start=0, step=1, limit=4
  $region2: #{residual_block_pallas.4} parent=0 // loop_pre_header
    _
  $region3: #{residual_block_pallas.4} parent=0 // loop_header
    %s12 = sphi 0, %s16
    %p13 = scmp.ge.s32.totalorder %s12, 4
    %s20 = sphi 0, %s20
    %s22 = sphi 0, %s20
    %s23 = sphi 0, %s22
    %s37 = sphi 0, %s23
    %s41 = sphi 0, %s41
    %s43 = sphi 0, %s41
    %s44 = sphi 0, %s43
    %s58 = sphi 0, %s44
    %s62 = sphi 0, %s62
    %s64 = sphi 0, %s62
    %s65 = sphi 0, %s64
    %s79 = sphi 0, %s65
    %s85 = sphi 0, %s87
    %s88 = sphi 0, %s85
    %s89 = sphi 0, %s88
    %s105 = sphi 0, %s89
    %s111 = sphi 0, %s113
    %s114 = sphi 0, %s111
    %s115 = sphi 0, %s114
    %s131 = sphi 0, %s115
    %s137 = sphi 0, %s139
    %s140 = sphi 0, %s137
    %s141 = sphi 0, %s140
    %s157 = sphi 0, %s141
  $region4: #{residual_block_pallas.4} parent=0 // loop_header_branch
    %15 = sbr.rel (%p13) target = $region8
  $region5: #{residual_block_pallas.4} parent=0 // loop_body
    %s17 = ssub.s32 %s12, 1
    %s18 = ssub.s32 %s12, 2
    %s19 = sadd.s32 %s12, 1
    %s21 = sadd.s32 %s20, 1
    %p24 = scmp.eq.s32.totalorder %s12, 1
    %p25 = scmp.ne.s32.totalorder %s20, %s22
    %p26 = scmp.eq.s32.totalorder %s12, 0
    %p27 = por %p25, %p26
    %p28 = scmp.ne.s32.totalorder %s20, %s22
    %p29 = scmp.eq.s32.totalorder %s17, 1
    %p30 = por %p28, %p29
    %p31 = scmp.ne.s32.totalorder %s22, %s23
    %p32 = scmp.eq.s32.totalorder %s17, 0
    %p33 = por %p31, %p32
    %p34 = scmp.ne.s32.totalorder %s22, %s23
    %p35 = scmp.eq.s32.totalorder %s18, 1
    %p36 = por %p34, %p35
    %p38 = scmp.ne.s32.totalorder %s23, %s37
    %p39 = scmp.eq.s32.totalorder %s18, 0
    %p40 = por %p38, %p39
    %s42 = sadd.s32 %s41, 1
    %p45 = scmp.eq.s32.totalorder %s12, 1
    %p46 = scmp.ne.s32.totalorder %s41, %s43
    %p47 = scmp.eq.s32.totalorder %s12, 0
    %p48 = por %p46, %p47
    %p49 = scmp.ne.s32.totalorder %s41, %s43
    %p50 = scmp.eq.s32.totalorder %s17, 1
    %p51 = por %p49, %p50
    %p52 = scmp.ne.s32.totalorder %s43, %s44
    %p53 = scmp.eq.s32.totalorder %s17, 0
    %p54 = por %p52, %p53
    %p55 = scmp.ne.s32.totalorder %s43, %s44
    %p56 = scmp.eq.s32.totalorder %s18, 1
    %p57 = por %p55, %p56
    %p59 = scmp.ne.s32.totalorder %s44, %s58
    %p60 = scmp.eq.s32.totalorder %s18, 0
    %p61 = por %p59, %p60
    %s63 = sadd.s32 %s62, 1
    %p66 = scmp.eq.s32.totalorder %s12, 1
    %p67 = scmp.ne.s32.totalorder %s62, %s64
    %p68 = scmp.eq.s32.totalorder %s12, 0
    %p69 = por %p67, %p68
    %p70 = scmp.ne.s32.totalorder %s62, %s64
    %p71 = scmp.eq.s32.totalorder %s17, 1
    %p72 = por %p70, %p71
    %p73 = scmp.ne.s32.totalorder %s64, %s65
    %p74 = scmp.eq.s32.totalorder %s17, 0
    %p75 = por %p73, %p74
    %p76 = scmp.ne.s32.totalorder %s64, %s65
    %p77 = scmp.eq.s32.totalorder %s18, 1
    %p78 = por %p76, %p77
    %p80 = scmp.ne.s32.totalorder %s65, %s79
    %p81 = scmp.eq.s32.totalorder %s18, 0
    %p82 = por %p80, %p81
    %s83 = ssub.s32 %s12, %s19
    %p84 = scmp.eq.s32.totalorder %s83, 0
    %s86 = sadd.s32 %s85, 1
    %s87 = scalar_select %p84, %s85, %s86
    %p90 = pneg %p84
    %p91 = scmp.eq.s32.totalorder %s12, 1
    %p92 = por %p90, %p91
    %p93 = scmp.ne.s32.totalorder %s85, %s88
    %p94 = scmp.eq.s32.totalorder %s12, 0
    %p95 = por %p93, %p94
    %p96 = scmp.ne.s32.totalorder %s85, %s88
    %p97 = scmp.eq.s32.totalorder %s17, 1
    %p98 = por %p96, %p97
    %p99 = scmp.ne.s32.totalorder %s88, %s89
    %p100 = scmp.eq.s32.totalorder %s17, 0
    %p101 = por %p99, %p100
    %p102 = scmp.ne.s32.totalorder %s88, %s89
    %p103 = scmp.eq.s32.totalorder %s18, 1
    %p104 = por %p102, %p103
    %p106 = scmp.ne.s32.totalorder %s89, %s105
    %p107 = scmp.eq.s32.totalorder %s18, 0
    %p108 = por %p106, %p107
    %s109 = ssub.s32 %s12, %s19
    %p110 = scmp.eq.s32.totalorder %s109, 0
    %s112 = sadd.s32 %s111, 1
    %s113 = scalar_select %p110, %s111, %s112
    %p116 = pneg %p110
    %p117 = scmp.eq.s32.totalorder %s12, 1
    %p118 = por %p116, %p117
    %p119 = scmp.ne.s32.totalorder %s111, %s114
    %p120 = scmp.eq.s32.totalorder %s12, 0
    %p121 = por %p119, %p120
    %p122 = scmp.ne.s32.totalorder %s111, %s114
    %p123 = scmp.eq.s32.totalorder %s17, 1
    %p124 = por %p122, %p123
    %p125 = scmp.ne.s32.totalorder %s114, %s115
    %p126 = scmp.eq.s32.totalorder %s17, 0
    %p127 = por %p125, %p126
    %p128 = scmp.ne.s32.totalorder %s114, %s115
    %p129 = scmp.eq.s32.totalorder %s18, 1
    %p130 = por %p128, %p129
    %p132 = scmp.ne.s32.totalorder %s115, %s131
    %p133 = scmp.eq.s32.totalorder %s18, 0
    %p134 = por %p132, %p133
    %s135 = ssub.s32 %s12, %s19
    %p136 = scmp.eq.s32.totalorder %s135, 0
    %s138 = sadd.s32 %s137, 1
    %s139 = scalar_select %p136, %s137, %s138
    %p142 = pneg %p136
    %p143 = scmp.eq.s32.totalorder %s12, 1
    %p144 = por %p142, %p143
    %p145 = scmp.ne.s32.totalorder %s137, %s140
    %p146 = scmp.eq.s32.totalorder %s12, 0
    %p147 = por %p145, %p146
    %p148 = scmp.ne.s32.totalorder %s137, %s140
    %p149 = scmp.eq.s32.totalorder %s17, 1
    %p150 = por %p148, %p149
    %p151 = scmp.ne.s32.totalorder %s140, %s141
    %p152 = scmp.eq.s32.totalorder %s17, 0
    %p153 = por %p151, %p152
    %p154 = scmp.ne.s32.totalorder %s140, %s141
    %p155 = scmp.eq.s32.totalorder %s18, 1
    %p156 = por %p154, %p155
    %p158 = scmp.ne.s32.totalorder %s141, %s157
    %p159 = scmp.eq.s32.totalorder %s18, 0
    %p160 = por %p158, %p159
    %p161 = scmp.le.s32.totalorder 1, %s12
    %p162 = scmp.lt.s32.totalorder %s12, 3
    %p163 = pnand %p161, %p162
    %p164 = pneg %p163
    // Predicated region
    $region9: #{residual_block_pallas.4} parent=5 // pred_check
      _
    $region10: #{residual_block_pallas.4} parent=5 // pred_check_branch
      %166 = sbr.rel (%p163) target = $region12
    $region11: #{residual_block_pallas.4} parent=5 // pred_region
      %s167 = ssub.s32 %s12, 1
      // Predicated region
      $region13: #{residual_block_pallas.4} parent=11 // pred_check
        %p168 = pneg %p33
      $region14: #{residual_block_pallas.4} parent=11 // pred_check_branch
        %170 = sbr.rel (%p168) target = $region16
      $region15: #{residual_block_pallas.4} parent=11 // pred_region
        _
      $region16: #{residual_block_pallas.4} parent=11 // pred_fallthru
        _
      // Predicated region
      $region17: #{residual_block_pallas.4} parent=11 // pred_check
        %p171 = pneg %p54
      $region18: #{residual_block_pallas.4} parent=11 // pred_check_branch
        %173 = sbr.rel (%p171) target = $region20
      $region19: #{residual_block_pallas.4} parent=11 // pred_region
        _
      $region20: #{residual_block_pallas.4} parent=11 // pred_fallthru
        _
      // Predicated region
      $region21: #{residual_block_pallas.4} parent=11 // pred_check
        %p174 = pneg %p75
      $region22: #{residual_block_pallas.4} parent=11 // pred_check_branch
        %176 = sbr.rel (%p174) target = $region24
      $region23: #{residual_block_pallas.4} parent=11 // pred_region
        _
      $region24: #{residual_block_pallas.4} parent=11 // pred_fallthru
        _
    $region12: #{residual_block_pallas.4} parent=5 // pred_fallthru
      _
    %p177 = scmp.lt.s32.totalorder %s12, 2
    // Predicated region
    $region25: #{residual_block_pallas.4} parent=5 // pred_check
      %p178 = pneg %p177
    $region26: #{residual_block_pallas.4} parent=5 // pred_check_branch
      %180 = sbr.rel (%p178) target = $region28
    $region27: #{residual_block_pallas.4} parent=5 // pred_region
      // Predicated region
      $region29: #{residual_block_pallas.4} parent=27 // pred_check
        %p181 = pneg %p95
      $region30: #{residual_block_pallas.4} parent=27 // pred_check_branch
        %183 = sbr.rel (%p181) target = $region32
      $region31: #{residual_block_pallas.4} parent=27 // pred_region
        %p184 = scmp.lt.s32.totalorder %s12, 1
        %s185 = scalar_select %p184, %s12, 1
        %s186 = smul.addr %s185, 32
        %s187 = smul.addr %s186, 8
        %s188 = scalar_lea.vmem %s3, %s187
      $region32: #{residual_block_pallas.4} parent=27 // pred_fallthru
        _
    $region28: #{residual_block_pallas.4} parent=5 // pred_fallthru
      _
    %p189 = scmp.le.s32.totalorder 1, %s12
    %p190 = scmp.lt.s32.totalorder %s12, 3
    %p191 = pnand %p189, %p190
    %p192 = pneg %p191
    // Predicated region
    $region33: #{residual_block_pallas.4} parent=5 // pred_check
      _
    $region34: #{residual_block_pallas.4} parent=5 // pred_check_branch
      %194 = sbr.rel (%p191) target = $region36
    $region35: #{residual_block_pallas.4} parent=5 // pred_region
      %s195 = ssub.s32 %s12, 1
      %p196 = pneg %p33
      %p197 = pneg %p30
      %p198 = pneg %p54
      %p199 = pneg %p51
      %p200 = pneg %p75
      %p201 = pneg %p72
      %p202 = scmp.lt.s32.totalorder %s17, 1
      %s203 = scalar_select %p202, %s17, 1
      %s204 = smul.addr %s203, 32
      %s205 = smul.addr %s204, 8
      %s206 = scalar_lea.vmem %s3, %s205
      %p207 = pneg %p101
      %p208 = pneg %p98
      %p209 = pneg %p127
      %p210 = pneg %p124
      %p211 = scmp.lt.s32.totalorder %s17, 1
      %s212 = scalar_select %p211, %s17, 1
      %s213 = smul.addr %s212, 32
      %s214 = smul.addr %s213, 4
      %s215 = scalar_lea.vmem %s4, %s214
      %p216 = pneg %p153
      %p217 = pneg %p150
      %p218 = scmp.lt.s32.totalorder %s17, 1
      %s219 = scalar_select %p218, %s17, 1
      %s220 = smul.addr %s219, 2
      %s221 = scalar_lea.vmem %s5, %s220
      %p222 = scmp.lt.s32.totalorder %s17, 1
      %s223 = scalar_select %p222, %s17, 1
      %s224 = smul.addr %s223, 32
      %s225 = smul.addr %s224, 8
      %s226 = scalar_lea.vmem %s3, %s225
      %p227 = scmp.lt.s32.totalorder %s17, 1
      %s228 = scalar_select %p227, %s17, 1
      %s229 = smul.addr %s228, 32
      %s230 = smul.addr %s229, 4
      %s231 = scalar_lea.vmem %s4, %s230
      %p232 = scmp.lt.s32.totalorder %s17, 1
      %s233 = scalar_select %p232, %s17, 1
      %s234 = smul.addr %s233, 2
      %s235 = scalar_lea.vmem %s5, %s234
      %v237 = vld [vmem:[%s226] sm:$0xff]
      %v238 = vld [vmem:[%s226 + $0x8] sm:$0xff]
      %v239 = vld [vmem:[%s226 + $0x10] sm:$0xff]
      %v240 = vld [vmem:[%s226 + $0x18] sm:$0xff]
      %v241 = vld [vmem:[%s226 + $0x20] sm:$0xff]
      %v242 = vld [vmem:[%s226 + $0x28] sm:$0xff]
      %v243 = vld [vmem:[%s226 + $0x30] sm:$0xff]
      %v244 = vld [vmem:[%s226 + $0x38] sm:$0xff]
      %v245 = vld [vmem:[%s226 + $0x40] sm:$0xff]
      %v246 = vld [vmem:[%s226 + $0x48] sm:$0xff]
      %v247 = vld [vmem:[%s226 + $0x50] sm:$0xff]
      %v248 = vld [vmem:[%s226 + $0x58] sm:$0xff]
      %v249 = vld [vmem:[%s226 + $0x60] sm:$0xff]
      %v250 = vld [vmem:[%s226 + $0x68] sm:$0xff]
      %v251 = vld [vmem:[%s226 + $0x70] sm:$0xff]
      %v252 = vld [vmem:[%s226 + $0x78] sm:$0xff]
      %v253 = vld [vmem:[%s226 + $0x80] sm:$0xff]
      %v254 = vld [vmem:[%s226 + $0x88] sm:$0xff]
      %v255 = vld [vmem:[%s226 + $0x90] sm:$0xff]
      %v256 = vld [vmem:[%s226 + $0x98] sm:$0xff]
      %v257 = vld [vmem:[%s226 + $0xa0] sm:$0xff]
      %v258 = vld [vmem:[%s226 + $0xa8] sm:$0xff]
      %v259 = vld [vmem:[%s226 + $0xb0] sm:$0xff]
      %v260 = vld [vmem:[%s226 + $0xb8] sm:$0xff]
      %v261 = vld [vmem:[%s226 + $0xc0] sm:$0xff]
      %v262 = vld [vmem:[%s226 + $0xc8] sm:$0xff]
      %v263 = vld [vmem:[%s226 + $0xd0] sm:$0xff]
      %v264 = vld [vmem:[%s226 + $0xd8] sm:$0xff]
      %v265 = vld [vmem:[%s226 + $0xe0] sm:$0xff]
      %v266 = vld [vmem:[%s226 + $0xe8] sm:$0xff]
      %v267 = vld [vmem:[%s226 + $0xf0] sm:$0xff]
      %v268 = vld [vmem:[%s226 + $0xf8] sm:$0xff]
      %v269 = vld [vmem:[%s0] sm:$0x1]
      %v271 = vperm.slane %v269, 0
      %v273 = vmul.f32 %v237, %v271
      %v274 = vmul.f32 %v238, %v271
      %v275 = vmul.f32 %v239, %v271
      %v276 = vmul.f32 %v240, %v271
      %v277 = vmul.f32 %v241, %v271
      %v278 = vmul.f32 %v242, %v271
      %v279 = vmul.f32 %v243, %v271
      %v280 = vmul.f32 %v244, %v271
      %v281 = vmul.f32 %v245, %v271
      %v282 = vmul.f32 %v246, %v271
      %v283 = vmul.f32 %v247, %v271
      %v284 = vmul.f32 %v248, %v271
      %v285 = vmul.f32 %v249, %v271
      %v286 = vmul.f32 %v250, %v271
      %v287 = vmul.f32 %v251, %v271
      %v288 = vmul.f32 %v252, %v271
      %v289 = vmul.f32 %v253, %v271
      %v290 = vmul.f32 %v254, %v271
      %v291 = vmul.f32 %v255, %v271
      %v292 = vmul.f32 %v256, %v271
      %v293 = vmul.f32 %v257, %v271
      %v294 = vmul.f32 %v258, %v271
      %v295 = vmul.f32 %v259, %v271
      %v296 = vmul.f32 %v260, %v271
      %v297 = vmul.f32 %v261, %v271
      %v298 = vmul.f32 %v262, %v271
      %v299 = vmul.f32 %v263, %v271
      %v300 = vmul.f32 %v264, %v271
      %v301 = vmul.f32 %v265, %v271
      %v302 = vmul.f32 %v266, %v271
      %v303 = vmul.f32 %v267, %v271
      %v304 = vmul.f32 %v268, %v271
      %v305 = vld [vmem:[%s1] sm:$0x1]
      %v307 = vperm.slane %v305, 0
      %v309 = vadd.f32 %v273, %v307
      %v310 = vadd.f32 %v274, %v307
      %v311 = vadd.f32 %v275, %v307
      %v312 = vadd.f32 %v276, %v307
      %v313 = vadd.f32 %v277, %v307
      %v314 = vadd.f32 %v278, %v307
      %v315 = vadd.f32 %v279, %v307
      %v316 = vadd.f32 %v280, %v307
      %v317 = vadd.f32 %v281, %v307
      %v318 = vadd.f32 %v282, %v307
      %v319 = vadd.f32 %v283, %v307
      %v320 = vadd.f32 %v284, %v307
      %v321 = vadd.f32 %v285, %v307
      %v322 = vadd.f32 %v286, %v307
      %v323 = vadd.f32 %v287, %v307
      %v324 = vadd.f32 %v288, %v307
      %v325 = vadd.f32 %v289, %v307
      %v326 = vadd.f32 %v290, %v307
      %v327 = vadd.f32 %v291, %v307
      %v328 = vadd.f32 %v292, %v307
      %v329 = vadd.f32 %v293, %v307
      %v330 = vadd.f32 %v294, %v307
      %v331 = vadd.f32 %v295, %v307
      %v332 = vadd.f32 %v296, %v307
      %v333 = vadd.f32 %v297, %v307
      %v334 = vadd.f32 %v298, %v307
      %v335 = vadd.f32 %v299, %v307
      %v336 = vadd.f32 %v300, %v307
      %v337 = vadd.f32 %v301, %v307
      %v338 = vadd.f32 %v302, %v307
      %v339 = vadd.f32 %v303, %v307
      %v340 = vadd.f32 %v304, %v307
      %v341 = vmax.f32 %v309, 0.0
      %v342 = vmax.f32 %v310, 0.0
      %v343 = vmax.f32 %v311, 0.0
      %v344 = vmax.f32 %v312, 0.0
      %v345 = vmax.f32 %v313, 0.0
      %v346 = vmax.f32 %v314, 0.0
      %v347 = vmax.f32 %v315, 0.0
      %v348 = vmax.f32 %v316, 0.0
      %v349 = vmax.f32 %v317, 0.0
      %v350 = vmax.f32 %v318, 0.0
      %v351 = vmax.f32 %v319, 0.0
      %v352 = vmax.f32 %v320, 0.0
      %v353 = vmax.f32 %v321, 0.0
      %v354 = vmax.f32 %v322, 0.0
      %v355 = vmax.f32 %v323, 0.0
      %v356 = vmax.f32 %v324, 0.0
      %v357 = vmax.f32 %v325, 0.0
      %v358 = vmax.f32 %v326, 0.0
      %v359 = vmax.f32 %v327, 0.0
      %v360 = vmax.f32 %v328, 0.0
      %v361 = vmax.f32 %v329, 0.0
      %v362 = vmax.f32 %v330, 0.0
      %v363 = vmax.f32 %v331, 0.0
      %v364 = vmax.f32 %v332, 0.0
      %v365 = vmax.f32 %v333, 0.0
      %v366 = vmax.f32 %v334, 0.0
      %v367 = vmax.f32 %v335, 0.0
      %v368 = vmax.f32 %v336, 0.0
      %v369 = vmax.f32 %v337, 0.0
      %v370 = vmax.f32 %v338, 0.0
      %v371 = vmax.f32 %v339, 0.0
      %v372 = vmax.f32 %v340, 0.0
      %373 = vst [vmem:[#allocation2] sm:$0xf] 0
      %374 = vst [vmem:[#allocation2 + $0x4] sm:$0xf] 0
      %375 = vst [vmem:[#allocation2 + $0x8] sm:$0xf] 0
      %376 = vst [vmem:[#allocation2 + $0xcc] sm:$0xf] 0
      %377 = vst [vmem:[#allocation2 + $0xd0] sm:$0xf] 0
      %378 = vst [vmem:[#allocation2 + $0xd4] sm:$0xf] 0
      %379 = vst [vmem:[#allocation2 + $0xd8] sm:$0xf] 0
      %380 = vst [vmem:[#allocation2 + $0xdc] sm:$0xf] 0
      %381 = vst [vmem:[#allocation2 + $0xe0] sm:$0xf] 0
      %v382 = vpack.c.bf16 %v341, %v341
      %v383 = vpack.c.bf16 %v342, %v342
      %v384 = vpack.c.bf16 %v343, %v343
      %v385 = vpack.c.bf16 %v344, %v344
      %v386 = vpack.c.bf16 %v345, %v345
      %v387 = vpack.c.bf16 %v346, %v346
      %v388 = vpack.c.bf16 %v347, %v347
      %v389 = vpack.c.bf16 %v348, %v348
      %v390 = vpack.c.bf16 %v349, %v349
      %v391 = vpack.c.bf16 %v350, %v350
      %v392 = vpack.c.bf16 %v351, %v351
      %v393 = vpack.c.bf16 %v352, %v352
      %v394 = vpack.c.bf16 %v353, %v353
      %v395 = vpack.c.bf16 %v354, %v354
      %v396 = vpack.c.bf16 %v355, %v355
      %v397 = vpack.c.bf16 %v356, %v356
      %v398 = vpack.c.bf16 %v357, %v357
      %v399 = vpack.c.bf16 %v358, %v358
      %v400 = vpack.c.bf16 %v359, %v359
      %v401 = vpack.c.bf16 %v360, %v360
      %v402 = vpack.c.bf16 %v361, %v361
      %v403 = vpack.c.bf16 %v362, %v362
      %v404 = vpack.c.bf16 %v363, %v363
      %v405 = vpack.c.bf16 %v364, %v364
      %v406 = vpack.c.bf16 %v365, %v365
      %v407 = vpack.c.bf16 %v366, %v366
      %v408 = vpack.c.bf16 %v367, %v367
      %v409 = vpack.c.bf16 %v368, %v368
      %v410 = vpack.c.bf16 %v369, %v369
      %v411 = vpack.c.bf16 %v370, %v370
      %v412 = vpack.c.bf16 %v371, %v371
      %v413 = vpack.c.bf16 %v372, %v372
      %v446 = vunpack.c.l.b16 %v382
      %v447 = vunpack.c.l.b16 %v383
      %v448 = vunpack.c.l.b16 %v384
      %v449 = vunpack.c.l.b16 %v385
      %v450 = vunpack.c.l.b16 %v386
      %v451 = vunpack.c.l.b16 %v387
      %v452 = vunpack.c.l.b16 %v388
      %v453 = vunpack.c.l.b16 %v389
      %v454 = vunpack.c.l.b16 %v390
      %v455 = vunpack.c.l.b16 %v391
      %v456 = vunpack.c.l.b16 %v392
      %v457 = vunpack.c.l.b16 %v393
      %v458 = vunpack.c.l.b16 %v394
      %v459 = vunpack.c.l.b16 %v395
      %v460 = vunpack.c.l.b16 %v396
      %v461 = vunpack.c.l.b16 %v397
      %v462 = vunpack.c.l.b16 %v398
      %v463 = vunpack.c.l.b16 %v399
      %v464 = vunpack.c.l.b16 %v400
      %v465 = vunpack.c.l.b16 %v401
      %v466 = vunpack.c.l.b16 %v402
      %v467 = vunpack.c.l.b16 %v403
      %v468 = vunpack.c.l.b16 %v404
      %v469 = vunpack.c.l.b16 %v405
      %v470 = vunpack.c.l.b16 %v406
      %v471 = vunpack.c.l.b16 %v407
      %v472 = vunpack.c.l.b16 %v408
      %v473 = vunpack.c.l.b16 %v409
      %v474 = vunpack.c.l.b16 %v410
      %v475 = vunpack.c.l.b16 %v411
      %v476 = vunpack.c.l.b16 %v412
      %v477 = vunpack.c.l.b16 %v413
      %v478 = vpack.c.b16 %v447, %v446
      %v479 = vpack.c.b16 %v449, %v448
      %v480 = vpack.c.b16 %v451, %v450
      %v481 = vpack.c.b16 %v453, %v452
      %v482 = vpack.c.b16 %v455, %v454
      %v483 = vpack.c.b16 %v457, %v456
      %v484 = vpack.c.b16 %v459, %v458
      %v485 = vpack.c.b16 %v461, %v460
      %v486 = vpack.c.b16 %v463, %v462
      %v487 = vpack.c.b16 %v465, %v464
      %v488 = vpack.c.b16 %v467, %v466
      %v489 = vpack.c.b16 %v469, %v468
      %v490 = vpack.c.b16 %v471, %v470
      %v491 = vpack.c.b16 %v473, %v472
      %v492 = vpack.c.b16 %v475, %v474
      %v493 = vpack.c.b16 %v477, %v476
      %v495 = vshrl.u32 %v478, 16
      %v497 = vrot.slane %v495, 7
      %v498 = vshll.u32 %v478, 16
      %v500 = vor.u32 %v497, %v498
      %v502 = vshrl.u32 %v479, 16
      %v504 = vrot.slane %v502, 7
      %v505 = vshll.u32 %v479, 16
      %v507 = vor.u32 %v504, %v505
      %v509 = vshrl.u32 %v480, 16
      %v511 = vrot.slane %v509, 7
      %v512 = vshll.u32 %v480, 16
      %v514 = vor.u32 %v511, %v512
      %v516 = vshrl.u32 %v481, 16
      %v518 = vrot.slane %v516, 7
      %v519 = vshll.u32 %v481, 16
      %v521 = vor.u32 %v518, %v519
      %v523 = vshrl.u32 %v482, 16
      %v525 = vrot.slane %v523, 7
      %v526 = vshll.u32 %v482, 16
      %v528 = vor.u32 %v525, %v526
      %v530 = vshrl.u32 %v483, 16
      %v532 = vrot.slane %v530, 7
      %v533 = vshll.u32 %v483, 16
      %v535 = vor.u32 %v532, %v533
      %v537 = vshrl.u32 %v484, 16
      %v539 = vrot.slane %v537, 7
      %v540 = vshll.u32 %v484, 16
      %v542 = vor.u32 %v539, %v540
      %v544 = vshrl.u32 %v485, 16
      %v546 = vrot.slane %v544, 7
      %v547 = vshll.u32 %v485, 16
      %v549 = vor.u32 %v546, %v547
      %v551 = vshrl.u32 %v486, 16
      %v553 = vrot.slane %v551, 7
      %v554 = vshll.u32 %v486, 16
      %v556 = vor.u32 %v553, %v554
      %v558 = vshrl.u32 %v487, 16
      %v560 = vrot.slane %v558, 7
      %v561 = vshll.u32 %v487, 16
      %v563 = vor.u32 %v560, %v561
      %v565 = vshrl.u32 %v488, 16
      %v567 = vrot.slane %v565, 7
      %v568 = vshll.u32 %v488, 16
      %v570 = vor.u32 %v567, %v568
      %v572 = vshrl.u32 %v489, 16
      %v574 = vrot.slane %v572, 7
      %v575 = vshll.u32 %v489, 16
      %v577 = vor.u32 %v574, %v575
      %v579 = vshrl.u32 %v490, 16
      %v581 = vrot.slane %v579, 7
      %v582 = vshll.u32 %v490, 16
      %v584 = vor.u32 %v581, %v582
      %v586 = vshrl.u32 %v491, 16
      %v588 = vrot.slane %v586, 7
      %v589 = vshll.u32 %v491, 16
      %v591 = vor.u32 %v588, %v589
      %v593 = vshrl.u32 %v492, 16
      %v595 = vrot.slane %v593, 7
      %v596 = vshll.u32 %v492, 16
      %v598 = vor.u32 %v595, %v596
      %v600 = vshrl.u32 %v493, 16
      %v602 = vrot.slane %v600, 7
      %v603 = vshll.u32 %v493, 16
      %v605 = vor.u32 %v602, %v603
      %vm638 = vcmask 1040384
      %vm639 = vsmask.f32 256
      %vm640 = vmand %vm638, %vm639
      %v641 = vsel %vm640, 0, %v500
      %v642 = vsel %vm640, 0, %v507
      %v643 = vsel %vm640, 0, %v514
      %v644 = vsel %vm640, 0, %v521
      %v645 = vsel %vm640, 0, %v528
      %v646 = vsel %vm640, 0, %v535
      %v647 = vsel %vm640, 0, %v542
      %v648 = vsel %vm640, 0, %v549
      %v649 = vsel %vm640, 0, %v556
      %v650 = vsel %vm640, 0, %v563
      %v651 = vsel %vm640, 0, %v570
      %v652 = vsel %vm640, 0, %v577
      %v653 = vsel %vm640, 0, %v584
      %v654 = vsel %vm640, 0, %v591
      %v655 = vsel %vm640, 0, %v598
      %v656 = vsel %vm640, 0, %v605
      %v657 = vsel %vm640, %v497, 0
      %v658 = vsel %vm640, %v504, 0
      %v659 = vsel %vm640, %v511, 0
      %v660 = vsel %vm640, %v518, 0
      %v661 = vsel %vm640, %v525, 0
      %v662 = vsel %vm640, %v532, 0
      %v663 = vsel %vm640, %v539, 0
      %v664 = vsel %vm640, %v546, 0
      %v665 = vsel %vm640, %v553, 0
      %v666 = vsel %vm640, %v560, 0
      %v667 = vsel %vm640, %v567, 0
      %v668 = vsel %vm640, %v574, 0
      %v669 = vsel %vm640, %v581, 0
      %v670 = vsel %vm640, %v588, 0
      %v671 = vsel %vm640, %v595, 0
      %v672 = vsel %vm640, %v602, 0
      %v705 = vunpack.c.l.b16 %v641
      %v706 = vunpack.c.h.b16 %v641
      %v707 = vunpack.c.l.b16 %v657
      %v708 = vunpack.c.l.b16 %v642
      %v709 = vunpack.c.h.b16 %v642
      %v710 = vunpack.c.l.b16 %v658
      %v711 = vunpack.c.l.b16 %v643
      %v712 = vunpack.c.h.b16 %v643
      %v713 = vunpack.c.l.b16 %v659
      %v714 = vunpack.c.l.b16 %v644
      %v715 = vunpack.c.h.b16 %v644
      %v716 = vunpack.c.l.b16 %v660
      %v717 = vunpack.c.l.b16 %v645
      %v718 = vunpack.c.h.b16 %v645
      %v719 = vunpack.c.l.b16 %v661
      %v720 = vunpack.c.l.b16 %v646
      %v721 = vunpack.c.h.b16 %v646
      %v722 = vunpack.c.l.b16 %v662
      %v723 = vunpack.c.l.b16 %v647
      %v724 = vunpack.c.h.b16 %v647
      %v725 = vunpack.c.l.b16 %v663
      %v726 = vunpack.c.l.b16 %v648
      %v727 = vunpack.c.h.b16 %v648
      %v728 = vunpack.c.l.b16 %v664
      %v729 = vunpack.c.l.b16 %v649
      %v730 = vunpack.c.h.b16 %v649
      %v731 = vunpack.c.l.b16 %v665
      %v732 = vunpack.c.l.b16 %v650
      %v733 = vunpack.c.h.b16 %v650
      %v734 = vunpack.c.l.b16 %v666
      %v735 = vunpack.c.l.b16 %v651
      %v736 = vunpack.c.h.b16 %v651
      %v737 = vunpack.c.l.b16 %v667
      %v738 = vunpack.c.l.b16 %v652
      %v739 = vunpack.c.h.b16 %v652
      %v740 = vunpack.c.l.b16 %v668
      %v741 = vunpack.c.l.b16 %v653
      %v742 = vunpack.c.h.b16 %v653
      %v743 = vunpack.c.l.b16 %v669
      %v744 = vunpack.c.l.b16 %v654
      %v745 = vunpack.c.h.b16 %v654
      %v746 = vunpack.c.l.b16 %v670
      %v747 = vunpack.c.l.b16 %v655
      %v748 = vunpack.c.h.b16 %v655
      %v749 = vunpack.c.l.b16 %v671
      %v750 = vunpack.c.l.b16 %v656
      %v751 = vunpack.c.h.b16 %v656
      %v752 = vunpack.c.l.b16 %v672
      %v753 = vpack.c.b16 %v705, %v705
      %v754 = vpack.c.b16 %v706, %v706
      %v755 = vpack.c.b16 %v707, %v707
      %v756 = vpack.c.b16 %v708, %v708
      %v757 = vpack.c.b16 %v709, %v709
      %v758 = vpack.c.b16 %v710, %v710
      %v759 = vpack.c.b16 %v711, %v711
      %v760 = vpack.c.b16 %v712, %v712
      %v761 = vpack.c.b16 %v713, %v713
      %v762 = vpack.c.b16 %v714, %v714
      %v763 = vpack.c.b16 %v715, %v715
      %v764 = vpack.c.b16 %v716, %v716
      %v765 = vpack.c.b16 %v717, %v717
      %v766 = vpack.c.b16 %v718, %v718
      %v767 = vpack.c.b16 %v719, %v719
      %v768 = vpack.c.b16 %v720, %v720
      %v769 = vpack.c.b16 %v721, %v721
      %v770 = vpack.c.b16 %v722, %v722
      %v771 = vpack.c.b16 %v723, %v723
      %v772 = vpack.c.b16 %v724, %v724
      %v773 = vpack.c.b16 %v725, %v725
      %v774 = vpack.c.b16 %v726, %v726
      %v775 = vpack.c.b16 %v727, %v727
      %v776 = vpack.c.b16 %v728, %v728
      %v777 = vpack.c.b16 %v729, %v729
      %v778 = vpack.c.b16 %v730, %v730
      %v779 = vpack.c.b16 %v731, %v731
      %v780 = vpack.c.b16 %v732, %v732
      %v781 = vpack.c.b16 %v733, %v733
      %v782 = vpack.c.b16 %v734, %v734
      %v783 = vpack.c.b16 %v735, %v735
      %v784 = vpack.c.b16 %v736, %v736
      %v785 = vpack.c.b16 %v737, %v737
      %v786 = vpack.c.b16 %v738, %v738
      %v787 = vpack.c.b16 %v739, %v739
      %v788 = vpack.c.b16 %v740, %v740
      %v789 = vpack.c.b16 %v741, %v741
      %v790 = vpack.c.b16 %v742, %v742
      %v791 = vpack.c.b16 %v743, %v743
      %v792 = vpack.c.b16 %v744, %v744
      %v793 = vpack.c.b16 %v745, %v745
      %v794 = vpack.c.b16 %v746, %v746
      %v795 = vpack.c.b16 %v747, %v747
      %v796 = vpack.c.b16 %v748, %v748
      %v797 = vpack.c.b16 %v749, %v749
      %v798 = vpack.c.b16 %v750, %v750
      %v799 = vpack.c.b16 %v751, %v751
      %v800 = vpack.c.b16 %v752, %v752
      %849 = vst [vmem:[#allocation2 + $0xc] sm:$0xf] %v753
      %850 = vst [vmem:[#allocation2 + $0x10] sm:$0xf] %v754
      %851 = vst [vmem:[#allocation2 + $0x14] sm:$0xf] %v755
      %852 = vst [vmem:[#allocation2 + $0x18] sm:$0xf] %v756
      %853 = vst [vmem:[#allocation2 + $0x1c] sm:$0xf] %v757
      %854 = vst [vmem:[#allocation2 + $0x20] sm:$0xf] %v758
      %855 = vst [vmem:[#allocation2 + $0x24] sm:$0xf] %v759
      %856 = vst [vmem:[#allocation2 + $0x28] sm:$0xf] %v760
      %857 = vst [vmem:[#allocation2 + $0x2c] sm:$0xf] %v761
      %858 = vst [vmem:[#allocation2 + $0x30] sm:$0xf] %v762
      %859 = vst [vmem:[#allocation2 + $0x34] sm:$0xf] %v763
      %860 = vst [vmem:[#allocation2 + $0x38] sm:$0xf] %v764
      %861 = vst [vmem:[#allocation2 + $0x3c] sm:$0xf] %v765
      %862 = vst [vmem:[#allocation2 + $0x40] sm:$0xf] %v766
      %863 = vst [vmem:[#allocation2 + $0x44] sm:$0xf] %v767
      %864 = vst [vmem:[#allocation2 + $0x48] sm:$0xf] %v768
      %865 = vst [vmem:[#allocation2 + $0x4c] sm:$0xf] %v769
      %866 = vst [vmem:[#allocation2 + $0x50] sm:$0xf] %v770
      %867 = vst [vmem:[#allocation2 + $0x54] sm:$0xf] %v771
      %868 = vst [vmem:[#allocation2 + $0x58] sm:$0xf] %v772
      %869 = vst [vmem:[#allocation2 + $0x5c] sm:$0xf] %v773
      %870 = vst [vmem:[#allocation2 + $0x60] sm:$0xf] %v774
      %871 = vst [vmem:[#allocation2 + $0x64] sm:$0xf] %v775
      %872 = vst [vmem:[#allocation2 + $0x68] sm:$0xf] %v776
      %873 = vst [vmem:[#allocation2 + $0x6c] sm:$0xf] %v777
      %874 = vst [vmem:[#allocation2 + $0x70] sm:$0xf] %v778
      %875 = vst [vmem:[#allocation2 + $0x74] sm:$0xf] %v779
      %876 = vst [vmem:[#allocation2 + $0x78] sm:$0xf] %v780
      %877 = vst [vmem:[#allocation2 + $0x7c] sm:$0xf] %v781
      %878 = vst [vmem:[#allocation2 + $0x80] sm:$0xf] %v782
      %879 = vst [vmem:[#allocation2 + $0x84] sm:$0xf] %v783
      %880 = vst [vmem:[#allocation2 + $0x88] sm:$0xf] %v784
      %881 = vst [vmem:[#allocation2 + $0x8c] sm:$0xf] %v785
      %882 = vst [vmem:[#allocation2 + $0x90] sm:$0xf] %v786
      %883 = vst [vmem:[#allocation2 + $0x94] sm:$0xf] %v787
      %884 = vst [vmem:[#allocation2 + $0x98] sm:$0xf] %v788
      %885 = vst [vmem:[#allocation2 + $0x9c] sm:$0xf] %v789
      %886 = vst [vmem:[#allocation2 + $0xa0] sm:$0xf] %v790
      %887 = vst [vmem:[#allocation2 + $0xa4] sm:$0xf] %v791
      %888 = vst [vmem:[#allocation2 + $0xa8] sm:$0xf] %v792
      %889 = vst [vmem:[#allocation2 + $0xac] sm:$0xf] %v793
      %890 = vst [vmem:[#allocation2 + $0xb0] sm:$0xf] %v794
      %891 = vst [vmem:[#allocation2 + $0xb4] sm:$0xf] %v795
      %892 = vst [vmem:[#allocation2 + $0xb8] sm:$0xf] %v796
      %893 = vst [vmem:[#allocation2 + $0xbc] sm:$0xf] %v797
      %894 = vst [vmem:[#allocation2 + $0xc0] sm:$0xf] %v798
      %895 = vst [vmem:[#allocation2 + $0xc4] sm:$0xf] %v799
      %896 = vst [vmem:[#allocation2 + $0xc8] sm:$0xf] %v800
      %v897 = vld [vmem:[#allocation2] sm:$0xf]
      %v898 = vld [vmem:[#allocation2 + $0x4] sm:$0xf]
      %v899 = vld [vmem:[#allocation2 + $0x8] sm:$0xf]
      %v900 = vld [vmem:[#allocation2 + $0xc] sm:$0xf]
      %v901 = vld [vmem:[#allocation2 + $0x10] sm:$0xf]
      %v902 = vld [vmem:[#allocation2 + $0x14] sm:$0xf]
      %v903 = vld [vmem:[#allocation2 + $0x18] sm:$0xf]
      %v904 = vld [vmem:[#allocation2 + $0x1c] sm:$0xf]
      %v905 = vld [vmem:[#allocation2 + $0x20] sm:$0xf]
      %v906 = vld [vmem:[#allocation2 + $0x24] sm:$0xf]
      %v907 = vld [vmem:[#allocation2 + $0x28] sm:$0xf]
      %v908 = vld [vmem:[#allocation2 + $0x2c] sm:$0xf]
      %v909 = vld [vmem:[#allocation2 + $0x30] sm:$0xf]
      %v910 = vld [vmem:[#allocation2 + $0x34] sm:$0xf]
      %v911 = vld [vmem:[#allocation2 + $0x38] sm:$0xf]
      %v912 = vld [vmem:[#allocation2 + $0x3c] sm:$0xf]
      %v913 = vld [vmem:[#allocation2 + $0x40] sm:$0xf]
      %v914 = vld [vmem:[#allocation2 + $0x44] sm:$0xf]
      %v915 = vld [vmem:[#allocation2 + $0x48] sm:$0xf]
      %v916 = vld [vmem:[#allocation2 + $0x4c] sm:$0xf]
      %v917 = vld [vmem:[#allocation2 + $0x50] sm:$0xf]
      %v918 = vld [vmem:[#allocation2 + $0x54] sm:$0xf]
      %v919 = vld [vmem:[#allocation2 + $0x58] sm:$0xf]
      %v920 = vld [vmem:[#allocation2 + $0x5c] sm:$0xf]
      %v921 = vld [vmem:[#allocation2 + $0x60] sm:$0xf]
      %v922 = vld [vmem:[#allocation2 + $0x64] sm:$0xf]
      %v923 = vld [vmem:[#allocation2 + $0x68] sm:$0xf]
      %v924 = vld [vmem:[#allocation2 + $0x6c] sm:$0xf]
      %v925 = vld [vmem:[#allocation2 + $0x70] sm:$0xf]
      %v926 = vld [vmem:[#allocation2 + $0x74] sm:$0xf]
      %v927 = vld [vmem:[#allocation2 + $0x78] sm:$0xf]
      %v928 = vld [vmem:[#allocation2 + $0x7c] sm:$0xf]
      %v929 = vld [vmem:[#allocation2 + $0x80] sm:$0xf]
      %v930 = vld [vmem:[#allocation2 + $0x84] sm:$0xf]
      %v931 = vld [vmem:[#allocation2 + $0x88] sm:$0xf]
      %v932 = vld [vmem:[#allocation2 + $0x8c] sm:$0xf]
      %v933 = vld [vmem:[#allocation2 + $0x90] sm:$0xf]
      %v934 = vld [vmem:[#allocation2 + $0x94] sm:$0xf]
      %v935 = vld [vmem:[#allocation2 + $0x98] sm:$0xf]
      %v936 = vld [vmem:[#allocation2 + $0x9c] sm:$0xf]
      %v937 = vld [vmem:[#allocation2 + $0xa0] sm:$0xf]
      %v938 = vld [vmem:[#allocation2 + $0xa4] sm:$0xf]
      %v939 = vld [vmem:[#allocation2 + $0xa8] sm:$0xf]
      %v940 = vld [vmem:[#allocation2 + $0xac] sm:$0xf]
      %v941 = vld [vmem:[#allocation2 + $0xb0] sm:$0xf]
      %v942 = vld [vmem:[#allocation2 + $0xb4] sm:$0xf]
      %v943 = vld [vmem:[#allocation2 + $0xb8] sm:$0xf]
      %v944 = vld [vmem:[#allocation2 + $0xbc] sm:$0xf]
      %v945 = vld [vmem:[%s2] sm:$0xf]
      %v946 = vld [vmem:[%s2 + $0x4] sm:$0xf]
      %v947 = vld [vmem:[%s2 + $0x8] sm:$0xf]
      %v948 = vld [vmem:[%s2 + $0xc] sm:$0xf]
      %v949 = vld [vmem:[%s2 + $0x10] sm:$0xf]
      %v950 = vld [vmem:[%s2 + $0x14] sm:$0xf]
      %v951 = vld [vmem:[%s2 + $0x18] sm:$0xf]
      %v952 = vld [vmem:[%s2 + $0x1c] sm:$0xf]
      %v953 = vld [vmem:[%s2 + $0x20] sm:$0xf]
      %v954 = vld [vmem:[%s2 + $0x24] sm:$0xf]
      %v955 = vld [vmem:[%s2 + $0x28] sm:$0xf]
      %v956 = vld [vmem:[%s2 + $0x2c] sm:$0xf]
      %v957 = vld [vmem:[%s2 + $0x30] sm:$0xf]
      %v958 = vld [vmem:[%s2 + $0x34] sm:$0xf]
      %v959 = vld [vmem:[%s2 + $0x38] sm:$0xf]
      %v960 = vld [vmem:[%s2 + $0x3c] sm:$0xf]
      %v961 = vld [vmem:[#allocation2 + $0xc0] sm:$0x1]
      %s962 = scalar_lea.vmem %s2, 64
      %v963 = vld [vmem:[%s962] sm:$0xf]
      %v964 = vld [vmem:[%s962 + $0x4] sm:$0xf]
      %v965 = vld [vmem:[%s962 + $0x8] sm:$0xf]
      %v966 = vld [vmem:[%s962 + $0xc] sm:$0xf]
      %v967 = vld [vmem:[%s962 + $0x10] sm:$0xf]
      %v968 = vld [vmem:[%s962 + $0x14] sm:$0xf]
      %v969 = vld [vmem:[%s962 + $0x18] sm:$0xf]
      %v970 = vld [vmem:[%s962 + $0x1c] sm:$0xf]
      %v971 = vld [vmem:[%s962 + $0x20] sm:$0xf]
      %v972 = vld [vmem:[%s962 + $0x24] sm:$0xf]
      %v973 = vld [vmem:[%s962 + $0x28] sm:$0xf]
      %v974 = vld [vmem:[%s962 + $0x2c] sm:$0xf]
      %v975 = vld [vmem:[%s962 + $0x30] sm:$0xf]
      %v976 = vld [vmem:[%s962 + $0x34] sm:$0xf]
      %v977 = vld [vmem:[%s962 + $0x38] sm:$0xf]
      %v978 = vld [vmem:[%s962 + $0x3c] sm:$0xf]
      %v1028 = vunpack.c.l.b16 %v897
      %v1029 = vunpack.c.l.b16 %v898
      %v1030 = vunpack.c.l.b16 %v899
      %v1031 = vunpack.c.l.b16 %v900
      %v1032 = vunpack.c.l.b16 %v901
      %v1033 = vunpack.c.l.b16 %v902
      %v1034 = vunpack.c.l.b16 %v903
      %v1035 = vunpack.c.l.b16 %v904
      %v1036 = vunpack.c.l.b16 %v905
      %v1037 = vunpack.c.l.b16 %v906
      %v1038 = vunpack.c.l.b16 %v907
      %v1039 = vunpack.c.l.b16 %v908
      %v1040 = vunpack.c.l.b16 %v909
      %v1041 = vunpack.c.l.b16 %v910
      %v1042 = vunpack.c.l.b16 %v911
      %v1043 = vunpack.c.l.b16 %v912
      %v1044 = vunpack.c.l.b16 %v913
      %v1045 = vunpack.c.l.b16 %v914
      %v1046 = vunpack.c.l.b16 %v915
      %v1047 = vunpack.c.l.b16 %v916
      %v1048 = vunpack.c.l.b16 %v917
      %v1049 = vunpack.c.l.b16 %v918
      %v1050 = vunpack.c.l.b16 %v919
      %v1051 = vunpack.c.l.b16 %v920
      %v1052 = vunpack.c.l.b16 %v921
      %v1053 = vunpack.c.l.b16 %v922
      %v1054 = vunpack.c.l.b16 %v923
      %v1055 = vunpack.c.l.b16 %v924
      %v1056 = vunpack.c.l.b16 %v925
      %v1057 = vunpack.c.l.b16 %v926
      %v1058 = vunpack.c.l.b16 %v927
      %v1059 = vunpack.c.l.b16 %v928
      %v1060 = vunpack.c.l.b16 %v929
      %v1061 = vunpack.c.l.b16 %v930
      %v1062 = vunpack.c.l.b16 %v931
      %v1063 = vunpack.c.l.b16 %v932
      %v1064 = vunpack.c.l.b16 %v933
      %v1065 = vunpack.c.l.b16 %v934
      %v1066 = vunpack.c.l.b16 %v935
      %v1067 = vunpack.c.l.b16 %v936
      %v1068 = vunpack.c.l.b16 %v937
      %v1069 = vunpack.c.l.b16 %v938
      %v1070 = vunpack.c.l.b16 %v939
      %v1071 = vunpack.c.l.b16 %v940
      %v1072 = vunpack.c.l.b16 %v941
      %v1073 = vunpack.c.l.b16 %v942
      %v1074 = vunpack.c.l.b16 %v943
      %v1075 = vunpack.c.l.b16 %v944
      %v1076 = vunpack.c.l.b16 %v961
      %v1077 = vpack.c.b16 %v1029, %v1028
      %v1078 = vpack.c.b16 %v1031, %v1030
      %v1079 = vpack.c.b16 %v1033, %v1032
      %v1080 = vpack.c.b16 %v1035, %v1034
      %v1081 = vpack.c.b16 %v1037, %v1036
      %v1082 = vpack.c.b16 %v1039, %v1038
      %v1083 = vpack.c.b16 %v1041, %v1040
      %v1084 = vpack.c.b16 %v1043, %v1042
      %v1085 = vpack.c.b16 %v1045, %v1044
      %v1086 = vpack.c.b16 %v1047, %v1046
      %v1087 = vpack.c.b16 %v1049, %v1048
      %v1088 = vpack.c.b16 %v1051, %v1050
      %v1089 = vpack.c.b16 %v1053, %v1052
      %v1090 = vpack.c.b16 %v1055, %v1054
      %v1091 = vpack.c.b16 %v1057, %v1056
      %v1092 = vpack.c.b16 %v1059, %v1058
      %v1093 = vpack.c.b16 %v1061, %v1060
      %v1094 = vpack.c.b16 %v1063, %v1062
      %v1095 = vpack.c.b16 %v1065, %v1064
      %v1096 = vpack.c.b16 %v1067, %v1066
      %v1097 = vpack.c.b16 %v1069, %v1068
      %v1098 = vpack.c.b16 %v1071, %v1070
      %v1099 = vpack.c.b16 %v1073, %v1072
      %v1100 = vpack.c.b16 %v1075, %v1074
      %v1101 = vpack.c.b16 %v1076, %v1076
      %vm1102 = vsmask.f32 7424
      %v1104 = vshrl.u32 %v1077, 16
      %v1106 = vshll.u32 %v1077, 16
      %v1108 = vrot.slane %v1106, 1
      %v1109 = vor.u32 %v1104, %v1108
      %v1111 = vshll.u32 %v1078, 16
      %v1113 = vrot.slane %v1111, 1
      %v1114 = vsel %vm1102, %v1109, %v1113
      %v1115 = vshrl.u32 %v1078, 16
      %v1117 = vor.u32 %v1115, %v1113
      %v1119 = vshll.u32 %v1079, 16
      %v1121 = vrot.slane %v1119, 1
      %v1122 = vsel %vm1102, %v1117, %v1121
      %v1123 = vshrl.u32 %v1079, 16
      %v1125 = vor.u32 %v1123, %v1121
      %v1127 = vshll.u32 %v1080, 16
      %v1129 = vrot.slane %v1127, 1
      %v1130 = vsel %vm1102, %v1125, %v1129
      %v1131 = vshrl.u32 %v1080, 16
      %v1133 = vor.u32 %v1131, %v1129
      %v1135 = vshll.u32 %v1081, 16
      %v1137 = vrot.slane %v1135, 1
      %v1138 = vsel %vm1102, %v1133, %v1137
      %v1139 = vshrl.u32 %v1081, 16
      %v1141 = vor.u32 %v1139, %v1137
      %v1143 = vshll.u32 %v1082, 16
      %v1145 = vrot.slane %v1143, 1
      %v1146 = vsel %vm1102, %v1141, %v1145
      %v1147 = vshrl.u32 %v1082, 16
      %v1149 = vor.u32 %v1147, %v1145
      %v1151 = vshll.u32 %v1083, 16
      %v1153 = vrot.slane %v1151, 1
      %v1154 = vsel %vm1102, %v1149, %v1153
      %v1155 = vshrl.u32 %v1083, 16
      %v1157 = vor.u32 %v1155, %v1153
      %v1159 = vshll.u32 %v1084, 16
      %v1161 = vrot.slane %v1159, 1
      %v1162 = vsel %vm1102, %v1157, %v1161
      %v1163 = vshrl.u32 %v1084, 16
      %v1165 = vor.u32 %v1163, %v1161
      %v1167 = vshll.u32 %v1085, 16
      %v1169 = vrot.slane %v1167, 1
      %v1170 = vsel %vm1102, %v1165, %v1169
      %v1171 = vshrl.u32 %v1085, 16
      %v1173 = vor.u32 %v1171, %v1169
      %v1175 = vshll.u32 %v1086, 16
      %v1177 = vrot.slane %v1175, 1
      %v1178 = vsel %vm1102, %v1173, %v1177
      %v1179 = vshrl.u32 %v1086, 16
      %v1181 = vor.u32 %v1179, %v1177
      %v1183 = vshll.u32 %v1087, 16
      %v1185 = vrot.slane %v1183, 1
      %v1186 = vsel %vm1102, %v1181, %v1185
      %v1187 = vshrl.u32 %v1087, 16
      %v1189 = vor.u32 %v1187, %v1185
      %v1191 = vshll.u32 %v1088, 16
      %v1193 = vrot.slane %v1191, 1
      %v1194 = vsel %vm1102, %v1189, %v1193
      %v1195 = vshrl.u32 %v1088, 16
      %v1197 = vor.u32 %v1195, %v1193
      %v1199 = vshll.u32 %v1089, 16
      %v1201 = vrot.slane %v1199, 1
      %v1202 = vsel %vm1102, %v1197, %v1201
      %v1203 = vshrl.u32 %v1089, 16
      %v1205 = vor.u32 %v1203, %v1201
      %v1207 = vshll.u32 %v1090, 16
      %v1209 = vrot.slane %v1207, 1
      %v1210 = vsel %vm1102, %v1205, %v1209
      %v1211 = vshrl.u32 %v1090, 16
      %v1213 = vor.u32 %v1211, %v1209
      %v1215 = vshll.u32 %v1091, 16
      %v1217 = vrot.slane %v1215, 1
      %v1218 = vsel %vm1102, %v1213, %v1217
      %v1219 = vshrl.u32 %v1091, 16
      %v1221 = vor.u32 %v1219, %v1217
      %v1223 = vshll.u32 %v1092, 16
      %v1225 = vrot.slane %v1223, 1
      %v1226 = vsel %vm1102, %v1221, %v1225
      %v1227 = vshrl.u32 %v1092, 16
      %v1229 = vor.u32 %v1227, %v1225
      %v1231 = vshll.u32 %v1093, 16
      %v1233 = vrot.slane %v1231, 1
      %v1234 = vsel %vm1102, %v1229, %v1233
      %v1235 = vshrl.u32 %v1093, 16
      %v1237 = vor.u32 %v1235, %v1233
      %v1239 = vshll.u32 %v1094, 16
      %v1241 = vrot.slane %v1239, 1
      %v1242 = vsel %vm1102, %v1237, %v1241
      %v1243 = vshrl.u32 %v1094, 16
      %v1245 = vor.u32 %v1243, %v1241
      %v1247 = vshll.u32 %v1095, 16
      %v1249 = vrot.slane %v1247, 1
      %v1250 = vsel %vm1102, %v1245, %v1249
      %v1251 = vshrl.u32 %v1095, 16
      %v1253 = vor.u32 %v1251, %v1249
      %v1255 = vshll.u32 %v1096, 16
      %v1257 = vrot.slane %v1255, 1
      %v1258 = vsel %vm1102, %v1253, %v1257
      %v1259 = vshrl.u32 %v1096, 16
      %v1261 = vor.u32 %v1259, %v1257
      %v1263 = vshll.u32 %v1097, 16
      %v1265 = vrot.slane %v1263, 1
      %v1266 = vsel %vm1102, %v1261, %v1265
      %v1267 = vshrl.u32 %v1097, 16
      %v1269 = vor.u32 %v1267, %v1265
      %v1271 = vshll.u32 %v1098, 16
      %v1273 = vrot.slane %v1271, 1
      %v1274 = vsel %vm1102, %v1269, %v1273
      %v1275 = vshrl.u32 %v1098, 16
      %v1277 = vor.u32 %v1275, %v1273
      %v1279 = vshll.u32 %v1099, 16
      %v1281 = vrot.slane %v1279, 1
      %v1282 = vsel %vm1102, %v1277, %v1281
      %v1283 = vshrl.u32 %v1099, 16
      %v1285 = vor.u32 %v1283, %v1281
      %v1287 = vshll.u32 %v1100, 16
      %v1289 = vrot.slane %v1287, 1
      %v1290 = vsel %vm1102, %v1285, %v1289
      %v1291 = vshrl.u32 %v1100, 16
      %v1293 = vor.u32 %v1291, %v1289
      %v1295 = vshll.u32 %v1101, 16
      %v1297 = vrot.slane %v1295, 1
      %v1298 = vsel %vm1102, %v1293, %v1297
      %v1339 = vunpack.c.l.b16 %v963
      %v1340 = vunpack.c.l.b16 %v964
      %v1341 = vunpack.c.l.b16 %v965
      %v1342 = vunpack.c.l.b16 %v966
      %v1343 = vunpack.c.l.b16 %v967
      %v1344 = vunpack.c.l.b16 %v968
      %v1345 = vunpack.c.l.b16 %v969
      %v1346 = vunpack.c.l.b16 %v970
      %v1347 = vunpack.c.l.b16 %v971
      %v1348 = vunpack.c.l.b16 %v972
      %v1349 = vunpack.c.l.b16 %v973
      %v1350 = vunpack.c.l.b16 %v974
      %v1351 = vunpack.c.l.b16 %v975
      %v1352 = vunpack.c.l.b16 %v976
      %v1353 = vunpack.c.l.b16 %v977
      %v1354 = vunpack.c.l.b16 %v978
      %v1355 = vpack.c.b16 %v1340, %v1339
      %v1356 = vpack.c.b16 %v1342, %v1341
      %v1357 = vpack.c.b16 %v1344, %v1343
      %v1358 = vpack.c.b16 %v1346, %v1345
      %v1359 = vpack.c.b16 %v1348, %v1347
      %v1360 = vpack.c.b16 %v1350, %v1349
      %v1361 = vpack.c.b16 %v1352, %v1351
      %v1362 = vpack.c.b16 %v1354, %v1353
      %1371 = vmatpush.bf16.msra.mxu0 %v1362
      %1372 = vmatpush.bf16.msra.mxu0 %v1361
      %1373 = vmatpush.bf16.msra.mxu0 %v1360
      %1374 = vmatpush.bf16.msra.mxu0 %v1359
      %1375 = vmatpush.bf16.msra.mxu0 %v1358
      %1376 = vmatpush.bf16.msra.mxu0 %v1357
      %1377 = vmatpush.bf16.msra.mxu0 %v1356
      %1378 = vmatpush.bf16.msra.mxu0 %v1355
      %1379 = vmatmul.bf16.gmra.mxu0 %v1114
      %v1380 = vpop.f32.mrf.mxu0
      %v1381 = vadd.f32 0.0, %v1380
      %v1382 = vpop.f32.mrf.mxu0
      %v1383 = vadd.f32 0.0, %v1382
      %1384 = vmatmul.bf16.gmra.mxu0 %v1122
      %v1385 = vpop.f32.mrf.mxu0
      %v1386 = vpop.f32.mrf.mxu0
      %v1387 = vadd.f32 0.0, %v1386
      %1388 = vmatmul.bf16.gmra.mxu0 %v1130
      %v1389 = vpop.f32.mrf.mxu0
      %v1390 = vadd.f32 0.0, %v1389
      %v1391 = vpop.f32.mrf.mxu0
      %1392 = vmatmul.bf16.gmra.mxu0 %v1138
      %v1393 = vpop.f32.mrf.mxu0
      %v1394 = vadd.f32 0.0, %v1393
      %v1395 = vpop.f32.mrf.mxu0
      %v1396 = vadd.f32 0.0, %v1395
      %1397 = vmatmul.bf16.gmra.mxu0 %v1146
      %v1398 = vpop.f32.mrf.mxu0
      %v1399 = vpop.f32.mrf.mxu0
      %v1400 = vadd.f32 0.0, %v1399
      %1401 = vmatmul.bf16.gmra.mxu0 %v1154
      %v1402 = vpop.f32.mrf.mxu0
      %v1403 = vadd.f32 0.0, %v1402
      %v1404 = vpop.f32.mrf.mxu0
      %1405 = vmatmul.bf16.gmra.mxu0 %v1162
      %v1406 = vpop.f32.mrf.mxu0
      %v1407 = vadd.f32 0.0, %v1406
      %v1408 = vpop.f32.mrf.mxu0
      %v1409 = vadd.f32 0.0, %v1408
      %1410 = vmatmul.bf16.gmra.mxu0 %v1170
      %v1411 = vpop.f32.mrf.mxu0
      %v1412 = vpop.f32.mrf.mxu0
      %v1413 = vadd.f32 0.0, %v1412
      %1414 = vmatmul.bf16.gmra.mxu0 %v1178
      %v1415 = vpop.f32.mrf.mxu0
      %v1416 = vadd.f32 0.0, %v1415
      %v1417 = vpop.f32.mrf.mxu0
      %1418 = vmatmul.bf16.gmra.mxu0 %v1186
      %v1419 = vpop.f32.mrf.mxu0
      %v1420 = vadd.f32 0.0, %v1419
      %v1421 = vpop.f32.mrf.mxu0
      %v1422 = vadd.f32 0.0, %v1421
      %1423 = vmatmul.bf16.gmra.mxu0 %v1194
      %v1424 = vpop.f32.mrf.mxu0
      %v1425 = vpop.f32.mrf.mxu0
      %v1426 = vadd.f32 0.0, %v1425
      %1427 = vmatmul.bf16.gmra.mxu0 %v1202
      %v1428 = vpop.f32.mrf.mxu0
      %v1429 = vadd.f32 0.0, %v1428
      %v1430 = vpop.f32.mrf.mxu0
      %1431 = vmatmul.bf16.gmra.mxu0 %v1210
      %v1432 = vpop.f32.mrf.mxu0
      %v1433 = vadd.f32 0.0, %v1432
      %v1434 = vpop.f32.mrf.mxu0
      %v1435 = vadd.f32 0.0, %v1434
      %1436 = vmatmul.bf16.gmra.mxu0 %v1218
      %v1437 = vpop.f32.mrf.mxu0
      %v1438 = vpop.f32.mrf.mxu0
      %v1439 = vadd.f32 0.0, %v1438
      %1440 = vmatmul.bf16.gmra.mxu0 %v1226
      %v1441 = vpop.f32.mrf.mxu0
      %v1442 = vadd.f32 0.0, %v1441
      %v1443 = vpop.f32.mrf.mxu0
      %1444 = vmatmul.bf16.gmra.mxu0 %v1234
      %v1445 = vpop.f32.mrf.mxu0
      %v1446 = vadd.f32 0.0, %v1445
      %v1447 = vpop.f32.mrf.mxu0
      %v1448 = vadd.f32 0.0, %v1447
      %1449 = vmatmul.bf16.gmra.mxu0 %v1242
      %v1450 = vpop.f32.mrf.mxu0
      %v1451 = vpop.f32.mrf.mxu0
      %v1452 = vadd.f32 0.0, %v1451
      %1453 = vmatmul.bf16.gmra.mxu0 %v1250
      %v1454 = vpop.f32.mrf.mxu0
      %v1455 = vadd.f32 0.0, %v1454
      %v1456 = vpop.f32.mrf.mxu0
      %1457 = vmatmul.bf16.gmra.mxu0 %v1258
      %v1458 = vpop.f32.mrf.mxu0
      %v1459 = vadd.f32 0.0, %v1458
      %v1460 = vpop.f32.mrf.mxu0
      %v1461 = vadd.f32 0.0, %v1460
      %1462 = vmatmul.bf16.gmra.mxu0 %v1266
      %v1463 = vpop.f32.mrf.mxu0
      %v1464 = vpop.f32.mrf.mxu0
      %v1465 = vadd.f32 0.0, %v1464
      %1466 = vmatmul.bf16.gmra.mxu0 %v1274
      %v1467 = vpop.f32.mrf.mxu0
      %v1468 = vadd.f32 0.0, %v1467
      %v1469 = vpop.f32.mrf.mxu0
      %1470 = vmatmul.bf16.gmra.mxu0 %v1282
      %v1471 = vpop.f32.mrf.mxu0
      %v1472 = vadd.f32 0.0, %v1471
      %v1473 = vpop.f32.mrf.mxu0
      %v1474 = vadd.f32 0.0, %v1473
      %1475 = vmatmul.bf16.gmra.mxu0 %v1290
      %v1476 = vpop.f32.mrf.mxu0
      %v1477 = vpop.f32.mrf.mxu0
      %v1478 = vadd.f32 0.0, %v1477
      %1479 = vmatmul.bf16.gmra.mxu0 %v1298
      %v1480 = vpop.f32.mrf.mxu0
      %v1481 = vadd.f32 0.0, %v1480
      %v1482 = vpop.f32.mrf.mxu0
      %1483 = vdwg.mxu0
      %v1524 = vunpack.c.l.b16 %v945
      %v1525 = vunpack.c.l.b16 %v946
      %v1526 = vunpack.c.l.b16 %v947
      %v1527 = vunpack.c.l.b16 %v948
      %v1528 = vunpack.c.l.b16 %v949
      %v1529 = vunpack.c.l.b16 %v950
      %v1530 = vunpack.c.l.b16 %v951
      %v1531 = vunpack.c.l.b16 %v952
      %v1532 = vunpack.c.l.b16 %v953
      %v1533 = vunpack.c.l.b16 %v954
      %v1534 = vunpack.c.l.b16 %v955
      %v1535 = vunpack.c.l.b16 %v956
      %v1536 = vunpack.c.l.b16 %v957
      %v1537 = vunpack.c.l.b16 %v958
      %v1538 = vunpack.c.l.b16 %v959
      %v1539 = vunpack.c.l.b16 %v960
      %v1540 = vpack.c.b16 %v1525, %v1524
      %v1541 = vpack.c.b16 %v1527, %v1526
      %v1542 = vpack.c.b16 %v1529, %v1528
      %v1543 = vpack.c.b16 %v1531, %v1530
      %v1544 = vpack.c.b16 %v1533, %v1532
      %v1545 = vpack.c.b16 %v1535, %v1534
      %v1546 = vpack.c.b16 %v1537, %v1536
      %v1547 = vpack.c.b16 %v1539, %v1538
      %1556 = vmatpush.bf16.msra.mxu0 %v1547
      %1557 = vmatpush.bf16.msra.mxu0 %v1546
      %1558 = vmatpush.bf16.msra.mxu0 %v1545
      %1559 = vmatpush.bf16.msra.mxu0 %v1544
      %1560 = vmatpush.bf16.msra.mxu0 %v1543
      %1561 = vmatpush.bf16.msra.mxu0 %v1542
      %1562 = vmatpush.bf16.msra.mxu0 %v1541
      %1563 = vmatpush.bf16.msra.mxu0 %v1540
      %1564 = vmatmul.bf16.gmra.mxu0 %v1077
      %v1565 = vpop.f32.mrf.mxu0
      %v1566 = vadd.f32 %v1381, %v1565
      %v1567 = vpop.f32.mrf.mxu0
      %v1568 = vadd.f32 %v1383, %v1567
      %1569 = vmatmul.bf16.gmra.mxu0 %v1078
      %v1570 = vpop.f32.mrf.mxu0
      %v1571 = vpop.f32.mrf.mxu0
      %v1572 = vadd.f32 %v1387, %v1571
      %1573 = vmatmul.bf16.gmra.mxu0 %v1079
      %v1574 = vpop.f32.mrf.mxu0
      %v1575 = vadd.f32 %v1390, %v1574
      %v1576 = vpop.f32.mrf.mxu0
      %1577 = vmatmul.bf16.gmra.mxu0 %v1080
      %v1578 = vpop.f32.mrf.mxu0
      %v1579 = vadd.f32 %v1394, %v1578
      %v1580 = vpop.f32.mrf.mxu0
      %v1581 = vadd.f32 %v1396, %v1580
      %1582 = vmatmul.bf16.gmra.mxu0 %v1081
      %v1583 = vpop.f32.mrf.mxu0
      %v1584 = vpop.f32.mrf.mxu0
      %v1585 = vadd.f32 %v1400, %v1584
      %1586 = vmatmul.bf16.gmra.mxu0 %v1082
      %v1587 = vpop.f32.mrf.mxu0
      %v1588 = vadd.f32 %v1403, %v1587
      %v1589 = vpop.f32.mrf.mxu0
      %1590 = vmatmul.bf16.gmra.mxu0 %v1083
      %v1591 = vpop.f32.mrf.mxu0
      %v1592 = vadd.f32 %v1407, %v1591
      %v1593 = vpop.f32.mrf.mxu0
      %v1594 = vadd.f32 %v1409, %v1593
      %1595 = vmatmul.bf16.gmra.mxu0 %v1084
      %v1596 = vpop.f32.mrf.mxu0
      %v1597 = vpop.f32.mrf.mxu0
      %v1598 = vadd.f32 %v1413, %v1597
      %1599 = vmatmul.bf16.gmra.mxu0 %v1085
      %v1600 = vpop.f32.mrf.mxu0
      %v1601 = vadd.f32 %v1416, %v1600
      %v1602 = vpop.f32.mrf.mxu0
      %1603 = vmatmul.bf16.gmra.mxu0 %v1086
      %v1604 = vpop.f32.mrf.mxu0
      %v1605 = vadd.f32 %v1420, %v1604
      %v1606 = vpop.f32.mrf.mxu0
      %v1607 = vadd.f32 %v1422, %v1606
      %1608 = vmatmul.bf16.gmra.mxu0 %v1087
      %v1609 = vpop.f32.mrf.mxu0
      %v1610 = vpop.f32.mrf.mxu0
      %v1611 = vadd.f32 %v1426, %v1610
      %1612 = vmatmul.bf16.gmra.mxu0 %v1088
      %v1613 = vpop.f32.mrf.mxu0
      %v1614 = vadd.f32 %v1429, %v1613
      %v1615 = vpop.f32.mrf.mxu0
      %1616 = vmatmul.bf16.gmra.mxu0 %v1089
      %v1617 = vpop.f32.mrf.mxu0
      %v1618 = vadd.f32 %v1433, %v1617
      %v1619 = vpop.f32.mrf.mxu0
      %v1620 = vadd.f32 %v1435, %v1619
      %1621 = vmatmul.bf16.gmra.mxu0 %v1090
      %v1622 = vpop.f32.mrf.mxu0
      %v1623 = vpop.f32.mrf.mxu0
      %v1624 = vadd.f32 %v1439, %v1623
      %1625 = vmatmul.bf16.gmra.mxu0 %v1091
      %v1626 = vpop.f32.mrf.mxu0
      %v1627 = vadd.f32 %v1442, %v1626
      %v1628 = vpop.f32.mrf.mxu0
      %1629 = vmatmul.bf16.gmra.mxu0 %v1092
      %v1630 = vpop.f32.mrf.mxu0
      %v1631 = vadd.f32 %v1446, %v1630
      %v1632 = vpop.f32.mrf.mxu0
      %v1633 = vadd.f32 %v1448, %v1632
      %1634 = vmatmul.bf16.gmra.mxu0 %v1093
      %v1635 = vpop.f32.mrf.mxu0
      %v1636 = vpop.f32.mrf.mxu0
      %v1637 = vadd.f32 %v1452, %v1636
      %1638 = vmatmul.bf16.gmra.mxu0 %v1094
      %v1639 = vpop.f32.mrf.mxu0
      %v1640 = vadd.f32 %v1455, %v1639
      %v1641 = vpop.f32.mrf.mxu0
      %1642 = vmatmul.bf16.gmra.mxu0 %v1095
      %v1643 = vpop.f32.mrf.mxu0
      %v1644 = vadd.f32 %v1459, %v1643
      %v1645 = vpop.f32.mrf.mxu0
      %v1646 = vadd.f32 %v1461, %v1645
      %1647 = vmatmul.bf16.gmra.mxu0 %v1096
      %v1648 = vpop.f32.mrf.mxu0
      %v1649 = vpop.f32.mrf.mxu0
      %v1650 = vadd.f32 %v1465, %v1649
      %1651 = vmatmul.bf16.gmra.mxu0 %v1097
      %v1652 = vpop.f32.mrf.mxu0
      %v1653 = vadd.f32 %v1468, %v1652
      %v1654 = vpop.f32.mrf.mxu0
      %1655 = vmatmul.bf16.gmra.mxu0 %v1098
      %v1656 = vpop.f32.mrf.mxu0
      %v1657 = vadd.f32 %v1472, %v1656
      %v1658 = vpop.f32.mrf.mxu0
      %v1659 = vadd.f32 %v1474, %v1658
      %1660 = vmatmul.bf16.gmra.mxu0 %v1099
      %v1661 = vpop.f32.mrf.mxu0
      %v1662 = vpop.f32.mrf.mxu0
      %v1663 = vadd.f32 %v1478, %v1662
      %1664 = vmatmul.bf16.gmra.mxu0 %v1100
      %v1665 = vpop.f32.mrf.mxu0
      %v1666 = vadd.f32 %v1481, %v1665
      %v1667 = vpop.f32.mrf.mxu0
      %1668 = vdwg.mxu0
      %v1669 = vld [vmem:[#allocation2] sm:$0xe]
      %s1670 = scalar_lea.vmem %s2, 128
      %v1671 = vld [vmem:[%s1670] sm:$0xf]
      %v1672 = vld [vmem:[%s1670 + $0x4] sm:$0xf]
      %v1673 = vld [vmem:[%s1670 + $0x8] sm:$0xf]
      %v1674 = vld [vmem:[%s1670 + $0xc] sm:$0xf]
      %v1675 = vld [vmem:[%s1670 + $0x10] sm:$0xf]
      %v1676 = vld [vmem:[%s1670 + $0x14] sm:$0xf]
      %v1677 = vld [vmem:[%s1670 + $0x18] sm:$0xf]
      %v1678 = vld [vmem:[%s1670 + $0x1c] sm:$0xf]
      %v1679 = vld [vmem:[%s1670 + $0x20] sm:$0xf]
      %v1680 = vld [vmem:[%s1670 + $0x24] sm:$0xf]
      %v1681 = vld [vmem:[%s1670 + $0x28] sm:$0xf]
      %v1682 = vld [vmem:[%s1670 + $0x2c] sm:$0xf]
      %v1683 = vld [vmem:[%s1670 + $0x30] sm:$0xf]
      %v1684 = vld [vmem:[%s1670 + $0x34] sm:$0xf]
      %v1685 = vld [vmem:[%s1670 + $0x38] sm:$0xf]
      %v1686 = vld [vmem:[%s1670 + $0x3c] sm:$0xf]
      %v1688 = vunpack.c.l.b16 %v1669
      %v1689 = vpack.c.b16 %v1029, %v1688
      %vm1690 = vcmask 1046528
      %v1691 = vrot.slane %v1689, 1
      %v1692 = vrot.slane %v1078, 1
      %v1693 = vsel %vm1690, %v1691, %v1692
      %v1694 = vrot.slane %v1079, 1
      %v1695 = vsel %vm1690, %v1692, %v1694
      %v1696 = vrot.slane %v1080, 1
      %v1697 = vsel %vm1690, %v1694, %v1696
      %v1698 = vrot.slane %v1081, 1
      %v1699 = vsel %vm1690, %v1696, %v1698
      %v1700 = vrot.slane %v1082, 1
      %v1701 = vsel %vm1690, %v1698, %v1700
      %v1702 = vrot.slane %v1083, 1
      %v1703 = vsel %vm1690, %v1700, %v1702
      %v1704 = vrot.slane %v1084, 1
      %v1705 = vsel %vm1690, %v1702, %v1704
      %v1706 = vrot.slane %v1085, 1
      %v1707 = vsel %vm1690, %v1704, %v1706
      %v1708 = vrot.slane %v1086, 1
      %v1709 = vsel %vm1690, %v1706, %v1708
      %v1710 = vrot.slane %v1087, 1
      %v1711 = vsel %vm1690, %v1708, %v1710
      %v1712 = vrot.slane %v1088, 1
      %v1713 = vsel %vm1690, %v1710, %v1712
      %v1714 = vrot.slane %v1089, 1
      %v1715 = vsel %vm1690, %v1712, %v1714
      %v1716 = vrot.slane %v1090, 1
      %v1717 = vsel %vm1690, %v1714, %v1716
      %v1718 = vrot.slane %v1091, 1
      %v1719 = vsel %vm1690, %v1716, %v1718
      %v1720 = vrot.slane %v1092, 1
      %v1721 = vsel %vm1690, %v1718, %v1720
      %v1722 = vrot.slane %v1093, 1
      %v1723 = vsel %vm1690, %v1720, %v1722
      %v1724 = vrot.slane %v1094, 1
      %v1725 = vsel %vm1690, %v1722, %v1724
      %v1726 = vrot.slane %v1095, 1
      %v1727 = vsel %vm1690, %v1724, %v1726
      %v1728 = vrot.slane %v1096, 1
      %v1729 = vsel %vm1690, %v1726, %v1728
      %v1730 = vrot.slane %v1097, 1
      %v1731 = vsel %vm1690, %v1728, %v1730
      %v1732 = vrot.slane %v1098, 1
      %v1733 = vsel %vm1690, %v1730, %v1732
      %v1734 = vrot.slane %v1099, 1
      %v1735 = vsel %vm1690, %v1732, %v1734
      %v1736 = vrot.slane %v1100, 1
      %v1737 = vsel %vm1690, %v1734, %v1736
      %v1738 = vrot.slane %v1101, 1
      %v1739 = vsel %vm1690, %v1736, %v1738
      %v1780 = vunpack.c.l.b16 %v1671
      %v1781 = vunpack.c.l.b16 %v1672
      %v1782 = vunpack.c.l.b16 %v1673
      %v1783 = vunpack.c.l.b16 %v1674
      %v1784 = vunpack.c.l.b16 %v1675
      %v1785 = vunpack.c.l.b16 %v1676
      %v1786 = vunpack.c.l.b16 %v1677
      %v1787 = vunpack.c.l.b16 %v1678
      %v1788 = vunpack.c.l.b16 %v1679
      %v1789 = vunpack.c.l.b16 %v1680
      %v1790 = vunpack.c.l.b16 %v1681
      %v1791 = vunpack.c.l.b16 %v1682
      %v1792 = vunpack.c.l.b16 %v1683
      %v1793 = vunpack.c.l.b16 %v1684
      %v1794 = vunpack.c.l.b16 %v1685
      %v1795 = vunpack.c.l.b16 %v1686
      %v1796 = vpack.c.b16 %v1781, %v1780
      %v1797 = vpack.c.b16 %v1783, %v1782
      %v1798 = vpack.c.b16 %v1785, %v1784
      %v1799 = vpack.c.b16 %v1787, %v1786
      %v1800 = vpack.c.b16 %v1789, %v1788
      %v1801 = vpack.c.b16 %v1791, %v1790
      %v1802 = vpack.c.b16 %v1793, %v1792
      %v1803 = vpack.c.b16 %v1795, %v1794
      %1812 = vmatpush.bf16.msra.mxu0 %v1803
      %1813 = vmatpush.bf16.msra.mxu0 %v1802
      %1814 = vmatpush.bf16.msra.mxu0 %v1801
      %1815 = vmatpush.bf16.msra.mxu0 %v1800
      %1816 = vmatpush.bf16.msra.mxu0 %v1799
      %1817 = vmatpush.bf16.msra.mxu0 %v1798
      %1818 = vmatpush.bf16.msra.mxu0 %v1797
      %1819 = vmatpush.bf16.msra.mxu0 %v1796
      %1820 = vmatmul.bf16.gmra.mxu0 %v1693
      %v1821 = vpop.f32.mrf.mxu0
      %v1822 = vadd.f32 0.0, %v1821
      %v1823 = vpop.f32.mrf.mxu0
      %v1824 = vadd.f32 0.0, %v1823
      %1825 = vmatmul.bf16.gmra.mxu0 %v1695
      %v1826 = vpop.f32.mrf.mxu0
      %v1827 = vpop.f32.mrf.mxu0
      %v1828 = vadd.f32 0.0, %v1827
      %1829 = vmatmul.bf16.gmra.mxu0 %v1697
      %v1830 = vpop.f32.mrf.mxu0
      %v1831 = vadd.f32 0.0, %v1830
      %v1832 = vpop.f32.mrf.mxu0
      %1833 = vmatmul.bf16.gmra.mxu0 %v1699
      %v1834 = vpop.f32.mrf.mxu0
      %v1835 = vadd.f32 0.0, %v1834
      %v1836 = vpop.f32.mrf.mxu0
      %v1837 = vadd.f32 0.0, %v1836
      %1838 = vmatmul.bf16.gmra.mxu0 %v1701
      %v1839 = vpop.f32.mrf.mxu0
      %v1840 = vpop.f32.mrf.mxu0
      %v1841 = vadd.f32 0.0, %v1840
      %1842 = vmatmul.bf16.gmra.mxu0 %v1703
      %v1843 = vpop.f32.mrf.mxu0
      %v1844 = vadd.f32 0.0, %v1843
      %v1845 = vpop.f32.mrf.mxu0
      %1846 = vmatmul.bf16.gmra.mxu0 %v1705
      %v1847 = vpop.f32.mrf.mxu0
      %v1848 = vadd.f32 0.0, %v1847
      %v1849 = vpop.f32.mrf.mxu0
      %v1850 = vadd.f32 0.0, %v1849
      %1851 = vmatmul.bf16.gmra.mxu0 %v1707
      %v1852 = vpop.f32.mrf.mxu0
      %v1853 = vpop.f32.mrf.mxu0
      %v1854 = vadd.f32 0.0, %v1853
      %1855 = vmatmul.bf16.gmra.mxu0 %v1709
      %v1856 = vpop.f32.mrf.mxu0
      %v1857 = vadd.f32 0.0, %v1856
      %v1858 = vpop.f32.mrf.mxu0
      %1859 = vmatmul.bf16.gmra.mxu0 %v1711
      %v1860 = vpop.f32.mrf.mxu0
      %v1861 = vadd.f32 0.0, %v1860
      %v1862 = vpop.f32.mrf.mxu0
      %v1863 = vadd.f32 0.0, %v1862
      %1864 = vmatmul.bf16.gmra.mxu0 %v1713
      %v1865 = vpop.f32.mrf.mxu0
      %v1866 = vpop.f32.mrf.mxu0
      %v1867 = vadd.f32 0.0, %v1866
      %1868 = vmatmul.bf16.gmra.mxu0 %v1715
      %v1869 = vpop.f32.mrf.mxu0
      %v1870 = vadd.f32 0.0, %v1869
      %v1871 = vpop.f32.mrf.mxu0
      %1872 = vmatmul.bf16.gmra.mxu0 %v1717
      %v1873 = vpop.f32.mrf.mxu0
      %v1874 = vadd.f32 0.0, %v1873
      %v1875 = vpop.f32.mrf.mxu0
      %v1876 = vadd.f32 0.0, %v1875
      %1877 = vmatmul.bf16.gmra.mxu0 %v1719
      %v1878 = vpop.f32.mrf.mxu0
      %v1879 = vpop.f32.mrf.mxu0
      %v1880 = vadd.f32 0.0, %v1879
      %1881 = vmatmul.bf16.gmra.mxu0 %v1721
      %v1882 = vpop.f32.mrf.mxu0
      %v1883 = vadd.f32 0.0, %v1882
      %v1884 = vpop.f32.mrf.mxu0
      %1885 = vmatmul.bf16.gmra.mxu0 %v1723
      %v1886 = vpop.f32.mrf.mxu0
      %v1887 = vadd.f32 0.0, %v1886
      %v1888 = vpop.f32.mrf.mxu0
      %v1889 = vadd.f32 0.0, %v1888
      %1890 = vmatmul.bf16.gmra.mxu0 %v1725
      %v1891 = vpop.f32.mrf.mxu0
      %v1892 = vpop.f32.mrf.mxu0
      %v1893 = vadd.f32 0.0, %v1892
      %1894 = vmatmul.bf16.gmra.mxu0 %v1727
      %v1895 = vpop.f32.mrf.mxu0
      %v1896 = vadd.f32 0.0, %v1895
      %v1897 = vpop.f32.mrf.mxu0
      %1898 = vmatmul.bf16.gmra.mxu0 %v1729
      %v1899 = vpop.f32.mrf.mxu0
      %v1900 = vadd.f32 0.0, %v1899
      %v1901 = vpop.f32.mrf.mxu0
      %v1902 = vadd.f32 0.0, %v1901
      %1903 = vmatmul.bf16.gmra.mxu0 %v1731
      %v1904 = vpop.f32.mrf.mxu0
      %v1905 = vpop.f32.mrf.mxu0
      %v1906 = vadd.f32 0.0, %v1905
      %1907 = vmatmul.bf16.gmra.mxu0 %v1733
      %v1908 = vpop.f32.mrf.mxu0
      %v1909 = vadd.f32 0.0, %v1908
      %v1910 = vpop.f32.mrf.mxu0
      %1911 = vmatmul.bf16.gmra.mxu0 %v1735
      %v1912 = vpop.f32.mrf.mxu0
      %v1913 = vadd.f32 0.0, %v1912
      %v1914 = vpop.f32.mrf.mxu0
      %v1915 = vadd.f32 0.0, %v1914
      %1916 = vmatmul.bf16.gmra.mxu0 %v1737
      %v1917 = vpop.f32.mrf.mxu0
      %v1918 = vpop.f32.mrf.mxu0
      %v1919 = vadd.f32 0.0, %v1918
      %1920 = vmatmul.bf16.gmra.mxu0 %v1739
      %v1921 = vpop.f32.mrf.mxu0
      %v1922 = vadd.f32 0.0, %v1921
      %v1923 = vpop.f32.mrf.mxu0
      %1924 = vdwg.mxu0
      %v1925 = vadd.f32 %v1566, %v1822
      %v1926 = vadd.f32 %v1568, %v1824
      %v1927 = vadd.f32 %v1572, %v1828
      %v1928 = vadd.f32 %v1575, %v1831
      %v1929 = vadd.f32 %v1579, %v1835
      %v1930 = vadd.f32 %v1581, %v1837
      %v1931 = vadd.f32 %v1585, %v1841
      %v1932 = vadd.f32 %v1588, %v1844
      %v1933 = vadd.f32 %v1592, %v1848
      %v1934 = vadd.f32 %v1594, %v1850
      %v1935 = vadd.f32 %v1598, %v1854
      %v1936 = vadd.f32 %v1601, %v1857
      %v1937 = vadd.f32 %v1605, %v1861
      %v1938 = vadd.f32 %v1607, %v1863
      %v1939 = vadd.f32 %v1611, %v1867
      %v1940 = vadd.f32 %v1614, %v1870
      %v1941 = vadd.f32 %v1618, %v1874
      %v1942 = vadd.f32 %v1620, %v1876
      %v1943 = vadd.f32 %v1624, %v1880
      %v1944 = vadd.f32 %v1627, %v1883
      %v1945 = vadd.f32 %v1631, %v1887
      %v1946 = vadd.f32 %v1633, %v1889
      %v1947 = vadd.f32 %v1637, %v1893
      %v1948 = vadd.f32 %v1640, %v1896
      %v1949 = vadd.f32 %v1644, %v1900
      %v1950 = vadd.f32 %v1646, %v1902
      %v1951 = vadd.f32 %v1650, %v1906
      %v1952 = vadd.f32 %v1653, %v1909
      %v1953 = vadd.f32 %v1657, %v1913
      %v1954 = vadd.f32 %v1659, %v1915
      %v1955 = vadd.f32 %v1663, %v1919
      %v1956 = vadd.f32 %v1666, %v1922
      %v1957 = vld [vmem:[#allocation2 + $0xc] sm:$0xf]
      %v1958 = vld [vmem:[#allocation2 + $0x10] sm:$0xf]
      %v1959 = vld [vmem:[#allocation2 + $0x14] sm:$0xf]
      %v1960 = vld [vmem:[#allocation2 + $0x18] sm:$0xf]
      %v1961 = vld [vmem:[#allocation2 + $0x1c] sm:$0xf]
      %v1962 = vld [vmem:[#allocation2 + $0x20] sm:$0xf]
      %v1963 = vld [vmem:[#allocation2 + $0x24] sm:$0xf]
      %v1964 = vld [vmem:[#allocation2 + $0x28] sm:$0xf]
      %v1965 = vld [vmem:[#allocation2 + $0x2c] sm:$0xf]
      %v1966 = vld [vmem:[#allocation2 + $0x30] sm:$0xf]
      %v1967 = vld [vmem:[#allocation2 + $0x34] sm:$0xf]
      %v1968 = vld [vmem:[#allocation2 + $0x38] sm:$0xf]
      %v1969 = vld [vmem:[#allocation2 + $0x3c] sm:$0xf]
      %v1970 = vld [vmem:[#allocation2 + $0x40] sm:$0xf]
      %v1971 = vld [vmem:[#allocation2 + $0x44] sm:$0xf]
      %v1972 = vld [vmem:[#allocation2 + $0x48] sm:$0xf]
      %v1973 = vld [vmem:[#allocation2 + $0x4c] sm:$0xf]
      %v1974 = vld [vmem:[#allocation2 + $0x50] sm:$0xf]
      %v1975 = vld [vmem:[#allocation2 + $0x54] sm:$0xf]
      %v1976 = vld [vmem:[#allocation2 + $0x58] sm:$0xf]
      %v1977 = vld [vmem:[#allocation2 + $0x5c] sm:$0xf]
      %v1978 = vld [vmem:[#allocation2 + $0x60] sm:$0xf]
      %v1979 = vld [vmem:[#allocation2 + $0x64] sm:$0xf]
      %v1980 = vld [vmem:[#allocation2 + $0x68] sm:$0xf]
      %v1981 = vld [vmem:[#allocation2 + $0x6c] sm:$0xf]
      %v1982 = vld [vmem:[#allocation2 + $0x70] sm:$0xf]
      %v1983 = vld [vmem:[#allocation2 + $0x74] sm:$0xf]
      %v1984 = vld [vmem:[#allocation2 + $0x78] sm:$0xf]
      %v1985 = vld [vmem:[#allocation2 + $0x7c] sm:$0xf]
      %v1986 = vld [vmem:[#allocation2 + $0x80] sm:$0xf]
      %v1987 = vld [vmem:[#allocation2 + $0x84] sm:$0xf]
      %v1988 = vld [vmem:[#allocation2 + $0x88] sm:$0xf]
      %v1989 = vld [vmem:[#allocation2 + $0x8c] sm:$0xf]
      %v1990 = vld [vmem:[#allocation2 + $0x90] sm:$0xf]
      %v1991 = vld [vmem:[#allocation2 + $0x94] sm:$0xf]
      %v1992 = vld [vmem:[#allocation2 + $0x98] sm:$0xf]
      %v1993 = vld [vmem:[#allocation2 + $0x9c] sm:$0xf]
      %v1994 = vld [vmem:[#allocation2 + $0xa0] sm:$0xf]
      %v1995 = vld [vmem:[#allocation2 + $0xa4] sm:$0xf]
      %v1996 = vld [vmem:[#allocation2 + $0xa8] sm:$0xf]
      %v1997 = vld [vmem:[#allocation2 + $0xac] sm:$0xf]
      %v1998 = vld [vmem:[#allocation2 + $0xb0] sm:$0xf]
      %v1999 = vld [vmem:[#allocation2 + $0xb4] sm:$0xf]
      %v2000 = vld [vmem:[#allocation2 + $0xb8] sm:$0xf]
      %v2001 = vld [vmem:[#allocation2 + $0xbc] sm:$0xf]
      %v2002 = vld [vmem:[#allocation2 + $0xc0] sm:$0xf]
      %v2003 = vld [vmem:[#allocation2 + $0xc4] sm:$0xf]
      %v2004 = vld [vmem:[#allocation2 + $0xc8] sm:$0xf]
      %s2005 = scalar_lea.vmem %s2, 192
      %v2006 = vld [vmem:[%s2005] sm:$0xf]
      %v2007 = vld [vmem:[%s2005 + $0x4] sm:$0xf]
      %v2008 = vld [vmem:[%s2005 + $0x8] sm:$0xf]
      %v2009 = vld [vmem:[%s2005 + $0xc] sm:$0xf]
      %v2010 = vld [vmem:[%s2005 + $0x10] sm:$0xf]
      %v2011 = vld [vmem:[%s2005 + $0x14] sm:$0xf]
      %v2012 = vld [vmem:[%s2005 + $0x18] sm:$0xf]
      %v2013 = vld [vmem:[%s2005 + $0x1c] sm:$0xf]
      %v2014 = vld [vmem:[%s2005 + $0x20] sm:$0xf]
      %v2015 = vld [vmem:[%s2005 + $0x24] sm:$0xf]
      %v2016 = vld [vmem:[%s2005 + $0x28] sm:$0xf]
      %v2017 = vld [vmem:[%s2005 + $0x2c] sm:$0xf]
      %v2018 = vld [vmem:[%s2005 + $0x30] sm:$0xf]
      %v2019 = vld [vmem:[%s2005 + $0x34] sm:$0xf]
      %v2020 = vld [vmem:[%s2005 + $0x38] sm:$0xf]
      %v2021 = vld [vmem:[%s2005 + $0x3c] sm:$0xf]
      %v2070 = vunpack.c.l.b16 %v1957
      %v2071 = vunpack.c.l.b16 %v1958
      %v2072 = vunpack.c.l.b16 %v1959
      %v2073 = vunpack.c.l.b16 %v1960
      %v2074 = vunpack.c.l.b16 %v1961
      %v2075 = vunpack.c.l.b16 %v1962
      %v2076 = vunpack.c.l.b16 %v1963
      %v2077 = vunpack.c.l.b16 %v1964
      %v2078 = vunpack.c.l.b16 %v1965
      %v2079 = vunpack.c.l.b16 %v1966
      %v2080 = vunpack.c.l.b16 %v1967
      %v2081 = vunpack.c.l.b16 %v1968
      %v2082 = vunpack.c.l.b16 %v1969
      %v2083 = vunpack.c.l.b16 %v1970
      %v2084 = vunpack.c.l.b16 %v1971
      %v2085 = vunpack.c.l.b16 %v1972
      %v2086 = vunpack.c.l.b16 %v1973
      %v2087 = vunpack.c.l.b16 %v1974
      %v2088 = vunpack.c.l.b16 %v1975
      %v2089 = vunpack.c.l.b16 %v1976
      %v2090 = vunpack.c.l.b16 %v1977
      %v2091 = vunpack.c.l.b16 %v1978
      %v2092 = vunpack.c.l.b16 %v1979
      %v2093 = vunpack.c.l.b16 %v1980
      %v2094 = vunpack.c.l.b16 %v1981
      %v2095 = vunpack.c.l.b16 %v1982
      %v2096 = vunpack.c.l.b16 %v1983
      %v2097 = vunpack.c.l.b16 %v1984
      %v2098 = vunpack.c.l.b16 %v1985
      %v2099 = vunpack.c.l.b16 %v1986
      %v2100 = vunpack.c.l.b16 %v1987
      %v2101 = vunpack.c.l.b16 %v1988
      %v2102 = vunpack.c.l.b16 %v1989
      %v2103 = vunpack.c.l.b16 %v1990
      %v2104 = vunpack.c.l.b16 %v1991
      %v2105 = vunpack.c.l.b16 %v1992
      %v2106 = vunpack.c.l.b16 %v1993
      %v2107 = vunpack.c.l.b16 %v1994
      %v2108 = vunpack.c.l.b16 %v1995
      %v2109 = vunpack.c.l.b16 %v1996
      %v2110 = vunpack.c.l.b16 %v1997
      %v2111 = vunpack.c.l.b16 %v1998
      %v2112 = vunpack.c.l.b16 %v1999
      %v2113 = vunpack.c.l.b16 %v2000
      %v2114 = vunpack.c.l.b16 %v2001
      %v2115 = vunpack.c.l.b16 %v2002
      %v2116 = vunpack.c.l.b16 %v2003
      %v2117 = vunpack.c.l.b16 %v2004
      %v2118 = vpack.c.b16 %v2071, %v2070
      %v2119 = vpack.c.b16 %v2073, %v2072
      %v2120 = vpack.c.b16 %v2075, %v2074
      %v2121 = vpack.c.b16 %v2077, %v2076
      %v2122 = vpack.c.b16 %v2079, %v2078
      %v2123 = vpack.c.b16 %v2081, %v2080
      %v2124 = vpack.c.b16 %v2083, %v2082
      %v2125 = vpack.c.b16 %v2085, %v2084
      %v2126 = vpack.c.b16 %v2087, %v2086
      %v2127 = vpack.c.b16 %v2089, %v2088
      %v2128 = vpack.c.b16 %v2091, %v2090
      %v2129 = vpack.c.b16 %v2093, %v2092
      %v2130 = vpack.c.b16 %v2095, %v2094
      %v2131 = vpack.c.b16 %v2097, %v2096
      %v2132 = vpack.c.b16 %v2099, %v2098
      %v2133 = vpack.c.b16 %v2101, %v2100
      %v2134 = vpack.c.b16 %v2103, %v2102
      %v2135 = vpack.c.b16 %v2105, %v2104
      %v2136 = vpack.c.b16 %v2107, %v2106
      %v2137 = vpack.c.b16 %v2109, %v2108
      %v2138 = vpack.c.b16 %v2111, %v2110
      %v2139 = vpack.c.b16 %v2113, %v2112
      %v2140 = vpack.c.b16 %v2115, %v2114
      %v2141 = vpack.c.b16 %v2117, %v2116
      %v2182 = vunpack.c.l.b16 %v2006
      %v2183 = vunpack.c.l.b16 %v2007
      %v2184 = vunpack.c.l.b16 %v2008
      %v2185 = vunpack.c.l.b16 %v2009
      %v2186 = vunpack.c.l.b16 %v2010
      %v2187 = vunpack.c.l.b16 %v2011
      %v2188 = vunpack.c.l.b16 %v2012
      %v2189 = vunpack.c.l.b16 %v2013
      %v2190 = vunpack.c.l.b16 %v2014
      %v2191 = vunpack.c.l.b16 %v2015
      %v2192 = vunpack.c.l.b16 %v2016
      %v2193 = vunpack.c.l.b16 %v2017
      %v2194 = vunpack.c.l.b16 %v2018
      %v2195 = vunpack.c.l.b16 %v2019
      %v2196 = vunpack.c.l.b16 %v2020
      %v2197 = vunpack.c.l.b16 %v2021
      %v2198 = vpack.c.b16 %v2183, %v2182
      %v2199 = vpack.c.b16 %v2185, %v2184
      %v2200 = vpack.c.b16 %v2187, %v2186
      %v2201 = vpack.c.b16 %v2189, %v2188
      %v2202 = vpack.c.b16 %v2191, %v2190
      %v2203 = vpack.c.b16 %v2193, %v2192
      %v2204 = vpack.c.b16 %v2195, %v2194
      %v2205 = vpack.c.b16 %v2197, %v2196
      %2214 = vmatpush.bf16.msra.mxu0 %v2205
      %2215 = vmatpush.bf16.msra.mxu0 %v2204
      %2216 = vmatpush.bf16.msra.mxu0 %v2203
      %2217 = vmatpush.bf16.msra.mxu0 %v2202
      %2218 = vmatpush.bf16.msra.mxu0 %v2201
      %2219 = vmatpush.bf16.msra.mxu0 %v2200
      %2220 = vmatpush.bf16.msra.mxu0 %v2199
      %2221 = vmatpush.bf16.msra.mxu0 %v2198
      %2222 = vmatmul.bf16.gmra.mxu0 %v2118
      %v2223 = vpop.f32.mrf.mxu0
      %v2224 = vadd.f32 0.0, %v2223
      %v2225 = vpop.f32.mrf.mxu0
      %v2226 = vadd.f32 0.0, %v2225
      %2227 = vmatmul.bf16.gmra.mxu0 %v2119
      %v2228 = vpop.f32.mrf.mxu0
      %v2229 = vpop.f32.mrf.mxu0
      %v2230 = vadd.f32 0.0, %v2229
      %2231 = vmatmul.bf16.gmra.mxu0 %v2120
      %v2232 = vpop.f32.mrf.mxu0
      %v2233 = vadd.f32 0.0, %v2232
      %v2234 = vpop.f32.mrf.mxu0
      %2235 = vmatmul.bf16.gmra.mxu0 %v2121
      %v2236 = vpop.f32.mrf.mxu0
      %v2237 = vadd.f32 0.0, %v2236
      %v2238 = vpop.f32.mrf.mxu0
      %v2239 = vadd.f32 0.0, %v2238
      %2240 = vmatmul.bf16.gmra.mxu0 %v2122
      %v2241 = vpop.f32.mrf.mxu0
      %v2242 = vpop.f32.mrf.mxu0
      %v2243 = vadd.f32 0.0, %v2242
      %2244 = vmatmul.bf16.gmra.mxu0 %v2123
      %v2245 = vpop.f32.mrf.mxu0
      %v2246 = vadd.f32 0.0, %v2245
      %v2247 = vpop.f32.mrf.mxu0
      %2248 = vmatmul.bf16.gmra.mxu0 %v2124
      %v2249 = vpop.f32.mrf.mxu0
      %v2250 = vadd.f32 0.0, %v2249
      %v2251 = vpop.f32.mrf.mxu0
      %v2252 = vadd.f32 0.0, %v2251
      %2253 = vmatmul.bf16.gmra.mxu0 %v2125
      %v2254 = vpop.f32.mrf.mxu0
      %v2255 = vpop.f32.mrf.mxu0
      %v2256 = vadd.f32 0.0, %v2255
      %2257 = vmatmul.bf16.gmra.mxu0 %v2126
      %v2258 = vpop.f32.mrf.mxu0
      %v2259 = vadd.f32 0.0, %v2258
      %v2260 = vpop.f32.mrf.mxu0
      %2261 = vmatmul.bf16.gmra.mxu0 %v2127
      %v2262 = vpop.f32.mrf.mxu0
      %v2263 = vadd.f32 0.0, %v2262
      %v2264 = vpop.f32.mrf.mxu0
      %v2265 = vadd.f32 0.0, %v2264
      %2266 = vmatmul.bf16.gmra.mxu0 %v2128
      %v2267 = vpop.f32.mrf.mxu0
      %v2268 = vpop.f32.mrf.mxu0
      %v2269 = vadd.f32 0.0, %v2268
      %2270 = vmatmul.bf16.gmra.mxu0 %v2129
      %v2271 = vpop.f32.mrf.mxu0
      %v2272 = vadd.f32 0.0, %v2271
      %v2273 = vpop.f32.mrf.mxu0
      %2274 = vmatmul.bf16.gmra.mxu0 %v2130
      %v2275 = vpop.f32.mrf.mxu0
      %v2276 = vadd.f32 0.0, %v2275
      %v2277 = vpop.f32.mrf.mxu0
      %v2278 = vadd.f32 0.0, %v2277
      %2279 = vmatmul.bf16.gmra.mxu0 %v2131
      %v2280 = vpop.f32.mrf.mxu0
      %v2281 = vpop.f32.mrf.mxu0
      %v2282 = vadd.f32 0.0, %v2281
      %2283 = vmatmul.bf16.gmra.mxu0 %v2132
      %v2284 = vpop.f32.mrf.mxu0
      %v2285 = vadd.f32 0.0, %v2284
      %v2286 = vpop.f32.mrf.mxu0
      %2287 = vmatmul.bf16.gmra.mxu0 %v2133
      %v2288 = vpop.f32.mrf.mxu0
      %v2289 = vadd.f32 0.0, %v2288
      %v2290 = vpop.f32.mrf.mxu0
      %v2291 = vadd.f32 0.0, %v2290
      %2292 = vmatmul.bf16.gmra.mxu0 %v2134
      %v2293 = vpop.f32.mrf.mxu0
      %v2294 = vpop.f32.mrf.mxu0
      %v2295 = vadd.f32 0.0, %v2294
      %2296 = vmatmul.bf16.gmra.mxu0 %v2135
      %v2297 = vpop.f32.mrf.mxu0
      %v2298 = vadd.f32 0.0, %v2297
      %v2299 = vpop.f32.mrf.mxu0
      %2300 = vmatmul.bf16.gmra.mxu0 %v2136
      %v2301 = vpop.f32.mrf.mxu0
      %v2302 = vadd.f32 0.0, %v2301
      %v2303 = vpop.f32.mrf.mxu0
      %v2304 = vadd.f32 0.0, %v2303
      %2305 = vmatmul.bf16.gmra.mxu0 %v2137
      %v2306 = vpop.f32.mrf.mxu0
      %v2307 = vpop.f32.mrf.mxu0
      %v2308 = vadd.f32 0.0, %v2307
      %2309 = vmatmul.bf16.gmra.mxu0 %v2138
      %v2310 = vpop.f32.mrf.mxu0
      %v2311 = vadd.f32 0.0, %v2310
      %v2312 = vpop.f32.mrf.mxu0
      %2313 = vmatmul.bf16.gmra.mxu0 %v2139
      %v2314 = vpop.f32.mrf.mxu0
      %v2315 = vadd.f32 0.0, %v2314
      %v2316 = vpop.f32.mrf.mxu0
      %v2317 = vadd.f32 0.0, %v2316
      %2318 = vmatmul.bf16.gmra.mxu0 %v2140
      %v2319 = vpop.f32.mrf.mxu0
      %v2320 = vpop.f32.mrf.mxu0
      %v2321 = vadd.f32 0.0, %v2320
      %2322 = vmatmul.bf16.gmra.mxu0 %v2141
      %v2323 = vpop.f32.mrf.mxu0
      %v2324 = vadd.f32 0.0, %v2323
      %v2325 = vpop.f32.mrf.mxu0
      %2326 = vdwg.mxu0
      %v2327 = vadd.f32 %v1925, %v2224
      %v2328 = vadd.f32 %v1926, %v2226
      %v2329 = vadd.f32 %v1927, %v2230
      %v2330 = vadd.f32 %v1928, %v2233
      %v2331 = vadd.f32 %v1929, %v2237
      %v2332 = vadd.f32 %v1930, %v2239
      %v2333 = vadd.f32 %v1931, %v2243
      %v2334 = vadd.f32 %v1932, %v2246
      %v2335 = vadd.f32 %v1933, %v2250
      %v2336 = vadd.f32 %v1934, %v2252
      %v2337 = vadd.f32 %v1935, %v2256
      %v2338 = vadd.f32 %v1936, %v2259
      %v2339 = vadd.f32 %v1937, %v2263
      %v2340 = vadd.f32 %v1938, %v2265
      %v2341 = vadd.f32 %v1939, %v2269
      %v2342 = vadd.f32 %v1940, %v2272
      %v2343 = vadd.f32 %v1941, %v2276
      %v2344 = vadd.f32 %v1942, %v2278
      %v2345 = vadd.f32 %v1943, %v2282
      %v2346 = vadd.f32 %v1944, %v2285
      %v2347 = vadd.f32 %v1945, %v2289
      %v2348 = vadd.f32 %v1946, %v2291
      %v2349 = vadd.f32 %v1947, %v2295
      %v2350 = vadd.f32 %v1948, %v2298
      %v2351 = vadd.f32 %v1949, %v2302
      %v2352 = vadd.f32 %v1950, %v2304
      %v2353 = vadd.f32 %v1951, %v2308
      %v2354 = vadd.f32 %v1952, %v2311
      %v2355 = vadd.f32 %v1953, %v2315
      %v2356 = vadd.f32 %v1954, %v2317
      %v2357 = vadd.f32 %v1955, %v2321
      %v2358 = vadd.f32 %v1956, %v2324
      %v2359 = vld [vmem:[#allocation2 + $0xc] sm:$0xf]
      %v2360 = vld [vmem:[#allocation2 + $0x10] sm:$0xf]
      %v2361 = vld [vmem:[#allocation2 + $0x14] sm:$0xf]
      %v2362 = vld [vmem:[#allocation2 + $0x18] sm:$0xf]
      %v2363 = vld [vmem:[#allocation2 + $0x1c] sm:$0xf]
      %v2364 = vld [vmem:[#allocation2 + $0x20] sm:$0xf]
      %v2365 = vld [vmem:[#allocation2 + $0x24] sm:$0xf]
      %v2366 = vld [vmem:[#allocation2 + $0x28] sm:$0xf]
      %v2367 = vld [vmem:[#allocation2 + $0x2c] sm:$0xf]
      %v2368 = vld [vmem:[#allocation2 + $0x30] sm:$0xf]
      %v2369 = vld [vmem:[#allocation2 + $0x34] sm:$0xf]
      %v2370 = vld [vmem:[#allocation2 + $0x38] sm:$0xf]
      %v2371 = vld [vmem:[#allocation2 + $0x3c] sm:$0xf]
      %v2372 = vld [vmem:[#allocation2 + $0x40] sm:$0xf]
      %v2373 = vld [vmem:[#allocation2 + $0x44] sm:$0xf]
      %v2374 = vld [vmem:[#allocation2 + $0x48] sm:$0xf]
      %v2375 = vld [vmem:[#allocation2 + $0x4c] sm:$0xf]
      %v2376 = vld [vmem:[#allocation2 + $0x50] sm:$0xf]
      %v2377 = vld [vmem:[#allocation2 + $0x54] sm:$0xf]
      %v2378 = vld [vmem:[#allocation2 + $0x58] sm:$0xf]
      %v2379 = vld [vmem:[#allocation2 + $0x5c] sm:$0xf]
      %v2380 = vld [vmem:[#allocation2 + $0x60] sm:$0xf]
      %v2381 = vld [vmem:[#allocation2 + $0x64] sm:$0xf]
      %v2382 = vld [vmem:[#allocation2 + $0x68] sm:$0xf]
      %v2383 = vld [vmem:[#allocation2 + $0x6c] sm:$0xf]
      %v2384 = vld [vmem:[#allocation2 + $0x70] sm:$0xf]
      %v2385 = vld [vmem:[#allocation2 + $0x74] sm:$0xf]
      %v2386 = vld [vmem:[#allocation2 + $0x78] sm:$0xf]
      %v2387 = vld [vmem:[#allocation2 + $0x7c] sm:$0xf]
      %v2388 = vld [vmem:[#allocation2 + $0x80] sm:$0xf]
      %v2389 = vld [vmem:[#allocation2 + $0x84] sm:$0xf]
      %v2390 = vld [vmem:[#allocation2 + $0x88] sm:$0xf]
      %v2391 = vld [vmem:[#allocation2 + $0x8c] sm:$0xf]
      %v2392 = vld [vmem:[#allocation2 + $0x90] sm:$0xf]
      %v2393 = vld [vmem:[#allocation2 + $0x94] sm:$0xf]
      %v2394 = vld [vmem:[#allocation2 + $0x98] sm:$0xf]
      %v2395 = vld [vmem:[#allocation2 + $0x9c] sm:$0xf]
      %v2396 = vld [vmem:[#allocation2 + $0xa0] sm:$0xf]
      %v2397 = vld [vmem:[#allocation2 + $0xa4] sm:$0xf]
      %v2398 = vld [vmem:[#allocation2 + $0xa8] sm:$0xf]
      %v2399 = vld [vmem:[#allocation2 + $0xac] sm:$0xf]
      %v2400 = vld [vmem:[#allocation2 + $0xb0] sm:$0xf]
      %v2401 = vld [vmem:[#allocation2 + $0xb4] sm:$0xf]
      %v2402 = vld [vmem:[#allocation2 + $0xb8] sm:$0xf]
      %v2403 = vld [vmem:[#allocation2 + $0xbc] sm:$0xf]
      %v2404 = vld [vmem:[#allocation2 + $0xc0] sm:$0xf]
      %v2405 = vld [vmem:[#allocation2 + $0xc4] sm:$0xf]
      %v2406 = vld [vmem:[#allocation2 + $0xc8] sm:$0xf]
      %v2407 = vld [vmem:[#allocation2 + $0xcc] sm:$0x1]
      %s2408 = scalar_lea.vmem %s2, 256
      %v2409 = vld [vmem:[%s2408] sm:$0xf]
      %v2410 = vld [vmem:[%s2408 + $0x4] sm:$0xf]
      %v2411 = vld [vmem:[%s2408 + $0x8] sm:$0xf]
      %v2412 = vld [vmem:[%s2408 + $0xc] sm:$0xf]
      %v2413 = vld [vmem:[%s2408 + $0x10] sm:$0xf]
      %v2414 = vld [vmem:[%s2408 + $0x14] sm:$0xf]
      %v2415 = vld [vmem:[%s2408 + $0x18] sm:$0xf]
      %v2416 = vld [vmem:[%s2408 + $0x1c] sm:$0xf]
      %v2417 = vld [vmem:[%s2408 + $0x20] sm:$0xf]
      %v2418 = vld [vmem:[%s2408 + $0x24] sm:$0xf]
      %v2419 = vld [vmem:[%s2408 + $0x28] sm:$0xf]
      %v2420 = vld [vmem:[%s2408 + $0x2c] sm:$0xf]
      %v2421 = vld [vmem:[%s2408 + $0x30] sm:$0xf]
      %v2422 = vld [vmem:[%s2408 + $0x34] sm:$0xf]
      %v2423 = vld [vmem:[%s2408 + $0x38] sm:$0xf]
      %v2424 = vld [vmem:[%s2408 + $0x3c] sm:$0xf]
      %v2474 = vunpack.c.l.b16 %v2359
      %v2475 = vunpack.c.l.b16 %v2360
      %v2476 = vunpack.c.l.b16 %v2361
      %v2477 = vunpack.c.l.b16 %v2362
      %v2478 = vunpack.c.l.b16 %v2363
      %v2479 = vunpack.c.l.b16 %v2364
      %v2480 = vunpack.c.l.b16 %v2365
      %v2481 = vunpack.c.l.b16 %v2366
      %v2482 = vunpack.c.l.b16 %v2367
      %v2483 = vunpack.c.l.b16 %v2368
      %v2484 = vunpack.c.l.b16 %v2369
      %v2485 = vunpack.c.l.b16 %v2370
      %v2486 = vunpack.c.l.b16 %v2371
      %v2487 = vunpack.c.l.b16 %v2372
      %v2488 = vunpack.c.l.b16 %v2373
      %v2489 = vunpack.c.l.b16 %v2374
      %v2490 = vunpack.c.l.b16 %v2375
      %v2491 = vunpack.c.l.b16 %v2376
      %v2492 = vunpack.c.l.b16 %v2377
      %v2493 = vunpack.c.l.b16 %v2378
      %v2494 = vunpack.c.l.b16 %v2379
      %v2495 = vunpack.c.l.b16 %v2380
      %v2496 = vunpack.c.l.b16 %v2381
      %v2497 = vunpack.c.l.b16 %v2382
      %v2498 = vunpack.c.l.b16 %v2383
      %v2499 = vunpack.c.l.b16 %v2384
      %v2500 = vunpack.c.l.b16 %v2385
      %v2501 = vunpack.c.l.b16 %v2386
      %v2502 = vunpack.c.l.b16 %v2387
      %v2503 = vunpack.c.l.b16 %v2388
      %v2504 = vunpack.c.l.b16 %v2389
      %v2505 = vunpack.c.l.b16 %v2390
      %v2506 = vunpack.c.l.b16 %v2391
      %v2507 = vunpack.c.l.b16 %v2392
      %v2508 = vunpack.c.l.b16 %v2393
      %v2509 = vunpack.c.l.b16 %v2394
      %v2510 = vunpack.c.l.b16 %v2395
      %v2511 = vunpack.c.l.b16 %v2396
      %v2512 = vunpack.c.l.b16 %v2397
      %v2513 = vunpack.c.l.b16 %v2398
      %v2514 = vunpack.c.l.b16 %v2399
      %v2515 = vunpack.c.l.b16 %v2400
      %v2516 = vunpack.c.l.b16 %v2401
      %v2517 = vunpack.c.l.b16 %v2402
      %v2518 = vunpack.c.l.b16 %v2403
      %v2519 = vunpack.c.l.b16 %v2404
      %v2520 = vunpack.c.l.b16 %v2405
      %v2521 = vunpack.c.l.b16 %v2406
      %v2522 = vunpack.c.l.b16 %v2407
      %v2523 = vpack.c.b16 %v2475, %v2474
      %v2524 = vpack.c.b16 %v2477, %v2476
      %v2525 = vpack.c.b16 %v2479, %v2478
      %v2526 = vpack.c.b16 %v2481, %v2480
      %v2527 = vpack.c.b16 %v2483, %v2482
      %v2528 = vpack.c.b16 %v2485, %v2484
      %v2529 = vpack.c.b16 %v2487, %v2486
      %v2530 = vpack.c.b16 %v2489, %v2488
      %v2531 = vpack.c.b16 %v2491, %v2490
      %v2532 = vpack.c.b16 %v2493, %v2492
      %v2533 = vpack.c.b16 %v2495, %v2494
      %v2534 = vpack.c.b16 %v2497, %v2496
      %v2535 = vpack.c.b16 %v2499, %v2498
      %v2536 = vpack.c.b16 %v2501, %v2500
      %v2537 = vpack.c.b16 %v2503, %v2502
      %v2538 = vpack.c.b16 %v2505, %v2504
      %v2539 = vpack.c.b16 %v2507, %v2506
      %v2540 = vpack.c.b16 %v2509, %v2508
      %v2541 = vpack.c.b16 %v2511, %v2510
      %v2542 = vpack.c.b16 %v2513, %v2512
      %v2543 = vpack.c.b16 %v2515, %v2514
      %v2544 = vpack.c.b16 %v2517, %v2516
      %v2545 = vpack.c.b16 %v2519, %v2518
      %v2546 = vpack.c.b16 %v2521, %v2520
      %v2547 = vpack.c.b16 %v2522, %v2522
      %v2549 = vshrl.u32 %v2523, 16
      %v2551 = vshll.u32 %v2523, 16
      %v2553 = vrot.slane %v2551, 1
      %v2554 = vor.u32 %v2549, %v2553
      %v2556 = vshll.u32 %v2524, 16
      %v2558 = vrot.slane %v2556, 1
      %v2559 = vsel %vm1102, %v2554, %v2558
      %v2560 = vshrl.u32 %v2524, 16
      %v2562 = vor.u32 %v2560, %v2558
      %v2564 = vshll.u32 %v2525, 16
      %v2566 = vrot.slane %v2564, 1
      %v2567 = vsel %vm1102, %v2562, %v2566
      %v2568 = vshrl.u32 %v2525, 16
      %v2570 = vor.u32 %v2568, %v2566
      %v2572 = vshll.u32 %v2526, 16
      %v2574 = vrot.slane %v2572, 1
      %v2575 = vsel %vm1102, %v2570, %v2574
      %v2576 = vshrl.u32 %v2526, 16
      %v2578 = vor.u32 %v2576, %v2574
      %v2580 = vshll.u32 %v2527, 16
      %v2582 = vrot.slane %v2580, 1
      %v2583 = vsel %vm1102, %v2578, %v2582
      %v2584 = vshrl.u32 %v2527, 16
      %v2586 = vor.u32 %v2584, %v2582
      %v2588 = vshll.u32 %v2528, 16
      %v2590 = vrot.slane %v2588, 1
      %v2591 = vsel %vm1102, %v2586, %v2590
      %v2592 = vshrl.u32 %v2528, 16
      %v2594 = vor.u32 %v2592, %v2590
      %v2596 = vshll.u32 %v2529, 16
      %v2598 = vrot.slane %v2596, 1
      %v2599 = vsel %vm1102, %v2594, %v2598
      %v2600 = vshrl.u32 %v2529, 16
      %v2602 = vor.u32 %v2600, %v2598
      %v2604 = vshll.u32 %v2530, 16
      %v2606 = vrot.slane %v2604, 1
      %v2607 = vsel %vm1102, %v2602, %v2606
      %v2608 = vshrl.u32 %v2530, 16
      %v2610 = vor.u32 %v2608, %v2606
      %v2612 = vshll.u32 %v2531, 16
      %v2614 = vrot.slane %v2612, 1
      %v2615 = vsel %vm1102, %v2610, %v2614
      %v2616 = vshrl.u32 %v2531, 16
      %v2618 = vor.u32 %v2616, %v2614
      %v2620 = vshll.u32 %v2532, 16
      %v2622 = vrot.slane %v2620, 1
      %v2623 = vsel %vm1102, %v2618, %v2622
      %v2624 = vshrl.u32 %v2532, 16
      %v2626 = vor.u32 %v2624, %v2622
      %v2628 = vshll.u32 %v2533, 16
      %v2630 = vrot.slane %v2628, 1
      %v2631 = vsel %vm1102, %v2626, %v2630
      %v2632 = vshrl.u32 %v2533, 16
      %v2634 = vor.u32 %v2632, %v2630
      %v2636 = vshll.u32 %v2534, 16
      %v2638 = vrot.slane %v2636, 1
      %v2639 = vsel %vm1102, %v2634, %v2638
      %v2640 = vshrl.u32 %v2534, 16
      %v2642 = vor.u32 %v2640, %v2638
      %v2644 = vshll.u32 %v2535, 16
      %v2646 = vrot.slane %v2644, 1
      %v2647 = vsel %vm1102, %v2642, %v2646
      %v2648 = vshrl.u32 %v2535, 16
      %v2650 = vor.u32 %v2648, %v2646
      %v2652 = vshll.u32 %v2536, 16
      %v2654 = vrot.slane %v2652, 1
      %v2655 = vsel %vm1102, %v2650, %v2654
      %v2656 = vshrl.u32 %v2536, 16
      %v2658 = vor.u32 %v2656, %v2654
      %v2660 = vshll.u32 %v2537, 16
      %v2662 = vrot.slane %v2660, 1
      %v2663 = vsel %vm1102, %v2658, %v2662
      %v2664 = vshrl.u32 %v2537, 16
      %v2666 = vor.u32 %v2664, %v2662
      %v2668 = vshll.u32 %v2538, 16
      %v2670 = vrot.slane %v2668, 1
      %v2671 = vsel %vm1102, %v2666, %v2670
      %v2672 = vshrl.u32 %v2538, 16
      %v2674 = vor.u32 %v2672, %v2670
      %v2676 = vshll.u32 %v2539, 16
      %v2678 = vrot.slane %v2676, 1
      %v2679 = vsel %vm1102, %v2674, %v2678
      %v2680 = vshrl.u32 %v2539, 16
      %v2682 = vor.u32 %v2680, %v2678
      %v2684 = vshll.u32 %v2540, 16
      %v2686 = vrot.slane %v2684, 1
      %v2687 = vsel %vm1102, %v2682, %v2686
      %v2688 = vshrl.u32 %v2540, 16
      %v2690 = vor.u32 %v2688, %v2686
      %v2692 = vshll.u32 %v2541, 16
      %v2694 = vrot.slane %v2692, 1
      %v2695 = vsel %vm1102, %v2690, %v2694
      %v2696 = vshrl.u32 %v2541, 16
      %v2698 = vor.u32 %v2696, %v2694
      %v2700 = vshll.u32 %v2542, 16
      %v2702 = vrot.slane %v2700, 1
      %v2703 = vsel %vm1102, %v2698, %v2702
      %v2704 = vshrl.u32 %v2542, 16
      %v2706 = vor.u32 %v2704, %v2702
      %v2708 = vshll.u32 %v2543, 16
      %v2710 = vrot.slane %v2708, 1
      %v2711 = vsel %vm1102, %v2706, %v2710
      %v2712 = vshrl.u32 %v2543, 16
      %v2714 = vor.u32 %v2712, %v2710
      %v2716 = vshll.u32 %v2544, 16
      %v2718 = vrot.slane %v2716, 1
      %v2719 = vsel %vm1102, %v2714, %v2718
      %v2720 = vshrl.u32 %v2544, 16
      %v2722 = vor.u32 %v2720, %v2718
      %v2724 = vshll.u32 %v2545, 16
      %v2726 = vrot.slane %v2724, 1
      %v2727 = vsel %vm1102, %v2722, %v2726
      %v2728 = vshrl.u32 %v2545, 16
      %v2730 = vor.u32 %v2728, %v2726
      %v2732 = vshll.u32 %v2546, 16
      %v2734 = vrot.slane %v2732, 1
      %v2735 = vsel %vm1102, %v2730, %v2734
      %v2736 = vshrl.u32 %v2546, 16
      %v2738 = vor.u32 %v2736, %v2734
      %v2740 = vshll.u32 %v2547, 16
      %v2742 = vrot.slane %v2740, 1
      %v2743 = vsel %vm1102, %v2738, %v2742
      %v2784 = vunpack.c.l.b16 %v2409
      %v2785 = vunpack.c.l.b16 %v2410
      %v2786 = vunpack.c.l.b16 %v2411
      %v2787 = vunpack.c.l.b16 %v2412
      %v2788 = vunpack.c.l.b16 %v2413
      %v2789 = vunpack.c.l.b16 %v2414
      %v2790 = vunpack.c.l.b16 %v2415
      %v2791 = vunpack.c.l.b16 %v2416
      %v2792 = vunpack.c.l.b16 %v2417
      %v2793 = vunpack.c.l.b16 %v2418
      %v2794 = vunpack.c.l.b16 %v2419
      %v2795 = vunpack.c.l.b16 %v2420
      %v2796 = vunpack.c.l.b16 %v2421
      %v2797 = vunpack.c.l.b16 %v2422
      %v2798 = vunpack.c.l.b16 %v2423
      %v2799 = vunpack.c.l.b16 %v2424
      %v2800 = vpack.c.b16 %v2785, %v2784
      %v2801 = vpack.c.b16 %v2787, %v2786
      %v2802 = vpack.c.b16 %v2789, %v2788
      %v2803 = vpack.c.b16 %v2791, %v2790
      %v2804 = vpack.c.b16 %v2793, %v2792
      %v2805 = vpack.c.b16 %v2795, %v2794
      %v2806 = vpack.c.b16 %v2797, %v2796
      %v2807 = vpack.c.b16 %v2799, %v2798
      %2816 = vmatpush.bf16.msra.mxu0 %v2807
      %2817 = vmatpush.bf16.msra.mxu0 %v2806
      %2818 = vmatpush.bf16.msra.mxu0 %v2805
      %2819 = vmatpush.bf16.msra.mxu0 %v2804
      %2820 = vmatpush.bf16.msra.mxu0 %v2803
      %2821 = vmatpush.bf16.msra.mxu0 %v2802
      %2822 = vmatpush.bf16.msra.mxu0 %v2801
      %2823 = vmatpush.bf16.msra.mxu0 %v2800
      %2824 = vmatmul.bf16.gmra.mxu0 %v2559
      %v2825 = vpop.f32.mrf.mxu0
      %v2826 = vadd.f32 0.0, %v2825
      %v2827 = vpop.f32.mrf.mxu0
      %v2828 = vadd.f32 0.0, %v2827
      %2829 = vmatmul.bf16.gmra.mxu0 %v2567
      %v2830 = vpop.f32.mrf.mxu0
      %v2831 = vpop.f32.mrf.mxu0
      %v2832 = vadd.f32 0.0, %v2831
      %2833 = vmatmul.bf16.gmra.mxu0 %v2575
      %v2834 = vpop.f32.mrf.mxu0
      %v2835 = vadd.f32 0.0, %v2834
      %v2836 = vpop.f32.mrf.mxu0
      %2837 = vmatmul.bf16.gmra.mxu0 %v2583
      %v2838 = vpop.f32.mrf.mxu0
      %v2839 = vadd.f32 0.0, %v2838
      %v2840 = vpop.f32.mrf.mxu0
      %v2841 = vadd.f32 0.0, %v2840
      %2842 = vmatmul.bf16.gmra.mxu0 %v2591
      %v2843 = vpop.f32.mrf.mxu0
      %v2844 = vpop.f32.mrf.mxu0
      %v2845 = vadd.f32 0.0, %v2844
      %2846 = vmatmul.bf16.gmra.mxu0 %v2599
      %v2847 = vpop.f32.mrf.mxu0
      %v2848 = vadd.f32 0.0, %v2847
      %v2849 = vpop.f32.mrf.mxu0
      %2850 = vmatmul.bf16.gmra.mxu0 %v2607
      %v2851 = vpop.f32.mrf.mxu0
      %v2852 = vadd.f32 0.0, %v2851
      %v2853 = vpop.f32.mrf.mxu0
      %v2854 = vadd.f32 0.0, %v2853
      %2855 = vmatmul.bf16.gmra.mxu0 %v2615
      %v2856 = vpop.f32.mrf.mxu0
      %v2857 = vpop.f32.mrf.mxu0
      %v2858 = vadd.f32 0.0, %v2857
      %2859 = vmatmul.bf16.gmra.mxu0 %v2623
      %v2860 = vpop.f32.mrf.mxu0
      %v2861 = vadd.f32 0.0, %v2860
      %v2862 = vpop.f32.mrf.mxu0
      %2863 = vmatmul.bf16.gmra.mxu0 %v2631
      %v2864 = vpop.f32.mrf.mxu0
      %v2865 = vadd.f32 0.0, %v2864
      %v2866 = vpop.f32.mrf.mxu0
      %v2867 = vadd.f32 0.0, %v2866
      %2868 = vmatmul.bf16.gmra.mxu0 %v2639
      %v2869 = vpop.f32.mrf.mxu0
      %v2870 = vpop.f32.mrf.mxu0
      %v2871 = vadd.f32 0.0, %v2870
      %2872 = vmatmul.bf16.gmra.mxu0 %v2647
      %v2873 = vpop.f32.mrf.mxu0
      %v2874 = vadd.f32 0.0, %v2873
      %v2875 = vpop.f32.mrf.mxu0
      %2876 = vmatmul.bf16.gmra.mxu0 %v2655
      %v2877 = vpop.f32.mrf.mxu0
      %v2878 = vadd.f32 0.0, %v2877
      %v2879 = vpop.f32.mrf.mxu0
      %v2880 = vadd.f32 0.0, %v2879
      %2881 = vmatmul.bf16.gmra.mxu0 %v2663
      %v2882 = vpop.f32.mrf.mxu0
      %v2883 = vpop.f32.mrf.mxu0
      %v2884 = vadd.f32 0.0, %v2883
      %2885 = vmatmul.bf16.gmra.mxu0 %v2671
      %v2886 = vpop.f32.mrf.mxu0
      %v2887 = vadd.f32 0.0, %v2886
      %v2888 = vpop.f32.mrf.mxu0
      %2889 = vmatmul.bf16.gmra.mxu0 %v2679
      %v2890 = vpop.f32.mrf.mxu0
      %v2891 = vadd.f32 0.0, %v2890
      %v2892 = vpop.f32.mrf.mxu0
      %v2893 = vadd.f32 0.0, %v2892
      %2894 = vmatmul.bf16.gmra.mxu0 %v2687
      %v2895 = vpop.f32.mrf.mxu0
      %v2896 = vpop.f32.mrf.mxu0
      %v2897 = vadd.f32 0.0, %v2896
      %2898 = vmatmul.bf16.gmra.mxu0 %v2695
      %v2899 = vpop.f32.mrf.mxu0
      %v2900 = vadd.f32 0.0, %v2899
      %v2901 = vpop.f32.mrf.mxu0
      %2902 = vmatmul.bf16.gmra.mxu0 %v2703
      %v2903 = vpop.f32.mrf.mxu0
      %v2904 = vadd.f32 0.0, %v2903
      %v2905 = vpop.f32.mrf.mxu0
      %v2906 = vadd.f32 0.0, %v2905
      %2907 = vmatmul.bf16.gmra.mxu0 %v2711
      %v2908 = vpop.f32.mrf.mxu0
      %v2909 = vpop.f32.mrf.mxu0
      %v2910 = vadd.f32 0.0, %v2909
      %2911 = vmatmul.bf16.gmra.mxu0 %v2719
      %v2912 = vpop.f32.mrf.mxu0
      %v2913 = vadd.f32 0.0, %v2912
      %v2914 = vpop.f32.mrf.mxu0
      %2915 = vmatmul.bf16.gmra.mxu0 %v2727
      %v2916 = vpop.f32.mrf.mxu0
      %v2917 = vadd.f32 0.0, %v2916
      %v2918 = vpop.f32.mrf.mxu0
      %v2919 = vadd.f32 0.0, %v2918
      %2920 = vmatmul.bf16.gmra.mxu0 %v2735
      %v2921 = vpop.f32.mrf.mxu0
      %v2922 = vpop.f32.mrf.mxu0
      %v2923 = vadd.f32 0.0, %v2922
      %2924 = vmatmul.bf16.gmra.mxu0 %v2743
      %v2925 = vpop.f32.mrf.mxu0
      %v2926 = vadd.f32 0.0, %v2925
      %v2927 = vpop.f32.mrf.mxu0
      %2928 = vdwg.mxu0
      %v2929 = vadd.f32 %v2327, %v2826
      %v2930 = vadd.f32 %v2328, %v2828
      %v2931 = vadd.f32 %v2329, %v2832
      %v2932 = vadd.f32 %v2330, %v2835
      %v2933 = vadd.f32 %v2331, %v2839
      %v2934 = vadd.f32 %v2332, %v2841
      %v2935 = vadd.f32 %v2333, %v2845
      %v2936 = vadd.f32 %v2334, %v2848
      %v2937 = vadd.f32 %v2335, %v2852
      %v2938 = vadd.f32 %v2336, %v2854
      %v2939 = vadd.f32 %v2337, %v2858
      %v2940 = vadd.f32 %v2338, %v2861
      %v2941 = vadd.f32 %v2339, %v2865
      %v2942 = vadd.f32 %v2340, %v2867
      %v2943 = vadd.f32 %v2341, %v2871
      %v2944 = vadd.f32 %v2342, %v2874
      %v2945 = vadd.f32 %v2343, %v2878
      %v2946 = vadd.f32 %v2344, %v2880
      %v2947 = vadd.f32 %v2345, %v2884
      %v2948 = vadd.f32 %v2346, %v2887
      %v2949 = vadd.f32 %v2347, %v2891
      %v2950 = vadd.f32 %v2348, %v2893
      %v2951 = vadd.f32 %v2349, %v2897
      %v2952 = vadd.f32 %v2350, %v2900
      %v2953 = vadd.f32 %v2351, %v2904
      %v2954 = vadd.f32 %v2352, %v2906
      %v2955 = vadd.f32 %v2353, %v2910
      %v2956 = vadd.f32 %v2354, %v2913
      %v2957 = vadd.f32 %v2355, %v2917
      %v2958 = vadd.f32 %v2356, %v2919
      %v2959 = vadd.f32 %v2357, %v2923
      %v2960 = vadd.f32 %v2358, %v2926
      %v2961 = vld [vmem:[#allocation2 + $0xc] sm:$0xe]
      %s2962 = scalar_lea.vmem %s2, 320
      %v2963 = vld [vmem:[%s2962] sm:$0xf]
      %v2964 = vld [vmem:[%s2962 + $0x4] sm:$0xf]
      %v2965 = vld [vmem:[%s2962 + $0x8] sm:$0xf]
      %v2966 = vld [vmem:[%s2962 + $0xc] sm:$0xf]
      %v2967 = vld [vmem:[%s2962 + $0x10] sm:$0xf]
      %v2968 = vld [vmem:[%s2962 + $0x14] sm:$0xf]
      %v2969 = vld [vmem:[%s2962 + $0x18] sm:$0xf]
      %v2970 = vld [vmem:[%s2962 + $0x1c] sm:$0xf]
      %v2971 = vld [vmem:[%s2962 + $0x20] sm:$0xf]
      %v2972 = vld [vmem:[%s2962 + $0x24] sm:$0xf]
      %v2973 = vld [vmem:[%s2962 + $0x28] sm:$0xf]
      %v2974 = vld [vmem:[%s2962 + $0x2c] sm:$0xf]
      %v2975 = vld [vmem:[%s2962 + $0x30] sm:$0xf]
      %v2976 = vld [vmem:[%s2962 + $0x34] sm:$0xf]
      %v2977 = vld [vmem:[%s2962 + $0x38] sm:$0xf]
      %v2978 = vld [vmem:[%s2962 + $0x3c] sm:$0xf]
      %v2980 = vunpack.c.l.b16 %v2961
      %v2981 = vpack.c.b16 %v2475, %v2980
      %v2982 = vrot.slane %v2981, 1
      %v2983 = vrot.slane %v2524, 1
      %v2984 = vsel %vm1690, %v2982, %v2983
      %v2985 = vrot.slane %v2525, 1
      %v2986 = vsel %vm1690, %v2983, %v2985
      %v2987 = vrot.slane %v2526, 1
      %v2988 = vsel %vm1690, %v2985, %v2987
      %v2989 = vrot.slane %v2527, 1
      %v2990 = vsel %vm1690, %v2987, %v2989
      %v2991 = vrot.slane %v2528, 1
      %v2992 = vsel %vm1690, %v2989, %v2991
      %v2993 = vrot.slane %v2529, 1
      %v2994 = vsel %vm1690, %v2991, %v2993
      %v2995 = vrot.slane %v2530, 1
      %v2996 = vsel %vm1690, %v2993, %v2995
      %v2997 = vrot.slane %v2531, 1
      %v2998 = vsel %vm1690, %v2995, %v2997
      %v2999 = vrot.slane %v2532, 1
      %v3000 = vsel %vm1690, %v2997, %v2999
      %v3001 = vrot.slane %v2533, 1
      %v3002 = vsel %vm1690, %v2999, %v3001
      %v3003 = vrot.slane %v2534, 1
      %v3004 = vsel %vm1690, %v3001, %v3003
      %v3005 = vrot.slane %v2535, 1
      %v3006 = vsel %vm1690, %v3003, %v3005
      %v3007 = vrot.slane %v2536, 1
      %v3008 = vsel %vm1690, %v3005, %v3007
      %v3009 = vrot.slane %v2537, 1
      %v3010 = vsel %vm1690, %v3007, %v3009
      %v3011 = vrot.slane %v2538, 1
      %v3012 = vsel %vm1690, %v3009, %v3011
      %v3013 = vrot.slane %v2539, 1
      %v3014 = vsel %vm1690, %v3011, %v3013
      %v3015 = vrot.slane %v2540, 1
      %v3016 = vsel %vm1690, %v3013, %v3015
      %v3017 = vrot.slane %v2541, 1
      %v3018 = vsel %vm1690, %v3015, %v3017
      %v3019 = vrot.slane %v2542, 1
      %v3020 = vsel %vm1690, %v3017, %v3019
      %v3021 = vrot.slane %v2543, 1
      %v3022 = vsel %vm1690, %v3019, %v3021
      %v3023 = vrot.slane %v2544, 1
      %v3024 = vsel %vm1690, %v3021, %v3023
      %v3025 = vrot.slane %v2545, 1
      %v3026 = vsel %vm1690, %v3023, %v3025
      %v3027 = vrot.slane %v2546, 1
      %v3028 = vsel %vm1690, %v3025, %v3027
      %v3029 = vrot.slane %v2547, 1
      %v3030 = vsel %vm1690, %v3027, %v3029
      %v3071 = vunpack.c.l.b16 %v2963
      %v3072 = vunpack.c.l.b16 %v2964
      %v3073 = vunpack.c.l.b16 %v2965
      %v3074 = vunpack.c.l.b16 %v2966
      %v3075 = vunpack.c.l.b16 %v2967
      %v3076 = vunpack.c.l.b16 %v2968
      %v3077 = vunpack.c.l.b16 %v2969
      %v3078 = vunpack.c.l.b16 %v2970
      %v3079 = vunpack.c.l.b16 %v2971
      %v3080 = vunpack.c.l.b16 %v2972
      %v3081 = vunpack.c.l.b16 %v2973
      %v3082 = vunpack.c.l.b16 %v2974
      %v3083 = vunpack.c.l.b16 %v2975
      %v3084 = vunpack.c.l.b16 %v2976
      %v3085 = vunpack.c.l.b16 %v2977
      %v3086 = vunpack.c.l.b16 %v2978
      %v3087 = vpack.c.b16 %v3072, %v3071
      %v3088 = vpack.c.b16 %v3074, %v3073
      %v3089 = vpack.c.b16 %v3076, %v3075
      %v3090 = vpack.c.b16 %v3078, %v3077
      %v3091 = vpack.c.b16 %v3080, %v3079
      %v3092 = vpack.c.b16 %v3082, %v3081
      %v3093 = vpack.c.b16 %v3084, %v3083
      %v3094 = vpack.c.b16 %v3086, %v3085
      %3103 = vmatpush.bf16.msra.mxu0 %v3094
      %3104 = vmatpush.bf16.msra.mxu0 %v3093
      %3105 = vmatpush.bf16.msra.mxu0 %v3092
      %3106 = vmatpush.bf16.msra.mxu0 %v3091
      %3107 = vmatpush.bf16.msra.mxu0 %v3090
      %3108 = vmatpush.bf16.msra.mxu0 %v3089
      %3109 = vmatpush.bf16.msra.mxu0 %v3088
      %3110 = vmatpush.bf16.msra.mxu0 %v3087
      %3111 = vmatmul.bf16.gmra.mxu0 %v2984
      %v3112 = vpop.f32.mrf.mxu0
      %v3113 = vadd.f32 0.0, %v3112
      %v3114 = vpop.f32.mrf.mxu0
      %v3115 = vadd.f32 0.0, %v3114
      %3116 = vmatmul.bf16.gmra.mxu0 %v2986
      %v3117 = vpop.f32.mrf.mxu0
      %v3118 = vpop.f32.mrf.mxu0
      %v3119 = vadd.f32 0.0, %v3118
      %3120 = vmatmul.bf16.gmra.mxu0 %v2988
      %v3121 = vpop.f32.mrf.mxu0
      %v3122 = vadd.f32 0.0, %v3121
      %v3123 = vpop.f32.mrf.mxu0
      %3124 = vmatmul.bf16.gmra.mxu0 %v2990
      %v3125 = vpop.f32.mrf.mxu0
      %v3126 = vadd.f32 0.0, %v3125
      %v3127 = vpop.f32.mrf.mxu0
      %v3128 = vadd.f32 0.0, %v3127
      %3129 = vmatmul.bf16.gmra.mxu0 %v2992
      %v3130 = vpop.f32.mrf.mxu0
      %v3131 = vpop.f32.mrf.mxu0
      %v3132 = vadd.f32 0.0, %v3131
      %3133 = vmatmul.bf16.gmra.mxu0 %v2994
      %v3134 = vpop.f32.mrf.mxu0
      %v3135 = vadd.f32 0.0, %v3134
      %v3136 = vpop.f32.mrf.mxu0
      %3137 = vmatmul.bf16.gmra.mxu0 %v2996
      %v3138 = vpop.f32.mrf.mxu0
      %v3139 = vadd.f32 0.0, %v3138
      %v3140 = vpop.f32.mrf.mxu0
      %v3141 = vadd.f32 0.0, %v3140
      %3142 = vmatmul.bf16.gmra.mxu0 %v2998
      %v3143 = vpop.f32.mrf.mxu0
      %v3144 = vpop.f32.mrf.mxu0
      %v3145 = vadd.f32 0.0, %v3144
      %3146 = vmatmul.bf16.gmra.mxu0 %v3000
      %v3147 = vpop.f32.mrf.mxu0
      %v3148 = vadd.f32 0.0, %v3147
      %v3149 = vpop.f32.mrf.mxu0
      %3150 = vmatmul.bf16.gmra.mxu0 %v3002
      %v3151 = vpop.f32.mrf.mxu0
      %v3152 = vadd.f32 0.0, %v3151
      %v3153 = vpop.f32.mrf.mxu0
      %v3154 = vadd.f32 0.0, %v3153
      %3155 = vmatmul.bf16.gmra.mxu0 %v3004
      %v3156 = vpop.f32.mrf.mxu0
      %v3157 = vpop.f32.mrf.mxu0
      %v3158 = vadd.f32 0.0, %v3157
      %3159 = vmatmul.bf16.gmra.mxu0 %v3006
      %v3160 = vpop.f32.mrf.mxu0
      %v3161 = vadd.f32 0.0, %v3160
      %v3162 = vpop.f32.mrf.mxu0
      %3163 = vmatmul.bf16.gmra.mxu0 %v3008
      %v3164 = vpop.f32.mrf.mxu0
      %v3165 = vadd.f32 0.0, %v3164
      %v3166 = vpop.f32.mrf.mxu0
      %v3167 = vadd.f32 0.0, %v3166
      %3168 = vmatmul.bf16.gmra.mxu0 %v3010
      %v3169 = vpop.f32.mrf.mxu0
      %v3170 = vpop.f32.mrf.mxu0
      %v3171 = vadd.f32 0.0, %v3170
      %3172 = vmatmul.bf16.gmra.mxu0 %v3012
      %v3173 = vpop.f32.mrf.mxu0
      %v3174 = vadd.f32 0.0, %v3173
      %v3175 = vpop.f32.mrf.mxu0
      %3176 = vmatmul.bf16.gmra.mxu0 %v3014
      %v3177 = vpop.f32.mrf.mxu0
      %v3178 = vadd.f32 0.0, %v3177
      %v3179 = vpop.f32.mrf.mxu0
      %v3180 = vadd.f32 0.0, %v3179
      %3181 = vmatmul.bf16.gmra.mxu0 %v3016
      %v3182 = vpop.f32.mrf.mxu0
      %v3183 = vpop.f32.mrf.mxu0
      %v3184 = vadd.f32 0.0, %v3183
      %3185 = vmatmul.bf16.gmra.mxu0 %v3018
      %v3186 = vpop.f32.mrf.mxu0
      %v3187 = vadd.f32 0.0, %v3186
      %v3188 = vpop.f32.mrf.mxu0
      %3189 = vmatmul.bf16.gmra.mxu0 %v3020
      %v3190 = vpop.f32.mrf.mxu0
      %v3191 = vadd.f32 0.0, %v3190
      %v3192 = vpop.f32.mrf.mxu0
      %v3193 = vadd.f32 0.0, %v3192
      %3194 = vmatmul.bf16.gmra.mxu0 %v3022
      %v3195 = vpop.f32.mrf.mxu0
      %v3196 = vpop.f32.mrf.mxu0
      %v3197 = vadd.f32 0.0, %v3196
      %3198 = vmatmul.bf16.gmra.mxu0 %v3024
      %v3199 = vpop.f32.mrf.mxu0
      %v3200 = vadd.f32 0.0, %v3199
      %v3201 = vpop.f32.mrf.mxu0
      %3202 = vmatmul.bf16.gmra.mxu0 %v3026
      %v3203 = vpop.f32.mrf.mxu0
      %v3204 = vadd.f32 0.0, %v3203
      %v3205 = vpop.f32.mrf.mxu0
      %v3206 = vadd.f32 0.0, %v3205
      %3207 = vmatmul.bf16.gmra.mxu0 %v3028
      %v3208 = vpop.f32.mrf.mxu0
      %v3209 = vpop.f32.mrf.mxu0
      %v3210 = vadd.f32 0.0, %v3209
      %3211 = vmatmul.bf16.gmra.mxu0 %v3030
      %v3212 = vpop.f32.mrf.mxu0
      %v3213 = vadd.f32 0.0, %v3212
      %v3214 = vpop.f32.mrf.mxu0
      %3215 = vdwg.mxu0
      %v3216 = vadd.f32 %v2929, %v3113
      %v3217 = vadd.f32 %v2930, %v3115
      %v3218 = vadd.f32 %v2931, %v3119
      %v3219 = vadd.f32 %v2932, %v3122
      %v3220 = vadd.f32 %v2933, %v3126
      %v3221 = vadd.f32 %v2934, %v3128
      %v3222 = vadd.f32 %v2935, %v3132
      %v3223 = vadd.f32 %v2936, %v3135
      %v3224 = vadd.f32 %v2937, %v3139
      %v3225 = vadd.f32 %v2938, %v3141
      %v3226 = vadd.f32 %v2939, %v3145
      %v3227 = vadd.f32 %v2940, %v3148
      %v3228 = vadd.f32 %v2941, %v3152
      %v3229 = vadd.f32 %v2942, %v3154
      %v3230 = vadd.f32 %v2943, %v3158
      %v3231 = vadd.f32 %v2944, %v3161
      %v3232 = vadd.f32 %v2945, %v3165
      %v3233 = vadd.f32 %v2946, %v3167
      %v3234 = vadd.f32 %v2947, %v3171
      %v3235 = vadd.f32 %v2948, %v3174
      %v3236 = vadd.f32 %v2949, %v3178
      %v3237 = vadd.f32 %v2950, %v3180
      %v3238 = vadd.f32 %v2951, %v3184
      %v3239 = vadd.f32 %v2952, %v3187
      %v3240 = vadd.f32 %v2953, %v3191
      %v3241 = vadd.f32 %v2954, %v3193
      %v3242 = vadd.f32 %v2955, %v3197
      %v3243 = vadd.f32 %v2956, %v3200
      %v3244 = vadd.f32 %v2957, %v3204
      %v3245 = vadd.f32 %v2958, %v3206
      %v3246 = vadd.f32 %v2959, %v3210
      %v3247 = vadd.f32 %v2960, %v3213
      %v3248 = vld [vmem:[#allocation2 + $0x18] sm:$0xf]
      %v3249 = vld [vmem:[#allocation2 + $0x1c] sm:$0xf]
      %v3250 = vld [vmem:[#allocation2 + $0x20] sm:$0xf]
      %v3251 = vld [vmem:[#allocation2 + $0x24] sm:$0xf]
      %v3252 = vld [vmem:[#allocation2 + $0x28] sm:$0xf]
      %v3253 = vld [vmem:[#allocation2 + $0x2c] sm:$0xf]
      %v3254 = vld [vmem:[#allocation2 + $0x30] sm:$0xf]
      %v3255 = vld [vmem:[#allocation2 + $0x34] sm:$0xf]
      %v3256 = vld [vmem:[#allocation2 + $0x38] sm:$0xf]
      %v3257 = vld [vmem:[#allocation2 + $0x3c] sm:$0xf]
      %v3258 = vld [vmem:[#allocation2 + $0x40] sm:$0xf]
      %v3259 = vld [vmem:[#allocation2 + $0x44] sm:$0xf]
      %v3260 = vld [vmem:[#allocation2 + $0x48] sm:$0xf]
      %v3261 = vld [vmem:[#allocation2 + $0x4c] sm:$0xf]
      %v3262 = vld [vmem:[#allocation2 + $0x50] sm:$0xf]
      %v3263 = vld [vmem:[#allocation2 + $0x54] sm:$0xf]
      %v3264 = vld [vmem:[#allocation2 + $0x58] sm:$0xf]
      %v3265 = vld [vmem:[#allocation2 + $0x5c] sm:$0xf]
      %v3266 = vld [vmem:[#allocation2 + $0x60] sm:$0xf]
      %v3267 = vld [vmem:[#allocation2 + $0x64] sm:$0xf]
      %v3268 = vld [vmem:[#allocation2 + $0x68] sm:$0xf]
      %v3269 = vld [vmem:[#allocation2 + $0x6c] sm:$0xf]
      %v3270 = vld [vmem:[#allocation2 + $0x70] sm:$0xf]
      %v3271 = vld [vmem:[#allocation2 + $0x74] sm:$0xf]
      %v3272 = vld [vmem:[#allocation2 + $0x78] sm:$0xf]
      %v3273 = vld [vmem:[#allocation2 + $0x7c] sm:$0xf]
      %v3274 = vld [vmem:[#allocation2 + $0x80] sm:$0xf]
      %v3275 = vld [vmem:[#allocation2 + $0x84] sm:$0xf]
      %v3276 = vld [vmem:[#allocation2 + $0x88] sm:$0xf]
      %v3277 = vld [vmem:[#allocation2 + $0x8c] sm:$0xf]
      %v3278 = vld [vmem:[#allocation2 + $0x90] sm:$0xf]
      %v3279 = vld [vmem:[#allocation2 + $0x94] sm:$0xf]
      %v3280 = vld [vmem:[#allocation2 + $0x98] sm:$0xf]
      %v3281 = vld [vmem:[#allocation2 + $0x9c] sm:$0xf]
      %v3282 = vld [vmem:[#allocation2 + $0xa0] sm:$0xf]
      %v3283 = vld [vmem:[#allocation2 + $0xa4] sm:$0xf]
      %v3284 = vld [vmem:[#allocation2 + $0xa8] sm:$0xf]
      %v3285 = vld [vmem:[#allocation2 + $0xac] sm:$0xf]
      %v3286 = vld [vmem:[#allocation2 + $0xb0] sm:$0xf]
      %v3287 = vld [vmem:[#allocation2 + $0xb4] sm:$0xf]
      %v3288 = vld [vmem:[#allocation2 + $0xb8] sm:$0xf]
      %v3289 = vld [vmem:[#allocation2 + $0xbc] sm:$0xf]
      %v3290 = vld [vmem:[#allocation2 + $0xc0] sm:$0xf]
      %v3291 = vld [vmem:[#allocation2 + $0xc4] sm:$0xf]
      %v3292 = vld [vmem:[#allocation2 + $0xc8] sm:$0xf]
      %v3293 = vld [vmem:[#allocation2 + $0xcc] sm:$0xf]
      %v3294 = vld [vmem:[#allocation2 + $0xd0] sm:$0xf]
      %v3295 = vld [vmem:[#allocation2 + $0xd4] sm:$0xf]
      %s3296 = scalar_lea.vmem %s2, 384
      %v3297 = vld [vmem:[%s3296] sm:$0xf]
      %v3298 = vld [vmem:[%s3296 + $0x4] sm:$0xf]
      %v3299 = vld [vmem:[%s3296 + $0x8] sm:$0xf]
      %v3300 = vld [vmem:[%s3296 + $0xc] sm:$0xf]
      %v3301 = vld [vmem:[%s3296 + $0x10] sm:$0xf]
      %v3302 = vld [vmem:[%s3296 + $0x14] sm:$0xf]
      %v3303 = vld [vmem:[%s3296 + $0x18] sm:$0xf]
      %v3304 = vld [vmem:[%s3296 + $0x1c] sm:$0xf]
      %v3305 = vld [vmem:[%s3296 + $0x20] sm:$0xf]
      %v3306 = vld [vmem:[%s3296 + $0x24] sm:$0xf]
      %v3307 = vld [vmem:[%s3296 + $0x28] sm:$0xf]
      %v3308 = vld [vmem:[%s3296 + $0x2c] sm:$0xf]
      %v3309 = vld [vmem:[%s3296 + $0x30] sm:$0xf]
      %v3310 = vld [vmem:[%s3296 + $0x34] sm:$0xf]
      %v3311 = vld [vmem:[%s3296 + $0x38] sm:$0xf]
      %v3312 = vld [vmem:[%s3296 + $0x3c] sm:$0xf]
      %v3361 = vunpack.c.l.b16 %v3248
      %v3362 = vunpack.c.l.b16 %v3249
      %v3363 = vunpack.c.l.b16 %v3250
      %v3364 = vunpack.c.l.b16 %v3251
      %v3365 = vunpack.c.l.b16 %v3252
      %v3366 = vunpack.c.l.b16 %v3253
      %v3367 = vunpack.c.l.b16 %v3254
      %v3368 = vunpack.c.l.b16 %v3255
      %v3369 = vunpack.c.l.b16 %v3256
      %v3370 = vunpack.c.l.b16 %v3257
      %v3371 = vunpack.c.l.b16 %v3258
      %v3372 = vunpack.c.l.b16 %v3259
      %v3373 = vunpack.c.l.b16 %v3260
      %v3374 = vunpack.c.l.b16 %v3261
      %v3375 = vunpack.c.l.b16 %v3262
      %v3376 = vunpack.c.l.b16 %v3263
      %v3377 = vunpack.c.l.b16 %v3264
      %v3378 = vunpack.c.l.b16 %v3265
      %v3379 = vunpack.c.l.b16 %v3266
      %v3380 = vunpack.c.l.b16 %v3267
      %v3381 = vunpack.c.l.b16 %v3268
      %v3382 = vunpack.c.l.b16 %v3269
      %v3383 = vunpack.c.l.b16 %v3270
      %v3384 = vunpack.c.l.b16 %v3271
      %v3385 = vunpack.c.l.b16 %v3272
      %v3386 = vunpack.c.l.b16 %v3273
      %v3387 = vunpack.c.l.b16 %v3274
      %v3388 = vunpack.c.l.b16 %v3275
      %v3389 = vunpack.c.l.b16 %v3276
      %v3390 = vunpack.c.l.b16 %v3277
      %v3391 = vunpack.c.l.b16 %v3278
      %v3392 = vunpack.c.l.b16 %v3279
      %v3393 = vunpack.c.l.b16 %v3280
      %v3394 = vunpack.c.l.b16 %v3281
      %v3395 = vunpack.c.l.b16 %v3282
      %v3396 = vunpack.c.l.b16 %v3283
      %v3397 = vunpack.c.l.b16 %v3284
      %v3398 = vunpack.c.l.b16 %v3285
      %v3399 = vunpack.c.l.b16 %v3286
      %v3400 = vunpack.c.l.b16 %v3287
      %v3401 = vunpack.c.l.b16 %v3288
      %v3402 = vunpack.c.l.b16 %v3289
      %v3403 = vunpack.c.l.b16 %v3290
      %v3404 = vunpack.c.l.b16 %v3291
      %v3405 = vunpack.c.l.b16 %v3292
      %v3406 = vunpack.c.l.b16 %v3293
      %v3407 = vunpack.c.l.b16 %v3294
      %v3408 = vunpack.c.l.b16 %v3295
      %v3409 = vpack.c.b16 %v3362, %v3361
      %v3410 = vpack.c.b16 %v3364, %v3363
      %v3411 = vpack.c.b16 %v3366, %v3365
      %v3412 = vpack.c.b16 %v3368, %v3367
      %v3413 = vpack.c.b16 %v3370, %v3369
      %v3414 = vpack.c.b16 %v3372, %v3371
      %v3415 = vpack.c.b16 %v3374, %v3373
      %v3416 = vpack.c.b16 %v3376, %v3375
      %v3417 = vpack.c.b16 %v3378, %v3377
      %v3418 = vpack.c.b16 %v3380, %v3379
      %v3419 = vpack.c.b16 %v3382, %v3381
      %v3420 = vpack.c.b16 %v3384, %v3383
      %v3421 = vpack.c.b16 %v3386, %v3385
      %v3422 = vpack.c.b16 %v3388, %v3387
      %v3423 = vpack.c.b16 %v3390, %v3389
      %v3424 = vpack.c.b16 %v3392, %v3391
      %v3425 = vpack.c.b16 %v3394, %v3393
      %v3426 = vpack.c.b16 %v3396, %v3395
      %v3427 = vpack.c.b16 %v3398, %v3397
      %v3428 = vpack.c.b16 %v3400, %v3399
      %v3429 = vpack.c.b16 %v3402, %v3401
      %v3430 = vpack.c.b16 %v3404, %v3403
      %v3431 = vpack.c.b16 %v3406, %v3405
      %v3432 = vpack.c.b16 %v3408, %v3407
      %v3473 = vunpack.c.l.b16 %v3297
      %v3474 = vunpack.c.l.b16 %v3298
      %v3475 = vunpack.c.l.b16 %v3299
      %v3476 = vunpack.c.l.b16 %v3300
      %v3477 = vunpack.c.l.b16 %v3301
      %v3478 = vunpack.c.l.b16 %v3302
      %v3479 = vunpack.c.l.b16 %v3303
      %v3480 = vunpack.c.l.b16 %v3304
      %v3481 = vunpack.c.l.b16 %v3305
      %v3482 = vunpack.c.l.b16 %v3306
      %v3483 = vunpack.c.l.b16 %v3307
      %v3484 = vunpack.c.l.b16 %v3308
      %v3485 = vunpack.c.l.b16 %v3309
      %v3486 = vunpack.c.l.b16 %v3310
      %v3487 = vunpack.c.l.b16 %v3311
      %v3488 = vunpack.c.l.b16 %v3312
      %v3489 = vpack.c.b16 %v3474, %v3473
      %v3490 = vpack.c.b16 %v3476, %v3475
      %v3491 = vpack.c.b16 %v3478, %v3477
      %v3492 = vpack.c.b16 %v3480, %v3479
      %v3493 = vpack.c.b16 %v3482, %v3481
      %v3494 = vpack.c.b16 %v3484, %v3483
      %v3495 = vpack.c.b16 %v3486, %v3485
      %v3496 = vpack.c.b16 %v3488, %v3487
      %3505 = vmatpush.bf16.msra.mxu0 %v3496
      %3506 = vmatpush.bf16.msra.mxu0 %v3495
      %3507 = vmatpush.bf16.msra.mxu0 %v3494
      %3508 = vmatpush.bf16.msra.mxu0 %v3493
      %3509 = vmatpush.bf16.msra.mxu0 %v3492
      %3510 = vmatpush.bf16.msra.mxu0 %v3491
      %3511 = vmatpush.bf16.msra.mxu0 %v3490
      %3512 = vmatpush.bf16.msra.mxu0 %v3489
      %3513 = vmatmul.bf16.gmra.mxu0 %v3409
      %v3514 = vpop.f32.mrf.mxu0
      %v3515 = vadd.f32 0.0, %v3514
      %v3516 = vpop.f32.mrf.mxu0
      %v3517 = vadd.f32 0.0, %v3516
      %3518 = vmatmul.bf16.gmra.mxu0 %v3410
      %v3519 = vpop.f32.mrf.mxu0
      %v3520 = vpop.f32.mrf.mxu0
      %v3521 = vadd.f32 0.0, %v3520
      %3522 = vmatmul.bf16.gmra.mxu0 %v3411
      %v3523 = vpop.f32.mrf.mxu0
      %v3524 = vadd.f32 0.0, %v3523
      %v3525 = vpop.f32.mrf.mxu0
      %3526 = vmatmul.bf16.gmra.mxu0 %v3412
      %v3527 = vpop.f32.mrf.mxu0
      %v3528 = vadd.f32 0.0, %v3527
      %v3529 = vpop.f32.mrf.mxu0
      %v3530 = vadd.f32 0.0, %v3529
      %3531 = vmatmul.bf16.gmra.mxu0 %v3413
      %v3532 = vpop.f32.mrf.mxu0
      %v3533 = vpop.f32.mrf.mxu0
      %v3534 = vadd.f32 0.0, %v3533
      %3535 = vmatmul.bf16.gmra.mxu0 %v3414
      %v3536 = vpop.f32.mrf.mxu0
      %v3537 = vadd.f32 0.0, %v3536
      %v3538 = vpop.f32.mrf.mxu0
      %3539 = vmatmul.bf16.gmra.mxu0 %v3415
      %v3540 = vpop.f32.mrf.mxu0
      %v3541 = vadd.f32 0.0, %v3540
      %v3542 = vpop.f32.mrf.mxu0
      %v3543 = vadd.f32 0.0, %v3542
      %3544 = vmatmul.bf16.gmra.mxu0 %v3416
      %v3545 = vpop.f32.mrf.mxu0
      %v3546 = vpop.f32.mrf.mxu0
      %v3547 = vadd.f32 0.0, %v3546
      %3548 = vmatmul.bf16.gmra.mxu0 %v3417
      %v3549 = vpop.f32.mrf.mxu0
      %v3550 = vadd.f32 0.0, %v3549
      %v3551 = vpop.f32.mrf.mxu0
      %3552 = vmatmul.bf16.gmra.mxu0 %v3418
      %v3553 = vpop.f32.mrf.mxu0
      %v3554 = vadd.f32 0.0, %v3553
      %v3555 = vpop.f32.mrf.mxu0
      %v3556 = vadd.f32 0.0, %v3555
      %3557 = vmatmul.bf16.gmra.mxu0 %v3419
      %v3558 = vpop.f32.mrf.mxu0
      %v3559 = vpop.f32.mrf.mxu0
      %v3560 = vadd.f32 0.0, %v3559
      %3561 = vmatmul.bf16.gmra.mxu0 %v3420
      %v3562 = vpop.f32.mrf.mxu0
      %v3563 = vadd.f32 0.0, %v3562
      %v3564 = vpop.f32.mrf.mxu0
      %3565 = vmatmul.bf16.gmra.mxu0 %v3421
      %v3566 = vpop.f32.mrf.mxu0
      %v3567 = vadd.f32 0.0, %v3566
      %v3568 = vpop.f32.mrf.mxu0
      %v3569 = vadd.f32 0.0, %v3568
      %3570 = vmatmul.bf16.gmra.mxu0 %v3422
      %v3571 = vpop.f32.mrf.mxu0
      %v3572 = vpop.f32.mrf.mxu0
      %v3573 = vadd.f32 0.0, %v3572
      %3574 = vmatmul.bf16.gmra.mxu0 %v3423
      %v3575 = vpop.f32.mrf.mxu0
      %v3576 = vadd.f32 0.0, %v3575
      %v3577 = vpop.f32.mrf.mxu0
      %3578 = vmatmul.bf16.gmra.mxu0 %v3424
      %v3579 = vpop.f32.mrf.mxu0
      %v3580 = vadd.f32 0.0, %v3579
      %v3581 = vpop.f32.mrf.mxu0
      %v3582 = vadd.f32 0.0, %v3581
      %3583 = vmatmul.bf16.gmra.mxu0 %v3425
      %v3584 = vpop.f32.mrf.mxu0
      %v3585 = vpop.f32.mrf.mxu0
      %v3586 = vadd.f32 0.0, %v3585
      %3587 = vmatmul.bf16.gmra.mxu0 %v3426
      %v3588 = vpop.f32.mrf.mxu0
      %v3589 = vadd.f32 0.0, %v3588
      %v3590 = vpop.f32.mrf.mxu0
      %3591 = vmatmul.bf16.gmra.mxu0 %v3427
      %v3592 = vpop.f32.mrf.mxu0
      %v3593 = vadd.f32 0.0, %v3592
      %v3594 = vpop.f32.mrf.mxu0
      %v3595 = vadd.f32 0.0, %v3594
      %3596 = vmatmul.bf16.gmra.mxu0 %v3428
      %v3597 = vpop.f32.mrf.mxu0
      %v3598 = vpop.f32.mrf.mxu0
      %v3599 = vadd.f32 0.0, %v3598
      %3600 = vmatmul.bf16.gmra.mxu0 %v3429
      %v3601 = vpop.f32.mrf.mxu0
      %v3602 = vadd.f32 0.0, %v3601
      %v3603 = vpop.f32.mrf.mxu0
      %3604 = vmatmul.bf16.gmra.mxu0 %v3430
      %v3605 = vpop.f32.mrf.mxu0
      %v3606 = vadd.f32 0.0, %v3605
      %v3607 = vpop.f32.mrf.mxu0
      %v3608 = vadd.f32 0.0, %v3607
      %3609 = vmatmul.bf16.gmra.mxu0 %v3431
      %v3610 = vpop.f32.mrf.mxu0
      %v3611 = vpop.f32.mrf.mxu0
      %v3612 = vadd.f32 0.0, %v3611
      %3613 = vmatmul.bf16.gmra.mxu0 %v3432
      %v3614 = vpop.f32.mrf.mxu0
      %v3615 = vadd.f32 0.0, %v3614
      %v3616 = vpop.f32.mrf.mxu0
      %3617 = vdwg.mxu0
      %v3618 = vadd.f32 %v3216, %v3515
      %v3619 = vadd.f32 %v3217, %v3517
      %v3620 = vadd.f32 %v3218, %v3521
      %v3621 = vadd.f32 %v3219, %v3524
      %v3622 = vadd.f32 %v3220, %v3528
      %v3623 = vadd.f32 %v3221, %v3530
      %v3624 = vadd.f32 %v3222, %v3534
      %v3625 = vadd.f32 %v3223, %v3537
      %v3626 = vadd.f32 %v3224, %v3541
      %v3627 = vadd.f32 %v3225, %v3543
      %v3628 = vadd.f32 %v3226, %v3547
      %v3629 = vadd.f32 %v3227, %v3550
      %v3630 = vadd.f32 %v3228, %v3554
      %v3631 = vadd.f32 %v3229, %v3556
      %v3632 = vadd.f32 %v3230, %v3560
      %v3633 = vadd.f32 %v3231, %v3563
      %v3634 = vadd.f32 %v3232, %v3567
      %v3635 = vadd.f32 %v3233, %v3569
      %v3636 = vadd.f32 %v3234, %v3573
      %v3637 = vadd.f32 %v3235, %v3576
      %v3638 = vadd.f32 %v3236, %v3580
      %v3639 = vadd.f32 %v3237, %v3582
      %v3640 = vadd.f32 %v3238, %v3586
      %v3641 = vadd.f32 %v3239, %v3589
      %v3642 = vadd.f32 %v3240, %v3593
      %v3643 = vadd.f32 %v3241, %v3595
      %v3644 = vadd.f32 %v3242, %v3599
      %v3645 = vadd.f32 %v3243, %v3602
      %v3646 = vadd.f32 %v3244, %v3606
      %v3647 = vadd.f32 %v3245, %v3608
      %v3648 = vadd.f32 %v3246, %v3612
      %v3649 = vadd.f32 %v3247, %v3615
      %v3650 = vld [vmem:[#allocation2 + $0x18] sm:$0xf]
      %v3651 = vld [vmem:[#allocation2 + $0x1c] sm:$0xf]
      %v3652 = vld [vmem:[#allocation2 + $0x20] sm:$0xf]
      %v3653 = vld [vmem:[#allocation2 + $0x24] sm:$0xf]
      %v3654 = vld [vmem:[#allocation2 + $0x28] sm:$0xf]
      %v3655 = vld [vmem:[#allocation2 + $0x2c] sm:$0xf]
      %v3656 = vld [vmem:[#allocation2 + $0x30] sm:$0xf]
      %v3657 = vld [vmem:[#allocation2 + $0x34] sm:$0xf]
      %v3658 = vld [vmem:[#allocation2 + $0x38] sm:$0xf]
      %v3659 = vld [vmem:[#allocation2 + $0x3c] sm:$0xf]
      %v3660 = vld [vmem:[#allocation2 + $0x40] sm:$0xf]
      %v3661 = vld [vmem:[#allocation2 + $0x44] sm:$0xf]
      %v3662 = vld [vmem:[#allocation2 + $0x48] sm:$0xf]
      %v3663 = vld [vmem:[#allocation2 + $0x4c] sm:$0xf]
      %v3664 = vld [vmem:[#allocation2 + $0x50] sm:$0xf]
      %v3665 = vld [vmem:[#allocation2 + $0x54] sm:$0xf]
      %v3666 = vld [vmem:[#allocation2 + $0x58] sm:$0xf]
      %v3667 = vld [vmem:[#allocation2 + $0x5c] sm:$0xf]
      %v3668 = vld [vmem:[#allocation2 + $0x60] sm:$0xf]
      %v3669 = vld [vmem:[#allocation2 + $0x64] sm:$0xf]
      %v3670 = vld [vmem:[#allocation2 + $0x68] sm:$0xf]
      %v3671 = vld [vmem:[#allocation2 + $0x6c] sm:$0xf]
      %v3672 = vld [vmem:[#allocation2 + $0x70] sm:$0xf]
      %v3673 = vld [vmem:[#allocation2 + $0x74] sm:$0xf]
      %v3674 = vld [vmem:[#allocation2 + $0x78] sm:$0xf]
      %v3675 = vld [vmem:[#allocation2 + $0x7c] sm:$0xf]
      %v3676 = vld [vmem:[#allocation2 + $0x80] sm:$0xf]
      %v3677 = vld [vmem:[#allocation2 + $0x84] sm:$0xf]
      %v3678 = vld [vmem:[#allocation2 + $0x88] sm:$0xf]
      %v3679 = vld [vmem:[#allocation2 + $0x8c] sm:$0xf]
      %v3680 = vld [vmem:[#allocation2 + $0x90] sm:$0xf]
      %v3681 = vld [vmem:[#allocation2 + $0x94] sm:$0xf]
      %v3682 = vld [vmem:[#allocation2 + $0x98] sm:$0xf]
      %v3683 = vld [vmem:[#allocation2 + $0x9c] sm:$0xf]
      %v3684 = vld [vmem:[#allocation2 + $0xa0] sm:$0xf]
      %v3685 = vld [vmem:[#allocation2 + $0xa4] sm:$0xf]
      %v3686 = vld [vmem:[#allocation2 + $0xa8] sm:$0xf]
      %v3687 = vld [vmem:[#allocation2 + $0xac] sm:$0xf]
      %v3688 = vld [vmem:[#allocation2 + $0xb0] sm:$0xf]
      %v3689 = vld [vmem:[#allocation2 + $0xb4] sm:$0xf]
      %v3690 = vld [vmem:[#allocation2 + $0xb8] sm:$0xf]
      %v3691 = vld [vmem:[#allocation2 + $0xbc] sm:$0xf]
      %v3692 = vld [vmem:[#allocation2 + $0xc0] sm:$0xf]
      %v3693 = vld [vmem:[#allocation2 + $0xc4] sm:$0xf]
      %v3694 = vld [vmem:[#allocation2 + $0xc8] sm:$0xf]
      %v3695 = vld [vmem:[#allocation2 + $0xcc] sm:$0xf]
      %v3696 = vld [vmem:[#allocation2 + $0xd0] sm:$0xf]
      %v3697 = vld [vmem:[#allocation2 + $0xd4] sm:$0xf]
      %v3698 = vld [vmem:[#allocation2 + $0xd8] sm:$0x1]
      %s3699 = scalar_lea.vmem %s2, 448
      %v3700 = vld [vmem:[%s3699] sm:$0xf]
      %v3701 = vld [vmem:[%s3699 + $0x4] sm:$0xf]
      %v3702 = vld [vmem:[%s3699 + $0x8] sm:$0xf]
      %v3703 = vld [vmem:[%s3699 + $0xc] sm:$0xf]
      %v3704 = vld [vmem:[%s3699 + $0x10] sm:$0xf]
      %v3705 = vld [vmem:[%s3699 + $0x14] sm:$0xf]
      %v3706 = vld [vmem:[%s3699 + $0x18] sm:$0xf]
      %v3707 = vld [vmem:[%s3699 + $0x1c] sm:$0xf]
      %v3708 = vld [vmem:[%s3699 + $0x20] sm:$0xf]
      %v3709 = vld [vmem:[%s3699 + $0x24] sm:$0xf]
      %v3710 = vld [vmem:[%s3699 + $0x28] sm:$0xf]
      %v3711 = vld [vmem:[%s3699 + $0x2c] sm:$0xf]
      %v3712 = vld [vmem:[%s3699 + $0x30] sm:$0xf]
      %v3713 = vld [vmem:[%s3699 + $0x34] sm:$0xf]
      %v3714 = vld [vmem:[%s3699 + $0x38] sm:$0xf]
      %v3715 = vld [vmem:[%s3699 + $0x3c] sm:$0xf]
      %v3765 = vunpack.c.l.b16 %v3650
      %v3766 = vunpack.c.l.b16 %v3651
      %v3767 = vunpack.c.l.b16 %v3652
      %v3768 = vunpack.c.l.b16 %v3653
      %v3769 = vunpack.c.l.b16 %v3654
      %v3770 = vunpack.c.l.b16 %v3655
      %v3771 = vunpack.c.l.b16 %v3656
      %v3772 = vunpack.c.l.b16 %v3657
      %v3773 = vunpack.c.l.b16 %v3658
      %v3774 = vunpack.c.l.b16 %v3659
      %v3775 = vunpack.c.l.b16 %v3660
      %v3776 = vunpack.c.l.b16 %v3661
      %v3777 = vunpack.c.l.b16 %v3662
      %v3778 = vunpack.c.l.b16 %v3663
      %v3779 = vunpack.c.l.b16 %v3664
      %v3780 = vunpack.c.l.b16 %v3665
      %v3781 = vunpack.c.l.b16 %v3666
      %v3782 = vunpack.c.l.b16 %v3667
      %v3783 = vunpack.c.l.b16 %v3668
      %v3784 = vunpack.c.l.b16 %v3669
      %v3785 = vunpack.c.l.b16 %v3670
      %v3786 = vunpack.c.l.b16 %v3671
      %v3787 = vunpack.c.l.b16 %v3672
      %v3788 = vunpack.c.l.b16 %v3673
      %v3789 = vunpack.c.l.b16 %v3674
      %v3790 = vunpack.c.l.b16 %v3675
      %v3791 = vunpack.c.l.b16 %v3676
      %v3792 = vunpack.c.l.b16 %v3677
      %v3793 = vunpack.c.l.b16 %v3678
      %v3794 = vunpack.c.l.b16 %v3679
      %v3795 = vunpack.c.l.b16 %v3680
      %v3796 = vunpack.c.l.b16 %v3681
      %v3797 = vunpack.c.l.b16 %v3682
      %v3798 = vunpack.c.l.b16 %v3683
      %v3799 = vunpack.c.l.b16 %v3684
      %v3800 = vunpack.c.l.b16 %v3685
      %v3801 = vunpack.c.l.b16 %v3686
      %v3802 = vunpack.c.l.b16 %v3687
      %v3803 = vunpack.c.l.b16 %v3688
      %v3804 = vunpack.c.l.b16 %v3689
      %v3805 = vunpack.c.l.b16 %v3690
      %v3806 = vunpack.c.l.b16 %v3691
      %v3807 = vunpack.c.l.b16 %v3692
      %v3808 = vunpack.c.l.b16 %v3693
      %v3809 = vunpack.c.l.b16 %v3694
      %v3810 = vunpack.c.l.b16 %v3695
      %v3811 = vunpack.c.l.b16 %v3696
      %v3812 = vunpack.c.l.b16 %v3697
      %v3813 = vunpack.c.l.b16 %v3698
      %v3814 = vpack.c.b16 %v3766, %v3765
      %v3815 = vpack.c.b16 %v3768, %v3767
      %v3816 = vpack.c.b16 %v3770, %v3769
      %v3817 = vpack.c.b16 %v3772, %v3771
      %v3818 = vpack.c.b16 %v3774, %v3773
      %v3819 = vpack.c.b16 %v3776, %v3775
      %v3820 = vpack.c.b16 %v3778, %v3777
      %v3821 = vpack.c.b16 %v3780, %v3779
      %v3822 = vpack.c.b16 %v3782, %v3781
      %v3823 = vpack.c.b16 %v3784, %v3783
      %v3824 = vpack.c.b16 %v3786, %v3785
      %v3825 = vpack.c.b16 %v3788, %v3787
      %v3826 = vpack.c.b16 %v3790, %v3789
      %v3827 = vpack.c.b16 %v3792, %v3791
      %v3828 = vpack.c.b16 %v3794, %v3793
      %v3829 = vpack.c.b16 %v3796, %v3795
      %v3830 = vpack.c.b16 %v3798, %v3797
      %v3831 = vpack.c.b16 %v3800, %v3799
      %v3832 = vpack.c.b16 %v3802, %v3801
      %v3833 = vpack.c.b16 %v3804, %v3803
      %v3834 = vpack.c.b16 %v3806, %v3805
      %v3835 = vpack.c.b16 %v3808, %v3807
      %v3836 = vpack.c.b16 %v3810, %v3809
      %v3837 = vpack.c.b16 %v3812, %v3811
      %v3838 = vpack.c.b16 %v3813, %v3813
      %v3840 = vshrl.u32 %v3814, 16
      %v3842 = vshll.u32 %v3814, 16
      %v3844 = vrot.slane %v3842, 1
      %v3845 = vor.u32 %v3840, %v3844
      %v3847 = vshll.u32 %v3815, 16
      %v3849 = vrot.slane %v3847, 1
      %v3850 = vsel %vm1102, %v3845, %v3849
      %v3851 = vshrl.u32 %v3815, 16
      %v3853 = vor.u32 %v3851, %v3849
      %v3855 = vshll.u32 %v3816, 16
      %v3857 = vrot.slane %v3855, 1
      %v3858 = vsel %vm1102, %v3853, %v3857
      %v3859 = vshrl.u32 %v3816, 16
      %v3861 = vor.u32 %v3859, %v3857
      %v3863 = vshll.u32 %v3817, 16
      %v3865 = vrot.slane %v3863, 1
      %v3866 = vsel %vm1102, %v3861, %v3865
      %v3867 = vshrl.u32 %v3817, 16
      %v3869 = vor.u32 %v3867, %v3865
      %v3871 = vshll.u32 %v3818, 16
      %v3873 = vrot.slane %v3871, 1
      %v3874 = vsel %vm1102, %v3869, %v3873
      %v3875 = vshrl.u32 %v3818, 16
      %v3877 = vor.u32 %v3875, %v3873
      %v3879 = vshll.u32 %v3819, 16
      %v3881 = vrot.slane %v3879, 1
      %v3882 = vsel %vm1102, %v3877, %v3881
      %v3883 = vshrl.u32 %v3819, 16
      %v3885 = vor.u32 %v3883, %v3881
      %v3887 = vshll.u32 %v3820, 16
      %v3889 = vrot.slane %v3887, 1
      %v3890 = vsel %vm1102, %v3885, %v3889
      %v3891 = vshrl.u32 %v3820, 16
      %v3893 = vor.u32 %v3891, %v3889
      %v3895 = vshll.u32 %v3821, 16
      %v3897 = vrot.slane %v3895, 1
      %v3898 = vsel %vm1102, %v3893, %v3897
      %v3899 = vshrl.u32 %v3821, 16
      %v3901 = vor.u32 %v3899, %v3897
      %v3903 = vshll.u32 %v3822, 16
      %v3905 = vrot.slane %v3903, 1
      %v3906 = vsel %vm1102, %v3901, %v3905
      %v3907 = vshrl.u32 %v3822, 16
      %v3909 = vor.u32 %v3907, %v3905
      %v3911 = vshll.u32 %v3823, 16
      %v3913 = vrot.slane %v3911, 1
      %v3914 = vsel %vm1102, %v3909, %v3913
      %v3915 = vshrl.u32 %v3823, 16
      %v3917 = vor.u32 %v3915, %v3913
      %v3919 = vshll.u32 %v3824, 16
      %v3921 = vrot.slane %v3919, 1
      %v3922 = vsel %vm1102, %v3917, %v3921
      %v3923 = vshrl.u32 %v3824, 16
      %v3925 = vor.u32 %v3923, %v3921
      %v3927 = vshll.u32 %v3825, 16
      %v3929 = vrot.slane %v3927, 1
      %v3930 = vsel %vm1102, %v3925, %v3929
      %v3931 = vshrl.u32 %v3825, 16
      %v3933 = vor.u32 %v3931, %v3929
      %v3935 = vshll.u32 %v3826, 16
      %v3937 = vrot.slane %v3935, 1
      %v3938 = vsel %vm1102, %v3933, %v3937
      %v3939 = vshrl.u32 %v3826, 16
      %v3941 = vor.u32 %v3939, %v3937
      %v3943 = vshll.u32 %v3827, 16
      %v3945 = vrot.slane %v3943, 1
      %v3946 = vsel %vm1102, %v3941, %v3945
      %v3947 = vshrl.u32 %v3827, 16
      %v3949 = vor.u32 %v3947, %v3945
      %v3951 = vshll.u32 %v3828, 16
      %v3953 = vrot.slane %v3951, 1
      %v3954 = vsel %vm1102, %v3949, %v3953
      %v3955 = vshrl.u32 %v3828, 16
      %v3957 = vor.u32 %v3955, %v3953
      %v3959 = vshll.u32 %v3829, 16
      %v3961 = vrot.slane %v3959, 1
      %v3962 = vsel %vm1102, %v3957, %v3961
      %v3963 = vshrl.u32 %v3829, 16
      %v3965 = vor.u32 %v3963, %v3961
      %v3967 = vshll.u32 %v3830, 16
      %v3969 = vrot.slane %v3967, 1
      %v3970 = vsel %vm1102, %v3965, %v3969
      %v3971 = vshrl.u32 %v3830, 16
      %v3973 = vor.u32 %v3971, %v3969
      %v3975 = vshll.u32 %v3831, 16
      %v3977 = vrot.slane %v3975, 1
      %v3978 = vsel %vm1102, %v3973, %v3977
      %v3979 = vshrl.u32 %v3831, 16
      %v3981 = vor.u32 %v3979, %v3977
      %v3983 = vshll.u32 %v3832, 16
      %v3985 = vrot.slane %v3983, 1
      %v3986 = vsel %vm1102, %v3981, %v3985
      %v3987 = vshrl.u32 %v3832, 16
      %v3989 = vor.u32 %v3987, %v3985
      %v3991 = vshll.u32 %v3833, 16
      %v3993 = vrot.slane %v3991, 1
      %v3994 = vsel %vm1102, %v3989, %v3993
      %v3995 = vshrl.u32 %v3833, 16
      %v3997 = vor.u32 %v3995, %v3993
      %v3999 = vshll.u32 %v3834, 16
      %v4001 = vrot.slane %v3999, 1
      %v4002 = vsel %vm1102, %v3997, %v4001
      %v4003 = vshrl.u32 %v3834, 16
      %v4005 = vor.u32 %v4003, %v4001
      %v4007 = vshll.u32 %v3835, 16
      %v4009 = vrot.slane %v4007, 1
      %v4010 = vsel %vm1102, %v4005, %v4009
      %v4011 = vshrl.u32 %v3835, 16
      %v4013 = vor.u32 %v4011, %v4009
      %v4015 = vshll.u32 %v3836, 16
      %v4017 = vrot.slane %v4015, 1
      %v4018 = vsel %vm1102, %v4013, %v4017
      %v4019 = vshrl.u32 %v3836, 16
      %v4021 = vor.u32 %v4019, %v4017
      %v4023 = vshll.u32 %v3837, 16
      %v4025 = vrot.slane %v4023, 1
      %v4026 = vsel %vm1102, %v4021, %v4025
      %v4027 = vshrl.u32 %v3837, 16
      %v4029 = vor.u32 %v4027, %v4025
      %v4031 = vshll.u32 %v3838, 16
      %v4033 = vrot.slane %v4031, 1
      %v4034 = vsel %vm1102, %v4029, %v4033
      %v4075 = vunpack.c.l.b16 %v3700
      %v4076 = vunpack.c.l.b16 %v3701
      %v4077 = vunpack.c.l.b16 %v3702
      %v4078 = vunpack.c.l.b16 %v3703
      %v4079 = vunpack.c.l.b16 %v3704
      %v4080 = vunpack.c.l.b16 %v3705
      %v4081 = vunpack.c.l.b16 %v3706
      %v4082 = vunpack.c.l.b16 %v3707
      %v4083 = vunpack.c.l.b16 %v3708
      %v4084 = vunpack.c.l.b16 %v3709
      %v4085 = vunpack.c.l.b16 %v3710
      %v4086 = vunpack.c.l.b16 %v3711
      %v4087 = vunpack.c.l.b16 %v3712
      %v4088 = vunpack.c.l.b16 %v3713
      %v4089 = vunpack.c.l.b16 %v3714
      %v4090 = vunpack.c.l.b16 %v3715
      %v4091 = vpack.c.b16 %v4076, %v4075
      %v4092 = vpack.c.b16 %v4078, %v4077
      %v4093 = vpack.c.b16 %v4080, %v4079
      %v4094 = vpack.c.b16 %v4082, %v4081
      %v4095 = vpack.c.b16 %v4084, %v4083
      %v4096 = vpack.c.b16 %v4086, %v4085
      %v4097 = vpack.c.b16 %v4088, %v4087
      %v4098 = vpack.c.b16 %v4090, %v4089
      %4107 = vmatpush.bf16.msra.mxu0 %v4098
      %4108 = vmatpush.bf16.msra.mxu0 %v4097
      %4109 = vmatpush.bf16.msra.mxu0 %v4096
      %4110 = vmatpush.bf16.msra.mxu0 %v4095
      %4111 = vmatpush.bf16.msra.mxu0 %v4094
      %4112 = vmatpush.bf16.msra.mxu0 %v4093
      %4113 = vmatpush.bf16.msra.mxu0 %v4092
      %4114 = vmatpush.bf16.msra.mxu0 %v4091
      %4115 = vmatmul.bf16.gmra.mxu0 %v3850
      %v4116 = vpop.f32.mrf.mxu0
      %v4117 = vadd.f32 0.0, %v4116
      %v4118 = vpop.f32.mrf.mxu0
      %v4119 = vadd.f32 0.0, %v4118
      %4120 = vmatmul.bf16.gmra.mxu0 %v3858
      %v4121 = vpop.f32.mrf.mxu0
      %v4122 = vpop.f32.mrf.mxu0
      %v4123 = vadd.f32 0.0, %v4122
      %4124 = vmatmul.bf16.gmra.mxu0 %v3866
      %v4125 = vpop.f32.mrf.mxu0
      %v4126 = vadd.f32 0.0, %v4125
      %v4127 = vpop.f32.mrf.mxu0
      %4128 = vmatmul.bf16.gmra.mxu0 %v3874
      %v4129 = vpop.f32.mrf.mxu0
      %v4130 = vadd.f32 0.0, %v4129
      %v4131 = vpop.f32.mrf.mxu0
      %v4132 = vadd.f32 0.0, %v4131
      %4133 = vmatmul.bf16.gmra.mxu0 %v3882
      %v4134 = vpop.f32.mrf.mxu0
      %v4135 = vpop.f32.mrf.mxu0
      %v4136 = vadd.f32 0.0, %v4135
      %4137 = vmatmul.bf16.gmra.mxu0 %v3890
      %v4138 = vpop.f32.mrf.mxu0
      %v4139 = vadd.f32 0.0, %v4138
      %v4140 = vpop.f32.mrf.mxu0
      %4141 = vmatmul.bf16.gmra.mxu0 %v3898
      %v4142 = vpop.f32.mrf.mxu0
      %v4143 = vadd.f32 0.0, %v4142
      %v4144 = vpop.f32.mrf.mxu0
      %v4145 = vadd.f32 0.0, %v4144
      %4146 = vmatmul.bf16.gmra.mxu0 %v3906
      %v4147 = vpop.f32.mrf.mxu0
      %v4148 = vpop.f32.mrf.mxu0
      %v4149 = vadd.f32 0.0, %v4148
      %4150 = vmatmul.bf16.gmra.mxu0 %v3914
      %v4151 = vpop.f32.mrf.mxu0
      %v4152 = vadd.f32 0.0, %v4151
      %v4153 = vpop.f32.mrf.mxu0
      %4154 = vmatmul.bf16.gmra.mxu0 %v3922
      %v4155 = vpop.f32.mrf.mxu0
      %v4156 = vadd.f32 0.0, %v4155
      %v4157 = vpop.f32.mrf.mxu0
      %v4158 = vadd.f32 0.0, %v4157
      %4159 = vmatmul.bf16.gmra.mxu0 %v3930
      %v4160 = vpop.f32.mrf.mxu0
      %v4161 = vpop.f32.mrf.mxu0
      %v4162 = vadd.f32 0.0, %v4161
      %4163 = vmatmul.bf16.gmra.mxu0 %v3938
      %v4164 = vpop.f32.mrf.mxu0
      %v4165 = vadd.f32 0.0, %v4164
      %v4166 = vpop.f32.mrf.mxu0
      %4167 = vmatmul.bf16.gmra.mxu0 %v3946
      %v4168 = vpop.f32.mrf.mxu0
      %v4169 = vadd.f32 0.0, %v4168
      %v4170 = vpop.f32.mrf.mxu0
      %v4171 = vadd.f32 0.0, %v4170
      %4172 = vmatmul.bf16.gmra.mxu0 %v3954
      %v4173 = vpop.f32.mrf.mxu0
      %v4174 = vpop.f32.mrf.mxu0
      %v4175 = vadd.f32 0.0, %v4174
      %4176 = vmatmul.bf16.gmra.mxu0 %v3962
      %v4177 = vpop.f32.mrf.mxu0
      %v4178 = vadd.f32 0.0, %v4177
      %v4179 = vpop.f32.mrf.mxu0
      %4180 = vmatmul.bf16.gmra.mxu0 %v3970
      %v4181 = vpop.f32.mrf.mxu0
      %v4182 = vadd.f32 0.0, %v4181
      %v4183 = vpop.f32.mrf.mxu0
      %v4184 = vadd.f32 0.0, %v4183
      %4185 = vmatmul.bf16.gmra.mxu0 %v3978
      %v4186 = vpop.f32.mrf.mxu0
      %v4187 = vpop.f32.mrf.mxu0
      %v4188 = vadd.f32 0.0, %v4187
      %4189 = vmatmul.bf16.gmra.mxu0 %v3986
      %v4190 = vpop.f32.mrf.mxu0
      %v4191 = vadd.f32 0.0, %v4190
      %v4192 = vpop.f32.mrf.mxu0
      %4193 = vmatmul.bf16.gmra.mxu0 %v3994
      %v4194 = vpop.f32.mrf.mxu0
      %v4195 = vadd.f32 0.0, %v4194
      %v4196 = vpop.f32.mrf.mxu0
      %v4197 = vadd.f32 0.0, %v4196
      %4198 = vmatmul.bf16.gmra.mxu0 %v4002
      %v4199 = vpop.f32.mrf.mxu0
      %v4200 = vpop.f32.mrf.mxu0
      %v4201 = vadd.f32 0.0, %v4200
      %4202 = vmatmul.bf16.gmra.mxu0 %v4010
      %v4203 = vpop.f32.mrf.mxu0
      %v4204 = vadd.f32 0.0, %v4203
      %v4205 = vpop.f32.mrf.mxu0
      %4206 = vmatmul.bf16.gmra.mxu0 %v4018
      %v4207 = vpop.f32.mrf.mxu0
      %v4208 = vadd.f32 0.0, %v4207
      %v4209 = vpop.f32.mrf.mxu0
      %v4210 = vadd.f32 0.0, %v4209
      %4211 = vmatmul.bf16.gmra.mxu0 %v4026
      %v4212 = vpop.f32.mrf.mxu0
      %v4213 = vpop.f32.mrf.mxu0
      %v4214 = vadd.f32 0.0, %v4213
      %4215 = vmatmul.bf16.gmra.mxu0 %v4034
      %v4216 = vpop.f32.mrf.mxu0
      %v4217 = vadd.f32 0.0, %v4216
      %v4218 = vpop.f32.mrf.mxu0
      %4219 = vdwg.mxu0
      %v4220 = vadd.f32 %v3618, %v4117
      %v4221 = vadd.f32 %v3619, %v4119
      %v4222 = vadd.f32 %v3620, %v4123
      %v4223 = vadd.f32 %v3621, %v4126
      %v4224 = vadd.f32 %v3622, %v4130
      %v4225 = vadd.f32 %v3623, %v4132
      %v4226 = vadd.f32 %v3624, %v4136
      %v4227 = vadd.f32 %v3625, %v4139
      %v4228 = vadd.f32 %v3626, %v4143
      %v4229 = vadd.f32 %v3627, %v4145
      %v4230 = vadd.f32 %v3628, %v4149
      %v4231 = vadd.f32 %v3629, %v4152
      %v4232 = vadd.f32 %v3630, %v4156
      %v4233 = vadd.f32 %v3631, %v4158
      %v4234 = vadd.f32 %v3632, %v4162
      %v4235 = vadd.f32 %v3633, %v4165
      %v4236 = vadd.f32 %v3634, %v4169
      %v4237 = vadd.f32 %v3635, %v4171
      %v4238 = vadd.f32 %v3636, %v4175
      %v4239 = vadd.f32 %v3637, %v4178
      %v4240 = vadd.f32 %v3638, %v4182
      %v4241 = vadd.f32 %v3639, %v4184
      %v4242 = vadd.f32 %v3640, %v4188
      %v4243 = vadd.f32 %v3641, %v4191
      %v4244 = vadd.f32 %v3642, %v4195
      %v4245 = vadd.f32 %v3643, %v4197
      %v4246 = vadd.f32 %v3644, %v4201
      %v4247 = vadd.f32 %v3645, %v4204
      %v4248 = vadd.f32 %v3646, %v4208
      %v4249 = vadd.f32 %v3647, %v4210
      %v4250 = vadd.f32 %v3648, %v4214
      %v4251 = vadd.f32 %v3649, %v4217
      %v4252 = vld [vmem:[#allocation2 + $0x18] sm:$0xe]
      %s4253 = scalar_lea.vmem %s2, 512
      %v4254 = vld [vmem:[%s4253] sm:$0xf]
      %v4255 = vld [vmem:[%s4253 + $0x4] sm:$0xf]
      %v4256 = vld [vmem:[%s4253 + $0x8] sm:$0xf]
      %v4257 = vld [vmem:[%s4253 + $0xc] sm:$0xf]
      %v4258 = vld [vmem:[%s4253 + $0x10] sm:$0xf]
      %v4259 = vld [vmem:[%s4253 + $0x14] sm:$0xf]
      %v4260 = vld [vmem:[%s4253 + $0x18] sm:$0xf]
      %v4261 = vld [vmem:[%s4253 + $0x1c] sm:$0xf]
      %v4262 = vld [vmem:[%s4253 + $0x20] sm:$0xf]
      %v4263 = vld [vmem:[%s4253 + $0x24] sm:$0xf]
      %v4264 = vld [vmem:[%s4253 + $0x28] sm:$0xf]
      %v4265 = vld [vmem:[%s4253 + $0x2c] sm:$0xf]
      %v4266 = vld [vmem:[%s4253 + $0x30] sm:$0xf]
      %v4267 = vld [vmem:[%s4253 + $0x34] sm:$0xf]
      %v4268 = vld [vmem:[%s4253 + $0x38] sm:$0xf]
      %v4269 = vld [vmem:[%s4253 + $0x3c] sm:$0xf]
      %v4271 = vunpack.c.l.b16 %v4252
      %v4272 = vpack.c.b16 %v3766, %v4271
      %v4273 = vrot.slane %v4272, 1
      %v4274 = vrot.slane %v3815, 1
      %v4275 = vsel %vm1690, %v4273, %v4274
      %v4276 = vrot.slane %v3816, 1
      %v4277 = vsel %vm1690, %v4274, %v4276
      %v4278 = vrot.slane %v3817, 1
      %v4279 = vsel %vm1690, %v4276, %v4278
      %v4280 = vrot.slane %v3818, 1
      %v4281 = vsel %vm1690, %v4278, %v4280
      %v4282 = vrot.slane %v3819, 1
      %v4283 = vsel %vm1690, %v4280, %v4282
      %v4284 = vrot.slane %v3820, 1
      %v4285 = vsel %vm1690, %v4282, %v4284
      %v4286 = vrot.slane %v3821, 1
      %v4287 = vsel %vm1690, %v4284, %v4286
      %v4288 = vrot.slane %v3822, 1
      %v4289 = vsel %vm1690, %v4286, %v4288
      %v4290 = vrot.slane %v3823, 1
      %v4291 = vsel %vm1690, %v4288, %v4290
      %v4292 = vrot.slane %v3824, 1
      %v4293 = vsel %vm1690, %v4290, %v4292
      %v4294 = vrot.slane %v3825, 1
      %v4295 = vsel %vm1690, %v4292, %v4294
      %v4296 = vrot.slane %v3826, 1
      %v4297 = vsel %vm1690, %v4294, %v4296
      %v4298 = vrot.slane %v3827, 1
      %v4299 = vsel %vm1690, %v4296, %v4298
      %v4300 = vrot.slane %v3828, 1
      %v4301 = vsel %vm1690, %v4298, %v4300
      %v4302 = vrot.slane %v3829, 1
      %v4303 = vsel %vm1690, %v4300, %v4302
      %v4304 = vrot.slane %v3830, 1
      %v4305 = vsel %vm1690, %v4302, %v4304
      %v4306 = vrot.slane %v3831, 1
      %v4307 = vsel %vm1690, %v4304, %v4306
      %v4308 = vrot.slane %v3832, 1
      %v4309 = vsel %vm1690, %v4306, %v4308
      %v4310 = vrot.slane %v3833, 1
      %v4311 = vsel %vm1690, %v4308, %v4310
      %v4312 = vrot.slane %v3834, 1
      %v4313 = vsel %vm1690, %v4310, %v4312
      %v4314 = vrot.slane %v3835, 1
      %v4315 = vsel %vm1690, %v4312, %v4314
      %v4316 = vrot.slane %v3836, 1
      %v4317 = vsel %vm1690, %v4314, %v4316
      %v4318 = vrot.slane %v3837, 1
      %v4319 = vsel %vm1690, %v4316, %v4318
      %v4320 = vrot.slane %v3838, 1
      %v4321 = vsel %vm1690, %v4318, %v4320
      %v4362 = vunpack.c.l.b16 %v4254
      %v4363 = vunpack.c.l.b16 %v4255
      %v4364 = vunpack.c.l.b16 %v4256
      %v4365 = vunpack.c.l.b16 %v4257
      %v4366 = vunpack.c.l.b16 %v4258
      %v4367 = vunpack.c.l.b16 %v4259
      %v4368 = vunpack.c.l.b16 %v4260
      %v4369 = vunpack.c.l.b16 %v4261
      %v4370 = vunpack.c.l.b16 %v4262
      %v4371 = vunpack.c.l.b16 %v4263
      %v4372 = vunpack.c.l.b16 %v4264
      %v4373 = vunpack.c.l.b16 %v4265
      %v4374 = vunpack.c.l.b16 %v4266
      %v4375 = vunpack.c.l.b16 %v4267
      %v4376 = vunpack.c.l.b16 %v4268
      %v4377 = vunpack.c.l.b16 %v4269
      %v4378 = vpack.c.b16 %v4363, %v4362
      %v4379 = vpack.c.b16 %v4365, %v4364
      %v4380 = vpack.c.b16 %v4367, %v4366
      %v4381 = vpack.c.b16 %v4369, %v4368
      %v4382 = vpack.c.b16 %v4371, %v4370
      %v4383 = vpack.c.b16 %v4373, %v4372
      %v4384 = vpack.c.b16 %v4375, %v4374
      %v4385 = vpack.c.b16 %v4377, %v4376
      %4394 = vmatpush.bf16.msra.mxu0 %v4385
      %4395 = vmatpush.bf16.msra.mxu0 %v4384
      %4396 = vmatpush.bf16.msra.mxu0 %v4383
      %4397 = vmatpush.bf16.msra.mxu0 %v4382
      %4398 = vmatpush.bf16.msra.mxu0 %v4381
      %4399 = vmatpush.bf16.msra.mxu0 %v4380
      %4400 = vmatpush.bf16.msra.mxu0 %v4379
      %4401 = vmatpush.bf16.msra.mxu0 %v4378
      %4402 = vmatmul.bf16.gmra.mxu0 %v4275
      %v4403 = vpop.f32.mrf.mxu0
      %v4404 = vadd.f32 0.0, %v4403
      %v4405 = vpop.f32.mrf.mxu0
      %v4406 = vadd.f32 0.0, %v4405
      %4407 = vmatmul.bf16.gmra.mxu0 %v4277
      %v4408 = vpop.f32.mrf.mxu0
      %v4409 = vpop.f32.mrf.mxu0
      %v4410 = vadd.f32 0.0, %v4409
      %4411 = vmatmul.bf16.gmra.mxu0 %v4279
      %v4412 = vpop.f32.mrf.mxu0
      %v4413 = vadd.f32 0.0, %v4412
      %v4414 = vpop.f32.mrf.mxu0
      %4415 = vmatmul.bf16.gmra.mxu0 %v4281
      %v4416 = vpop.f32.mrf.mxu0
      %v4417 = vadd.f32 0.0, %v4416
      %v4418 = vpop.f32.mrf.mxu0
      %v4419 = vadd.f32 0.0, %v4418
      %4420 = vmatmul.bf16.gmra.mxu0 %v4283
      %v4421 = vpop.f32.mrf.mxu0
      %v4422 = vpop.f32.mrf.mxu0
      %v4423 = vadd.f32 0.0, %v4422
      %4424 = vmatmul.bf16.gmra.mxu0 %v4285
      %v4425 = vpop.f32.mrf.mxu0
      %v4426 = vadd.f32 0.0, %v4425
      %v4427 = vpop.f32.mrf.mxu0
      %4428 = vmatmul.bf16.gmra.mxu0 %v4287
      %v4429 = vpop.f32.mrf.mxu0
      %v4430 = vadd.f32 0.0, %v4429
      %v4431 = vpop.f32.mrf.mxu0
      %v4432 = vadd.f32 0.0, %v4431
      %4433 = vmatmul.bf16.gmra.mxu0 %v4289
      %v4434 = vpop.f32.mrf.mxu0
      %v4435 = vpop.f32.mrf.mxu0
      %v4436 = vadd.f32 0.0, %v4435
      %4437 = vmatmul.bf16.gmra.mxu0 %v4291
      %v4438 = vpop.f32.mrf.mxu0
      %v4439 = vadd.f32 0.0, %v4438
      %v4440 = vpop.f32.mrf.mxu0
      %4441 = vmatmul.bf16.gmra.mxu0 %v4293
      %v4442 = vpop.f32.mrf.mxu0
      %v4443 = vadd.f32 0.0, %v4442
      %v4444 = vpop.f32.mrf.mxu0
      %v4445 = vadd.f32 0.0, %v4444
      %4446 = vmatmul.bf16.gmra.mxu0 %v4295
      %v4447 = vpop.f32.mrf.mxu0
      %v4448 = vpop.f32.mrf.mxu0
      %v4449 = vadd.f32 0.0, %v4448
      %4450 = vmatmul.bf16.gmra.mxu0 %v4297
      %v4451 = vpop.f32.mrf.mxu0
      %v4452 = vadd.f32 0.0, %v4451
      %v4453 = vpop.f32.mrf.mxu0
      %4454 = vmatmul.bf16.gmra.mxu0 %v4299
      %v4455 = vpop.f32.mrf.mxu0
      %v4456 = vadd.f32 0.0, %v4455
      %v4457 = vpop.f32.mrf.mxu0
      %v4458 = vadd.f32 0.0, %v4457
      %4459 = vmatmul.bf16.gmra.mxu0 %v4301
      %v4460 = vpop.f32.mrf.mxu0
      %v4461 = vpop.f32.mrf.mxu0
      %v4462 = vadd.f32 0.0, %v4461
      %4463 = vmatmul.bf16.gmra.mxu0 %v4303
      %v4464 = vpop.f32.mrf.mxu0
      %v4465 = vadd.f32 0.0, %v4464
      %v4466 = vpop.f32.mrf.mxu0
      %4467 = vmatmul.bf16.gmra.mxu0 %v4305
      %v4468 = vpop.f32.mrf.mxu0
      %v4469 = vadd.f32 0.0, %v4468
      %v4470 = vpop.f32.mrf.mxu0
      %v4471 = vadd.f32 0.0, %v4470
      %4472 = vmatmul.bf16.gmra.mxu0 %v4307
      %v4473 = vpop.f32.mrf.mxu0
      %v4474 = vpop.f32.mrf.mxu0
      %v4475 = vadd.f32 0.0, %v4474
      %4476 = vmatmul.bf16.gmra.mxu0 %v4309
      %v4477 = vpop.f32.mrf.mxu0
      %v4478 = vadd.f32 0.0, %v4477
      %v4479 = vpop.f32.mrf.mxu0
      %4480 = vmatmul.bf16.gmra.mxu0 %v4311
      %v4481 = vpop.f32.mrf.mxu0
      %v4482 = vadd.f32 0.0, %v4481
      %v4483 = vpop.f32.mrf.mxu0
      %v4484 = vadd.f32 0.0, %v4483
      %4485 = vmatmul.bf16.gmra.mxu0 %v4313
      %v4486 = vpop.f32.mrf.mxu0
      %v4487 = vpop.f32.mrf.mxu0
      %v4488 = vadd.f32 0.0, %v4487
      %4489 = vmatmul.bf16.gmra.mxu0 %v4315
      %v4490 = vpop.f32.mrf.mxu0
      %v4491 = vadd.f32 0.0, %v4490
      %v4492 = vpop.f32.mrf.mxu0
      %4493 = vmatmul.bf16.gmra.mxu0 %v4317
      %v4494 = vpop.f32.mrf.mxu0
      %v4495 = vadd.f32 0.0, %v4494
      %v4496 = vpop.f32.mrf.mxu0
      %v4497 = vadd.f32 0.0, %v4496
      %4498 = vmatmul.bf16.gmra.mxu0 %v4319
      %v4499 = vpop.f32.mrf.mxu0
      %v4500 = vpop.f32.mrf.mxu0
      %v4501 = vadd.f32 0.0, %v4500
      %4502 = vmatmul.bf16.gmra.mxu0 %v4321
      %v4503 = vpop.f32.mrf.mxu0
      %v4504 = vadd.f32 0.0, %v4503
      %v4505 = vpop.f32.mrf.mxu0
      %4506 = vdwg.mxu0
      %v4507 = vadd.f32 %v4220, %v4404
      %v4508 = vadd.f32 %v4221, %v4406
      %v4509 = vadd.f32 %v4222, %v4410
      %v4510 = vadd.f32 %v4223, %v4413
      %v4511 = vadd.f32 %v4224, %v4417
      %v4512 = vadd.f32 %v4225, %v4419
      %v4513 = vadd.f32 %v4226, %v4423
      %v4514 = vadd.f32 %v4227, %v4426
      %v4515 = vadd.f32 %v4228, %v4430
      %v4516 = vadd.f32 %v4229, %v4432
      %v4517 = vadd.f32 %v4230, %v4436
      %v4518 = vadd.f32 %v4231, %v4439
      %v4519 = vadd.f32 %v4232, %v4443
      %v4520 = vadd.f32 %v4233, %v4445
      %v4521 = vadd.f32 %v4234, %v4449
      %v4522 = vadd.f32 %v4235, %v4452
      %v4523 = vadd.f32 %v4236, %v4456
      %v4524 = vadd.f32 %v4237, %v4458
      %v4525 = vadd.f32 %v4238, %v4462
      %v4526 = vadd.f32 %v4239, %v4465
      %v4527 = vadd.f32 %v4240, %v4469
      %v4528 = vadd.f32 %v4241, %v4471
      %v4529 = vadd.f32 %v4242, %v4475
      %v4530 = vadd.f32 %v4243, %v4478
      %v4531 = vadd.f32 %v4244, %v4482
      %v4532 = vadd.f32 %v4245, %v4484
      %v4533 = vadd.f32 %v4246, %v4488
      %v4534 = vadd.f32 %v4247, %v4491
      %v4535 = vadd.f32 %v4248, %v4495
      %v4536 = vadd.f32 %v4249, %v4497
      %v4537 = vadd.f32 %v4250, %v4501
      %v4538 = vadd.f32 %v4251, %v4504
      %v4539 = vpack.c.bf16 %v4507, %v4507
      %v4540 = vpack.c.bf16 %v4508, %v4508
      %v4541 = vpack.c.bf16 %v4509, %v4509
      %v4542 = vpack.c.bf16 %v4510, %v4510
      %v4543 = vpack.c.bf16 %v4511, %v4511
      %v4544 = vpack.c.bf16 %v4512, %v4512
      %v4545 = vpack.c.bf16 %v4513, %v4513
      %v4546 = vpack.c.bf16 %v4514, %v4514
      %v4547 = vpack.c.bf16 %v4515, %v4515
      %v4548 = vpack.c.bf16 %v4516, %v4516
      %v4549 = vpack.c.bf16 %v4517, %v4517
      %v4550 = vpack.c.bf16 %v4518, %v4518
      %v4551 = vpack.c.bf16 %v4519, %v4519
      %v4552 = vpack.c.bf16 %v4520, %v4520
      %v4553 = vpack.c.bf16 %v4521, %v4521
      %v4554 = vpack.c.bf16 %v4522, %v4522
      %v4555 = vpack.c.bf16 %v4523, %v4523
      %v4556 = vpack.c.bf16 %v4524, %v4524
      %v4557 = vpack.c.bf16 %v4525, %v4525
      %v4558 = vpack.c.bf16 %v4526, %v4526
      %v4559 = vpack.c.bf16 %v4527, %v4527
      %v4560 = vpack.c.bf16 %v4528, %v4528
      %v4561 = vpack.c.bf16 %v4529, %v4529
      %v4562 = vpack.c.bf16 %v4530, %v4530
      %v4563 = vpack.c.bf16 %v4531, %v4531
      %v4564 = vpack.c.bf16 %v4532, %v4532
      %v4565 = vpack.c.bf16 %v4533, %v4533
      %v4566 = vpack.c.bf16 %v4534, %v4534
      %v4567 = vpack.c.bf16 %v4535, %v4535
      %v4568 = vpack.c.bf16 %v4536, %v4536
      %v4569 = vpack.c.bf16 %v4537, %v4537
      %v4570 = vpack.c.bf16 %v4538, %v4538
      %4571 = vst [vmem:[%s231] sm:$0xf] %v4539
      %4572 = vst [vmem:[%s231 + $0x4] sm:$0xf] %v4540
      %4573 = vst [vmem:[%s231 + $0x8] sm:$0xf] %v4541
      %4574 = vst [vmem:[%s231 + $0xc] sm:$0xf] %v4542
      %4575 = vst [vmem:[%s231 + $0x10] sm:$0xf] %v4543
      %4576 = vst [vmem:[%s231 + $0x14] sm:$0xf] %v4544
      %4577 = vst [vmem:[%s231 + $0x18] sm:$0xf] %v4545
      %4578 = vst [vmem:[%s231 + $0x1c] sm:$0xf] %v4546
      %4579 = vst [vmem:[%s231 + $0x20] sm:$0xf] %v4547
      %4580 = vst [vmem:[%s231 + $0x24] sm:$0xf] %v4548
      %4581 = vst [vmem:[%s231 + $0x28] sm:$0xf] %v4549
      %4582 = vst [vmem:[%s231 + $0x2c] sm:$0xf] %v4550
      %4583 = vst [vmem:[%s231 + $0x30] sm:$0xf] %v4551
      %4584 = vst [vmem:[%s231 + $0x34] sm:$0xf] %v4552
      %4585 = vst [vmem:[%s231 + $0x38] sm:$0xf] %v4553
      %4586 = vst [vmem:[%s231 + $0x3c] sm:$0xf] %v4554
      %4587 = vst [vmem:[%s231 + $0x40] sm:$0xf] %v4555
      %4588 = vst [vmem:[%s231 + $0x44] sm:$0xf] %v4556
      %4589 = vst [vmem:[%s231 + $0x48] sm:$0xf] %v4557
      %4590 = vst [vmem:[%s231 + $0x4c] sm:$0xf] %v4558
      %4591 = vst [vmem:[%s231 + $0x50] sm:$0xf] %v4559
      %4592 = vst [vmem:[%s231 + $0x54] sm:$0xf] %v4560
      %4593 = vst [vmem:[%s231 + $0x58] sm:$0xf] %v4561
      %4594 = vst [vmem:[%s231 + $0x5c] sm:$0xf] %v4562
      %4595 = vst [vmem:[%s231 + $0x60] sm:$0xf] %v4563
      %4596 = vst [vmem:[%s231 + $0x64] sm:$0xf] %v4564
      %4597 = vst [vmem:[%s231 + $0x68] sm:$0xf] %v4565
      %4598 = vst [vmem:[%s231 + $0x6c] sm:$0xf] %v4566
      %4599 = vst [vmem:[%s231 + $0x70] sm:$0xf] %v4567
      %4600 = vst [vmem:[%s231 + $0x74] sm:$0xf] %v4568
      %4601 = vst [vmem:[%s231 + $0x78] sm:$0xf] %v4569
      %4602 = vst [vmem:[%s231 + $0x7c] sm:$0xf] %v4570
      %v4603 = vadd.f32 %v4507, %v4508
      %v4604 = vadd.f32 %v4603, %v4509
      %v4605 = vadd.f32 %v4604, %v4510
      %v4606 = vadd.f32 %v4605, %v4511
      %v4607 = vadd.f32 %v4606, %v4512
      %v4608 = vadd.f32 %v4607, %v4513
      %v4609 = vadd.f32 %v4608, %v4514
      %v4610 = vadd.f32 %v4609, %v4515
      %v4611 = vadd.f32 %v4610, %v4516
      %v4612 = vadd.f32 %v4611, %v4517
      %v4613 = vadd.f32 %v4612, %v4518
      %v4614 = vadd.f32 %v4613, %v4519
      %v4615 = vadd.f32 %v4614, %v4520
      %v4616 = vadd.f32 %v4615, %v4521
      %v4617 = vadd.f32 %v4616, %v4522
      %v4618 = vadd.f32 %v4617, %v4523
      %v4619 = vadd.f32 %v4618, %v4524
      %v4620 = vadd.f32 %v4619, %v4525
      %v4621 = vadd.f32 %v4620, %v4526
      %v4622 = vadd.f32 %v4621, %v4527
      %v4623 = vadd.f32 %v4622, %v4528
      %v4624 = vadd.f32 %v4623, %v4529
      %v4625 = vadd.f32 %v4624, %v4530
      %v4626 = vadd.f32 %v4625, %v4531
      %v4627 = vadd.f32 %v4626, %v4532
      %v4628 = vadd.f32 %v4627, %v4533
      %v4629 = vadd.f32 %v4628, %v4534
      %v4630 = vadd.f32 %v4629, %v4535
      %v4631 = vadd.f32 %v4630, %v4536
      %v4632 = vadd.f32 %v4631, %v4537
      %v4633 = vadd.f32 %v4632, %v4538
      %v4634 = vrot.slane %v4633, 4
      %v4635 = vadd.f32 %v4633, %v4634
      %v4636 = vrot.slane %v4635, 2
      %v4637 = vadd.f32 %v4635, %v4636
      %v4638 = vrot.slane %v4637, 1
      %v4639 = vadd.f32 %v4637, %v4638
      %v4640 = vmul.f32 %v4507, %v4507
      %v4641 = vmul.f32 %v4508, %v4508
      %v4642 = vmul.f32 %v4509, %v4509
      %v4643 = vmul.f32 %v4510, %v4510
      %v4644 = vmul.f32 %v4511, %v4511
      %v4645 = vmul.f32 %v4512, %v4512
      %v4646 = vmul.f32 %v4513, %v4513
      %v4647 = vmul.f32 %v4514, %v4514
      %v4648 = vmul.f32 %v4515, %v4515
      %v4649 = vmul.f32 %v4516, %v4516
      %v4650 = vmul.f32 %v4517, %v4517
      %v4651 = vmul.f32 %v4518, %v4518
      %v4652 = vmul.f32 %v4519, %v4519
      %v4653 = vmul.f32 %v4520, %v4520
      %v4654 = vmul.f32 %v4521, %v4521
      %v4655 = vmul.f32 %v4522, %v4522
      %v4656 = vmul.f32 %v4523, %v4523
      %v4657 = vmul.f32 %v4524, %v4524
      %v4658 = vmul.f32 %v4525, %v4525
      %v4659 = vmul.f32 %v4526, %v4526
      %v4660 = vmul.f32 %v4527, %v4527
      %v4661 = vmul.f32 %v4528, %v4528
      %v4662 = vmul.f32 %v4529, %v4529
      %v4663 = vmul.f32 %v4530, %v4530
      %v4664 = vmul.f32 %v4531, %v4531
      %v4665 = vmul.f32 %v4532, %v4532
      %v4666 = vmul.f32 %v4533, %v4533
      %v4667 = vmul.f32 %v4534, %v4534
      %v4668 = vmul.f32 %v4535, %v4535
      %v4669 = vmul.f32 %v4536, %v4536
      %v4670 = vmul.f32 %v4537, %v4537
      %v4671 = vmul.f32 %v4538, %v4538
      %v4672 = vadd.f32 %v4640, %v4641
      %v4673 = vadd.f32 %v4672, %v4642
      %v4674 = vadd.f32 %v4673, %v4643
      %v4675 = vadd.f32 %v4674, %v4644
      %v4676 = vadd.f32 %v4675, %v4645
      %v4677 = vadd.f32 %v4676, %v4646
      %v4678 = vadd.f32 %v4677, %v4647
      %v4679 = vadd.f32 %v4678, %v4648
      %v4680 = vadd.f32 %v4679, %v4649
      %v4681 = vadd.f32 %v4680, %v4650
      %v4682 = vadd.f32 %v4681, %v4651
      %v4683 = vadd.f32 %v4682, %v4652
      %v4684 = vadd.f32 %v4683, %v4653
      %v4685 = vadd.f32 %v4684, %v4654
      %v4686 = vadd.f32 %v4685, %v4655
      %v4687 = vadd.f32 %v4686, %v4656
      %v4688 = vadd.f32 %v4687, %v4657
      %v4689 = vadd.f32 %v4688, %v4658
      %v4690 = vadd.f32 %v4689, %v4659
      %v4691 = vadd.f32 %v4690, %v4660
      %v4692 = vadd.f32 %v4691, %v4661
      %v4693 = vadd.f32 %v4692, %v4662
      %v4694 = vadd.f32 %v4693, %v4663
      %v4695 = vadd.f32 %v4694, %v4664
      %v4696 = vadd.f32 %v4695, %v4665
      %v4697 = vadd.f32 %v4696, %v4666
      %v4698 = vadd.f32 %v4697, %v4667
      %v4699 = vadd.f32 %v4698, %v4668
      %v4700 = vadd.f32 %v4699, %v4669
      %v4701 = vadd.f32 %v4700, %v4670
      %v4702 = vadd.f32 %v4701, %v4671
      %v4703 = vrot.slane %v4702, 4
      %v4704 = vadd.f32 %v4702, %v4703
      %v4705 = vrot.slane %v4704, 2
      %v4706 = vadd.f32 %v4704, %v4705
      %v4707 = vrot.slane %v4706, 1
      %v4708 = vadd.f32 %v4706, %v4707
      %vm4709 = vcmask 1040384
      %v4710 = vsel %vm4709, %v4639, %v4708
      %4711 = vst [vmem:[%s235] sm:$0x3] %v4710
      %p4712 = scmp.lt.s32.totalorder %s17, 1
      %s4713 = scalar_select %p4712, %s17, 1
      %s4714 = smul.addr %s4713, 32
      %s4715 = smul.addr %s4714, 4
      %s4716 = scalar_lea.vmem %s4, %s4715
      %p4717 = scmp.lt.s32.totalorder %s17, 1
      %s4718 = scalar_select %p4717, %s17, 1
      %s4719 = smul.addr %s4718, 2
      %s4720 = scalar_lea.vmem %s5, %s4719
      // Predicated region
      $region37: #{residual_block_pallas.4} parent=35 // pred_check
        %p4721 = pneg %p124
      $region38: #{residual_block_pallas.4} parent=35 // pred_check_branch
        %4723 = sbr.rel (%p4721) target = $region40
      $region39: #{residual_block_pallas.4} parent=35 // pred_region
        _
      $region40: #{residual_block_pallas.4} parent=35 // pred_fallthru
        _
      // Predicated region
      $region41: #{residual_block_pallas.4} parent=35 // pred_check
        %p4724 = pneg %p150
      $region42: #{residual_block_pallas.4} parent=35 // pred_check_branch
        %4726 = sbr.rel (%p4724) target = $region44
      $region43: #{residual_block_pallas.4} parent=35 // pred_region
        _
      $region44: #{residual_block_pallas.4} parent=35 // pred_fallthru
        _
    $region36: #{residual_block_pallas.4} parent=5 // pred_fallthru
      _
    %p4727 = scmp.le.s32.totalorder 2, %s12
    // Predicated region
    $region45: #{residual_block_pallas.4} parent=5 // pred_check
      %p4728 = pneg %p4727
    $region46: #{residual_block_pallas.4} parent=5 // pred_check_branch
      %4730 = sbr.rel (%p4728) target = $region48
    $region47: #{residual_block_pallas.4} parent=5 // pred_region
      %s4731 = ssub.s32 %s12, 2
      // Predicated region
      $region49: #{residual_block_pallas.4} parent=47 // pred_check
        %p4732 = pneg %p130
      $region50: #{residual_block_pallas.4} parent=47 // pred_check_branch
        %4734 = sbr.rel (%p4732) target = $region52
      $region51: #{residual_block_pallas.4} parent=47 // pred_region
        %p4735 = scmp.lt.s32.totalorder %s18, 1
        %s4736 = scalar_select %p4735, %s18, 1
        %s4737 = smul.addr %s4736, 32
        %s4738 = smul.addr %s4737, 4
        %s4739 = scalar_lea.vmem %s4, %s4738
      $region52: #{residual_block_pallas.4} parent=47 // pred_fallthru
        _
      // Predicated region
      $region53: #{residual_block_pallas.4} parent=47 // pred_check
        %p4740 = pneg %p156
      $region54: #{residual_block_pallas.4} parent=47 // pred_check_branch
        %4742 = sbr.rel (%p4740) target = $region56
      $region55: #{residual_block_pallas.4} parent=47 // pred_region
        %p4743 = scmp.lt.s32.totalorder %s18, 1
        %s4744 = scalar_select %p4743, %s18, 1
        %s4745 = smul.addr %s4744, 2
        %s4746 = scalar_lea.vmem %s5, %s4745
      $region56: #{residual_block_pallas.4} parent=47 // pred_fallthru
        _
    $region48: #{residual_block_pallas.4} parent=5 // pred_fallthru
      _
  $region6: #{residual_block_pallas.4} parent=0 // loop_footer
    %s16 = sadd.s32 1, %s12
  $region7: #{residual_block_pallas.4} parent=0 // loop_footer_branch
    %11 = sbr.rel target = $region3
  $region8: #{residual_block_pallas.4} parent=0 // loop_exit
    _

</llo_original>
